<compile_context>
chip_gen: v7x
topology: tpu7x:2x2x1
jax: 0.10.0
libtpu: 0.0.40
codegen_flags: <defaults>
</compile_context>

<pallas_src>
import jax
import jax.numpy as jnp
from jax import lax
from jax.experimental import pallas as pl
from jax.experimental.pallas import tpu as pltpu

CONV_CFG = [(1, 4, 31), (4, 8, 5), (8, 16, 5), (16, 32, 5)]  # (C_in, C_out, K), stride 2
STRIDE = 2
HIDDEN = 16
BN_EPS = 1e-5
LRELU_SLOPE = 0.2


# ----------------------------- in-kernel helpers -------------------------------------

def _conv_bn_lrelu(in_ref, w_ref, bgb_ref, n_batch):
    """Conv1d(stride=2, valid) + training-mode BatchNorm1d + LeakyReLU(0.2) in VMEM.

    in_ref : (L_in, n_batch * C_in) ref  -- length on sublanes, batch packed on lanes.
    w_ref  : (K, C_in, C_out) per-tap conv weights.
    bgb_ref: (3, C_out) packed [conv bias; BN gamma; BN beta].
    Returns a list of n_batch values, each (L_out, C_out), never written to HBM.
    """
    k, c_in, c_out = w_ref.shape
    l_in = in_ref.shape[0]
    l_out = (l_in - k) // STRIDE + 1
    assert in_ref.shape[1] == n_batch * c_in

    accs = [jnp.zeros((l_out, c_out), jnp.float32) for _ in range(n_batch)]
    for dk in range(k):
        # Stride-2 window for tap dk: rows dk, dk+2, ...  (sublane-strided VMEM read).
        win = in_ref[pl.ds(dk, l_out, STRIDE), :]               # (l_out, n_batch*c_in)
        w_dk = w_ref[dk]                                        # (c_in, c_out)
        for b in range(n_batch):
            win_b = win[:, b * c_in:(b + 1) * c_in]             # (l_out, c_in)
            if c_in == 1:
                # First layer: contraction dim is 1, a VPU broadcast-multiply is enough.
                accs[b] = accs[b] + win_b * w_dk
            else:
                accs[b] = accs[b] + jnp.dot(win_b, w_dk,
                                            preferred_element_type=jnp.float32)

    bias = bgb_ref[0:1, :]
    gamma = bgb_ref[1:2, :]
    beta = bgb_ref[2:3, :]
    ys = [acc + bias for acc in accs]

    # BatchNorm1d training mode: per-channel stats over all N*L_out positions.
    cnt = float(n_batch * l_out)
    mean = sum(jnp.sum(y, axis=0, keepdims=True) for y in ys) / cnt
    var = sum(jnp.sum(jnp.square(y - mean), axis=0, keepdims=True) for y in ys) / cnt
    inv = lax.rsqrt(var + BN_EPS)

    outs = []
    for y in ys:
        z = (y - mean) * inv * gamma + beta
        outs.append(jnp.where(z >= 0, z, LRELU_SLOPE * z))       # LeakyReLU(0.2)
    return outs


def _store_batched(a_ref, ys):
    """Write per-batch (L, C) values into a (L, N*C) VMEM scratch (batch on lanes)."""
    c_out = ys[0].shape[1]
    for b, y in enumerate(ys):
        a_ref[:, b * c_out:(b + 1) * c_out] = y


# ----------------------------- the fused kernel --------------------------------------

def _discriminator_kernel(x_ref,
                          w1_ref, bgb1_ref, w2_ref, bgb2_ref,
                          w3_ref, bgb3_ref, w4_ref, bgb4_ref,
                          wih_f_ref, whh_f_ref, bf_ref,
                          wih_b_ref, whh_b_ref, bb_ref,
                          wfc_ref, bfc_ref,
                          out_ref,
                          a1_ref, a2_ref, a3_ref):
    n = out_ref.shape[0]

    # ---------------- conv stack (activations stay in VMEM) ----------------
    y1 = _conv_bn_lrelu(x_ref, w1_ref, bgb1_ref, n)
    _store_batched(a1_ref, y1)
    y2 = _conv_bn_lrelu(a1_ref, w2_ref, bgb2_ref, n)
    _store_batched(a2_ref, y2)
    y3 = _conv_bn_lrelu(a2_ref, w3_ref, bgb3_ref, n)
    _store_batched(a3_ref, y3)
    y4 = _conv_bn_lrelu(a3_ref, w4_ref, bgb4_ref, n)   # list of (T, 32) values per batch

    t_len = y4[0].shape[0]
    hd = whh_f_ref.shape[0]

    # ----------------------------- BiLSTM + FC ------------------------------
    # Hoisted input projection for the forward direction: one matmul per batch
    # element, outside the serial recurrence.
    gxf = [jnp.dot(y4[b], wih_f_ref[...], preferred_element_type=jnp.float32)
           for b in range(n)]                                      # each (T, 4H)

    def gate_combine(gates, c_prev):
        # One sigmoid + one tanh pass over the full 4H-wide gate vector, then split.
        sg = jax.nn.sigmoid(gates)
        th = jnp.tanh(gates)
        i_g = sg[:, 0:hd]
        f_g = sg[:, hd:2 * hd]
        g_g = th[:, 2 * hd:3 * hd]
        o_g = sg[:, 3 * hd:4 * hd]
        c_new = f_g * c_prev + i_g * g_g
        return o_g * jnp.tanh(c_new), c_new

    whh_f = whh_f_ref[...]
    bf = bf_ref[...]
    h = jnp.zeros((n, hd), jnp.float32)
    c = jnp.zeros((n, hd), jnp.float32)
    # Fully unrolled forward recurrence (T is static and small); only the h @ W_hh
    # chain is serially dependent.
    for t in range(t_len):
        gx_t = jnp.concatenate([gxf[b][t:t + 1, :] for b in range(n)], axis=0)  # (N, 4H)
        gates = gx_t + jnp.dot(h, whh_f, preferred_element_type=jnp.float32) + bf
        h, c = gate_combine(gates, c)
    h_fwd = h

    # Backward direction of output[:, -1, :]: first step of the reverse scan, i.e.
    # one cell on x[T-1] from the zero state.  h0 == 0, so the h @ W_hh_reverse term
    # is exactly zero and whh_b_ref is intentionally unused.
    del whh_b_ref
    x_last = jnp.concatenate([y4[b][t_len - 1:t_len, :] for b in range(n)], axis=0)  # (N, 32)
    gates_b = (jnp.dot(x_last, wih_b_ref[...], preferred_element_type=jnp.float32)
               + bb_ref[...])
    h_bwd, _ = gate_combine(gates_b, jnp.zeros((n, hd), jnp.float32))

    h_cat = jnp.concatenate([h_fwd, h_bwd], axis=1)                # (N, 2H)
    logit = jnp.dot(h_cat, wfc_ref[...], preferred_element_type=jnp.float32) + bfc_ref[...]
    out_ref[...] = jax.nn.sigmoid(logit)


# ----------------------------- wrapper / params --------------------------------------

def discriminator_forward(x, params):
    """x: (N, 1, L) float32 in PyTorch NCL layout.  Returns (N,) sigmoid scores."""
    n, _, l = x.shape

    lens = []
    cur = l
    for (_, _, k) in CONV_CFG:
        cur = (cur - k) // STRIDE + 1
        lens.append(cur)

    # Kernel input layout: length on sublanes, batch packed along lanes.
    x2d = jnp.transpose(x[:, 0, :], (1, 0))                        # (L, N)

    # VMEM scratch for the first three conv activations (batch packed along lanes);
    # the last conv output feeds the LSTM directly as values.
    scratch = [pltpu.VMEM((lens[i], n * CONV_CFG[i][1]), jnp.float32) for i in range(3)]

    # Note: single gridless invocation (one TensorCore).  For large batches a grid
    # over the batch dim with dimension_semantics=("parallel",) would use both TCs
    # on v7x (BN batch stats would then need a cross-block reduction).
    out = pl.pallas_call(
        _discriminator_kernel,
        out_shape=jax.ShapeDtypeStruct((n, 1), jnp.float32),
        scratch_shapes=scratch,
    )(x2d,
      params['w1'], params['bgb1'], params['w2'], params['bgb2'],
      params['w3'], params['bgb3'], params['w4'], params['bgb4'],
      params['wih_f'], params['whh_f'], params['b_f'],
      params['wih_b'], params['whh_b'], params['b_b'],
      params['wfc'], params['bfc'])
    return out[:, 0]                                               # squeeze(1) -> (N,)


def init_params(key):
    ks = iter(jax.random.split(key, 16))

    def norm(shape, scale=0.1):
        return scale * jax.random.normal(next(ks), shape, jnp.float32)

    p = {}
    for idx, (cin, cout, k) in enumerate(CONV_CFG, start=1):
        # PyTorch Conv1d weight is (C_out, C_in, K); kernel wants per-tap (K, C_in, C_out).
        w_pt = norm((cout, cin, k))
        p[f'w{idx}'] = jnp.transpose(w_pt, (2, 1, 0))
        b = norm((cout,))
        gamma = jnp.ones((cout,), jnp.float32)
        beta = jnp.zeros((cout,), jnp.float32)
        p[f'bgb{idx}'] = jnp.stack([b, gamma, beta], axis=0)       # (3, C_out)

    h, cin = HIDDEN, 32
    # PyTorch LSTM stores W_ih (4H, In), W_hh (4H, H) with gate order [i, f, g, o];
    # kept pre-transposed here for x @ W, with b = b_ih + b_hh folded together.
    p['wih_f'] = norm((cin, 4 * h)); p['whh_f'] = norm((h, 4 * h)); p['b_f'] = norm((1, 4 * h))
    p['wih_b'] = norm((cin, 4 * h)); p['whh_b'] = norm((h, 4 * h)); p['b_b'] = norm((1, 4 * h))
    p['wfc'] = norm((2 * h, 1)); p['bfc'] = norm((1, 1))
    return p


# ----------------------------- pure-JAX reference ------------------------------------

def reference_forward(x, params):
    n = x.shape[0]
    h_ncl = x                                                      # (N, C, L)
    for idx, (cin, cout, k) in enumerate(CONV_CFG, start=1):
        w = params[f'w{idx}']                                      # (K, C_in, C_out)
        bgb = params[f'bgb{idx}']
        l_in = h_ncl.shape[2]
        l_out = (l_in - k) // STRIDE + 1
        taps = jnp.stack(
            [lax.slice_in_dim(h_ncl, dk, dk + STRIDE * (l_out - 1) + 1, STRIDE, axis=2)
             for dk in range(k)], axis=-1)                         # (N, C_in, L_out, K)
        y = jnp.einsum('nclk,kcd->nld', taps, w) + bgb[0]          # (N, L_out, C_out)
        mean = jnp.mean(y, axis=(0, 1), keepdims=True)
        var = jnp.mean(jnp.square(y - mean), axis=(0, 1), keepdims=True)
        y = (y - mean) * lax.rsqrt(var + BN_EPS) * bgb[1] + bgb[2]
        y = jnp.where(y >= 0, y, LRELU_SLOPE * y)
        h_ncl = jnp.transpose(y, (0, 2, 1))

    x_seq = jnp.transpose(h_ncl, (0, 2, 1))                        # (N, T, C)
    t_len = x_seq.shape[1]
    hd = params['whh_f'].shape[0]

    def cell(x_t, h, c, wih, whh, b):
        g = x_t @ wih + h @ whh + b
        i = jax.nn.sigmoid(g[:, :hd]); f = jax.nn.sigmoid(g[:, hd:2 * hd])
        gg = jnp.tanh(g[:, 2 * hd:3 * hd]); o = jax.nn.sigmoid(g[:, 3 * hd:])
        c2 = f * c + i * gg
        return o * jnp.tanh(c2), c2

    h = jnp.zeros((n, hd), jnp.float32)
    c = jnp.zeros((n, hd), jnp.float32)
    for t in range(t_len):
        h, c = cell(x_seq[:, t, :], h, c, params['wih_f'], params['whh_f'], params['b_f'])
    h_bwd, _ = cell(x_seq[:, t_len - 1, :], jnp.zeros((n, hd)), jnp.zeros((n, hd)),
                    params['wih_b'], params['whh_b'], params['b_b'])
    out = jnp.concatenate([h, h_bwd], axis=1) @ params['wfc'] + params['bfc']
    return jax.nn.sigmoid(out)[:, 0]


# ----------------------------------- main ---------------------------------------------

if __name__ == "__main__":
    key = jax.random.PRNGKey(0)
    k_x, k_p = jax.random.split(key)
    N, L = 2, 160                      # conv lengths: 160 -> 65 -> 31 -> 14 -> 5 (T=5)
    x = jax.random.normal(k_x, (N, 1, L), jnp.float32)
    params = init_params(k_p)

    out = jax.jit(discriminator_forward)(x, params)
    out = jax.block_until_ready(out)

    assert out.shape == (N,), out.shape
    assert bool(jnp.all(jnp.isfinite(out)))
    assert bool(jnp.all((out >= 0.0) & (out <= 1.0)))              # sigmoid range

    ref = jax.jit(reference_forward)(x, params)
    assert bool(jnp.allclose(out, ref, rtol=2e-3, atol=2e-3)), (out, ref)

    print("KERNEL_OK")
</pallas_src>

<mosaic_0001>
module attributes {stable_mosaic.version = 11 : i64} {
  func.func @_discriminator_kernel(%arg0: memref<160x2xf32, #tpu.memory_space<vmem>>, %arg1: memref<31x1x4xf32, #tpu.memory_space<vmem>>, %arg2: memref<3x4xf32, #tpu.memory_space<vmem>>, %arg3: memref<5x4x8xf32, #tpu.memory_space<vmem>>, %arg4: memref<3x8xf32, #tpu.memory_space<vmem>>, %arg5: memref<5x8x16xf32, #tpu.memory_space<vmem>>, %arg6: memref<3x16xf32, #tpu.memory_space<vmem>>, %arg7: memref<5x16x32xf32, #tpu.memory_space<vmem>>, %arg8: memref<3x32xf32, #tpu.memory_space<vmem>>, %arg9: memref<32x64xf32, #tpu.memory_space<vmem>>, %arg10: memref<16x64xf32, #tpu.memory_space<vmem>>, %arg11: memref<1x64xf32, #tpu.memory_space<vmem>>, %arg12: memref<32x64xf32, #tpu.memory_space<vmem>>, %arg13: memref<16x64xf32, #tpu.memory_space<vmem>>, %arg14: memref<1x64xf32, #tpu.memory_space<vmem>>, %arg15: memref<32x1xf32, #tpu.memory_space<vmem>>, %arg16: memref<1x1xf32, #tpu.memory_space<vmem>>, %arg17: memref<2x1xf32, #tpu.memory_space<vmem>>, %arg18: memref<65x8xf32, #tpu.memory_space<vmem>>, %arg19: memref<31x16xf32, #tpu.memory_space<vmem>>, %arg20: memref<14x32xf32, #tpu.memory_space<vmem>>) attributes {dimension_semantics = [], scalar_prefetch = 0 : i64, scratch_operands = 3 : i64, tpu.core_type = #tpu.core_type<tc>} {
    %cst = arith.constant 0.000000e+00 : f32
    %0 = vector.broadcast %cst : f32 to vector<65x4xf32>
    %cst_0 = arith.constant 0.000000e+00 : f32
    %1 = vector.broadcast %cst_0 : f32 to vector<65x4xf32>
    %c0 = arith.constant 0 : index
    %c0_1 = arith.constant 0 : index
    %2 = tpu.strided_load %arg0[%c0, %c0_1] {strides = array<i32: 2, 1>} : memref<160x2xf32, #tpu.memory_space<vmem>>, vector<65x2xf32>
    %c0_2 = arith.constant 0 : index
    %c0_3 = arith.constant 0 : index
    %c0_4 = arith.constant 0 : index
    %3 = vector.load %arg1[%c0_2, %c0_3, %c0_4] : memref<31x1x4xf32, #tpu.memory_space<vmem>>, vector<1x1x4xf32>
    %4 = vector.shape_cast %3 : vector<1x1x4xf32> to vector<1x4xf32>
    %5 = vector.extract_strided_slice %2 {offsets = [0, 0], sizes = [65, 1], strides = [1, 1]} : vector<65x2xf32> to vector<65x1xf32>
    %6 = vector.broadcast %5 : vector<65x1xf32> to vector<65x4xf32>
    %7 = vector.broadcast %4 : vector<1x4xf32> to vector<65x4xf32>
    %8 = arith.mulf %6, %7 : vector<65x4xf32>
    %9 = arith.addf %0, %8 : vector<65x4xf32>
    %10 = vector.extract_strided_slice %2 {offsets = [0, 1], sizes = [65, 1], strides = [1, 1]} : vector<65x2xf32> to vector<65x1xf32>
    %11 = vector.broadcast %10 : vector<65x1xf32> to vector<65x4xf32>
    %12 = vector.broadcast %4 : vector<1x4xf32> to vector<65x4xf32>
    %13 = arith.mulf %11, %12 : vector<65x4xf32>
    %14 = arith.addf %1, %13 : vector<65x4xf32>
    %c1 = arith.constant 1 : index
    %c0_5 = arith.constant 0 : index
    %15 = tpu.strided_load %arg0[%c1, %c0_5] {strides = array<i32: 2, 1>} : memref<160x2xf32, #tpu.memory_space<vmem>>, vector<65x2xf32>
    %c1_6 = arith.constant 1 : index
    %c0_7 = arith.constant 0 : index
    %c0_8 = arith.constant 0 : index
    %16 = vector.load %arg1[%c1_6, %c0_7, %c0_8] : memref<31x1x4xf32, #tpu.memory_space<vmem>>, vector<1x1x4xf32>
    %17 = vector.shape_cast %16 : vector<1x1x4xf32> to vector<1x4xf32>
    %18 = vector.extract_strided_slice %15 {offsets = [0, 0], sizes = [65, 1], strides = [1, 1]} : vector<65x2xf32> to vector<65x1xf32>
    %19 = vector.broadcast %18 : vector<65x1xf32> to vector<65x4xf32>
    %20 = vector.broadcast %17 : vector<1x4xf32> to vector<65x4xf32>
    %21 = arith.mulf %19, %20 : vector<65x4xf32>
    %22 = arith.addf %9, %21 : vector<65x4xf32>
    %23 = vector.extract_strided_slice %15 {offsets = [0, 1], sizes = [65, 1], strides = [1, 1]} : vector<65x2xf32> to vector<65x1xf32>
    %24 = vector.broadcast %23 : vector<65x1xf32> to vector<65x4xf32>
    %25 = vector.broadcast %17 : vector<1x4xf32> to vector<65x4xf32>
    %26 = arith.mulf %24, %25 : vector<65x4xf32>
    %27 = arith.addf %14, %26 : vector<65x4xf32>
    %c2 = arith.constant 2 : index
    %c0_9 = arith.constant 0 : index
    %28 = tpu.strided_load %arg0[%c2, %c0_9] {strides = array<i32: 2, 1>} : memref<160x2xf32, #tpu.memory_space<vmem>>, vector<65x2xf32>
    %c2_10 = arith.constant 2 : index
    %c0_11 = arith.constant 0 : index
    %c0_12 = arith.constant 0 : index
    %29 = vector.load %arg1[%c2_10, %c0_11, %c0_12] : memref<31x1x4xf32, #tpu.memory_space<vmem>>, vector<1x1x4xf32>
    %30 = vector.shape_cast %29 : vector<1x1x4xf32> to vector<1x4xf32>
    %31 = vector.extract_strided_slice %28 {offsets = [0, 0], sizes = [65, 1], strides = [1, 1]} : vector<65x2xf32> to vector<65x1xf32>
    %32 = vector.broadcast %31 : vector<65x1xf32> to vector<65x4xf32>
    %33 = vector.broadcast %30 : vector<1x4xf32> to vector<65x4xf32>
    %34 = arith.mulf %32, %33 : vector<65x4xf32>
    %35 = arith.addf %22, %34 : vector<65x4xf32>
    %36 = vector.extract_strided_slice %28 {offsets = [0, 1], sizes = [65, 1], strides = [1, 1]} : vector<65x2xf32> to vector<65x1xf32>
    %37 = vector.broadcast %36 : vector<65x1xf32> to vector<65x4xf32>
    %38 = vector.broadcast %30 : vector<1x4xf32> to vector<65x4xf32>
    %39 = arith.mulf %37, %38 : vector<65x4xf32>
    %40 = arith.addf %27, %39 : vector<65x4xf32>
    %c3 = arith.constant 3 : index
    %c0_13 = arith.constant 0 : index
    %41 = tpu.strided_load %arg0[%c3, %c0_13] {strides = array<i32: 2, 1>} : memref<160x2xf32, #tpu.memory_space<vmem>>, vector<65x2xf32>
    %c3_14 = arith.constant 3 : index
    %c0_15 = arith.constant 0 : index
    %c0_16 = arith.constant 0 : index
    %42 = vector.load %arg1[%c3_14, %c0_15, %c0_16] : memref<31x1x4xf32, #tpu.memory_space<vmem>>, vector<1x1x4xf32>
    %43 = vector.shape_cast %42 : vector<1x1x4xf32> to vector<1x4xf32>
    %44 = vector.extract_strided_slice %41 {offsets = [0, 0], sizes = [65, 1], strides = [1, 1]} : vector<65x2xf32> to vector<65x1xf32>
    %45 = vector.broadcast %44 : vector<65x1xf32> to vector<65x4xf32>
    %46 = vector.broadcast %43 : vector<1x4xf32> to vector<65x4xf32>
    %47 = arith.mulf %45, %46 : vector<65x4xf32>
    %48 = arith.addf %35, %47 : vector<65x4xf32>
    %49 = vector.extract_strided_slice %41 {offsets = [0, 1], sizes = [65, 1], strides = [1, 1]} : vector<65x2xf32> to vector<65x1xf32>
    %50 = vector.broadcast %49 : vector<65x1xf32> to vector<65x4xf32>
    %51 = vector.broadcast %43 : vector<1x4xf32> to vector<65x4xf32>
    %52 = arith.mulf %50, %51 : vector<65x4xf32>
    %53 = arith.addf %40, %52 : vector<65x4xf32>
    %c4 = arith.constant 4 : index
    %c0_17 = arith.constant 0 : index
    %54 = tpu.strided_load %arg0[%c4, %c0_17] {strides = array<i32: 2, 1>} : memref<160x2xf32, #tpu.memory_space<vmem>>, vector<65x2xf32>
    %c4_18 = arith.constant 4 : index
    %c0_19 = arith.constant 0 : index
    %c0_20 = arith.constant 0 : index
    %55 = vector.load %arg1[%c4_18, %c0_19, %c0_20] : memref<31x1x4xf32, #tpu.memory_space<vmem>>, vector<1x1x4xf32>
    %56 = vector.shape_cast %55 : vector<1x1x4xf32> to vector<1x4xf32>
    %57 = vector.extract_strided_slice %54 {offsets = [0, 0], sizes = [65, 1], strides = [1, 1]} : vector<65x2xf32> to vector<65x1xf32>
    %58 = vector.broadcast %57 : vector<65x1xf32> to vector<65x4xf32>
    %59 = vector.broadcast %56 : vector<1x4xf32> to vector<65x4xf32>
    %60 = arith.mulf %58, %59 : vector<65x4xf32>
    %61 = arith.addf %48, %60 : vector<65x4xf32>
    %62 = vector.extract_strided_slice %54 {offsets = [0, 1], sizes = [65, 1], strides = [1, 1]} : vector<65x2xf32> to vector<65x1xf32>
    %63 = vector.broadcast %62 : vector<65x1xf32> to vector<65x4xf32>
    %64 = vector.broadcast %56 : vector<1x4xf32> to vector<65x4xf32>
    %65 = arith.mulf %63, %64 : vector<65x4xf32>
    %66 = arith.addf %53, %65 : vector<65x4xf32>
    %c5 = arith.constant 5 : index
    %c0_21 = arith.constant 0 : index
    %67 = tpu.strided_load %arg0[%c5, %c0_21] {strides = array<i32: 2, 1>} : memref<160x2xf32, #tpu.memory_space<vmem>>, vector<65x2xf32>
    %c5_22 = arith.constant 5 : index
    %c0_23 = arith.constant 0 : index
    %c0_24 = arith.constant 0 : index
    %68 = vector.load %arg1[%c5_22, %c0_23, %c0_24] : memref<31x1x4xf32, #tpu.memory_space<vmem>>, vector<1x1x4xf32>
    %69 = vector.shape_cast %68 : vector<1x1x4xf32> to vector<1x4xf32>
    %70 = vector.extract_strided_slice %67 {offsets = [0, 0], sizes = [65, 1], strides = [1, 1]} : vector<65x2xf32> to vector<65x1xf32>
    %71 = vector.broadcast %70 : vector<65x1xf32> to vector<65x4xf32>
    %72 = vector.broadcast %69 : vector<1x4xf32> to vector<65x4xf32>
    %73 = arith.mulf %71, %72 : vector<65x4xf32>
    %74 = arith.addf %61, %73 : vector<65x4xf32>
    %75 = vector.extract_strided_slice %67 {offsets = [0, 1], sizes = [65, 1], strides = [1, 1]} : vector<65x2xf32> to vector<65x1xf32>
    %76 = vector.broadcast %75 : vector<65x1xf32> to vector<65x4xf32>
    %77 = vector.broadcast %69 : vector<1x4xf32> to vector<65x4xf32>
    %78 = arith.mulf %76, %77 : vector<65x4xf32>
    %79 = arith.addf %66, %78 : vector<65x4xf32>
    %c6 = arith.constant 6 : index
    %c0_25 = arith.constant 0 : index
    %80 = tpu.strided_load %arg0[%c6, %c0_25] {strides = array<i32: 2, 1>} : memref<160x2xf32, #tpu.memory_space<vmem>>, vector<65x2xf32>
    %c6_26 = arith.constant 6 : index
    %c0_27 = arith.constant 0 : index
    %c0_28 = arith.constant 0 : index
    %81 = vector.load %arg1[%c6_26, %c0_27, %c0_28] : memref<31x1x4xf32, #tpu.memory_space<vmem>>, vector<1x1x4xf32>
    %82 = vector.shape_cast %81 : vector<1x1x4xf32> to vector<1x4xf32>
    %83 = vector.extract_strided_slice %80 {offsets = [0, 0], sizes = [65, 1], strides = [1, 1]} : vector<65x2xf32> to vector<65x1xf32>
    %84 = vector.broadcast %83 : vector<65x1xf32> to vector<65x4xf32>
    %85 = vector.broadcast %82 : vector<1x4xf32> to vector<65x4xf32>
    %86 = arith.mulf %84, %85 : vector<65x4xf32>
    %87 = arith.addf %74, %86 : vector<65x4xf32>
    %88 = vector.extract_strided_slice %80 {offsets = [0, 1], sizes = [65, 1], strides = [1, 1]} : vector<65x2xf32> to vector<65x1xf32>
    %89 = vector.broadcast %88 : vector<65x1xf32> to vector<65x4xf32>
    %90 = vector.broadcast %82 : vector<1x4xf32> to vector<65x4xf32>
    %91 = arith.mulf %89, %90 : vector<65x4xf32>
    %92 = arith.addf %79, %91 : vector<65x4xf32>
    %c7 = arith.constant 7 : index
    %c0_29 = arith.constant 0 : index
    %93 = tpu.strided_load %arg0[%c7, %c0_29] {strides = array<i32: 2, 1>} : memref<160x2xf32, #tpu.memory_space<vmem>>, vector<65x2xf32>
    %c7_30 = arith.constant 7 : index
    %c0_31 = arith.constant 0 : index
    %c0_32 = arith.constant 0 : index
    %94 = vector.load %arg1[%c7_30, %c0_31, %c0_32] : memref<31x1x4xf32, #tpu.memory_space<vmem>>, vector<1x1x4xf32>
    %95 = vector.shape_cast %94 : vector<1x1x4xf32> to vector<1x4xf32>
    %96 = vector.extract_strided_slice %93 {offsets = [0, 0], sizes = [65, 1], strides = [1, 1]} : vector<65x2xf32> to vector<65x1xf32>
    %97 = vector.broadcast %96 : vector<65x1xf32> to vector<65x4xf32>
    %98 = vector.broadcast %95 : vector<1x4xf32> to vector<65x4xf32>
    %99 = arith.mulf %97, %98 : vector<65x4xf32>
    %100 = arith.addf %87, %99 : vector<65x4xf32>
    %101 = vector.extract_strided_slice %93 {offsets = [0, 1], sizes = [65, 1], strides = [1, 1]} : vector<65x2xf32> to vector<65x1xf32>
    %102 = vector.broadcast %101 : vector<65x1xf32> to vector<65x4xf32>
    %103 = vector.broadcast %95 : vector<1x4xf32> to vector<65x4xf32>
    %104 = arith.mulf %102, %103 : vector<65x4xf32>
    %105 = arith.addf %92, %104 : vector<65x4xf32>
    %c8 = arith.constant 8 : index
    %c0_33 = arith.constant 0 : index
    %106 = tpu.strided_load %arg0[%c8, %c0_33] {strides = array<i32: 2, 1>} : memref<160x2xf32, #tpu.memory_space<vmem>>, vector<65x2xf32>
    %c8_34 = arith.constant 8 : index
    %c0_35 = arith.constant 0 : index
    %c0_36 = arith.constant 0 : index
    %107 = vector.load %arg1[%c8_34, %c0_35, %c0_36] : memref<31x1x4xf32, #tpu.memory_space<vmem>>, vector<1x1x4xf32>
    %108 = vector.shape_cast %107 : vector<1x1x4xf32> to vector<1x4xf32>
    %109 = vector.extract_strided_slice %106 {offsets = [0, 0], sizes = [65, 1], strides = [1, 1]} : vector<65x2xf32> to vector<65x1xf32>
    %110 = vector.broadcast %109 : vector<65x1xf32> to vector<65x4xf32>
    %111 = vector.broadcast %108 : vector<1x4xf32> to vector<65x4xf32>
    %112 = arith.mulf %110, %111 : vector<65x4xf32>
    %113 = arith.addf %100, %112 : vector<65x4xf32>
    %114 = vector.extract_strided_slice %106 {offsets = [0, 1], sizes = [65, 1], strides = [1, 1]} : vector<65x2xf32> to vector<65x1xf32>
    %115 = vector.broadcast %114 : vector<65x1xf32> to vector<65x4xf32>
    %116 = vector.broadcast %108 : vector<1x4xf32> to vector<65x4xf32>
    %117 = arith.mulf %115, %116 : vector<65x4xf32>
    %118 = arith.addf %105, %117 : vector<65x4xf32>
    %c9 = arith.constant 9 : index
    %c0_37 = arith.constant 0 : index
    %119 = tpu.strided_load %arg0[%c9, %c0_37] {strides = array<i32: 2, 1>} : memref<160x2xf32, #tpu.memory_space<vmem>>, vector<65x2xf32>
    %c9_38 = arith.constant 9 : index
    %c0_39 = arith.constant 0 : index
    %c0_40 = arith.constant 0 : index
    %120 = vector.load %arg1[%c9_38, %c0_39, %c0_40] : memref<31x1x4xf32, #tpu.memory_space<vmem>>, vector<1x1x4xf32>
    %121 = vector.shape_cast %120 : vector<1x1x4xf32> to vector<1x4xf32>
    %122 = vector.extract_strided_slice %119 {offsets = [0, 0], sizes = [65, 1], strides = [1, 1]} : vector<65x2xf32> to vector<65x1xf32>
    %123 = vector.broadcast %122 : vector<65x1xf32> to vector<65x4xf32>
    %124 = vector.broadcast %121 : vector<1x4xf32> to vector<65x4xf32>
    %125 = arith.mulf %123, %124 : vector<65x4xf32>
    %126 = arith.addf %113, %125 : vector<65x4xf32>
    %127 = vector.extract_strided_slice %119 {offsets = [0, 1], sizes = [65, 1], strides = [1, 1]} : vector<65x2xf32> to vector<65x1xf32>
    %128 = vector.broadcast %127 : vector<65x1xf32> to vector<65x4xf32>
    %129 = vector.broadcast %121 : vector<1x4xf32> to vector<65x4xf32>
    %130 = arith.mulf %128, %129 : vector<65x4xf32>
    %131 = arith.addf %118, %130 : vector<65x4xf32>
    %c10 = arith.constant 10 : index
    %c0_41 = arith.constant 0 : index
    %132 = tpu.strided_load %arg0[%c10, %c0_41] {strides = array<i32: 2, 1>} : memref<160x2xf32, #tpu.memory_space<vmem>>, vector<65x2xf32>
    %c10_42 = arith.constant 10 : index
    %c0_43 = arith.constant 0 : index
    %c0_44 = arith.constant 0 : index
    %133 = vector.load %arg1[%c10_42, %c0_43, %c0_44] : memref<31x1x4xf32, #tpu.memory_space<vmem>>, vector<1x1x4xf32>
    %134 = vector.shape_cast %133 : vector<1x1x4xf32> to vector<1x4xf32>
    %135 = vector.extract_strided_slice %132 {offsets = [0, 0], sizes = [65, 1], strides = [1, 1]} : vector<65x2xf32> to vector<65x1xf32>
    %136 = vector.broadcast %135 : vector<65x1xf32> to vector<65x4xf32>
    %137 = vector.broadcast %134 : vector<1x4xf32> to vector<65x4xf32>
    %138 = arith.mulf %136, %137 : vector<65x4xf32>
    %139 = arith.addf %126, %138 : vector<65x4xf32>
    %140 = vector.extract_strided_slice %132 {offsets = [0, 1], sizes = [65, 1], strides = [1, 1]} : vector<65x2xf32> to vector<65x1xf32>
    %141 = vector.broadcast %140 : vector<65x1xf32> to vector<65x4xf32>
    %142 = vector.broadcast %134 : vector<1x4xf32> to vector<65x4xf32>
    %143 = arith.mulf %141, %142 : vector<65x4xf32>
    %144 = arith.addf %131, %143 : vector<65x4xf32>
    %c11 = arith.constant 11 : index
    %c0_45 = arith.constant 0 : index
    %145 = tpu.strided_load %arg0[%c11, %c0_45] {strides = array<i32: 2, 1>} : memref<160x2xf32, #tpu.memory_space<vmem>>, vector<65x2xf32>
    %c11_46 = arith.constant 11 : index
    %c0_47 = arith.constant 0 : index
    %c0_48 = arith.constant 0 : index
    %146 = vector.load %arg1[%c11_46, %c0_47, %c0_48] : memref<31x1x4xf32, #tpu.memory_space<vmem>>, vector<1x1x4xf32>
    %147 = vector.shape_cast %146 : vector<1x1x4xf32> to vector<1x4xf32>
    %148 = vector.extract_strided_slice %145 {offsets = [0, 0], sizes = [65, 1], strides = [1, 1]} : vector<65x2xf32> to vector<65x1xf32>
    %149 = vector.broadcast %148 : vector<65x1xf32> to vector<65x4xf32>
    %150 = vector.broadcast %147 : vector<1x4xf32> to vector<65x4xf32>
    %151 = arith.mulf %149, %150 : vector<65x4xf32>
    %152 = arith.addf %139, %151 : vector<65x4xf32>
    %153 = vector.extract_strided_slice %145 {offsets = [0, 1], sizes = [65, 1], strides = [1, 1]} : vector<65x2xf32> to vector<65x1xf32>
    %154 = vector.broadcast %153 : vector<65x1xf32> to vector<65x4xf32>
    %155 = vector.broadcast %147 : vector<1x4xf32> to vector<65x4xf32>
    %156 = arith.mulf %154, %155 : vector<65x4xf32>
    %157 = arith.addf %144, %156 : vector<65x4xf32>
    %c12 = arith.constant 12 : index
    %c0_49 = arith.constant 0 : index
    %158 = tpu.strided_load %arg0[%c12, %c0_49] {strides = array<i32: 2, 1>} : memref<160x2xf32, #tpu.memory_space<vmem>>, vector<65x2xf32>
    %c12_50 = arith.constant 12 : index
    %c0_51 = arith.constant 0 : index
    %c0_52 = arith.constant 0 : index
    %159 = vector.load %arg1[%c12_50, %c0_51, %c0_52] : memref<31x1x4xf32, #tpu.memory_space<vmem>>, vector<1x1x4xf32>
    %160 = vector.shape_cast %159 : vector<1x1x4xf32> to vector<1x4xf32>
    %161 = vector.extract_strided_slice %158 {offsets = [0, 0], sizes = [65, 1], strides = [1, 1]} : vector<65x2xf32> to vector<65x1xf32>
    %162 = vector.broadcast %161 : vector<65x1xf32> to vector<65x4xf32>
    %163 = vector.broadcast %160 : vector<1x4xf32> to vector<65x4xf32>
    %164 = arith.mulf %162, %163 : vector<65x4xf32>
    %165 = arith.addf %152, %164 : vector<65x4xf32>
    %166 = vector.extract_strided_slice %158 {offsets = [0, 1], sizes = [65, 1], strides = [1, 1]} : vector<65x2xf32> to vector<65x1xf32>
    %167 = vector.broadcast %166 : vector<65x1xf32> to vector<65x4xf32>
    %168 = vector.broadcast %160 : vector<1x4xf32> to vector<65x4xf32>
    %169 = arith.mulf %167, %168 : vector<65x4xf32>
    %170 = arith.addf %157, %169 : vector<65x4xf32>
    %c13 = arith.constant 13 : index
    %c0_53 = arith.constant 0 : index
    %171 = tpu.strided_load %arg0[%c13, %c0_53] {strides = array<i32: 2, 1>} : memref<160x2xf32, #tpu.memory_space<vmem>>, vector<65x2xf32>
    %c13_54 = arith.constant 13 : index
    %c0_55 = arith.constant 0 : index
    %c0_56 = arith.constant 0 : index
    %172 = vector.load %arg1[%c13_54, %c0_55, %c0_56] : memref<31x1x4xf32, #tpu.memory_space<vmem>>, vector<1x1x4xf32>
    %173 = vector.shape_cast %172 : vector<1x1x4xf32> to vector<1x4xf32>
    %174 = vector.extract_strided_slice %171 {offsets = [0, 0], sizes = [65, 1], strides = [1, 1]} : vector<65x2xf32> to vector<65x1xf32>
    %175 = vector.broadcast %174 : vector<65x1xf32> to vector<65x4xf32>
    %176 = vector.broadcast %173 : vector<1x4xf32> to vector<65x4xf32>
    %177 = arith.mulf %175, %176 : vector<65x4xf32>
    %178 = arith.addf %165, %177 : vector<65x4xf32>
    %179 = vector.extract_strided_slice %171 {offsets = [0, 1], sizes = [65, 1], strides = [1, 1]} : vector<65x2xf32> to vector<65x1xf32>
    %180 = vector.broadcast %179 : vector<65x1xf32> to vector<65x4xf32>
    %181 = vector.broadcast %173 : vector<1x4xf32> to vector<65x4xf32>
    %182 = arith.mulf %180, %181 : vector<65x4xf32>
    %183 = arith.addf %170, %182 : vector<65x4xf32>
    %c14 = arith.constant 14 : index
    %c0_57 = arith.constant 0 : index
    %184 = tpu.strided_load %arg0[%c14, %c0_57] {strides = array<i32: 2, 1>} : memref<160x2xf32, #tpu.memory_space<vmem>>, vector<65x2xf32>
    %c14_58 = arith.constant 14 : index
    %c0_59 = arith.constant 0 : index
    %c0_60 = arith.constant 0 : index
    %185 = vector.load %arg1[%c14_58, %c0_59, %c0_60] : memref<31x1x4xf32, #tpu.memory_space<vmem>>, vector<1x1x4xf32>
    %186 = vector.shape_cast %185 : vector<1x1x4xf32> to vector<1x4xf32>
    %187 = vector.extract_strided_slice %184 {offsets = [0, 0], sizes = [65, 1], strides = [1, 1]} : vector<65x2xf32> to vector<65x1xf32>
    %188 = vector.broadcast %187 : vector<65x1xf32> to vector<65x4xf32>
    %189 = vector.broadcast %186 : vector<1x4xf32> to vector<65x4xf32>
    %190 = arith.mulf %188, %189 : vector<65x4xf32>
    %191 = arith.addf %178, %190 : vector<65x4xf32>
    %192 = vector.extract_strided_slice %184 {offsets = [0, 1], sizes = [65, 1], strides = [1, 1]} : vector<65x2xf32> to vector<65x1xf32>
    %193 = vector.broadcast %192 : vector<65x1xf32> to vector<65x4xf32>
    %194 = vector.broadcast %186 : vector<1x4xf32> to vector<65x4xf32>
    %195 = arith.mulf %193, %194 : vector<65x4xf32>
    %196 = arith.addf %183, %195 : vector<65x4xf32>
    %c15 = arith.constant 15 : index
    %c0_61 = arith.constant 0 : index
    %197 = tpu.strided_load %arg0[%c15, %c0_61] {strides = array<i32: 2, 1>} : memref<160x2xf32, #tpu.memory_space<vmem>>, vector<65x2xf32>
    %c15_62 = arith.constant 15 : index
    %c0_63 = arith.constant 0 : index
    %c0_64 = arith.constant 0 : index
    %198 = vector.load %arg1[%c15_62, %c0_63, %c0_64] : memref<31x1x4xf32, #tpu.memory_space<vmem>>, vector<1x1x4xf32>
    %199 = vector.shape_cast %198 : vector<1x1x4xf32> to vector<1x4xf32>
    %200 = vector.extract_strided_slice %197 {offsets = [0, 0], sizes = [65, 1], strides = [1, 1]} : vector<65x2xf32> to vector<65x1xf32>
    %201 = vector.broadcast %200 : vector<65x1xf32> to vector<65x4xf32>
    %202 = vector.broadcast %199 : vector<1x4xf32> to vector<65x4xf32>
    %203 = arith.mulf %201, %202 : vector<65x4xf32>
    %204 = arith.addf %191, %203 : vector<65x4xf32>
    %205 = vector.extract_strided_slice %197 {offsets = [0, 1], sizes = [65, 1], strides = [1, 1]} : vector<65x2xf32> to vector<65x1xf32>
    %206 = vector.broadcast %205 : vector<65x1xf32> to vector<65x4xf32>
    %207 = vector.broadcast %199 : vector<1x4xf32> to vector<65x4xf32>
    %208 = arith.mulf %206, %207 : vector<65x4xf32>
    %209 = arith.addf %196, %208 : vector<65x4xf32>
    %c16 = arith.constant 16 : index
    %c0_65 = arith.constant 0 : index
    %210 = tpu.strided_load %arg0[%c16, %c0_65] {strides = array<i32: 2, 1>} : memref<160x2xf32, #tpu.memory_space<vmem>>, vector<65x2xf32>
    %c16_66 = arith.constant 16 : index
    %c0_67 = arith.constant 0 : index
    %c0_68 = arith.constant 0 : index
    %211 = vector.load %arg1[%c16_66, %c0_67, %c0_68] : memref<31x1x4xf32, #tpu.memory_space<vmem>>, vector<1x1x4xf32>
    %212 = vector.shape_cast %211 : vector<1x1x4xf32> to vector<1x4xf32>
    %213 = vector.extract_strided_slice %210 {offsets = [0, 0], sizes = [65, 1], strides = [1, 1]} : vector<65x2xf32> to vector<65x1xf32>
    %214 = vector.broadcast %213 : vector<65x1xf32> to vector<65x4xf32>
    %215 = vector.broadcast %212 : vector<1x4xf32> to vector<65x4xf32>
    %216 = arith.mulf %214, %215 : vector<65x4xf32>
    %217 = arith.addf %204, %216 : vector<65x4xf32>
    %218 = vector.extract_strided_slice %210 {offsets = [0, 1], sizes = [65, 1], strides = [1, 1]} : vector<65x2xf32> to vector<65x1xf32>
    %219 = vector.broadcast %218 : vector<65x1xf32> to vector<65x4xf32>
    %220 = vector.broadcast %212 : vector<1x4xf32> to vector<65x4xf32>
    %221 = arith.mulf %219, %220 : vector<65x4xf32>
    %222 = arith.addf %209, %221 : vector<65x4xf32>
    %c17 = arith.constant 17 : index
    %c0_69 = arith.constant 0 : index
    %223 = tpu.strided_load %arg0[%c17, %c0_69] {strides = array<i32: 2, 1>} : memref<160x2xf32, #tpu.memory_space<vmem>>, vector<65x2xf32>
    %c17_70 = arith.constant 17 : index
    %c0_71 = arith.constant 0 : index
    %c0_72 = arith.constant 0 : index
    %224 = vector.load %arg1[%c17_70, %c0_71, %c0_72] : memref<31x1x4xf32, #tpu.memory_space<vmem>>, vector<1x1x4xf32>
    %225 = vector.shape_cast %224 : vector<1x1x4xf32> to vector<1x4xf32>
    %226 = vector.extract_strided_slice %223 {offsets = [0, 0], sizes = [65, 1], strides = [1, 1]} : vector<65x2xf32> to vector<65x1xf32>
    %227 = vector.broadcast %226 : vector<65x1xf32> to vector<65x4xf32>
    %228 = vector.broadcast %225 : vector<1x4xf32> to vector<65x4xf32>
    %229 = arith.mulf %227, %228 : vector<65x4xf32>
    %230 = arith.addf %217, %229 : vector<65x4xf32>
    %231 = vector.extract_strided_slice %223 {offsets = [0, 1], sizes = [65, 1], strides = [1, 1]} : vector<65x2xf32> to vector<65x1xf32>
    %232 = vector.broadcast %231 : vector<65x1xf32> to vector<65x4xf32>
    %233 = vector.broadcast %225 : vector<1x4xf32> to vector<65x4xf32>
    %234 = arith.mulf %232, %233 : vector<65x4xf32>
    %235 = arith.addf %222, %234 : vector<65x4xf32>
    %c18 = arith.constant 18 : index
    %c0_73 = arith.constant 0 : index
    %236 = tpu.strided_load %arg0[%c18, %c0_73] {strides = array<i32: 2, 1>} : memref<160x2xf32, #tpu.memory_space<vmem>>, vector<65x2xf32>
    %c18_74 = arith.constant 18 : index
    %c0_75 = arith.constant 0 : index
    %c0_76 = arith.constant 0 : index
    %237 = vector.load %arg1[%c18_74, %c0_75, %c0_76] : memref<31x1x4xf32, #tpu.memory_space<vmem>>, vector<1x1x4xf32>
    %238 = vector.shape_cast %237 : vector<1x1x4xf32> to vector<1x4xf32>
    %239 = vector.extract_strided_slice %236 {offsets = [0, 0], sizes = [65, 1], strides = [1, 1]} : vector<65x2xf32> to vector<65x1xf32>
    %240 = vector.broadcast %239 : vector<65x1xf32> to vector<65x4xf32>
    %241 = vector.broadcast %238 : vector<1x4xf32> to vector<65x4xf32>
    %242 = arith.mulf %240, %241 : vector<65x4xf32>
    %243 = arith.addf %230, %242 : vector<65x4xf32>
    %244 = vector.extract_strided_slice %236 {offsets = [0, 1], sizes = [65, 1], strides = [1, 1]} : vector<65x2xf32> to vector<65x1xf32>
    %245 = vector.broadcast %244 : vector<65x1xf32> to vector<65x4xf32>
    %246 = vector.broadcast %238 : vector<1x4xf32> to vector<65x4xf32>
    %247 = arith.mulf %245, %246 : vector<65x4xf32>
    %248 = arith.addf %235, %247 : vector<65x4xf32>
    %c19 = arith.constant 19 : index
    %c0_77 = arith.constant 0 : index
    %249 = tpu.strided_load %arg0[%c19, %c0_77] {strides = array<i32: 2, 1>} : memref<160x2xf32, #tpu.memory_space<vmem>>, vector<65x2xf32>
    %c19_78 = arith.constant 19 : index
    %c0_79 = arith.constant 0 : index
    %c0_80 = arith.constant 0 : index
    %250 = vector.load %arg1[%c19_78, %c0_79, %c0_80] : memref<31x1x4xf32, #tpu.memory_space<vmem>>, vector<1x1x4xf32>
    %251 = vector.shape_cast %250 : vector<1x1x4xf32> to vector<1x4xf32>
    %252 = vector.extract_strided_slice %249 {offsets = [0, 0], sizes = [65, 1], strides = [1, 1]} : vector<65x2xf32> to vector<65x1xf32>
    %253 = vector.broadcast %252 : vector<65x1xf32> to vector<65x4xf32>
    %254 = vector.broadcast %251 : vector<1x4xf32> to vector<65x4xf32>
    %255 = arith.mulf %253, %254 : vector<65x4xf32>
    %256 = arith.addf %243, %255 : vector<65x4xf32>
    %257 = vector.extract_strided_slice %249 {offsets = [0, 1], sizes = [65, 1], strides = [1, 1]} : vector<65x2xf32> to vector<65x1xf32>
    %258 = vector.broadcast %257 : vector<65x1xf32> to vector<65x4xf32>
    %259 = vector.broadcast %251 : vector<1x4xf32> to vector<65x4xf32>
    %260 = arith.mulf %258, %259 : vector<65x4xf32>
    %261 = arith.addf %248, %260 : vector<65x4xf32>
    %c20 = arith.constant 20 : index
    %c0_81 = arith.constant 0 : index
    %262 = tpu.strided_load %arg0[%c20, %c0_81] {strides = array<i32: 2, 1>} : memref<160x2xf32, #tpu.memory_space<vmem>>, vector<65x2xf32>
    %c20_82 = arith.constant 20 : index
    %c0_83 = arith.constant 0 : index
    %c0_84 = arith.constant 0 : index
    %263 = vector.load %arg1[%c20_82, %c0_83, %c0_84] : memref<31x1x4xf32, #tpu.memory_space<vmem>>, vector<1x1x4xf32>
    %264 = vector.shape_cast %263 : vector<1x1x4xf32> to vector<1x4xf32>
    %265 = vector.extract_strided_slice %262 {offsets = [0, 0], sizes = [65, 1], strides = [1, 1]} : vector<65x2xf32> to vector<65x1xf32>
    %266 = vector.broadcast %265 : vector<65x1xf32> to vector<65x4xf32>
    %267 = vector.broadcast %264 : vector<1x4xf32> to vector<65x4xf32>
    %268 = arith.mulf %266, %267 : vector<65x4xf32>
    %269 = arith.addf %256, %268 : vector<65x4xf32>
    %270 = vector.extract_strided_slice %262 {offsets = [0, 1], sizes = [65, 1], strides = [1, 1]} : vector<65x2xf32> to vector<65x1xf32>
    %271 = vector.broadcast %270 : vector<65x1xf32> to vector<65x4xf32>
    %272 = vector.broadcast %264 : vector<1x4xf32> to vector<65x4xf32>
    %273 = arith.mulf %271, %272 : vector<65x4xf32>
    %274 = arith.addf %261, %273 : vector<65x4xf32>
    %c21 = arith.constant 21 : index
    %c0_85 = arith.constant 0 : index
    %275 = tpu.strided_load %arg0[%c21, %c0_85] {strides = array<i32: 2, 1>} : memref<160x2xf32, #tpu.memory_space<vmem>>, vector<65x2xf32>
    %c21_86 = arith.constant 21 : index
    %c0_87 = arith.constant 0 : index
    %c0_88 = arith.constant 0 : index
    %276 = vector.load %arg1[%c21_86, %c0_87, %c0_88] : memref<31x1x4xf32, #tpu.memory_space<vmem>>, vector<1x1x4xf32>
    %277 = vector.shape_cast %276 : vector<1x1x4xf32> to vector<1x4xf32>
    %278 = vector.extract_strided_slice %275 {offsets = [0, 0], sizes = [65, 1], strides = [1, 1]} : vector<65x2xf32> to vector<65x1xf32>
    %279 = vector.broadcast %278 : vector<65x1xf32> to vector<65x4xf32>
    %280 = vector.broadcast %277 : vector<1x4xf32> to vector<65x4xf32>
    %281 = arith.mulf %279, %280 : vector<65x4xf32>
    %282 = arith.addf %269, %281 : vector<65x4xf32>
    %283 = vector.extract_strided_slice %275 {offsets = [0, 1], sizes = [65, 1], strides = [1, 1]} : vector<65x2xf32> to vector<65x1xf32>
    %284 = vector.broadcast %283 : vector<65x1xf32> to vector<65x4xf32>
    %285 = vector.broadcast %277 : vector<1x4xf32> to vector<65x4xf32>
    %286 = arith.mulf %284, %285 : vector<65x4xf32>
    %287 = arith.addf %274, %286 : vector<65x4xf32>
    %c22 = arith.constant 22 : index
    %c0_89 = arith.constant 0 : index
    %288 = tpu.strided_load %arg0[%c22, %c0_89] {strides = array<i32: 2, 1>} : memref<160x2xf32, #tpu.memory_space<vmem>>, vector<65x2xf32>
    %c22_90 = arith.constant 22 : index
    %c0_91 = arith.constant 0 : index
    %c0_92 = arith.constant 0 : index
    %289 = vector.load %arg1[%c22_90, %c0_91, %c0_92] : memref<31x1x4xf32, #tpu.memory_space<vmem>>, vector<1x1x4xf32>
    %290 = vector.shape_cast %289 : vector<1x1x4xf32> to vector<1x4xf32>
    %291 = vector.extract_strided_slice %288 {offsets = [0, 0], sizes = [65, 1], strides = [1, 1]} : vector<65x2xf32> to vector<65x1xf32>
    %292 = vector.broadcast %291 : vector<65x1xf32> to vector<65x4xf32>
    %293 = vector.broadcast %290 : vector<1x4xf32> to vector<65x4xf32>
    %294 = arith.mulf %292, %293 : vector<65x4xf32>
    %295 = arith.addf %282, %294 : vector<65x4xf32>
    %296 = vector.extract_strided_slice %288 {offsets = [0, 1], sizes = [65, 1], strides = [1, 1]} : vector<65x2xf32> to vector<65x1xf32>
    %297 = vector.broadcast %296 : vector<65x1xf32> to vector<65x4xf32>
    %298 = vector.broadcast %290 : vector<1x4xf32> to vector<65x4xf32>
    %299 = arith.mulf %297, %298 : vector<65x4xf32>
    %300 = arith.addf %287, %299 : vector<65x4xf32>
    %c23 = arith.constant 23 : index
    %c0_93 = arith.constant 0 : index
    %301 = tpu.strided_load %arg0[%c23, %c0_93] {strides = array<i32: 2, 1>} : memref<160x2xf32, #tpu.memory_space<vmem>>, vector<65x2xf32>
    %c23_94 = arith.constant 23 : index
    %c0_95 = arith.constant 0 : index
    %c0_96 = arith.constant 0 : index
    %302 = vector.load %arg1[%c23_94, %c0_95, %c0_96] : memref<31x1x4xf32, #tpu.memory_space<vmem>>, vector<1x1x4xf32>
    %303 = vector.shape_cast %302 : vector<1x1x4xf32> to vector<1x4xf32>
    %304 = vector.extract_strided_slice %301 {offsets = [0, 0], sizes = [65, 1], strides = [1, 1]} : vector<65x2xf32> to vector<65x1xf32>
    %305 = vector.broadcast %304 : vector<65x1xf32> to vector<65x4xf32>
    %306 = vector.broadcast %303 : vector<1x4xf32> to vector<65x4xf32>
    %307 = arith.mulf %305, %306 : vector<65x4xf32>
    %308 = arith.addf %295, %307 : vector<65x4xf32>
    %309 = vector.extract_strided_slice %301 {offsets = [0, 1], sizes = [65, 1], strides = [1, 1]} : vector<65x2xf32> to vector<65x1xf32>
    %310 = vector.broadcast %309 : vector<65x1xf32> to vector<65x4xf32>
    %311 = vector.broadcast %303 : vector<1x4xf32> to vector<65x4xf32>
    %312 = arith.mulf %310, %311 : vector<65x4xf32>
    %313 = arith.addf %300, %312 : vector<65x4xf32>
    %c24 = arith.constant 24 : index
    %c0_97 = arith.constant 0 : index
    %314 = tpu.strided_load %arg0[%c24, %c0_97] {strides = array<i32: 2, 1>} : memref<160x2xf32, #tpu.memory_space<vmem>>, vector<65x2xf32>
    %c24_98 = arith.constant 24 : index
    %c0_99 = arith.constant 0 : index
    %c0_100 = arith.constant 0 : index
    %315 = vector.load %arg1[%c24_98, %c0_99, %c0_100] : memref<31x1x4xf32, #tpu.memory_space<vmem>>, vector<1x1x4xf32>
    %316 = vector.shape_cast %315 : vector<1x1x4xf32> to vector<1x4xf32>
    %317 = vector.extract_strided_slice %314 {offsets = [0, 0], sizes = [65, 1], strides = [1, 1]} : vector<65x2xf32> to vector<65x1xf32>
    %318 = vector.broadcast %317 : vector<65x1xf32> to vector<65x4xf32>
    %319 = vector.broadcast %316 : vector<1x4xf32> to vector<65x4xf32>
    %320 = arith.mulf %318, %319 : vector<65x4xf32>
    %321 = arith.addf %308, %320 : vector<65x4xf32>
    %322 = vector.extract_strided_slice %314 {offsets = [0, 1], sizes = [65, 1], strides = [1, 1]} : vector<65x2xf32> to vector<65x1xf32>
    %323 = vector.broadcast %322 : vector<65x1xf32> to vector<65x4xf32>
    %324 = vector.broadcast %316 : vector<1x4xf32> to vector<65x4xf32>
    %325 = arith.mulf %323, %324 : vector<65x4xf32>
    %326 = arith.addf %313, %325 : vector<65x4xf32>
    %c25 = arith.constant 25 : index
    %c0_101 = arith.constant 0 : index
    %327 = tpu.strided_load %arg0[%c25, %c0_101] {strides = array<i32: 2, 1>} : memref<160x2xf32, #tpu.memory_space<vmem>>, vector<65x2xf32>
    %c25_102 = arith.constant 25 : index
    %c0_103 = arith.constant 0 : index
    %c0_104 = arith.constant 0 : index
    %328 = vector.load %arg1[%c25_102, %c0_103, %c0_104] : memref<31x1x4xf32, #tpu.memory_space<vmem>>, vector<1x1x4xf32>
    %329 = vector.shape_cast %328 : vector<1x1x4xf32> to vector<1x4xf32>
    %330 = vector.extract_strided_slice %327 {offsets = [0, 0], sizes = [65, 1], strides = [1, 1]} : vector<65x2xf32> to vector<65x1xf32>
    %331 = vector.broadcast %330 : vector<65x1xf32> to vector<65x4xf32>
    %332 = vector.broadcast %329 : vector<1x4xf32> to vector<65x4xf32>
    %333 = arith.mulf %331, %332 : vector<65x4xf32>
    %334 = arith.addf %321, %333 : vector<65x4xf32>
    %335 = vector.extract_strided_slice %327 {offsets = [0, 1], sizes = [65, 1], strides = [1, 1]} : vector<65x2xf32> to vector<65x1xf32>
    %336 = vector.broadcast %335 : vector<65x1xf32> to vector<65x4xf32>
    %337 = vector.broadcast %329 : vector<1x4xf32> to vector<65x4xf32>
    %338 = arith.mulf %336, %337 : vector<65x4xf32>
    %339 = arith.addf %326, %338 : vector<65x4xf32>
    %c26 = arith.constant 26 : index
    %c0_105 = arith.constant 0 : index
    %340 = tpu.strided_load %arg0[%c26, %c0_105] {strides = array<i32: 2, 1>} : memref<160x2xf32, #tpu.memory_space<vmem>>, vector<65x2xf32>
    %c26_106 = arith.constant 26 : index
    %c0_107 = arith.constant 0 : index
    %c0_108 = arith.constant 0 : index
    %341 = vector.load %arg1[%c26_106, %c0_107, %c0_108] : memref<31x1x4xf32, #tpu.memory_space<vmem>>, vector<1x1x4xf32>
    %342 = vector.shape_cast %341 : vector<1x1x4xf32> to vector<1x4xf32>
    %343 = vector.extract_strided_slice %340 {offsets = [0, 0], sizes = [65, 1], strides = [1, 1]} : vector<65x2xf32> to vector<65x1xf32>
    %344 = vector.broadcast %343 : vector<65x1xf32> to vector<65x4xf32>
    %345 = vector.broadcast %342 : vector<1x4xf32> to vector<65x4xf32>
    %346 = arith.mulf %344, %345 : vector<65x4xf32>
    %347 = arith.addf %334, %346 : vector<65x4xf32>
    %348 = vector.extract_strided_slice %340 {offsets = [0, 1], sizes = [65, 1], strides = [1, 1]} : vector<65x2xf32> to vector<65x1xf32>
    %349 = vector.broadcast %348 : vector<65x1xf32> to vector<65x4xf32>
    %350 = vector.broadcast %342 : vector<1x4xf32> to vector<65x4xf32>
    %351 = arith.mulf %349, %350 : vector<65x4xf32>
    %352 = arith.addf %339, %351 : vector<65x4xf32>
    %c27 = arith.constant 27 : index
    %c0_109 = arith.constant 0 : index
    %353 = tpu.strided_load %arg0[%c27, %c0_109] {strides = array<i32: 2, 1>} : memref<160x2xf32, #tpu.memory_space<vmem>>, vector<65x2xf32>
    %c27_110 = arith.constant 27 : index
    %c0_111 = arith.constant 0 : index
    %c0_112 = arith.constant 0 : index
    %354 = vector.load %arg1[%c27_110, %c0_111, %c0_112] : memref<31x1x4xf32, #tpu.memory_space<vmem>>, vector<1x1x4xf32>
    %355 = vector.shape_cast %354 : vector<1x1x4xf32> to vector<1x4xf32>
    %356 = vector.extract_strided_slice %353 {offsets = [0, 0], sizes = [65, 1], strides = [1, 1]} : vector<65x2xf32> to vector<65x1xf32>
    %357 = vector.broadcast %356 : vector<65x1xf32> to vector<65x4xf32>
    %358 = vector.broadcast %355 : vector<1x4xf32> to vector<65x4xf32>
    %359 = arith.mulf %357, %358 : vector<65x4xf32>
    %360 = arith.addf %347, %359 : vector<65x4xf32>
    %361 = vector.extract_strided_slice %353 {offsets = [0, 1], sizes = [65, 1], strides = [1, 1]} : vector<65x2xf32> to vector<65x1xf32>
    %362 = vector.broadcast %361 : vector<65x1xf32> to vector<65x4xf32>
    %363 = vector.broadcast %355 : vector<1x4xf32> to vector<65x4xf32>
    %364 = arith.mulf %362, %363 : vector<65x4xf32>
    %365 = arith.addf %352, %364 : vector<65x4xf32>
    %c28 = arith.constant 28 : index
    %c0_113 = arith.constant 0 : index
    %366 = tpu.strided_load %arg0[%c28, %c0_113] {strides = array<i32: 2, 1>} : memref<160x2xf32, #tpu.memory_space<vmem>>, vector<65x2xf32>
    %c28_114 = arith.constant 28 : index
    %c0_115 = arith.constant 0 : index
    %c0_116 = arith.constant 0 : index
    %367 = vector.load %arg1[%c28_114, %c0_115, %c0_116] : memref<31x1x4xf32, #tpu.memory_space<vmem>>, vector<1x1x4xf32>
    %368 = vector.shape_cast %367 : vector<1x1x4xf32> to vector<1x4xf32>
    %369 = vector.extract_strided_slice %366 {offsets = [0, 0], sizes = [65, 1], strides = [1, 1]} : vector<65x2xf32> to vector<65x1xf32>
    %370 = vector.broadcast %369 : vector<65x1xf32> to vector<65x4xf32>
    %371 = vector.broadcast %368 : vector<1x4xf32> to vector<65x4xf32>
    %372 = arith.mulf %370, %371 : vector<65x4xf32>
    %373 = arith.addf %360, %372 : vector<65x4xf32>
    %374 = vector.extract_strided_slice %366 {offsets = [0, 1], sizes = [65, 1], strides = [1, 1]} : vector<65x2xf32> to vector<65x1xf32>
    %375 = vector.broadcast %374 : vector<65x1xf32> to vector<65x4xf32>
    %376 = vector.broadcast %368 : vector<1x4xf32> to vector<65x4xf32>
    %377 = arith.mulf %375, %376 : vector<65x4xf32>
    %378 = arith.addf %365, %377 : vector<65x4xf32>
    %c29 = arith.constant 29 : index
    %c0_117 = arith.constant 0 : index
    %379 = tpu.strided_load %arg0[%c29, %c0_117] {strides = array<i32: 2, 1>} : memref<160x2xf32, #tpu.memory_space<vmem>>, vector<65x2xf32>
    %c29_118 = arith.constant 29 : index
    %c0_119 = arith.constant 0 : index
    %c0_120 = arith.constant 0 : index
    %380 = vector.load %arg1[%c29_118, %c0_119, %c0_120] : memref<31x1x4xf32, #tpu.memory_space<vmem>>, vector<1x1x4xf32>
    %381 = vector.shape_cast %380 : vector<1x1x4xf32> to vector<1x4xf32>
    %382 = vector.extract_strided_slice %379 {offsets = [0, 0], sizes = [65, 1], strides = [1, 1]} : vector<65x2xf32> to vector<65x1xf32>
    %383 = vector.broadcast %382 : vector<65x1xf32> to vector<65x4xf32>
    %384 = vector.broadcast %381 : vector<1x4xf32> to vector<65x4xf32>
    %385 = arith.mulf %383, %384 : vector<65x4xf32>
    %386 = arith.addf %373, %385 : vector<65x4xf32>
    %387 = vector.extract_strided_slice %379 {offsets = [0, 1], sizes = [65, 1], strides = [1, 1]} : vector<65x2xf32> to vector<65x1xf32>
    %388 = vector.broadcast %387 : vector<65x1xf32> to vector<65x4xf32>
    %389 = vector.broadcast %381 : vector<1x4xf32> to vector<65x4xf32>
    %390 = arith.mulf %388, %389 : vector<65x4xf32>
    %391 = arith.addf %378, %390 : vector<65x4xf32>
    %c30 = arith.constant 30 : index
    %c0_121 = arith.constant 0 : index
    %392 = tpu.strided_load %arg0[%c30, %c0_121] {strides = array<i32: 2, 1>} : memref<160x2xf32, #tpu.memory_space<vmem>>, vector<65x2xf32>
    %c30_122 = arith.constant 30 : index
    %c0_123 = arith.constant 0 : index
    %c0_124 = arith.constant 0 : index
    %393 = vector.load %arg1[%c30_122, %c0_123, %c0_124] : memref<31x1x4xf32, #tpu.memory_space<vmem>>, vector<1x1x4xf32>
    %394 = vector.shape_cast %393 : vector<1x1x4xf32> to vector<1x4xf32>
    %395 = vector.extract_strided_slice %392 {offsets = [0, 0], sizes = [65, 1], strides = [1, 1]} : vector<65x2xf32> to vector<65x1xf32>
    %396 = vector.broadcast %395 : vector<65x1xf32> to vector<65x4xf32>
    %397 = vector.broadcast %394 : vector<1x4xf32> to vector<65x4xf32>
    %398 = arith.mulf %396, %397 : vector<65x4xf32>
    %399 = arith.addf %386, %398 : vector<65x4xf32>
    %400 = vector.extract_strided_slice %392 {offsets = [0, 1], sizes = [65, 1], strides = [1, 1]} : vector<65x2xf32> to vector<65x1xf32>
    %401 = vector.broadcast %400 : vector<65x1xf32> to vector<65x4xf32>
    %402 = vector.broadcast %394 : vector<1x4xf32> to vector<65x4xf32>
    %403 = arith.mulf %401, %402 : vector<65x4xf32>
    %404 = arith.addf %391, %403 : vector<65x4xf32>
    %c0_125 = arith.constant 0 : index
    %c0_126 = arith.constant 0 : index
    %405 = vector.load %arg2[%c0_125, %c0_126] : memref<3x4xf32, #tpu.memory_space<vmem>>, vector<1x4xf32>
    %c1_127 = arith.constant 1 : index
    %c0_128 = arith.constant 0 : index
    %406 = vector.load %arg2[%c1_127, %c0_128] : memref<3x4xf32, #tpu.memory_space<vmem>>, vector<1x4xf32>
    %c2_129 = arith.constant 2 : index
    %c0_130 = arith.constant 0 : index
    %407 = vector.load %arg2[%c2_129, %c0_130] : memref<3x4xf32, #tpu.memory_space<vmem>>, vector<1x4xf32>
    %408 = vector.broadcast %405 : vector<1x4xf32> to vector<65x4xf32>
    %409 = arith.addf %399, %408 : vector<65x4xf32>
    %410 = vector.broadcast %405 : vector<1x4xf32> to vector<65x4xf32>
    %411 = arith.addf %404, %410 : vector<65x4xf32>
    %cst_131 = arith.constant dense<0.000000e+00> : vector<4xf32>
    %412 = vector.multi_reduction <add>, %409, %cst_131 [0] : vector<65x4xf32> to vector<4xf32>
    %413 = vector.shape_cast %412 : vector<4xf32> to vector<1x4xf32>
    %cst_132 = arith.constant 0.000000e+00 : f32
    %414 = vector.broadcast %cst_132 : f32 to vector<1x4xf32>
    %415 = arith.addf %414, %413 : vector<1x4xf32>
    %cst_133 = arith.constant dense<0.000000e+00> : vector<4xf32>
    %416 = vector.multi_reduction <add>, %411, %cst_133 [0] : vector<65x4xf32> to vector<4xf32>
    %417 = vector.shape_cast %416 : vector<4xf32> to vector<1x4xf32>
    %418 = arith.addf %415, %417 : vector<1x4xf32>
    %cst_134 = arith.constant 1.300000e+02 : f32
    %419 = vector.broadcast %cst_134 : f32 to vector<1x4xf32>
    %420 = arith.divf %418, %419 : vector<1x4xf32>
    %421 = vector.broadcast %420 : vector<1x4xf32> to vector<65x4xf32>
    %422 = arith.subf %409, %421 : vector<65x4xf32>
    %423 = arith.mulf %422, %422 : vector<65x4xf32>
    %cst_135 = arith.constant dense<0.000000e+00> : vector<4xf32>
    %424 = vector.multi_reduction <add>, %423, %cst_135 [0] : vector<65x4xf32> to vector<4xf32>
    %425 = vector.shape_cast %424 : vector<4xf32> to vector<1x4xf32>
    %cst_136 = arith.constant 0.000000e+00 : f32
    %426 = vector.broadcast %cst_136 : f32 to vector<1x4xf32>
    %427 = arith.addf %426, %425 : vector<1x4xf32>
    %428 = vector.broadcast %420 : vector<1x4xf32> to vector<65x4xf32>
    %429 = arith.subf %411, %428 : vector<65x4xf32>
    %430 = arith.mulf %429, %429 : vector<65x4xf32>
    %cst_137 = arith.constant dense<0.000000e+00> : vector<4xf32>
    %431 = vector.multi_reduction <add>, %430, %cst_137 [0] : vector<65x4xf32> to vector<4xf32>
    %432 = vector.shape_cast %431 : vector<4xf32> to vector<1x4xf32>
    %433 = arith.addf %427, %432 : vector<1x4xf32>
    %cst_138 = arith.constant 1.300000e+02 : f32
    %434 = vector.broadcast %cst_138 : f32 to vector<1x4xf32>
    %435 = arith.divf %433, %434 : vector<1x4xf32>
    %cst_139 = arith.constant 9.99999974E-6 : f32
    %436 = vector.broadcast %cst_139 : f32 to vector<1x4xf32>
    %437 = arith.addf %435, %436 : vector<1x4xf32>
    %438 = math.rsqrt %437 : vector<1x4xf32>
    %439 = vector.broadcast %420 : vector<1x4xf32> to vector<65x4xf32>
    %440 = arith.subf %409, %439 : vector<65x4xf32>
    %441 = vector.broadcast %438 : vector<1x4xf32> to vector<65x4xf32>
    %442 = arith.mulf %440, %441 : vector<65x4xf32>
    %443 = vector.broadcast %406 : vector<1x4xf32> to vector<65x4xf32>
    %444 = arith.mulf %442, %443 : vector<65x4xf32>
    %445 = vector.broadcast %407 : vector<1x4xf32> to vector<65x4xf32>
    %446 = arith.addf %444, %445 : vector<65x4xf32>
    %cst_140 = arith.constant 0.000000e+00 : f32
    %447 = vector.broadcast %cst_140 : f32 to vector<65x4xf32>
    %448 = arith.cmpf oge, %446, %447 : vector<65x4xf32>
    %cst_141 = arith.constant 2.000000e-01 : f32
    %449 = vector.broadcast %cst_141 : f32 to vector<65x4xf32>
    %450 = arith.mulf %449, %446 : vector<65x4xf32>
    %451 = arith.select %448, %446, %450 : vector<65x4xi1>, vector<65x4xf32>
    %452 = vector.broadcast %420 : vector<1x4xf32> to vector<65x4xf32>
    %453 = arith.subf %411, %452 : vector<65x4xf32>
    %454 = vector.broadcast %438 : vector<1x4xf32> to vector<65x4xf32>
    %455 = arith.mulf %453, %454 : vector<65x4xf32>
    %456 = vector.broadcast %406 : vector<1x4xf32> to vector<65x4xf32>
    %457 = arith.mulf %455, %456 : vector<65x4xf32>
    %458 = vector.broadcast %407 : vector<1x4xf32> to vector<65x4xf32>
    %459 = arith.addf %457, %458 : vector<65x4xf32>
    %cst_142 = arith.constant 0.000000e+00 : f32
    %460 = vector.broadcast %cst_142 : f32 to vector<65x4xf32>
    %461 = arith.cmpf oge, %459, %460 : vector<65x4xf32>
    %cst_143 = arith.constant 2.000000e-01 : f32
    %462 = vector.broadcast %cst_143 : f32 to vector<65x4xf32>
    %463 = arith.mulf %462, %459 : vector<65x4xf32>
    %464 = arith.select %461, %459, %463 : vector<65x4xi1>, vector<65x4xf32>
    %c0_144 = arith.constant 0 : index
    %c0_145 = arith.constant 0 : index
    %465 = vector.load %arg18[%c0_144, %c0_145] : memref<65x8xf32, #tpu.memory_space<vmem>>, vector<65x4xf32>
    tpu.vector_store %arg18[%c0_144, %c0_145], %451 {strides = array<i32>} : memref<65x8xf32, #tpu.memory_space<vmem>>, vector<65x4xf32>,
    %c0_146 = arith.constant 0 : index
    %c4_147 = arith.constant 4 : index
    %466 = vector.load %arg18[%c0_146, %c4_147] : memref<65x8xf32, #tpu.memory_space<vmem>>, vector<65x4xf32>
    tpu.vector_store %arg18[%c0_146, %c4_147], %464 {strides = array<i32>} : memref<65x8xf32, #tpu.memory_space<vmem>>, vector<65x4xf32>,
    %cst_148 = arith.constant 0.000000e+00 : f32
    %467 = vector.broadcast %cst_148 : f32 to vector<31x8xf32>
    %cst_149 = arith.constant 0.000000e+00 : f32
    %468 = vector.broadcast %cst_149 : f32 to vector<31x8xf32>
    %c0_150 = arith.constant 0 : index
    %c0_151 = arith.constant 0 : index
    %469 = tpu.strided_load %arg18[%c0_150, %c0_151] {strides = array<i32: 2, 1>} : memref<65x8xf32, #tpu.memory_space<vmem>>, vector<31x8xf32>
    %c0_152 = arith.constant 0 : index
    %c0_153 = arith.constant 0 : index
    %c0_154 = arith.constant 0 : index
    %470 = vector.load %arg3[%c0_152, %c0_153, %c0_154] : memref<5x4x8xf32, #tpu.memory_space<vmem>>, vector<1x4x8xf32>
    %471 = vector.shape_cast %470 : vector<1x4x8xf32> to vector<4x8xf32>
    %472 = vector.extract_strided_slice %469 {offsets = [0, 0], sizes = [31, 4], strides = [1, 1]} : vector<31x8xf32> to vector<31x4xf32>
    %cst_155 = arith.constant dense<0.000000e+00> : vector<31x8xf32>
    %473 = tpu.matmul %472, %471, %cst_155 {dimension_numbers = #tpu.dot_dimension_numbers<[1], [0], [0], [1], [0, 0, 1, 1], [], []>} : vector<31x4xf32>, vector<4x8xf32>, vector<31x8xf32> -> vector<31x8xf32>
    %474 = arith.addf %467, %473 : vector<31x8xf32>
    %475 = vector.extract_strided_slice %469 {offsets = [0, 4], sizes = [31, 4], strides = [1, 1]} : vector<31x8xf32> to vector<31x4xf32>
    %cst_156 = arith.constant dense<0.000000e+00> : vector<31x8xf32>
    %476 = tpu.matmul %475, %471, %cst_156 {dimension_numbers = #tpu.dot_dimension_numbers<[1], [0], [0], [1], [0, 0, 1, 1], [], []>} : vector<31x4xf32>, vector<4x8xf32>, vector<31x8xf32> -> vector<31x8xf32>
    %477 = arith.addf %468, %476 : vector<31x8xf32>
    %c1_157 = arith.constant 1 : index
    %c0_158 = arith.constant 0 : index
    %478 = tpu.strided_load %arg18[%c1_157, %c0_158] {strides = array<i32: 2, 1>} : memref<65x8xf32, #tpu.memory_space<vmem>>, vector<31x8xf32>
    %c1_159 = arith.constant 1 : index
    %c0_160 = arith.constant 0 : index
    %c0_161 = arith.constant 0 : index
    %479 = vector.load %arg3[%c1_159, %c0_160, %c0_161] : memref<5x4x8xf32, #tpu.memory_space<vmem>>, vector<1x4x8xf32>
    %480 = vector.shape_cast %479 : vector<1x4x8xf32> to vector<4x8xf32>
    %481 = vector.extract_strided_slice %478 {offsets = [0, 0], sizes = [31, 4], strides = [1, 1]} : vector<31x8xf32> to vector<31x4xf32>
    %cst_162 = arith.constant dense<0.000000e+00> : vector<31x8xf32>
    %482 = tpu.matmul %481, %480, %cst_162 {dimension_numbers = #tpu.dot_dimension_numbers<[1], [0], [0], [1], [0, 0, 1, 1], [], []>} : vector<31x4xf32>, vector<4x8xf32>, vector<31x8xf32> -> vector<31x8xf32>
    %483 = arith.addf %474, %482 : vector<31x8xf32>
    %484 = vector.extract_strided_slice %478 {offsets = [0, 4], sizes = [31, 4], strides = [1, 1]} : vector<31x8xf32> to vector<31x4xf32>
    %cst_163 = arith.constant dense<0.000000e+00> : vector<31x8xf32>
    %485 = tpu.matmul %484, %480, %cst_163 {dimension_numbers = #tpu.dot_dimension_numbers<[1], [0], [0], [1], [0, 0, 1, 1], [], []>} : vector<31x4xf32>, vector<4x8xf32>, vector<31x8xf32> -> vector<31x8xf32>
    %486 = arith.addf %477, %485 : vector<31x8xf32>
    %c2_164 = arith.constant 2 : index
    %c0_165 = arith.constant 0 : index
    %487 = tpu.strided_load %arg18[%c2_164, %c0_165] {strides = array<i32: 2, 1>} : memref<65x8xf32, #tpu.memory_space<vmem>>, vector<31x8xf32>
    %c2_166 = arith.constant 2 : index
    %c0_167 = arith.constant 0 : index
    %c0_168 = arith.constant 0 : index
    %488 = vector.load %arg3[%c2_166, %c0_167, %c0_168] : memref<5x4x8xf32, #tpu.memory_space<vmem>>, vector<1x4x8xf32>
    %489 = vector.shape_cast %488 : vector<1x4x8xf32> to vector<4x8xf32>
    %490 = vector.extract_strided_slice %487 {offsets = [0, 0], sizes = [31, 4], strides = [1, 1]} : vector<31x8xf32> to vector<31x4xf32>
    %cst_169 = arith.constant dense<0.000000e+00> : vector<31x8xf32>
    %491 = tpu.matmul %490, %489, %cst_169 {dimension_numbers = #tpu.dot_dimension_numbers<[1], [0], [0], [1], [0, 0, 1, 1], [], []>} : vector<31x4xf32>, vector<4x8xf32>, vector<31x8xf32> -> vector<31x8xf32>
    %492 = arith.addf %483, %491 : vector<31x8xf32>
    %493 = vector.extract_strided_slice %487 {offsets = [0, 4], sizes = [31, 4], strides = [1, 1]} : vector<31x8xf32> to vector<31x4xf32>
    %cst_170 = arith.constant dense<0.000000e+00> : vector<31x8xf32>
    %494 = tpu.matmul %493, %489, %cst_170 {dimension_numbers = #tpu.dot_dimension_numbers<[1], [0], [0], [1], [0, 0, 1, 1], [], []>} : vector<31x4xf32>, vector<4x8xf32>, vector<31x8xf32> -> vector<31x8xf32>
    %495 = arith.addf %486, %494 : vector<31x8xf32>
    %c3_171 = arith.constant 3 : index
    %c0_172 = arith.constant 0 : index
    %496 = tpu.strided_load %arg18[%c3_171, %c0_172] {strides = array<i32: 2, 1>} : memref<65x8xf32, #tpu.memory_space<vmem>>, vector<31x8xf32>
    %c3_173 = arith.constant 3 : index
    %c0_174 = arith.constant 0 : index
    %c0_175 = arith.constant 0 : index
    %497 = vector.load %arg3[%c3_173, %c0_174, %c0_175] : memref<5x4x8xf32, #tpu.memory_space<vmem>>, vector<1x4x8xf32>
    %498 = vector.shape_cast %497 : vector<1x4x8xf32> to vector<4x8xf32>
    %499 = vector.extract_strided_slice %496 {offsets = [0, 0], sizes = [31, 4], strides = [1, 1]} : vector<31x8xf32> to vector<31x4xf32>
    %cst_176 = arith.constant dense<0.000000e+00> : vector<31x8xf32>
    %500 = tpu.matmul %499, %498, %cst_176 {dimension_numbers = #tpu.dot_dimension_numbers<[1], [0], [0], [1], [0, 0, 1, 1], [], []>} : vector<31x4xf32>, vector<4x8xf32>, vector<31x8xf32> -> vector<31x8xf32>
    %501 = arith.addf %492, %500 : vector<31x8xf32>
    %502 = vector.extract_strided_slice %496 {offsets = [0, 4], sizes = [31, 4], strides = [1, 1]} : vector<31x8xf32> to vector<31x4xf32>
    %cst_177 = arith.constant dense<0.000000e+00> : vector<31x8xf32>
    %503 = tpu.matmul %502, %498, %cst_177 {dimension_numbers = #tpu.dot_dimension_numbers<[1], [0], [0], [1], [0, 0, 1, 1], [], []>} : vector<31x4xf32>, vector<4x8xf32>, vector<31x8xf32> -> vector<31x8xf32>
    %504 = arith.addf %495, %503 : vector<31x8xf32>
    %c4_178 = arith.constant 4 : index
    %c0_179 = arith.constant 0 : index
    %505 = tpu.strided_load %arg18[%c4_178, %c0_179] {strides = array<i32: 2, 1>} : memref<65x8xf32, #tpu.memory_space<vmem>>, vector<31x8xf32>
    %c4_180 = arith.constant 4 : index
    %c0_181 = arith.constant 0 : index
    %c0_182 = arith.constant 0 : index
    %506 = vector.load %arg3[%c4_180, %c0_181, %c0_182] : memref<5x4x8xf32, #tpu.memory_space<vmem>>, vector<1x4x8xf32>
    %507 = vector.shape_cast %506 : vector<1x4x8xf32> to vector<4x8xf32>
    %508 = vector.extract_strided_slice %505 {offsets = [0, 0], sizes = [31, 4], strides = [1, 1]} : vector<31x8xf32> to vector<31x4xf32>
    %cst_183 = arith.constant dense<0.000000e+00> : vector<31x8xf32>
    %509 = tpu.matmul %508, %507, %cst_183 {dimension_numbers = #tpu.dot_dimension_numbers<[1], [0], [0], [1], [0, 0, 1, 1], [], []>} : vector<31x4xf32>, vector<4x8xf32>, vector<31x8xf32> -> vector<31x8xf32>
    %510 = arith.addf %501, %509 : vector<31x8xf32>
    %511 = vector.extract_strided_slice %505 {offsets = [0, 4], sizes = [31, 4], strides = [1, 1]} : vector<31x8xf32> to vector<31x4xf32>
    %cst_184 = arith.constant dense<0.000000e+00> : vector<31x8xf32>
    %512 = tpu.matmul %511, %507, %cst_184 {dimension_numbers = #tpu.dot_dimension_numbers<[1], [0], [0], [1], [0, 0, 1, 1], [], []>} : vector<31x4xf32>, vector<4x8xf32>, vector<31x8xf32> -> vector<31x8xf32>
    %513 = arith.addf %504, %512 : vector<31x8xf32>
    %c0_185 = arith.constant 0 : index
    %c0_186 = arith.constant 0 : index
    %514 = vector.load %arg4[%c0_185, %c0_186] : memref<3x8xf32, #tpu.memory_space<vmem>>, vector<1x8xf32>
    %c1_187 = arith.constant 1 : index
    %c0_188 = arith.constant 0 : index
    %515 = vector.load %arg4[%c1_187, %c0_188] : memref<3x8xf32, #tpu.memory_space<vmem>>, vector<1x8xf32>
    %c2_189 = arith.constant 2 : index
    %c0_190 = arith.constant 0 : index
    %516 = vector.load %arg4[%c2_189, %c0_190] : memref<3x8xf32, #tpu.memory_space<vmem>>, vector<1x8xf32>
    %517 = vector.broadcast %514 : vector<1x8xf32> to vector<31x8xf32>
    %518 = arith.addf %510, %517 : vector<31x8xf32>
    %519 = vector.broadcast %514 : vector<1x8xf32> to vector<31x8xf32>
    %520 = arith.addf %513, %519 : vector<31x8xf32>
    %cst_191 = arith.constant dense<0.000000e+00> : vector<8xf32>
    %521 = vector.multi_reduction <add>, %518, %cst_191 [0] : vector<31x8xf32> to vector<8xf32>
    %522 = vector.shape_cast %521 : vector<8xf32> to vector<1x8xf32>
    %cst_192 = arith.constant 0.000000e+00 : f32
    %523 = vector.broadcast %cst_192 : f32 to vector<1x8xf32>
    %524 = arith.addf %523, %522 : vector<1x8xf32>
    %cst_193 = arith.constant dense<0.000000e+00> : vector<8xf32>
    %525 = vector.multi_reduction <add>, %520, %cst_193 [0] : vector<31x8xf32> to vector<8xf32>
    %526 = vector.shape_cast %525 : vector<8xf32> to vector<1x8xf32>
    %527 = arith.addf %524, %526 : vector<1x8xf32>
    %cst_194 = arith.constant 6.200000e+01 : f32
    %528 = vector.broadcast %cst_194 : f32 to vector<1x8xf32>
    %529 = arith.divf %527, %528 : vector<1x8xf32>
    %530 = vector.broadcast %529 : vector<1x8xf32> to vector<31x8xf32>
    %531 = arith.subf %518, %530 : vector<31x8xf32>
    %532 = arith.mulf %531, %531 : vector<31x8xf32>
    %cst_195 = arith.constant dense<0.000000e+00> : vector<8xf32>
    %533 = vector.multi_reduction <add>, %532, %cst_195 [0] : vector<31x8xf32> to vector<8xf32>
    %534 = vector.shape_cast %533 : vector<8xf32> to vector<1x8xf32>
    %cst_196 = arith.constant 0.000000e+00 : f32
    %535 = vector.broadcast %cst_196 : f32 to vector<1x8xf32>
    %536 = arith.addf %535, %534 : vector<1x8xf32>
    %537 = vector.broadcast %529 : vector<1x8xf32> to vector<31x8xf32>
    %538 = arith.subf %520, %537 : vector<31x8xf32>
    %539 = arith.mulf %538, %538 : vector<31x8xf32>
    %cst_197 = arith.constant dense<0.000000e+00> : vector<8xf32>
    %540 = vector.multi_reduction <add>, %539, %cst_197 [0] : vector<31x8xf32> to vector<8xf32>
    %541 = vector.shape_cast %540 : vector<8xf32> to vector<1x8xf32>
    %542 = arith.addf %536, %541 : vector<1x8xf32>
    %cst_198 = arith.constant 6.200000e+01 : f32
    %543 = vector.broadcast %cst_198 : f32 to vector<1x8xf32>
    %544 = arith.divf %542, %543 : vector<1x8xf32>
    %cst_199 = arith.constant 9.99999974E-6 : f32
    %545 = vector.broadcast %cst_199 : f32 to vector<1x8xf32>
    %546 = arith.addf %544, %545 : vector<1x8xf32>
    %547 = math.rsqrt %546 : vector<1x8xf32>
    %548 = vector.broadcast %529 : vector<1x8xf32> to vector<31x8xf32>
    %549 = arith.subf %518, %548 : vector<31x8xf32>
    %550 = vector.broadcast %547 : vector<1x8xf32> to vector<31x8xf32>
    %551 = arith.mulf %549, %550 : vector<31x8xf32>
    %552 = vector.broadcast %515 : vector<1x8xf32> to vector<31x8xf32>
    %553 = arith.mulf %551, %552 : vector<31x8xf32>
    %554 = vector.broadcast %516 : vector<1x8xf32> to vector<31x8xf32>
    %555 = arith.addf %553, %554 : vector<31x8xf32>
    %cst_200 = arith.constant 0.000000e+00 : f32
    %556 = vector.broadcast %cst_200 : f32 to vector<31x8xf32>
    %557 = arith.cmpf oge, %555, %556 : vector<31x8xf32>
    %cst_201 = arith.constant 2.000000e-01 : f32
    %558 = vector.broadcast %cst_201 : f32 to vector<31x8xf32>
    %559 = arith.mulf %558, %555 : vector<31x8xf32>
    %560 = arith.select %557, %555, %559 : vector<31x8xi1>, vector<31x8xf32>
    %561 = vector.broadcast %529 : vector<1x8xf32> to vector<31x8xf32>
    %562 = arith.subf %520, %561 : vector<31x8xf32>
    %563 = vector.broadcast %547 : vector<1x8xf32> to vector<31x8xf32>
    %564 = arith.mulf %562, %563 : vector<31x8xf32>
    %565 = vector.broadcast %515 : vector<1x8xf32> to vector<31x8xf32>
    %566 = arith.mulf %564, %565 : vector<31x8xf32>
    %567 = vector.broadcast %516 : vector<1x8xf32> to vector<31x8xf32>
    %568 = arith.addf %566, %567 : vector<31x8xf32>
    %cst_202 = arith.constant 0.000000e+00 : f32
    %569 = vector.broadcast %cst_202 : f32 to vector<31x8xf32>
    %570 = arith.cmpf oge, %568, %569 : vector<31x8xf32>
    %cst_203 = arith.constant 2.000000e-01 : f32
    %571 = vector.broadcast %cst_203 : f32 to vector<31x8xf32>
    %572 = arith.mulf %571, %568 : vector<31x8xf32>
    %573 = arith.select %570, %568, %572 : vector<31x8xi1>, vector<31x8xf32>
    %c0_204 = arith.constant 0 : index
    %c0_205 = arith.constant 0 : index
    %574 = vector.load %arg19[%c0_204, %c0_205] : memref<31x16xf32, #tpu.memory_space<vmem>>, vector<31x8xf32>
    tpu.vector_store %arg19[%c0_204, %c0_205], %560 {strides = array<i32>} : memref<31x16xf32, #tpu.memory_space<vmem>>, vector<31x8xf32>,
    %c0_206 = arith.constant 0 : index
    %c8_207 = arith.constant 8 : index
    %575 = vector.load %arg19[%c0_206, %c8_207] : memref<31x16xf32, #tpu.memory_space<vmem>>, vector<31x8xf32>
    tpu.vector_store %arg19[%c0_206, %c8_207], %573 {strides = array<i32>} : memref<31x16xf32, #tpu.memory_space<vmem>>, vector<31x8xf32>,
    %cst_208 = arith.constant 0.000000e+00 : f32
    %576 = vector.broadcast %cst_208 : f32 to vector<14x16xf32>
    %cst_209 = arith.constant 0.000000e+00 : f32
    %577 = vector.broadcast %cst_209 : f32 to vector<14x16xf32>
    %c0_210 = arith.constant 0 : index
    %c0_211 = arith.constant 0 : index
    %578 = tpu.strided_load %arg19[%c0_210, %c0_211] {strides = array<i32: 2, 1>} : memref<31x16xf32, #tpu.memory_space<vmem>>, vector<14x16xf32>
    %c0_212 = arith.constant 0 : index
    %c0_213 = arith.constant 0 : index
    %c0_214 = arith.constant 0 : index
    %579 = vector.load %arg5[%c0_212, %c0_213, %c0_214] : memref<5x8x16xf32, #tpu.memory_space<vmem>>, vector<1x8x16xf32>
    %580 = vector.shape_cast %579 : vector<1x8x16xf32> to vector<8x16xf32>
    %581 = vector.extract_strided_slice %578 {offsets = [0, 0], sizes = [14, 8], strides = [1, 1]} : vector<14x16xf32> to vector<14x8xf32>
    %cst_215 = arith.constant dense<0.000000e+00> : vector<14x16xf32>
    %582 = tpu.matmul %581, %580, %cst_215 {dimension_numbers = #tpu.dot_dimension_numbers<[1], [0], [0], [1], [0, 0, 1, 1], [], []>} : vector<14x8xf32>, vector<8x16xf32>, vector<14x16xf32> -> vector<14x16xf32>
    %583 = arith.addf %576, %582 : vector<14x16xf32>
    %584 = vector.extract_strided_slice %578 {offsets = [0, 8], sizes = [14, 8], strides = [1, 1]} : vector<14x16xf32> to vector<14x8xf32>
    %cst_216 = arith.constant dense<0.000000e+00> : vector<14x16xf32>
    %585 = tpu.matmul %584, %580, %cst_216 {dimension_numbers = #tpu.dot_dimension_numbers<[1], [0], [0], [1], [0, 0, 1, 1], [], []>} : vector<14x8xf32>, vector<8x16xf32>, vector<14x16xf32> -> vector<14x16xf32>
    %586 = arith.addf %577, %585 : vector<14x16xf32>
    %c1_217 = arith.constant 1 : index
    %c0_218 = arith.constant 0 : index
    %587 = tpu.strided_load %arg19[%c1_217, %c0_218] {strides = array<i32: 2, 1>} : memref<31x16xf32, #tpu.memory_space<vmem>>, vector<14x16xf32>
    %c1_219 = arith.constant 1 : index
    %c0_220 = arith.constant 0 : index
    %c0_221 = arith.constant 0 : index
    %588 = vector.load %arg5[%c1_219, %c0_220, %c0_221] : memref<5x8x16xf32, #tpu.memory_space<vmem>>, vector<1x8x16xf32>
    %589 = vector.shape_cast %588 : vector<1x8x16xf32> to vector<8x16xf32>
    %590 = vector.extract_strided_slice %587 {offsets = [0, 0], sizes = [14, 8], strides = [1, 1]} : vector<14x16xf32> to vector<14x8xf32>
    %cst_222 = arith.constant dense<0.000000e+00> : vector<14x16xf32>
    %591 = tpu.matmul %590, %589, %cst_222 {dimension_numbers = #tpu.dot_dimension_numbers<[1], [0], [0], [1], [0, 0, 1, 1], [], []>} : vector<14x8xf32>, vector<8x16xf32>, vector<14x16xf32> -> vector<14x16xf32>
    %592 = arith.addf %583, %591 : vector<14x16xf32>
    %593 = vector.extract_strided_slice %587 {offsets = [0, 8], sizes = [14, 8], strides = [1, 1]} : vector<14x16xf32> to vector<14x8xf32>
    %cst_223 = arith.constant dense<0.000000e+00> : vector<14x16xf32>
    %594 = tpu.matmul %593, %589, %cst_223 {dimension_numbers = #tpu.dot_dimension_numbers<[1], [0], [0], [1], [0, 0, 1, 1], [], []>} : vector<14x8xf32>, vector<8x16xf32>, vector<14x16xf32> -> vector<14x16xf32>
    %595 = arith.addf %586, %594 : vector<14x16xf32>
    %c2_224 = arith.constant 2 : index
    %c0_225 = arith.constant 0 : index
    %596 = tpu.strided_load %arg19[%c2_224, %c0_225] {strides = array<i32: 2, 1>} : memref<31x16xf32, #tpu.memory_space<vmem>>, vector<14x16xf32>
    %c2_226 = arith.constant 2 : index
    %c0_227 = arith.constant 0 : index
    %c0_228 = arith.constant 0 : index
    %597 = vector.load %arg5[%c2_226, %c0_227, %c0_228] : memref<5x8x16xf32, #tpu.memory_space<vmem>>, vector<1x8x16xf32>
    %598 = vector.shape_cast %597 : vector<1x8x16xf32> to vector<8x16xf32>
    %599 = vector.extract_strided_slice %596 {offsets = [0, 0], sizes = [14, 8], strides = [1, 1]} : vector<14x16xf32> to vector<14x8xf32>
    %cst_229 = arith.constant dense<0.000000e+00> : vector<14x16xf32>
    %600 = tpu.matmul %599, %598, %cst_229 {dimension_numbers = #tpu.dot_dimension_numbers<[1], [0], [0], [1], [0, 0, 1, 1], [], []>} : vector<14x8xf32>, vector<8x16xf32>, vector<14x16xf32> -> vector<14x16xf32>
    %601 = arith.addf %592, %600 : vector<14x16xf32>
    %602 = vector.extract_strided_slice %596 {offsets = [0, 8], sizes = [14, 8], strides = [1, 1]} : vector<14x16xf32> to vector<14x8xf32>
    %cst_230 = arith.constant dense<0.000000e+00> : vector<14x16xf32>
    %603 = tpu.matmul %602, %598, %cst_230 {dimension_numbers = #tpu.dot_dimension_numbers<[1], [0], [0], [1], [0, 0, 1, 1], [], []>} : vector<14x8xf32>, vector<8x16xf32>, vector<14x16xf32> -> vector<14x16xf32>
    %604 = arith.addf %595, %603 : vector<14x16xf32>
    %c3_231 = arith.constant 3 : index
    %c0_232 = arith.constant 0 : index
    %605 = tpu.strided_load %arg19[%c3_231, %c0_232] {strides = array<i32: 2, 1>} : memref<31x16xf32, #tpu.memory_space<vmem>>, vector<14x16xf32>
    %c3_233 = arith.constant 3 : index
    %c0_234 = arith.constant 0 : index
    %c0_235 = arith.constant 0 : index
    %606 = vector.load %arg5[%c3_233, %c0_234, %c0_235] : memref<5x8x16xf32, #tpu.memory_space<vmem>>, vector<1x8x16xf32>
    %607 = vector.shape_cast %606 : vector<1x8x16xf32> to vector<8x16xf32>
    %608 = vector.extract_strided_slice %605 {offsets = [0, 0], sizes = [14, 8], strides = [1, 1]} : vector<14x16xf32> to vector<14x8xf32>
    %cst_236 = arith.constant dense<0.000000e+00> : vector<14x16xf32>
    %609 = tpu.matmul %608, %607, %cst_236 {dimension_numbers = #tpu.dot_dimension_numbers<[1], [0], [0], [1], [0, 0, 1, 1], [], []>} : vector<14x8xf32>, vector<8x16xf32>, vector<14x16xf32> -> vector<14x16xf32>
    %610 = arith.addf %601, %609 : vector<14x16xf32>
    %611 = vector.extract_strided_slice %605 {offsets = [0, 8], sizes = [14, 8], strides = [1, 1]} : vector<14x16xf32> to vector<14x8xf32>
    %cst_237 = arith.constant dense<0.000000e+00> : vector<14x16xf32>
    %612 = tpu.matmul %611, %607, %cst_237 {dimension_numbers = #tpu.dot_dimension_numbers<[1], [0], [0], [1], [0, 0, 1, 1], [], []>} : vector<14x8xf32>, vector<8x16xf32>, vector<14x16xf32> -> vector<14x16xf32>
    %613 = arith.addf %604, %612 : vector<14x16xf32>
    %c4_238 = arith.constant 4 : index
    %c0_239 = arith.constant 0 : index
    %614 = tpu.strided_load %arg19[%c4_238, %c0_239] {strides = array<i32: 2, 1>} : memref<31x16xf32, #tpu.memory_space<vmem>>, vector<14x16xf32>
    %c4_240 = arith.constant 4 : index
    %c0_241 = arith.constant 0 : index
    %c0_242 = arith.constant 0 : index
    %615 = vector.load %arg5[%c4_240, %c0_241, %c0_242] : memref<5x8x16xf32, #tpu.memory_space<vmem>>, vector<1x8x16xf32>
    %616 = vector.shape_cast %615 : vector<1x8x16xf32> to vector<8x16xf32>
    %617 = vector.extract_strided_slice %614 {offsets = [0, 0], sizes = [14, 8], strides = [1, 1]} : vector<14x16xf32> to vector<14x8xf32>
    %cst_243 = arith.constant dense<0.000000e+00> : vector<14x16xf32>
    %618 = tpu.matmul %617, %616, %cst_243 {dimension_numbers = #tpu.dot_dimension_numbers<[1], [0], [0], [1], [0, 0, 1, 1], [], []>} : vector<14x8xf32>, vector<8x16xf32>, vector<14x16xf32> -> vector<14x16xf32>
    %619 = arith.addf %610, %618 : vector<14x16xf32>
    %620 = vector.extract_strided_slice %614 {offsets = [0, 8], sizes = [14, 8], strides = [1, 1]} : vector<14x16xf32> to vector<14x8xf32>
    %cst_244 = arith.constant dense<0.000000e+00> : vector<14x16xf32>
    %621 = tpu.matmul %620, %616, %cst_244 {dimension_numbers = #tpu.dot_dimension_numbers<[1], [0], [0], [1], [0, 0, 1, 1], [], []>} : vector<14x8xf32>, vector<8x16xf32>, vector<14x16xf32> -> vector<14x16xf32>
    %622 = arith.addf %613, %621 : vector<14x16xf32>
    %c0_245 = arith.constant 0 : index
    %c0_246 = arith.constant 0 : index
    %623 = vector.load %arg6[%c0_245, %c0_246] : memref<3x16xf32, #tpu.memory_space<vmem>>, vector<1x16xf32>
    %c1_247 = arith.constant 1 : index
    %c0_248 = arith.constant 0 : index
    %624 = vector.load %arg6[%c1_247, %c0_248] : memref<3x16xf32, #tpu.memory_space<vmem>>, vector<1x16xf32>
    %c2_249 = arith.constant 2 : index
    %c0_250 = arith.constant 0 : index
    %625 = vector.load %arg6[%c2_249, %c0_250] : memref<3x16xf32, #tpu.memory_space<vmem>>, vector<1x16xf32>
    %626 = vector.broadcast %623 : vector<1x16xf32> to vector<14x16xf32>
    %627 = arith.addf %619, %626 : vector<14x16xf32>
    %628 = vector.broadcast %623 : vector<1x16xf32> to vector<14x16xf32>
    %629 = arith.addf %622, %628 : vector<14x16xf32>
    %cst_251 = arith.constant dense<0.000000e+00> : vector<16xf32>
    %630 = vector.multi_reduction <add>, %627, %cst_251 [0] : vector<14x16xf32> to vector<16xf32>
    %631 = vector.shape_cast %630 : vector<16xf32> to vector<1x16xf32>
    %cst_252 = arith.constant 0.000000e+00 : f32
    %632 = vector.broadcast %cst_252 : f32 to vector<1x16xf32>
    %633 = arith.addf %632, %631 : vector<1x16xf32>
    %cst_253 = arith.constant dense<0.000000e+00> : vector<16xf32>
    %634 = vector.multi_reduction <add>, %629, %cst_253 [0] : vector<14x16xf32> to vector<16xf32>
    %635 = vector.shape_cast %634 : vector<16xf32> to vector<1x16xf32>
    %636 = arith.addf %633, %635 : vector<1x16xf32>
    %cst_254 = arith.constant 2.800000e+01 : f32
    %637 = vector.broadcast %cst_254 : f32 to vector<1x16xf32>
    %638 = arith.divf %636, %637 : vector<1x16xf32>
    %639 = vector.broadcast %638 : vector<1x16xf32> to vector<14x16xf32>
    %640 = arith.subf %627, %639 : vector<14x16xf32>
    %641 = arith.mulf %640, %640 : vector<14x16xf32>
    %cst_255 = arith.constant dense<0.000000e+00> : vector<16xf32>
    %642 = vector.multi_reduction <add>, %641, %cst_255 [0] : vector<14x16xf32> to vector<16xf32>
    %643 = vector.shape_cast %642 : vector<16xf32> to vector<1x16xf32>
    %cst_256 = arith.constant 0.000000e+00 : f32
    %644 = vector.broadcast %cst_256 : f32 to vector<1x16xf32>
    %645 = arith.addf %644, %643 : vector<1x16xf32>
    %646 = vector.broadcast %638 : vector<1x16xf32> to vector<14x16xf32>
    %647 = arith.subf %629, %646 : vector<14x16xf32>
    %648 = arith.mulf %647, %647 : vector<14x16xf32>
    %cst_257 = arith.constant dense<0.000000e+00> : vector<16xf32>
    %649 = vector.multi_reduction <add>, %648, %cst_257 [0] : vector<14x16xf32> to vector<16xf32>
    %650 = vector.shape_cast %649 : vector<16xf32> to vector<1x16xf32>
    %651 = arith.addf %645, %650 : vector<1x16xf32>
    %cst_258 = arith.constant 2.800000e+01 : f32
    %652 = vector.broadcast %cst_258 : f32 to vector<1x16xf32>
    %653 = arith.divf %651, %652 : vector<1x16xf32>
    %cst_259 = arith.constant 9.99999974E-6 : f32
    %654 = vector.broadcast %cst_259 : f32 to vector<1x16xf32>
    %655 = arith.addf %653, %654 : vector<1x16xf32>
    %656 = math.rsqrt %655 : vector<1x16xf32>
    %657 = vector.broadcast %638 : vector<1x16xf32> to vector<14x16xf32>
    %658 = arith.subf %627, %657 : vector<14x16xf32>
    %659 = vector.broadcast %656 : vector<1x16xf32> to vector<14x16xf32>
    %660 = arith.mulf %658, %659 : vector<14x16xf32>
    %661 = vector.broadcast %624 : vector<1x16xf32> to vector<14x16xf32>
    %662 = arith.mulf %660, %661 : vector<14x16xf32>
    %663 = vector.broadcast %625 : vector<1x16xf32> to vector<14x16xf32>
    %664 = arith.addf %662, %663 : vector<14x16xf32>
    %cst_260 = arith.constant 0.000000e+00 : f32
    %665 = vector.broadcast %cst_260 : f32 to vector<14x16xf32>
    %666 = arith.cmpf oge, %664, %665 : vector<14x16xf32>
    %cst_261 = arith.constant 2.000000e-01 : f32
    %667 = vector.broadcast %cst_261 : f32 to vector<14x16xf32>
    %668 = arith.mulf %667, %664 : vector<14x16xf32>
    %669 = arith.select %666, %664, %668 : vector<14x16xi1>, vector<14x16xf32>
    %670 = vector.broadcast %638 : vector<1x16xf32> to vector<14x16xf32>
    %671 = arith.subf %629, %670 : vector<14x16xf32>
    %672 = vector.broadcast %656 : vector<1x16xf32> to vector<14x16xf32>
    %673 = arith.mulf %671, %672 : vector<14x16xf32>
    %674 = vector.broadcast %624 : vector<1x16xf32> to vector<14x16xf32>
    %675 = arith.mulf %673, %674 : vector<14x16xf32>
    %676 = vector.broadcast %625 : vector<1x16xf32> to vector<14x16xf32>
    %677 = arith.addf %675, %676 : vector<14x16xf32>
    %cst_262 = arith.constant 0.000000e+00 : f32
    %678 = vector.broadcast %cst_262 : f32 to vector<14x16xf32>
    %679 = arith.cmpf oge, %677, %678 : vector<14x16xf32>
    %cst_263 = arith.constant 2.000000e-01 : f32
    %680 = vector.broadcast %cst_263 : f32 to vector<14x16xf32>
    %681 = arith.mulf %680, %677 : vector<14x16xf32>
    %682 = arith.select %679, %677, %681 : vector<14x16xi1>, vector<14x16xf32>
    %c0_264 = arith.constant 0 : index
    %c0_265 = arith.constant 0 : index
    %683 = vector.load %arg20[%c0_264, %c0_265] : memref<14x32xf32, #tpu.memory_space<vmem>>, vector<14x16xf32>
    tpu.vector_store %arg20[%c0_264, %c0_265], %669 {strides = array<i32>} : memref<14x32xf32, #tpu.memory_space<vmem>>, vector<14x16xf32>,
    %c0_266 = arith.constant 0 : index
    %c16_267 = arith.constant 16 : index
    %684 = vector.load %arg20[%c0_266, %c16_267] : memref<14x32xf32, #tpu.memory_space<vmem>>, vector<14x16xf32>
    tpu.vector_store %arg20[%c0_266, %c16_267], %682 {strides = array<i32>} : memref<14x32xf32, #tpu.memory_space<vmem>>, vector<14x16xf32>,
    %cst_268 = arith.constant 0.000000e+00 : f32
    %685 = vector.broadcast %cst_268 : f32 to vector<5x32xf32>
    %cst_269 = arith.constant 0.000000e+00 : f32
    %686 = vector.broadcast %cst_269 : f32 to vector<5x32xf32>
    %c0_270 = arith.constant 0 : index
    %c0_271 = arith.constant 0 : index
    %687 = tpu.strided_load %arg20[%c0_270, %c0_271] {strides = array<i32: 2, 1>} : memref<14x32xf32, #tpu.memory_space<vmem>>, vector<5x32xf32>
    %c0_272 = arith.constant 0 : index
    %c0_273 = arith.constant 0 : index
    %c0_274 = arith.constant 0 : index
    %688 = vector.load %arg7[%c0_272, %c0_273, %c0_274] : memref<5x16x32xf32, #tpu.memory_space<vmem>>, vector<1x16x32xf32>
    %689 = vector.shape_cast %688 : vector<1x16x32xf32> to vector<16x32xf32>
    %690 = vector.extract_strided_slice %687 {offsets = [0, 0], sizes = [5, 16], strides = [1, 1]} : vector<5x32xf32> to vector<5x16xf32>
    %cst_275 = arith.constant dense<0.000000e+00> : vector<5x32xf32>
    %691 = tpu.matmul %690, %689, %cst_275 {dimension_numbers = #tpu.dot_dimension_numbers<[1], [0], [0], [1], [0, 0, 1, 1], [], []>} : vector<5x16xf32>, vector<16x32xf32>, vector<5x32xf32> -> vector<5x32xf32>
    %692 = arith.addf %685, %691 : vector<5x32xf32>
    %693 = vector.extract_strided_slice %687 {offsets = [0, 16], sizes = [5, 16], strides = [1, 1]} : vector<5x32xf32> to vector<5x16xf32>
    %cst_276 = arith.constant dense<0.000000e+00> : vector<5x32xf32>
    %694 = tpu.matmul %693, %689, %cst_276 {dimension_numbers = #tpu.dot_dimension_numbers<[1], [0], [0], [1], [0, 0, 1, 1], [], []>} : vector<5x16xf32>, vector<16x32xf32>, vector<5x32xf32> -> vector<5x32xf32>
    %695 = arith.addf %686, %694 : vector<5x32xf32>
    %c1_277 = arith.constant 1 : index
    %c0_278 = arith.constant 0 : index
    %696 = tpu.strided_load %arg20[%c1_277, %c0_278] {strides = array<i32: 2, 1>} : memref<14x32xf32, #tpu.memory_space<vmem>>, vector<5x32xf32>
    %c1_279 = arith.constant 1 : index
    %c0_280 = arith.constant 0 : index
    %c0_281 = arith.constant 0 : index
    %697 = vector.load %arg7[%c1_279, %c0_280, %c0_281] : memref<5x16x32xf32, #tpu.memory_space<vmem>>, vector<1x16x32xf32>
    %698 = vector.shape_cast %697 : vector<1x16x32xf32> to vector<16x32xf32>
    %699 = vector.extract_strided_slice %696 {offsets = [0, 0], sizes = [5, 16], strides = [1, 1]} : vector<5x32xf32> to vector<5x16xf32>
    %cst_282 = arith.constant dense<0.000000e+00> : vector<5x32xf32>
    %700 = tpu.matmul %699, %698, %cst_282 {dimension_numbers = #tpu.dot_dimension_numbers<[1], [0], [0], [1], [0, 0, 1, 1], [], []>} : vector<5x16xf32>, vector<16x32xf32>, vector<5x32xf32> -> vector<5x32xf32>
    %701 = arith.addf %692, %700 : vector<5x32xf32>
    %702 = vector.extract_strided_slice %696 {offsets = [0, 16], sizes = [5, 16], strides = [1, 1]} : vector<5x32xf32> to vector<5x16xf32>
    %cst_283 = arith.constant dense<0.000000e+00> : vector<5x32xf32>
    %703 = tpu.matmul %702, %698, %cst_283 {dimension_numbers = #tpu.dot_dimension_numbers<[1], [0], [0], [1], [0, 0, 1, 1], [], []>} : vector<5x16xf32>, vector<16x32xf32>, vector<5x32xf32> -> vector<5x32xf32>
    %704 = arith.addf %695, %703 : vector<5x32xf32>
    %c2_284 = arith.constant 2 : index
    %c0_285 = arith.constant 0 : index
    %705 = tpu.strided_load %arg20[%c2_284, %c0_285] {strides = array<i32: 2, 1>} : memref<14x32xf32, #tpu.memory_space<vmem>>, vector<5x32xf32>
    %c2_286 = arith.constant 2 : index
    %c0_287 = arith.constant 0 : index
    %c0_288 = arith.constant 0 : index
    %706 = vector.load %arg7[%c2_286, %c0_287, %c0_288] : memref<5x16x32xf32, #tpu.memory_space<vmem>>, vector<1x16x32xf32>
    %707 = vector.shape_cast %706 : vector<1x16x32xf32> to vector<16x32xf32>
    %708 = vector.extract_strided_slice %705 {offsets = [0, 0], sizes = [5, 16], strides = [1, 1]} : vector<5x32xf32> to vector<5x16xf32>
    %cst_289 = arith.constant dense<0.000000e+00> : vector<5x32xf32>
    %709 = tpu.matmul %708, %707, %cst_289 {dimension_numbers = #tpu.dot_dimension_numbers<[1], [0], [0], [1], [0, 0, 1, 1], [], []>} : vector<5x16xf32>, vector<16x32xf32>, vector<5x32xf32> -> vector<5x32xf32>
    %710 = arith.addf %701, %709 : vector<5x32xf32>
    %711 = vector.extract_strided_slice %705 {offsets = [0, 16], sizes = [5, 16], strides = [1, 1]} : vector<5x32xf32> to vector<5x16xf32>
    %cst_290 = arith.constant dense<0.000000e+00> : vector<5x32xf32>
    %712 = tpu.matmul %711, %707, %cst_290 {dimension_numbers = #tpu.dot_dimension_numbers<[1], [0], [0], [1], [0, 0, 1, 1], [], []>} : vector<5x16xf32>, vector<16x32xf32>, vector<5x32xf32> -> vector<5x32xf32>
    %713 = arith.addf %704, %712 : vector<5x32xf32>
    %c3_291 = arith.constant 3 : index
    %c0_292 = arith.constant 0 : index
    %714 = tpu.strided_load %arg20[%c3_291, %c0_292] {strides = array<i32: 2, 1>} : memref<14x32xf32, #tpu.memory_space<vmem>>, vector<5x32xf32>
    %c3_293 = arith.constant 3 : index
    %c0_294 = arith.constant 0 : index
    %c0_295 = arith.constant 0 : index
    %715 = vector.load %arg7[%c3_293, %c0_294, %c0_295] : memref<5x16x32xf32, #tpu.memory_space<vmem>>, vector<1x16x32xf32>
    %716 = vector.shape_cast %715 : vector<1x16x32xf32> to vector<16x32xf32>
    %717 = vector.extract_strided_slice %714 {offsets = [0, 0], sizes = [5, 16], strides = [1, 1]} : vector<5x32xf32> to vector<5x16xf32>
    %cst_296 = arith.constant dense<0.000000e+00> : vector<5x32xf32>
    %718 = tpu.matmul %717, %716, %cst_296 {dimension_numbers = #tpu.dot_dimension_numbers<[1], [0], [0], [1], [0, 0, 1, 1], [], []>} : vector<5x16xf32>, vector<16x32xf32>, vector<5x32xf32> -> vector<5x32xf32>
    %719 = arith.addf %710, %718 : vector<5x32xf32>
    %720 = vector.extract_strided_slice %714 {offsets = [0, 16], sizes = [5, 16], strides = [1, 1]} : vector<5x32xf32> to vector<5x16xf32>
    %cst_297 = arith.constant dense<0.000000e+00> : vector<5x32xf32>
    %721 = tpu.matmul %720, %716, %cst_297 {dimension_numbers = #tpu.dot_dimension_numbers<[1], [0], [0], [1], [0, 0, 1, 1], [], []>} : vector<5x16xf32>, vector<16x32xf32>, vector<5x32xf32> -> vector<5x32xf32>
    %722 = arith.addf %713, %721 : vector<5x32xf32>
    %c4_298 = arith.constant 4 : index
    %c0_299 = arith.constant 0 : index
    %723 = tpu.strided_load %arg20[%c4_298, %c0_299] {strides = array<i32: 2, 1>} : memref<14x32xf32, #tpu.memory_space<vmem>>, vector<5x32xf32>
    %c4_300 = arith.constant 4 : index
    %c0_301 = arith.constant 0 : index
    %c0_302 = arith.constant 0 : index
    %724 = vector.load %arg7[%c4_300, %c0_301, %c0_302] : memref<5x16x32xf32, #tpu.memory_space<vmem>>, vector<1x16x32xf32>
    %725 = vector.shape_cast %724 : vector<1x16x32xf32> to vector<16x32xf32>
    %726 = vector.extract_strided_slice %723 {offsets = [0, 0], sizes = [5, 16], strides = [1, 1]} : vector<5x32xf32> to vector<5x16xf32>
    %cst_303 = arith.constant dense<0.000000e+00> : vector<5x32xf32>
    %727 = tpu.matmul %726, %725, %cst_303 {dimension_numbers = #tpu.dot_dimension_numbers<[1], [0], [0], [1], [0, 0, 1, 1], [], []>} : vector<5x16xf32>, vector<16x32xf32>, vector<5x32xf32> -> vector<5x32xf32>
    %728 = arith.addf %719, %727 : vector<5x32xf32>
    %729 = vector.extract_strided_slice %723 {offsets = [0, 16], sizes = [5, 16], strides = [1, 1]} : vector<5x32xf32> to vector<5x16xf32>
    %cst_304 = arith.constant dense<0.000000e+00> : vector<5x32xf32>
    %730 = tpu.matmul %729, %725, %cst_304 {dimension_numbers = #tpu.dot_dimension_numbers<[1], [0], [0], [1], [0, 0, 1, 1], [], []>} : vector<5x16xf32>, vector<16x32xf32>, vector<5x32xf32> -> vector<5x32xf32>
    %731 = arith.addf %722, %730 : vector<5x32xf32>
    %c0_305 = arith.constant 0 : index
    %c0_306 = arith.constant 0 : index
    %732 = vector.load %arg8[%c0_305, %c0_306] : memref<3x32xf32, #tpu.memory_space<vmem>>, vector<1x32xf32>
    %c1_307 = arith.constant 1 : index
    %c0_308 = arith.constant 0 : index
    %733 = vector.load %arg8[%c1_307, %c0_308] : memref<3x32xf32, #tpu.memory_space<vmem>>, vector<1x32xf32>
    %c2_309 = arith.constant 2 : index
    %c0_310 = arith.constant 0 : index
    %734 = vector.load %arg8[%c2_309, %c0_310] : memref<3x32xf32, #tpu.memory_space<vmem>>, vector<1x32xf32>
    %735 = vector.broadcast %732 : vector<1x32xf32> to vector<5x32xf32>
    %736 = arith.addf %728, %735 : vector<5x32xf32>
    %737 = vector.broadcast %732 : vector<1x32xf32> to vector<5x32xf32>
    %738 = arith.addf %731, %737 : vector<5x32xf32>
    %cst_311 = arith.constant dense<0.000000e+00> : vector<32xf32>
    %739 = vector.multi_reduction <add>, %736, %cst_311 [0] : vector<5x32xf32> to vector<32xf32>
    %740 = vector.shape_cast %739 : vector<32xf32> to vector<1x32xf32>
    %cst_312 = arith.constant 0.000000e+00 : f32
    %741 = vector.broadcast %cst_312 : f32 to vector<1x32xf32>
    %742 = arith.addf %741, %740 : vector<1x32xf32>
    %cst_313 = arith.constant dense<0.000000e+00> : vector<32xf32>
    %743 = vector.multi_reduction <add>, %738, %cst_313 [0] : vector<5x32xf32> to vector<32xf32>
    %744 = vector.shape_cast %743 : vector<32xf32> to vector<1x32xf32>
    %745 = arith.addf %742, %744 : vector<1x32xf32>
    %cst_314 = arith.constant 1.000000e+01 : f32
    %746 = vector.broadcast %cst_314 : f32 to vector<1x32xf32>
    %747 = arith.divf %745, %746 : vector<1x32xf32>
    %748 = vector.broadcast %747 : vector<1x32xf32> to vector<5x32xf32>
    %749 = arith.subf %736, %748 : vector<5x32xf32>
    %750 = arith.mulf %749, %749 : vector<5x32xf32>
    %cst_315 = arith.constant dense<0.000000e+00> : vector<32xf32>
    %751 = vector.multi_reduction <add>, %750, %cst_315 [0] : vector<5x32xf32> to vector<32xf32>
    %752 = vector.shape_cast %751 : vector<32xf32> to vector<1x32xf32>
    %cst_316 = arith.constant 0.000000e+00 : f32
    %753 = vector.broadcast %cst_316 : f32 to vector<1x32xf32>
    %754 = arith.addf %753, %752 : vector<1x32xf32>
    %755 = vector.broadcast %747 : vector<1x32xf32> to vector<5x32xf32>
    %756 = arith.subf %738, %755 : vector<5x32xf32>
    %757 = arith.mulf %756, %756 : vector<5x32xf32>
    %cst_317 = arith.constant dense<0.000000e+00> : vector<32xf32>
    %758 = vector.multi_reduction <add>, %757, %cst_317 [0] : vector<5x32xf32> to vector<32xf32>
    %759 = vector.shape_cast %758 : vector<32xf32> to vector<1x32xf32>
    %760 = arith.addf %754, %759 : vector<1x32xf32>
    %cst_318 = arith.constant 1.000000e+01 : f32
    %761 = vector.broadcast %cst_318 : f32 to vector<1x32xf32>
    %762 = arith.divf %760, %761 : vector<1x32xf32>
    %cst_319 = arith.constant 9.99999974E-6 : f32
    %763 = vector.broadcast %cst_319 : f32 to vector<1x32xf32>
    %764 = arith.addf %762, %763 : vector<1x32xf32>
    %765 = math.rsqrt %764 : vector<1x32xf32>
    %766 = vector.broadcast %747 : vector<1x32xf32> to vector<5x32xf32>
    %767 = arith.subf %736, %766 : vector<5x32xf32>
    %768 = vector.broadcast %765 : vector<1x32xf32> to vector<5x32xf32>
    %769 = arith.mulf %767, %768 : vector<5x32xf32>
    %770 = vector.broadcast %733 : vector<1x32xf32> to vector<5x32xf32>
    %771 = arith.mulf %769, %770 : vector<5x32xf32>
    %772 = vector.broadcast %734 : vector<1x32xf32> to vector<5x32xf32>
    %773 = arith.addf %771, %772 : vector<5x32xf32>
    %cst_320 = arith.constant 0.000000e+00 : f32
    %774 = vector.broadcast %cst_320 : f32 to vector<5x32xf32>
    %775 = arith.cmpf oge, %773, %774 : vector<5x32xf32>
    %cst_321 = arith.constant 2.000000e-01 : f32
    %776 = vector.broadcast %cst_321 : f32 to vector<5x32xf32>
    %777 = arith.mulf %776, %773 : vector<5x32xf32>
    %778 = arith.select %775, %773, %777 : vector<5x32xi1>, vector<5x32xf32>
    %779 = vector.broadcast %747 : vector<1x32xf32> to vector<5x32xf32>
    %780 = arith.subf %738, %779 : vector<5x32xf32>
    %781 = vector.broadcast %765 : vector<1x32xf32> to vector<5x32xf32>
    %782 = arith.mulf %780, %781 : vector<5x32xf32>
    %783 = vector.broadcast %733 : vector<1x32xf32> to vector<5x32xf32>
    %784 = arith.mulf %782, %783 : vector<5x32xf32>
    %785 = vector.broadcast %734 : vector<1x32xf32> to vector<5x32xf32>
    %786 = arith.addf %784, %785 : vector<5x32xf32>
    %cst_322 = arith.constant 0.000000e+00 : f32
    %787 = vector.broadcast %cst_322 : f32 to vector<5x32xf32>
    %788 = arith.cmpf oge, %786, %787 : vector<5x32xf32>
    %cst_323 = arith.constant 2.000000e-01 : f32
    %789 = vector.broadcast %cst_323 : f32 to vector<5x32xf32>
    %790 = arith.mulf %789, %786 : vector<5x32xf32>
    %791 = arith.select %788, %786, %790 : vector<5x32xi1>, vector<5x32xf32>
    %c0_324 = arith.constant 0 : index
    %c0_325 = arith.constant 0 : index
    %792 = vector.load %arg9[%c0_324, %c0_325] : memref<32x64xf32, #tpu.memory_space<vmem>>, vector<32x64xf32>
    %cst_326 = arith.constant dense<0.000000e+00> : vector<5x64xf32>
    %793 = tpu.matmul %778, %792, %cst_326 {dimension_numbers = #tpu.dot_dimension_numbers<[1], [0], [0], [1], [0, 0, 1, 1], [], []>} : vector<5x32xf32>, vector<32x64xf32>, vector<5x64xf32> -> vector<5x64xf32>
    %c0_327 = arith.constant 0 : index
    %c0_328 = arith.constant 0 : index
    %794 = vector.load %arg9[%c0_327, %c0_328] : memref<32x64xf32, #tpu.memory_space<vmem>>, vector<32x64xf32>
    %cst_329 = arith.constant dense<0.000000e+00> : vector<5x64xf32>
    %795 = tpu.matmul %791, %794, %cst_329 {dimension_numbers = #tpu.dot_dimension_numbers<[1], [0], [0], [1], [0, 0, 1, 1], [], []>} : vector<5x32xf32>, vector<32x64xf32>, vector<5x64xf32> -> vector<5x64xf32>
    %c0_330 = arith.constant 0 : index
    %c0_331 = arith.constant 0 : index
    %796 = vector.load %arg10[%c0_330, %c0_331] : memref<16x64xf32, #tpu.memory_space<vmem>>, vector<16x64xf32>
    %c0_332 = arith.constant 0 : index
    %c0_333 = arith.constant 0 : index
    %797 = vector.load %arg11[%c0_332, %c0_333] : memref<1x64xf32, #tpu.memory_space<vmem>>, vector<1x64xf32>
    %cst_334 = arith.constant 0.000000e+00 : f32
    %798 = vector.broadcast %cst_334 : f32 to vector<2x16xf32>
    %cst_335 = arith.constant 0.000000e+00 : f32
    %799 = vector.broadcast %cst_335 : f32 to vector<2x16xf32>
    %800 = vector.extract_strided_slice %793 {offsets = [0, 0], sizes = [1, 64], strides = [1, 1]} : vector<5x64xf32> to vector<1x64xf32>
    %801 = vector.extract_strided_slice %795 {offsets = [0, 0], sizes = [1, 64], strides = [1, 1]} : vector<5x64xf32> to vector<1x64xf32>
    %802 = tpu.concatenate %800, %801 in 0 : vector<1x64xf32>, vector<1x64xf32> -> vector<2x64xf32>
    %cst_336 = arith.constant dense<0.000000e+00> : vector<2x64xf32>
    %803 = tpu.matmul %798, %796, %cst_336 {dimension_numbers = #tpu.dot_dimension_numbers<[1], [0], [0], [1], [0, 0, 1, 1], [], []>} : vector<2x16xf32>, vector<16x64xf32>, vector<2x64xf32> -> vector<2x64xf32>
    %804 = arith.addf %802, %803 : vector<2x64xf32>
    %805 = vector.broadcast %797 : vector<1x64xf32> to vector<2x64xf32>
    %806 = arith.addf %804, %805 : vector<2x64xf32>
    %807 = arith.negf %806 : vector<2x64xf32>
    %808 = math.exp %807 : vector<2x64xf32>
    %cst_337 = arith.constant 1.000000e+00 : f32
    %809 = vector.broadcast %cst_337 : f32 to vector<2x64xf32>
    %810 = arith.addf %809, %808 : vector<2x64xf32>
    %811 = arith.divf %809, %810 : vector<2x64xf32>
    %812 = math.tanh %806 : vector<2x64xf32>
    %813 = vector.extract_strided_slice %811 {offsets = [0, 0], sizes = [2, 16], strides = [1, 1]} : vector<2x64xf32> to vector<2x16xf32>
    %814 = vector.extract_strided_slice %811 {offsets = [0, 16], sizes = [2, 16], strides = [1, 1]} : vector<2x64xf32> to vector<2x16xf32>
    %815 = vector.extract_strided_slice %812 {offsets = [0, 32], sizes = [2, 16], strides = [1, 1]} : vector<2x64xf32> to vector<2x16xf32>
    %816 = vector.extract_strided_slice %811 {offsets = [0, 48], sizes = [2, 16], strides = [1, 1]} : vector<2x64xf32> to vector<2x16xf32>
    %817 = arith.mulf %814, %799 : vector<2x16xf32>
    %818 = arith.mulf %813, %815 : vector<2x16xf32>
    %819 = arith.addf %817, %818 : vector<2x16xf32>
    %820 = math.tanh %819 : vector<2x16xf32>
    %821 = arith.mulf %816, %820 : vector<2x16xf32>
    %822 = vector.extract_strided_slice %793 {offsets = [1, 0], sizes = [1, 64], strides = [1, 1]} : vector<5x64xf32> to vector<1x64xf32>
    %823 = vector.extract_strided_slice %795 {offsets = [1, 0], sizes = [1, 64], strides = [1, 1]} : vector<5x64xf32> to vector<1x64xf32>
    %824 = tpu.concatenate %822, %823 in 0 : vector<1x64xf32>, vector<1x64xf32> -> vector<2x64xf32>
    %cst_338 = arith.constant dense<0.000000e+00> : vector<2x64xf32>
    %825 = tpu.matmul %821, %796, %cst_338 {dimension_numbers = #tpu.dot_dimension_numbers<[1], [0], [0], [1], [0, 0, 1, 1], [], []>} : vector<2x16xf32>, vector<16x64xf32>, vector<2x64xf32> -> vector<2x64xf32>
    %826 = arith.addf %824, %825 : vector<2x64xf32>
    %827 = vector.broadcast %797 : vector<1x64xf32> to vector<2x64xf32>
    %828 = arith.addf %826, %827 : vector<2x64xf32>
    %829 = arith.negf %828 : vector<2x64xf32>
    %830 = math.exp %829 : vector<2x64xf32>
    %cst_339 = arith.constant 1.000000e+00 : f32
    %831 = vector.broadcast %cst_339 : f32 to vector<2x64xf32>
    %832 = arith.addf %831, %830 : vector<2x64xf32>
    %833 = arith.divf %831, %832 : vector<2x64xf32>
    %834 = math.tanh %828 : vector<2x64xf32>
    %835 = vector.extract_strided_slice %833 {offsets = [0, 0], sizes = [2, 16], strides = [1, 1]} : vector<2x64xf32> to vector<2x16xf32>
    %836 = vector.extract_strided_slice %833 {offsets = [0, 16], sizes = [2, 16], strides = [1, 1]} : vector<2x64xf32> to vector<2x16xf32>
    %837 = vector.extract_strided_slice %834 {offsets = [0, 32], sizes = [2, 16], strides = [1, 1]} : vector<2x64xf32> to vector<2x16xf32>
    %838 = vector.extract_strided_slice %833 {offsets = [0, 48], sizes = [2, 16], strides = [1, 1]} : vector<2x64xf32> to vector<2x16xf32>
    %839 = arith.mulf %836, %819 : vector<2x16xf32>
    %840 = arith.mulf %835, %837 : vector<2x16xf32>
    %841 = arith.addf %839, %840 : vector<2x16xf32>
    %842 = math.tanh %841 : vector<2x16xf32>
    %843 = arith.mulf %838, %842 : vector<2x16xf32>
    %844 = vector.extract_strided_slice %793 {offsets = [2, 0], sizes = [1, 64], strides = [1, 1]} : vector<5x64xf32> to vector<1x64xf32>
    %845 = vector.extract_strided_slice %795 {offsets = [2, 0], sizes = [1, 64], strides = [1, 1]} : vector<5x64xf32> to vector<1x64xf32>
    %846 = tpu.concatenate %844, %845 in 0 : vector<1x64xf32>, vector<1x64xf32> -> vector<2x64xf32>
    %cst_340 = arith.constant dense<0.000000e+00> : vector<2x64xf32>
    %847 = tpu.matmul %843, %796, %cst_340 {dimension_numbers = #tpu.dot_dimension_numbers<[1], [0], [0], [1], [0, 0, 1, 1], [], []>} : vector<2x16xf32>, vector<16x64xf32>, vector<2x64xf32> -> vector<2x64xf32>
    %848 = arith.addf %846, %847 : vector<2x64xf32>
    %849 = vector.broadcast %797 : vector<1x64xf32> to vector<2x64xf32>
    %850 = arith.addf %848, %849 : vector<2x64xf32>
    %851 = arith.negf %850 : vector<2x64xf32>
    %852 = math.exp %851 : vector<2x64xf32>
    %cst_341 = arith.constant 1.000000e+00 : f32
    %853 = vector.broadcast %cst_341 : f32 to vector<2x64xf32>
    %854 = arith.addf %853, %852 : vector<2x64xf32>
    %855 = arith.divf %853, %854 : vector<2x64xf32>
    %856 = math.tanh %850 : vector<2x64xf32>
    %857 = vector.extract_strided_slice %855 {offsets = [0, 0], sizes = [2, 16], strides = [1, 1]} : vector<2x64xf32> to vector<2x16xf32>
    %858 = vector.extract_strided_slice %855 {offsets = [0, 16], sizes = [2, 16], strides = [1, 1]} : vector<2x64xf32> to vector<2x16xf32>
    %859 = vector.extract_strided_slice %856 {offsets = [0, 32], sizes = [2, 16], strides = [1, 1]} : vector<2x64xf32> to vector<2x16xf32>
    %860 = vector.extract_strided_slice %855 {offsets = [0, 48], sizes = [2, 16], strides = [1, 1]} : vector<2x64xf32> to vector<2x16xf32>
    %861 = arith.mulf %858, %841 : vector<2x16xf32>
    %862 = arith.mulf %857, %859 : vector<2x16xf32>
    %863 = arith.addf %861, %862 : vector<2x16xf32>
    %864 = math.tanh %863 : vector<2x16xf32>
    %865 = arith.mulf %860, %864 : vector<2x16xf32>
    %866 = vector.extract_strided_slice %793 {offsets = [3, 0], sizes = [1, 64], strides = [1, 1]} : vector<5x64xf32> to vector<1x64xf32>
    %867 = vector.extract_strided_slice %795 {offsets = [3, 0], sizes = [1, 64], strides = [1, 1]} : vector<5x64xf32> to vector<1x64xf32>
    %868 = tpu.concatenate %866, %867 in 0 : vector<1x64xf32>, vector<1x64xf32> -> vector<2x64xf32>
    %cst_342 = arith.constant dense<0.000000e+00> : vector<2x64xf32>
    %869 = tpu.matmul %865, %796, %cst_342 {dimension_numbers = #tpu.dot_dimension_numbers<[1], [0], [0], [1], [0, 0, 1, 1], [], []>} : vector<2x16xf32>, vector<16x64xf32>, vector<2x64xf32> -> vector<2x64xf32>
    %870 = arith.addf %868, %869 : vector<2x64xf32>
    %871 = vector.broadcast %797 : vector<1x64xf32> to vector<2x64xf32>
    %872 = arith.addf %870, %871 : vector<2x64xf32>
    %873 = arith.negf %872 : vector<2x64xf32>
    %874 = math.exp %873 : vector<2x64xf32>
    %cst_343 = arith.constant 1.000000e+00 : f32
    %875 = vector.broadcast %cst_343 : f32 to vector<2x64xf32>
    %876 = arith.addf %875, %874 : vector<2x64xf32>
    %877 = arith.divf %875, %876 : vector<2x64xf32>
    %878 = math.tanh %872 : vector<2x64xf32>
    %879 = vector.extract_strided_slice %877 {offsets = [0, 0], sizes = [2, 16], strides = [1, 1]} : vector<2x64xf32> to vector<2x16xf32>
    %880 = vector.extract_strided_slice %877 {offsets = [0, 16], sizes = [2, 16], strides = [1, 1]} : vector<2x64xf32> to vector<2x16xf32>
    %881 = vector.extract_strided_slice %878 {offsets = [0, 32], sizes = [2, 16], strides = [1, 1]} : vector<2x64xf32> to vector<2x16xf32>
    %882 = vector.extract_strided_slice %877 {offsets = [0, 48], sizes = [2, 16], strides = [1, 1]} : vector<2x64xf32> to vector<2x16xf32>
    %883 = arith.mulf %880, %863 : vector<2x16xf32>
    %884 = arith.mulf %879, %881 : vector<2x16xf32>
    %885 = arith.addf %883, %884 : vector<2x16xf32>
    %886 = math.tanh %885 : vector<2x16xf32>
    %887 = arith.mulf %882, %886 : vector<2x16xf32>
    %888 = vector.extract_strided_slice %793 {offsets = [4, 0], sizes = [1, 64], strides = [1, 1]} : vector<5x64xf32> to vector<1x64xf32>
    %889 = vector.extract_strided_slice %795 {offsets = [4, 0], sizes = [1, 64], strides = [1, 1]} : vector<5x64xf32> to vector<1x64xf32>
    %890 = tpu.concatenate %888, %889 in 0 : vector<1x64xf32>, vector<1x64xf32> -> vector<2x64xf32>
    %cst_344 = arith.constant dense<0.000000e+00> : vector<2x64xf32>
    %891 = tpu.matmul %887, %796, %cst_344 {dimension_numbers = #tpu.dot_dimension_numbers<[1], [0], [0], [1], [0, 0, 1, 1], [], []>} : vector<2x16xf32>, vector<16x64xf32>, vector<2x64xf32> -> vector<2x64xf32>
    %892 = arith.addf %890, %891 : vector<2x64xf32>
    %893 = vector.broadcast %797 : vector<1x64xf32> to vector<2x64xf32>
    %894 = arith.addf %892, %893 : vector<2x64xf32>
    %895 = arith.negf %894 : vector<2x64xf32>
    %896 = math.exp %895 : vector<2x64xf32>
    %cst_345 = arith.constant 1.000000e+00 : f32
    %897 = vector.broadcast %cst_345 : f32 to vector<2x64xf32>
    %898 = arith.addf %897, %896 : vector<2x64xf32>
    %899 = arith.divf %897, %898 : vector<2x64xf32>
    %900 = math.tanh %894 : vector<2x64xf32>
    %901 = vector.extract_strided_slice %899 {offsets = [0, 0], sizes = [2, 16], strides = [1, 1]} : vector<2x64xf32> to vector<2x16xf32>
    %902 = vector.extract_strided_slice %899 {offsets = [0, 16], sizes = [2, 16], strides = [1, 1]} : vector<2x64xf32> to vector<2x16xf32>
    %903 = vector.extract_strided_slice %900 {offsets = [0, 32], sizes = [2, 16], strides = [1, 1]} : vector<2x64xf32> to vector<2x16xf32>
    %904 = vector.extract_strided_slice %899 {offsets = [0, 48], sizes = [2, 16], strides = [1, 1]} : vector<2x64xf32> to vector<2x16xf32>
    %905 = arith.mulf %902, %885 : vector<2x16xf32>
    %906 = arith.mulf %901, %903 : vector<2x16xf32>
    %907 = arith.addf %905, %906 : vector<2x16xf32>
    %908 = math.tanh %907 : vector<2x16xf32>
    %909 = arith.mulf %904, %908 : vector<2x16xf32>
    %910 = vector.extract_strided_slice %778 {offsets = [4, 0], sizes = [1, 32], strides = [1, 1]} : vector<5x32xf32> to vector<1x32xf32>
    %911 = vector.extract_strided_slice %791 {offsets = [4, 0], sizes = [1, 32], strides = [1, 1]} : vector<5x32xf32> to vector<1x32xf32>
    %912 = tpu.concatenate %910, %911 in 0 : vector<1x32xf32>, vector<1x32xf32> -> vector<2x32xf32>
    %c0_346 = arith.constant 0 : index
    %c0_347 = arith.constant 0 : index
    %913 = vector.load %arg12[%c0_346, %c0_347] : memref<32x64xf32, #tpu.memory_space<vmem>>, vector<32x64xf32>
    %cst_348 = arith.constant dense<0.000000e+00> : vector<2x64xf32>
    %914 = tpu.matmul %912, %913, %cst_348 {dimension_numbers = #tpu.dot_dimension_numbers<[1], [0], [0], [1], [0, 0, 1, 1], [], []>} : vector<2x32xf32>, vector<32x64xf32>, vector<2x64xf32> -> vector<2x64xf32>
    %c0_349 = arith.constant 0 : index
    %c0_350 = arith.constant 0 : index
    %915 = vector.load %arg14[%c0_349, %c0_350] : memref<1x64xf32, #tpu.memory_space<vmem>>, vector<1x64xf32>
    %916 = vector.broadcast %915 : vector<1x64xf32> to vector<2x64xf32>
    %917 = arith.addf %914, %916 : vector<2x64xf32>
    %cst_351 = arith.constant 0.000000e+00 : f32
    %918 = vector.broadcast %cst_351 : f32 to vector<2x16xf32>
    %919 = arith.negf %917 : vector<2x64xf32>
    %920 = math.exp %919 : vector<2x64xf32>
    %cst_352 = arith.constant 1.000000e+00 : f32
    %921 = vector.broadcast %cst_352 : f32 to vector<2x64xf32>
    %922 = arith.addf %921, %920 : vector<2x64xf32>
    %923 = arith.divf %921, %922 : vector<2x64xf32>
    %924 = math.tanh %917 : vector<2x64xf32>
    %925 = vector.extract_strided_slice %923 {offsets = [0, 0], sizes = [2, 16], strides = [1, 1]} : vector<2x64xf32> to vector<2x16xf32>
    %926 = vector.extract_strided_slice %923 {offsets = [0, 16], sizes = [2, 16], strides = [1, 1]} : vector<2x64xf32> to vector<2x16xf32>
    %927 = vector.extract_strided_slice %924 {offsets = [0, 32], sizes = [2, 16], strides = [1, 1]} : vector<2x64xf32> to vector<2x16xf32>
    %928 = vector.extract_strided_slice %923 {offsets = [0, 48], sizes = [2, 16], strides = [1, 1]} : vector<2x64xf32> to vector<2x16xf32>
    %929 = arith.mulf %926, %918 : vector<2x16xf32>
    %930 = arith.mulf %925, %927 : vector<2x16xf32>
    %931 = arith.addf %929, %930 : vector<2x16xf32>
    %932 = math.tanh %931 : vector<2x16xf32>
    %933 = arith.mulf %928, %932 : vector<2x16xf32>
    %934 = tpu.concatenate %909, %933 in 1 : vector<2x16xf32>, vector<2x16xf32> -> vector<2x32xf32>
    %c0_353 = arith.constant 0 : index
    %c0_354 = arith.constant 0 : index
    %935 = vector.load %arg15[%c0_353, %c0_354] : memref<32x1xf32, #tpu.memory_space<vmem>>, vector<32x1xf32>
    %cst_355 = arith.constant dense<0.000000e+00> : vector<2x1xf32>
    %936 = tpu.matmul %934, %935, %cst_355 {dimension_numbers = #tpu.dot_dimension_numbers<[1], [0], [0], [1], [0, 0, 1, 1], [], []>} : vector<2x32xf32>, vector<32x1xf32>, vector<2x1xf32> -> vector<2x1xf32>
    %c0_356 = arith.constant 0 : index
    %c0_357 = arith.constant 0 : index
    %937 = vector.load %arg16[%c0_356, %c0_357] : memref<1x1xf32, #tpu.memory_space<vmem>>, vector<1x1xf32>
    %938 = vector.broadcast %937 : vector<1x1xf32> to vector<2x1xf32>
    %939 = arith.addf %936, %938 : vector<2x1xf32>
    %940 = arith.negf %939 : vector<2x1xf32>
    %941 = math.exp %940 : vector<2x1xf32>
    %cst_358 = arith.constant 1.000000e+00 : f32
    %942 = vector.broadcast %cst_358 : f32 to vector<2x1xf32>
    %943 = arith.addf %942, %941 : vector<2x1xf32>
    %944 = arith.divf %942, %943 : vector<2x1xf32>
    %c0_359 = arith.constant 0 : index
    %c0_360 = arith.constant 0 : index
    %945 = vector.load %arg17[%c0_359, %c0_360] : memref<2x1xf32, #tpu.memory_space<vmem>>, vector<2x1xf32>
    tpu.vector_store %arg17[%c0_359, %c0_360], %944 {strides = array<i32>} : memref<2x1xf32, #tpu.memory_space<vmem>>, vector<2x1xf32>,
    return
  }
}

</mosaic_0001>

<llo_original>
// kernel: discriminator_forward.1
$region0: #{discriminator_forward.1}
  #allocation0 [shape = 'u32[]', space=smem, size = 0x4, offset = 0x4, fixed_abs, tag = 'smem constant byte address 0x4 - core index']
  #allocation1 [shape = 'u32[144,128]{1,0:T(1,128)}', space=vmem, size = 0x12000, scoped, tag = 'internal scratch']
  #allocation2 [shape = 'f32[65,8]{1,0:T(8,128)}', space=vmem, size = 0x9000, scoped, tag = 'scratch operand']
  #allocation3 [shape = 'f32[31,16]{1,0:T(8,128)}', space=vmem, size = 0x4000, scoped, tag = 'scratch operand']
  #allocation4 [shape = 'f32[14,32]{1,0:T(8,128)}', space=vmem, size = 0x2000, scoped, tag = 'scratch operand']
  #allocation5 [shape = 'f32[1,1]{1,0:T(1,128)S(1)}', space=vmem, size = 0x200, scoped, tag = 'scoped memory for discriminator_forward.1']
  %s0 = inlined_call_operand.vmem [shape: f32[160,2], index: 0, kind: input, shape index: {}]
  %s1 = inlined_call_operand.vmem [shape: f32[31,1,4], index: 1, kind: input, shape index: {}]
  %s2 = inlined_call_operand.vmem [shape: f32[3,4], index: 2, kind: input, shape index: {}]
  %s3 = inlined_call_operand.vmem [shape: f32[5,4,8], index: 3, kind: input, shape index: {}]
  %s4 = inlined_call_operand.vmem [shape: f32[3,8], index: 4, kind: input, shape index: {}]
  %s5 = inlined_call_operand.vmem [shape: f32[5,8,16], index: 5, kind: input, shape index: {}]
  %s6 = inlined_call_operand.vmem [shape: f32[3,16], index: 6, kind: input, shape index: {}]
  %s7 = inlined_call_operand.vmem [shape: f32[5,16,32], index: 7, kind: input, shape index: {}]
  %s8 = inlined_call_operand.vmem [shape: f32[3,32], index: 8, kind: input, shape index: {}]
  %s9 = inlined_call_operand.vmem [shape: f32[32,64], index: 9, kind: input, shape index: {}]
  %s10 = inlined_call_operand.vmem [shape: f32[16,64], index: 10, kind: input, shape index: {}]
  %s11 = inlined_call_operand.vmem [shape: f32[1,64], index: 11, kind: input, shape index: {}]
  %s12 = inlined_call_operand.vmem [shape: f32[32,64], index: 12, kind: input, shape index: {}]
  %s13 = inlined_call_operand.vmem [shape: f32[16,64], index: 13, kind: input, shape index: {}]
  %s14 = inlined_call_operand.vmem [shape: f32[1,64], index: 14, kind: input, shape index: {}]
  %s15 = inlined_call_operand.vmem [shape: f32[32,1], index: 15, kind: input, shape index: {}]
  %s16 = inlined_call_operand.<no memory space> [shape: f32[1,1], index: 16, kind: input, shape index: {}]
  %s17 = inlined_call_operand.vmem [shape: f32[2,1], index: 17, kind: output, shape index: {}]
  %s18 = sld [smem:[#allocation0]]
  $region78: #{discriminator_forward.1} parent=0
    _
  %s20 = ssub.s32 1, %s18
  %s21 = scalar_select 0, %s20, %s18
  %v22 = vstv %s16
  %23 = vst [vmem:[#allocation5] sm:$0x1] %v22
  // Predicated region
  $region2: #{discriminator_forward.1} parent=0 // pred_check
    _
  $region3: #{discriminator_forward.1} parent=0 // pred_check_branch
    %25 = sbr.rel (0) target = $region5
  $region4: #{discriminator_forward.1} parent=0 // pred_region
    _
  $region5: #{discriminator_forward.1} parent=0 // pred_fallthru
    _
  // Predicated region
  $region6: #{discriminator_forward.1} parent=0 // pred_check
    _
  $region7: #{discriminator_forward.1} parent=0 // pred_check_branch
    %27 = sbr.rel (0) target = $region9
  $region8: #{discriminator_forward.1} parent=0 // pred_region
    _
  $region9: #{discriminator_forward.1} parent=0 // pred_fallthru
    _
  // Predicated region
  $region10: #{discriminator_forward.1} parent=0 // pred_check
    _
  $region11: #{discriminator_forward.1} parent=0 // pred_check_branch
    %29 = sbr.rel (0) target = $region13
  $region12: #{discriminator_forward.1} parent=0 // pred_region
    _
  $region13: #{discriminator_forward.1} parent=0 // pred_fallthru
    _
  // Predicated region
  $region14: #{discriminator_forward.1} parent=0 // pred_check
    _
  $region15: #{discriminator_forward.1} parent=0 // pred_check_branch
    %31 = sbr.rel (0) target = $region17
  $region16: #{discriminator_forward.1} parent=0 // pred_region
    _
  $region17: #{discriminator_forward.1} parent=0 // pred_fallthru
    _
  // Predicated region
  $region18: #{discriminator_forward.1} parent=0 // pred_check
    _
  $region19: #{discriminator_forward.1} parent=0 // pred_check_branch
    %33 = sbr.rel (0) target = $region21
  $region20: #{discriminator_forward.1} parent=0 // pred_region
    _
  $region21: #{discriminator_forward.1} parent=0 // pred_fallthru
    _
  // Predicated region
  $region22: #{discriminator_forward.1} parent=0 // pred_check
    _
  $region23: #{discriminator_forward.1} parent=0 // pred_check_branch
    %35 = sbr.rel (0) target = $region25
  $region24: #{discriminator_forward.1} parent=0 // pred_region
    _
  $region25: #{discriminator_forward.1} parent=0 // pred_fallthru
    _
  // Predicated region
  $region26: #{discriminator_forward.1} parent=0 // pred_check
    _
  $region27: #{discriminator_forward.1} parent=0 // pred_check_branch
    %37 = sbr.rel (0) target = $region29
  $region28: #{discriminator_forward.1} parent=0 // pred_region
    _
  $region29: #{discriminator_forward.1} parent=0 // pred_fallthru
    _
  // Predicated region
  $region30: #{discriminator_forward.1} parent=0 // pred_check
    _
  $region31: #{discriminator_forward.1} parent=0 // pred_check_branch
    %39 = sbr.rel (0) target = $region33
  $region32: #{discriminator_forward.1} parent=0 // pred_region
    _
  $region33: #{discriminator_forward.1} parent=0 // pred_fallthru
    _
  // Predicated region
  $region34: #{discriminator_forward.1} parent=0 // pred_check
    _
  $region35: #{discriminator_forward.1} parent=0 // pred_check_branch
    %41 = sbr.rel (0) target = $region37
  $region36: #{discriminator_forward.1} parent=0 // pred_region
    _
  $region37: #{discriminator_forward.1} parent=0 // pred_fallthru
    _
  // Predicated region
  $region38: #{discriminator_forward.1} parent=0 // pred_check
    _
  $region39: #{discriminator_forward.1} parent=0 // pred_check_branch
    %43 = sbr.rel (0) target = $region41
  $region40: #{discriminator_forward.1} parent=0 // pred_region
    _
  $region41: #{discriminator_forward.1} parent=0 // pred_fallthru
    _
  // Predicated region
  $region42: #{discriminator_forward.1} parent=0 // pred_check
    _
  $region43: #{discriminator_forward.1} parent=0 // pred_check_branch
    %45 = sbr.rel (0) target = $region45
  $region44: #{discriminator_forward.1} parent=0 // pred_region
    _
  $region45: #{discriminator_forward.1} parent=0 // pred_fallthru
    _
  // Predicated region
  $region46: #{discriminator_forward.1} parent=0 // pred_check
    _
  $region47: #{discriminator_forward.1} parent=0 // pred_check_branch
    %47 = sbr.rel (0) target = $region49
  $region48: #{discriminator_forward.1} parent=0 // pred_region
    _
  $region49: #{discriminator_forward.1} parent=0 // pred_fallthru
    _
  // Predicated region
  $region50: #{discriminator_forward.1} parent=0 // pred_check
    _
  $region51: #{discriminator_forward.1} parent=0 // pred_check_branch
    %49 = sbr.rel (0) target = $region53
  $region52: #{discriminator_forward.1} parent=0 // pred_region
    _
  $region53: #{discriminator_forward.1} parent=0 // pred_fallthru
    _
  // Predicated region
  $region54: #{discriminator_forward.1} parent=0 // pred_check
    _
  $region55: #{discriminator_forward.1} parent=0 // pred_check_branch
    %51 = sbr.rel (0) target = $region57
  $region56: #{discriminator_forward.1} parent=0 // pred_region
    _
  $region57: #{discriminator_forward.1} parent=0 // pred_fallthru
    _
  // Predicated region
  $region58: #{discriminator_forward.1} parent=0 // pred_check
    _
  $region59: #{discriminator_forward.1} parent=0 // pred_check_branch
    %53 = sbr.rel (0) target = $region61
  $region60: #{discriminator_forward.1} parent=0 // pred_region
    _
  $region61: #{discriminator_forward.1} parent=0 // pred_fallthru
    _
  // Predicated region
  $region62: #{discriminator_forward.1} parent=0 // pred_check
    _
  $region63: #{discriminator_forward.1} parent=0 // pred_check_branch
    %55 = sbr.rel (0) target = $region65
  $region64: #{discriminator_forward.1} parent=0 // pred_region
    _
  $region65: #{discriminator_forward.1} parent=0 // pred_fallthru
    _
  // Predicated region
  $region66: #{discriminator_forward.1} parent=0 // pred_check
    _
  $region67: #{discriminator_forward.1} parent=0 // pred_check_branch
    %57 = sbr.rel (0) target = $region69
  $region68: #{discriminator_forward.1} parent=0 // pred_region
    _
  $region69: #{discriminator_forward.1} parent=0 // pred_fallthru
    _
  %v58 = vld [vmem:[%s0] ss:$2 sm:$0xff]
  %s59 = scalar_lea.vmem %s0, 16
  %v60 = vld [vmem:[%s59] ss:$2 sm:$0xff]
  %s61 = scalar_lea.vmem %s0, 32
  %v62 = vld [vmem:[%s61] ss:$2 sm:$0xff]
  %s63 = scalar_lea.vmem %s0, 48
  %v64 = vld [vmem:[%s63] ss:$2 sm:$0xff]
  %s65 = scalar_lea.vmem %s0, 64
  %v66 = vld [vmem:[%s65] ss:$2 sm:$0xff]
  %s67 = scalar_lea.vmem %s0, 80
  %v68 = vld [vmem:[%s67] ss:$2 sm:$0xff]
  %s69 = scalar_lea.vmem %s0, 96
  %v70 = vld [vmem:[%s69] ss:$2 sm:$0xff]
  %s71 = scalar_lea.vmem %s0, 112
  %v72 = vld [vmem:[%s71] ss:$2 sm:$0xff]
  %s73 = scalar_lea.vmem %s0, 128
  %v74 = vld [vmem:[%s73] ss:$2 sm:$0x1]
  %v75 = vld [vmem:[%s1] sm:$0x1]
  %77 = vset.pattern.permute.xlu0 0
  %78 = vperm.xlu0 %77, %v58
  %v79 = vpop.permute.xlu0 %78
  %82 = vset.pattern.permute.xlu0 0
  %83 = vperm.xlu0 %82, %v60
  %v84 = vpop.permute.xlu0 %83
  %87 = vset.pattern.permute.xlu0 0
  %88 = vperm.xlu0 %87, %v62
  %v89 = vpop.permute.xlu0 %88
  %92 = vset.pattern.permute.xlu0 0
  %93 = vperm.xlu0 %92, %v64
  %v94 = vpop.permute.xlu0 %93
  %97 = vset.pattern.permute.xlu0 0
  %98 = vperm.xlu0 %97, %v66
  %v99 = vpop.permute.xlu0 %98
  %102 = vset.pattern.permute.xlu0 0
  %103 = vperm.xlu0 %102, %v68
  %v104 = vpop.permute.xlu0 %103
  %107 = vset.pattern.permute.xlu0 0
  %108 = vperm.xlu0 %107, %v70
  %v109 = vpop.permute.xlu0 %108
  %112 = vset.pattern.permute.xlu0 0
  %113 = vperm.xlu0 %112, %v72
  %v114 = vpop.permute.xlu0 %113
  %117 = vset.pattern.permute.xlu0 0
  %118 = vperm.xlu0 %117, %v74
  %v119 = vpop.permute.xlu0 %118
  %v122 = vlaneseq
  %v123 = vshrl.u32 %v122, 7
  %v124 = vsub.s32 0, %v123
  %v125 = vrot.slane %v75, %v124
  %v127 = vmul.f32 %v79, %v125
  %v128 = vmul.f32 %v84, %v125
  %v129 = vmul.f32 %v89, %v125
  %v130 = vmul.f32 %v94, %v125
  %v131 = vmul.f32 %v99, %v125
  %v132 = vmul.f32 %v104, %v125
  %v133 = vmul.f32 %v109, %v125
  %v134 = vmul.f32 %v114, %v125
  %v135 = vmul.f32 %v119, %v125
  %v136 = vadd.f32 %v127, 0.0
  %v137 = vadd.f32 %v128, 0.0
  %v138 = vadd.f32 %v129, 0.0
  %v139 = vadd.f32 %v130, 0.0
  %v140 = vadd.f32 %v131, 0.0
  %v141 = vadd.f32 %v132, 0.0
  %v142 = vadd.f32 %v133, 0.0
  %v143 = vadd.f32 %v134, 0.0
  %v144 = vadd.f32 %v135, 0.0
  %145 = vset.pattern.permute.xlu0 1
  %146 = vperm.xlu0 %145, %v58
  %v147 = vpop.permute.xlu0 %146
  %149 = vset.pattern.permute.xlu0 1
  %150 = vperm.xlu0 %149, %v60
  %v151 = vpop.permute.xlu0 %150
  %153 = vset.pattern.permute.xlu0 1
  %154 = vperm.xlu0 %153, %v62
  %v155 = vpop.permute.xlu0 %154
  %157 = vset.pattern.permute.xlu0 1
  %158 = vperm.xlu0 %157, %v64
  %v159 = vpop.permute.xlu0 %158
  %161 = vset.pattern.permute.xlu0 1
  %162 = vperm.xlu0 %161, %v66
  %v163 = vpop.permute.xlu0 %162
  %165 = vset.pattern.permute.xlu0 1
  %166 = vperm.xlu0 %165, %v68
  %v167 = vpop.permute.xlu0 %166
  %169 = vset.pattern.permute.xlu0 1
  %170 = vperm.xlu0 %169, %v70
  %v171 = vpop.permute.xlu0 %170
  %173 = vset.pattern.permute.xlu0 1
  %174 = vperm.xlu0 %173, %v72
  %v175 = vpop.permute.xlu0 %174
  %177 = vset.pattern.permute.xlu0 1
  %178 = vperm.xlu0 %177, %v74
  %v179 = vpop.permute.xlu0 %178
  %v181 = vmul.f32 %v147, %v125
  %v182 = vmul.f32 %v151, %v125
  %v183 = vmul.f32 %v155, %v125
  %v184 = vmul.f32 %v159, %v125
  %v185 = vmul.f32 %v163, %v125
  %v186 = vmul.f32 %v167, %v125
  %v187 = vmul.f32 %v171, %v125
  %v188 = vmul.f32 %v175, %v125
  %v189 = vmul.f32 %v179, %v125
  %v190 = vadd.f32 %v181, 0.0
  %v191 = vadd.f32 %v182, 0.0
  %v192 = vadd.f32 %v183, 0.0
  %v193 = vadd.f32 %v184, 0.0
  %v194 = vadd.f32 %v185, 0.0
  %v195 = vadd.f32 %v186, 0.0
  %v196 = vadd.f32 %v187, 0.0
  %v197 = vadd.f32 %v188, 0.0
  %v198 = vadd.f32 %v189, 0.0
  %s199 = scalar_lea.vmem %s0, 1
  %v200 = vld [vmem:[%s199] ss:$2 sm:$0xff]
  %s201 = scalar_lea.vmem %s0, 17
  %v202 = vld [vmem:[%s201] ss:$2 sm:$0xff]
  %s203 = scalar_lea.vmem %s0, 33
  %v204 = vld [vmem:[%s203] ss:$2 sm:$0xff]
  %s205 = scalar_lea.vmem %s0, 49
  %v206 = vld [vmem:[%s205] ss:$2 sm:$0xff]
  %s207 = scalar_lea.vmem %s0, 65
  %v208 = vld [vmem:[%s207] ss:$2 sm:$0xff]
  %s209 = scalar_lea.vmem %s0, 81
  %v210 = vld [vmem:[%s209] ss:$2 sm:$0xff]
  %s211 = scalar_lea.vmem %s0, 97
  %v212 = vld [vmem:[%s211] ss:$2 sm:$0xff]
  %s213 = scalar_lea.vmem %s0, 113
  %v214 = vld [vmem:[%s213] ss:$2 sm:$0xff]
  %s215 = scalar_lea.vmem %s0, 129
  %v216 = vld [vmem:[%s215] ss:$2 sm:$0x1]
  %s217 = scalar_lea.vmem %s1, 1
  %v218 = vld [vmem:[%s217] sm:$0x1]
  %220 = vset.pattern.permute.xlu0 0
  %221 = vperm.xlu0 %220, %v200
  %v222 = vpop.permute.xlu0 %221
  %225 = vset.pattern.permute.xlu0 0
  %226 = vperm.xlu0 %225, %v202
  %v227 = vpop.permute.xlu0 %226
  %230 = vset.pattern.permute.xlu0 0
  %231 = vperm.xlu0 %230, %v204
  %v232 = vpop.permute.xlu0 %231
  %235 = vset.pattern.permute.xlu0 0
  %236 = vperm.xlu0 %235, %v206
  %v237 = vpop.permute.xlu0 %236
  %240 = vset.pattern.permute.xlu0 0
  %241 = vperm.xlu0 %240, %v208
  %v242 = vpop.permute.xlu0 %241
  %245 = vset.pattern.permute.xlu0 0
  %246 = vperm.xlu0 %245, %v210
  %v247 = vpop.permute.xlu0 %246
  %250 = vset.pattern.permute.xlu0 0
  %251 = vperm.xlu0 %250, %v212
  %v252 = vpop.permute.xlu0 %251
  %255 = vset.pattern.permute.xlu0 0
  %256 = vperm.xlu0 %255, %v214
  %v257 = vpop.permute.xlu0 %256
  %260 = vset.pattern.permute.xlu0 0
  %261 = vperm.xlu0 %260, %v216
  %v262 = vpop.permute.xlu0 %261
  %v265 = vlaneseq
  %v266 = vshrl.u32 %v265, 7
  %v267 = vsub.s32 0, %v266
  %v268 = vrot.slane %v218, %v267
  %v270 = vmul.f32 %v222, %v268
  %v271 = vmul.f32 %v227, %v268
  %v272 = vmul.f32 %v232, %v268
  %v273 = vmul.f32 %v237, %v268
  %v274 = vmul.f32 %v242, %v268
  %v275 = vmul.f32 %v247, %v268
  %v276 = vmul.f32 %v252, %v268
  %v277 = vmul.f32 %v257, %v268
  %v278 = vmul.f32 %v262, %v268
  %v279 = vadd.f32 %v136, %v270
  %v280 = vadd.f32 %v137, %v271
  %v281 = vadd.f32 %v138, %v272
  %v282 = vadd.f32 %v139, %v273
  %v283 = vadd.f32 %v140, %v274
  %v284 = vadd.f32 %v141, %v275
  %v285 = vadd.f32 %v142, %v276
  %v286 = vadd.f32 %v143, %v277
  %v287 = vadd.f32 %v144, %v278
  %288 = vset.pattern.permute.xlu0 1
  %289 = vperm.xlu0 %288, %v200
  %v290 = vpop.permute.xlu0 %289
  %292 = vset.pattern.permute.xlu0 1
  %293 = vperm.xlu0 %292, %v202
  %v294 = vpop.permute.xlu0 %293
  %296 = vset.pattern.permute.xlu0 1
  %297 = vperm.xlu0 %296, %v204
  %v298 = vpop.permute.xlu0 %297
  %300 = vset.pattern.permute.xlu0 1
  %301 = vperm.xlu0 %300, %v206
  %v302 = vpop.permute.xlu0 %301
  %304 = vset.pattern.permute.xlu0 1
  %305 = vperm.xlu0 %304, %v208
  %v306 = vpop.permute.xlu0 %305
  %308 = vset.pattern.permute.xlu0 1
  %309 = vperm.xlu0 %308, %v210
  %v310 = vpop.permute.xlu0 %309
  %312 = vset.pattern.permute.xlu0 1
  %313 = vperm.xlu0 %312, %v212
  %v314 = vpop.permute.xlu0 %313
  %316 = vset.pattern.permute.xlu0 1
  %317 = vperm.xlu0 %316, %v214
  %v318 = vpop.permute.xlu0 %317
  %320 = vset.pattern.permute.xlu0 1
  %321 = vperm.xlu0 %320, %v216
  %v322 = vpop.permute.xlu0 %321
  %v324 = vmul.f32 %v290, %v268
  %v325 = vmul.f32 %v294, %v268
  %v326 = vmul.f32 %v298, %v268
  %v327 = vmul.f32 %v302, %v268
  %v328 = vmul.f32 %v306, %v268
  %v329 = vmul.f32 %v310, %v268
  %v330 = vmul.f32 %v314, %v268
  %v331 = vmul.f32 %v318, %v268
  %v332 = vmul.f32 %v322, %v268
  %v333 = vadd.f32 %v190, %v324
  %v334 = vadd.f32 %v191, %v325
  %v335 = vadd.f32 %v192, %v326
  %v336 = vadd.f32 %v193, %v327
  %v337 = vadd.f32 %v194, %v328
  %v338 = vadd.f32 %v195, %v329
  %v339 = vadd.f32 %v196, %v330
  %v340 = vadd.f32 %v197, %v331
  %v341 = vadd.f32 %v198, %v332
  %s342 = scalar_lea.vmem %s0, 2
  %v343 = vld [vmem:[%s342] ss:$2 sm:$0xff]
  %s344 = scalar_lea.vmem %s0, 18
  %v345 = vld [vmem:[%s344] ss:$2 sm:$0xff]
  %s346 = scalar_lea.vmem %s0, 34
  %v347 = vld [vmem:[%s346] ss:$2 sm:$0xff]
  %s348 = scalar_lea.vmem %s0, 50
  %v349 = vld [vmem:[%s348] ss:$2 sm:$0xff]
  %s350 = scalar_lea.vmem %s0, 66
  %v351 = vld [vmem:[%s350] ss:$2 sm:$0xff]
  %s352 = scalar_lea.vmem %s0, 82
  %v353 = vld [vmem:[%s352] ss:$2 sm:$0xff]
  %s354 = scalar_lea.vmem %s0, 98
  %v355 = vld [vmem:[%s354] ss:$2 sm:$0xff]
  %s356 = scalar_lea.vmem %s0, 114
  %v357 = vld [vmem:[%s356] ss:$2 sm:$0xff]
  %s358 = scalar_lea.vmem %s0, 130
  %v359 = vld [vmem:[%s358] ss:$2 sm:$0x1]
  %s360 = scalar_lea.vmem %s1, 2
  %v361 = vld [vmem:[%s360] sm:$0x1]
  %363 = vset.pattern.permute.xlu0 0
  %364 = vperm.xlu0 %363, %v343
  %v365 = vpop.permute.xlu0 %364
  %368 = vset.pattern.permute.xlu0 0
  %369 = vperm.xlu0 %368, %v345
  %v370 = vpop.permute.xlu0 %369
  %373 = vset.pattern.permute.xlu0 0
  %374 = vperm.xlu0 %373, %v347
  %v375 = vpop.permute.xlu0 %374
  %378 = vset.pattern.permute.xlu0 0
  %379 = vperm.xlu0 %378, %v349
  %v380 = vpop.permute.xlu0 %379
  %383 = vset.pattern.permute.xlu0 0
  %384 = vperm.xlu0 %383, %v351
  %v385 = vpop.permute.xlu0 %384
  %388 = vset.pattern.permute.xlu0 0
  %389 = vperm.xlu0 %388, %v353
  %v390 = vpop.permute.xlu0 %389
  %393 = vset.pattern.permute.xlu0 0
  %394 = vperm.xlu0 %393, %v355
  %v395 = vpop.permute.xlu0 %394
  %398 = vset.pattern.permute.xlu0 0
  %399 = vperm.xlu0 %398, %v357
  %v400 = vpop.permute.xlu0 %399
  %403 = vset.pattern.permute.xlu0 0
  %404 = vperm.xlu0 %403, %v359
  %v405 = vpop.permute.xlu0 %404
  %v408 = vlaneseq
  %v409 = vshrl.u32 %v408, 7
  %v410 = vsub.s32 0, %v409
  %v411 = vrot.slane %v361, %v410
  %v413 = vmul.f32 %v365, %v411
  %v414 = vmul.f32 %v370, %v411
  %v415 = vmul.f32 %v375, %v411
  %v416 = vmul.f32 %v380, %v411
  %v417 = vmul.f32 %v385, %v411
  %v418 = vmul.f32 %v390, %v411
  %v419 = vmul.f32 %v395, %v411
  %v420 = vmul.f32 %v400, %v411
  %v421 = vmul.f32 %v405, %v411
  %v422 = vadd.f32 %v279, %v413
  %v423 = vadd.f32 %v280, %v414
  %v424 = vadd.f32 %v281, %v415
  %v425 = vadd.f32 %v282, %v416
  %v426 = vadd.f32 %v283, %v417
  %v427 = vadd.f32 %v284, %v418
  %v428 = vadd.f32 %v285, %v419
  %v429 = vadd.f32 %v286, %v420
  %v430 = vadd.f32 %v287, %v421
  %431 = vset.pattern.permute.xlu0 1
  %432 = vperm.xlu0 %431, %v343
  %v433 = vpop.permute.xlu0 %432
  %435 = vset.pattern.permute.xlu0 1
  %436 = vperm.xlu0 %435, %v345
  %v437 = vpop.permute.xlu0 %436
  %439 = vset.pattern.permute.xlu0 1
  %440 = vperm.xlu0 %439, %v347
  %v441 = vpop.permute.xlu0 %440
  %443 = vset.pattern.permute.xlu0 1
  %444 = vperm.xlu0 %443, %v349
  %v445 = vpop.permute.xlu0 %444
  %447 = vset.pattern.permute.xlu0 1
  %448 = vperm.xlu0 %447, %v351
  %v449 = vpop.permute.xlu0 %448
  %451 = vset.pattern.permute.xlu0 1
  %452 = vperm.xlu0 %451, %v353
  %v453 = vpop.permute.xlu0 %452
  %455 = vset.pattern.permute.xlu0 1
  %456 = vperm.xlu0 %455, %v355
  %v457 = vpop.permute.xlu0 %456
  %459 = vset.pattern.permute.xlu0 1
  %460 = vperm.xlu0 %459, %v357
  %v461 = vpop.permute.xlu0 %460
  %463 = vset.pattern.permute.xlu0 1
  %464 = vperm.xlu0 %463, %v359
  %v465 = vpop.permute.xlu0 %464
  %v467 = vmul.f32 %v433, %v411
  %v468 = vmul.f32 %v437, %v411
  %v469 = vmul.f32 %v441, %v411
  %v470 = vmul.f32 %v445, %v411
  %v471 = vmul.f32 %v449, %v411
  %v472 = vmul.f32 %v453, %v411
  %v473 = vmul.f32 %v457, %v411
  %v474 = vmul.f32 %v461, %v411
  %v475 = vmul.f32 %v465, %v411
  %v476 = vadd.f32 %v333, %v467
  %v477 = vadd.f32 %v334, %v468
  %v478 = vadd.f32 %v335, %v469
  %v479 = vadd.f32 %v336, %v470
  %v480 = vadd.f32 %v337, %v471
  %v481 = vadd.f32 %v338, %v472
  %v482 = vadd.f32 %v339, %v473
  %v483 = vadd.f32 %v340, %v474
  %v484 = vadd.f32 %v341, %v475
  %s485 = scalar_lea.vmem %s0, 3
  %v486 = vld [vmem:[%s485] ss:$2 sm:$0xff]
  %s487 = scalar_lea.vmem %s0, 19
  %v488 = vld [vmem:[%s487] ss:$2 sm:$0xff]
  %s489 = scalar_lea.vmem %s0, 35
  %v490 = vld [vmem:[%s489] ss:$2 sm:$0xff]
  %s491 = scalar_lea.vmem %s0, 51
  %v492 = vld [vmem:[%s491] ss:$2 sm:$0xff]
  %s493 = scalar_lea.vmem %s0, 67
  %v494 = vld [vmem:[%s493] ss:$2 sm:$0xff]
  %s495 = scalar_lea.vmem %s0, 83
  %v496 = vld [vmem:[%s495] ss:$2 sm:$0xff]
  %s497 = scalar_lea.vmem %s0, 99
  %v498 = vld [vmem:[%s497] ss:$2 sm:$0xff]
  %s499 = scalar_lea.vmem %s0, 115
  %v500 = vld [vmem:[%s499] ss:$2 sm:$0xff]
  %s501 = scalar_lea.vmem %s0, 131
  %v502 = vld [vmem:[%s501] ss:$2 sm:$0x1]
  %s503 = scalar_lea.vmem %s1, 3
  %v504 = vld [vmem:[%s503] sm:$0x1]
  %506 = vset.pattern.permute.xlu0 0
  %507 = vperm.xlu0 %506, %v486
  %v508 = vpop.permute.xlu0 %507
  %511 = vset.pattern.permute.xlu0 0
  %512 = vperm.xlu0 %511, %v488
  %v513 = vpop.permute.xlu0 %512
  %516 = vset.pattern.permute.xlu0 0
  %517 = vperm.xlu0 %516, %v490
  %v518 = vpop.permute.xlu0 %517
  %521 = vset.pattern.permute.xlu0 0
  %522 = vperm.xlu0 %521, %v492
  %v523 = vpop.permute.xlu0 %522
  %526 = vset.pattern.permute.xlu0 0
  %527 = vperm.xlu0 %526, %v494
  %v528 = vpop.permute.xlu0 %527
  %531 = vset.pattern.permute.xlu0 0
  %532 = vperm.xlu0 %531, %v496
  %v533 = vpop.permute.xlu0 %532
  %536 = vset.pattern.permute.xlu0 0
  %537 = vperm.xlu0 %536, %v498
  %v538 = vpop.permute.xlu0 %537
  %541 = vset.pattern.permute.xlu0 0
  %542 = vperm.xlu0 %541, %v500
  %v543 = vpop.permute.xlu0 %542
  %546 = vset.pattern.permute.xlu0 0
  %547 = vperm.xlu0 %546, %v502
  %v548 = vpop.permute.xlu0 %547
  %v551 = vlaneseq
  %v552 = vshrl.u32 %v551, 7
  %v553 = vsub.s32 0, %v552
  %v554 = vrot.slane %v504, %v553
  %v556 = vmul.f32 %v508, %v554
  %v557 = vmul.f32 %v513, %v554
  %v558 = vmul.f32 %v518, %v554
  %v559 = vmul.f32 %v523, %v554
  %v560 = vmul.f32 %v528, %v554
  %v561 = vmul.f32 %v533, %v554
  %v562 = vmul.f32 %v538, %v554
  %v563 = vmul.f32 %v543, %v554
  %v564 = vmul.f32 %v548, %v554
  %v565 = vadd.f32 %v422, %v556
  %v566 = vadd.f32 %v423, %v557
  %v567 = vadd.f32 %v424, %v558
  %v568 = vadd.f32 %v425, %v559
  %v569 = vadd.f32 %v426, %v560
  %v570 = vadd.f32 %v427, %v561
  %v571 = vadd.f32 %v428, %v562
  %v572 = vadd.f32 %v429, %v563
  %v573 = vadd.f32 %v430, %v564
  %574 = vset.pattern.permute.xlu0 1
  %575 = vperm.xlu0 %574, %v486
  %v576 = vpop.permute.xlu0 %575
  %578 = vset.pattern.permute.xlu0 1
  %579 = vperm.xlu0 %578, %v488
  %v580 = vpop.permute.xlu0 %579
  %582 = vset.pattern.permute.xlu0 1
  %583 = vperm.xlu0 %582, %v490
  %v584 = vpop.permute.xlu0 %583
  %586 = vset.pattern.permute.xlu0 1
  %587 = vperm.xlu0 %586, %v492
  %v588 = vpop.permute.xlu0 %587
  %590 = vset.pattern.permute.xlu0 1
  %591 = vperm.xlu0 %590, %v494
  %v592 = vpop.permute.xlu0 %591
  %594 = vset.pattern.permute.xlu0 1
  %595 = vperm.xlu0 %594, %v496
  %v596 = vpop.permute.xlu0 %595
  %598 = vset.pattern.permute.xlu0 1
  %599 = vperm.xlu0 %598, %v498
  %v600 = vpop.permute.xlu0 %599
  %602 = vset.pattern.permute.xlu0 1
  %603 = vperm.xlu0 %602, %v500
  %v604 = vpop.permute.xlu0 %603
  %606 = vset.pattern.permute.xlu0 1
  %607 = vperm.xlu0 %606, %v502
  %v608 = vpop.permute.xlu0 %607
  %v610 = vmul.f32 %v576, %v554
  %v611 = vmul.f32 %v580, %v554
  %v612 = vmul.f32 %v584, %v554
  %v613 = vmul.f32 %v588, %v554
  %v614 = vmul.f32 %v592, %v554
  %v615 = vmul.f32 %v596, %v554
  %v616 = vmul.f32 %v600, %v554
  %v617 = vmul.f32 %v604, %v554
  %v618 = vmul.f32 %v608, %v554
  %v619 = vadd.f32 %v476, %v610
  %v620 = vadd.f32 %v477, %v611
  %v621 = vadd.f32 %v478, %v612
  %v622 = vadd.f32 %v479, %v613
  %v623 = vadd.f32 %v480, %v614
  %v624 = vadd.f32 %v481, %v615
  %v625 = vadd.f32 %v482, %v616
  %v626 = vadd.f32 %v483, %v617
  %v627 = vadd.f32 %v484, %v618
  %s628 = scalar_lea.vmem %s0, 4
  %v629 = vld [vmem:[%s628] ss:$2 sm:$0xff]
  %s630 = scalar_lea.vmem %s0, 20
  %v631 = vld [vmem:[%s630] ss:$2 sm:$0xff]
  %s632 = scalar_lea.vmem %s0, 36
  %v633 = vld [vmem:[%s632] ss:$2 sm:$0xff]
  %s634 = scalar_lea.vmem %s0, 52
  %v635 = vld [vmem:[%s634] ss:$2 sm:$0xff]
  %s636 = scalar_lea.vmem %s0, 68
  %v637 = vld [vmem:[%s636] ss:$2 sm:$0xff]
  %s638 = scalar_lea.vmem %s0, 84
  %v639 = vld [vmem:[%s638] ss:$2 sm:$0xff]
  %s640 = scalar_lea.vmem %s0, 100
  %v641 = vld [vmem:[%s640] ss:$2 sm:$0xff]
  %s642 = scalar_lea.vmem %s0, 116
  %v643 = vld [vmem:[%s642] ss:$2 sm:$0xff]
  %s644 = scalar_lea.vmem %s0, 132
  %v645 = vld [vmem:[%s644] ss:$2 sm:$0x1]
  %s646 = scalar_lea.vmem %s1, 4
  %v647 = vld [vmem:[%s646] sm:$0x1]
  %649 = vset.pattern.permute.xlu0 0
  %650 = vperm.xlu0 %649, %v629
  %v651 = vpop.permute.xlu0 %650
  %654 = vset.pattern.permute.xlu0 0
  %655 = vperm.xlu0 %654, %v631
  %v656 = vpop.permute.xlu0 %655
  %659 = vset.pattern.permute.xlu0 0
  %660 = vperm.xlu0 %659, %v633
  %v661 = vpop.permute.xlu0 %660
  %664 = vset.pattern.permute.xlu0 0
  %665 = vperm.xlu0 %664, %v635
  %v666 = vpop.permute.xlu0 %665
  %669 = vset.pattern.permute.xlu0 0
  %670 = vperm.xlu0 %669, %v637
  %v671 = vpop.permute.xlu0 %670
  %674 = vset.pattern.permute.xlu0 0
  %675 = vperm.xlu0 %674, %v639
  %v676 = vpop.permute.xlu0 %675
  %679 = vset.pattern.permute.xlu0 0
  %680 = vperm.xlu0 %679, %v641
  %v681 = vpop.permute.xlu0 %680
  %684 = vset.pattern.permute.xlu0 0
  %685 = vperm.xlu0 %684, %v643
  %v686 = vpop.permute.xlu0 %685
  %689 = vset.pattern.permute.xlu0 0
  %690 = vperm.xlu0 %689, %v645
  %v691 = vpop.permute.xlu0 %690
  %v694 = vlaneseq
  %v695 = vshrl.u32 %v694, 7
  %v696 = vsub.s32 0, %v695
  %v697 = vrot.slane %v647, %v696
  %v699 = vmul.f32 %v651, %v697
  %v700 = vmul.f32 %v656, %v697
  %v701 = vmul.f32 %v661, %v697
  %v702 = vmul.f32 %v666, %v697
  %v703 = vmul.f32 %v671, %v697
  %v704 = vmul.f32 %v676, %v697
  %v705 = vmul.f32 %v681, %v697
  %v706 = vmul.f32 %v686, %v697
  %v707 = vmul.f32 %v691, %v697
  %v708 = vadd.f32 %v565, %v699
  %v709 = vadd.f32 %v566, %v700
  %v710 = vadd.f32 %v567, %v701
  %v711 = vadd.f32 %v568, %v702
  %v712 = vadd.f32 %v569, %v703
  %v713 = vadd.f32 %v570, %v704
  %v714 = vadd.f32 %v571, %v705
  %v715 = vadd.f32 %v572, %v706
  %v716 = vadd.f32 %v573, %v707
  %717 = vset.pattern.permute.xlu0 1
  %718 = vperm.xlu0 %717, %v629
  %v719 = vpop.permute.xlu0 %718
  %721 = vset.pattern.permute.xlu0 1
  %722 = vperm.xlu0 %721, %v631
  %v723 = vpop.permute.xlu0 %722
  %725 = vset.pattern.permute.xlu0 1
  %726 = vperm.xlu0 %725, %v633
  %v727 = vpop.permute.xlu0 %726
  %729 = vset.pattern.permute.xlu0 1
  %730 = vperm.xlu0 %729, %v635
  %v731 = vpop.permute.xlu0 %730
  %733 = vset.pattern.permute.xlu0 1
  %734 = vperm.xlu0 %733, %v637
  %v735 = vpop.permute.xlu0 %734
  %737 = vset.pattern.permute.xlu0 1
  %738 = vperm.xlu0 %737, %v639
  %v739 = vpop.permute.xlu0 %738
  %741 = vset.pattern.permute.xlu0 1
  %742 = vperm.xlu0 %741, %v641
  %v743 = vpop.permute.xlu0 %742
  %745 = vset.pattern.permute.xlu0 1
  %746 = vperm.xlu0 %745, %v643
  %v747 = vpop.permute.xlu0 %746
  %749 = vset.pattern.permute.xlu0 1
  %750 = vperm.xlu0 %749, %v645
  %v751 = vpop.permute.xlu0 %750
  %v753 = vmul.f32 %v719, %v697
  %v754 = vmul.f32 %v723, %v697
  %v755 = vmul.f32 %v727, %v697
  %v756 = vmul.f32 %v731, %v697
  %v757 = vmul.f32 %v735, %v697
  %v758 = vmul.f32 %v739, %v697
  %v759 = vmul.f32 %v743, %v697
  %v760 = vmul.f32 %v747, %v697
  %v761 = vmul.f32 %v751, %v697
  %v762 = vadd.f32 %v619, %v753
  %v763 = vadd.f32 %v620, %v754
  %v764 = vadd.f32 %v621, %v755
  %v765 = vadd.f32 %v622, %v756
  %v766 = vadd.f32 %v623, %v757
  %v767 = vadd.f32 %v624, %v758
  %v768 = vadd.f32 %v625, %v759
  %v769 = vadd.f32 %v626, %v760
  %v770 = vadd.f32 %v627, %v761
  %s771 = scalar_lea.vmem %s0, 5
  %v772 = vld [vmem:[%s771] ss:$2 sm:$0xff]
  %s773 = scalar_lea.vmem %s0, 21
  %v774 = vld [vmem:[%s773] ss:$2 sm:$0xff]
  %s775 = scalar_lea.vmem %s0, 37
  %v776 = vld [vmem:[%s775] ss:$2 sm:$0xff]
  %s777 = scalar_lea.vmem %s0, 53
  %v778 = vld [vmem:[%s777] ss:$2 sm:$0xff]
  %s779 = scalar_lea.vmem %s0, 69
  %v780 = vld [vmem:[%s779] ss:$2 sm:$0xff]
  %s781 = scalar_lea.vmem %s0, 85
  %v782 = vld [vmem:[%s781] ss:$2 sm:$0xff]
  %s783 = scalar_lea.vmem %s0, 101
  %v784 = vld [vmem:[%s783] ss:$2 sm:$0xff]
  %s785 = scalar_lea.vmem %s0, 117
  %v786 = vld [vmem:[%s785] ss:$2 sm:$0xff]
  %s787 = scalar_lea.vmem %s0, 133
  %v788 = vld [vmem:[%s787] ss:$2 sm:$0x1]
  %s789 = scalar_lea.vmem %s1, 5
  %v790 = vld [vmem:[%s789] sm:$0x1]
  %792 = vset.pattern.permute.xlu0 0
  %793 = vperm.xlu0 %792, %v772
  %v794 = vpop.permute.xlu0 %793
  %797 = vset.pattern.permute.xlu0 0
  %798 = vperm.xlu0 %797, %v774
  %v799 = vpop.permute.xlu0 %798
  %802 = vset.pattern.permute.xlu0 0
  %803 = vperm.xlu0 %802, %v776
  %v804 = vpop.permute.xlu0 %803
  %807 = vset.pattern.permute.xlu0 0
  %808 = vperm.xlu0 %807, %v778
  %v809 = vpop.permute.xlu0 %808
  %812 = vset.pattern.permute.xlu0 0
  %813 = vperm.xlu0 %812, %v780
  %v814 = vpop.permute.xlu0 %813
  %817 = vset.pattern.permute.xlu0 0
  %818 = vperm.xlu0 %817, %v782
  %v819 = vpop.permute.xlu0 %818
  %822 = vset.pattern.permute.xlu0 0
  %823 = vperm.xlu0 %822, %v784
  %v824 = vpop.permute.xlu0 %823
  %827 = vset.pattern.permute.xlu0 0
  %828 = vperm.xlu0 %827, %v786
  %v829 = vpop.permute.xlu0 %828
  %832 = vset.pattern.permute.xlu0 0
  %833 = vperm.xlu0 %832, %v788
  %v834 = vpop.permute.xlu0 %833
  %v837 = vlaneseq
  %v838 = vshrl.u32 %v837, 7
  %v839 = vsub.s32 0, %v838
  %v840 = vrot.slane %v790, %v839
  %v842 = vmul.f32 %v794, %v840
  %v843 = vmul.f32 %v799, %v840
  %v844 = vmul.f32 %v804, %v840
  %v845 = vmul.f32 %v809, %v840
  %v846 = vmul.f32 %v814, %v840
  %v847 = vmul.f32 %v819, %v840
  %v848 = vmul.f32 %v824, %v840
  %v849 = vmul.f32 %v829, %v840
  %v850 = vmul.f32 %v834, %v840
  %v851 = vadd.f32 %v708, %v842
  %v852 = vadd.f32 %v709, %v843
  %v853 = vadd.f32 %v710, %v844
  %v854 = vadd.f32 %v711, %v845
  %v855 = vadd.f32 %v712, %v846
  %v856 = vadd.f32 %v713, %v847
  %v857 = vadd.f32 %v714, %v848
  %v858 = vadd.f32 %v715, %v849
  %v859 = vadd.f32 %v716, %v850
  %860 = vset.pattern.permute.xlu0 1
  %861 = vperm.xlu0 %860, %v772
  %v862 = vpop.permute.xlu0 %861
  %864 = vset.pattern.permute.xlu0 1
  %865 = vperm.xlu0 %864, %v774
  %v866 = vpop.permute.xlu0 %865
  %868 = vset.pattern.permute.xlu0 1
  %869 = vperm.xlu0 %868, %v776
  %v870 = vpop.permute.xlu0 %869
  %872 = vset.pattern.permute.xlu0 1
  %873 = vperm.xlu0 %872, %v778
  %v874 = vpop.permute.xlu0 %873
  %876 = vset.pattern.permute.xlu0 1
  %877 = vperm.xlu0 %876, %v780
  %v878 = vpop.permute.xlu0 %877
  %880 = vset.pattern.permute.xlu0 1
  %881 = vperm.xlu0 %880, %v782
  %v882 = vpop.permute.xlu0 %881
  %884 = vset.pattern.permute.xlu0 1
  %885 = vperm.xlu0 %884, %v784
  %v886 = vpop.permute.xlu0 %885
  %888 = vset.pattern.permute.xlu0 1
  %889 = vperm.xlu0 %888, %v786
  %v890 = vpop.permute.xlu0 %889
  %892 = vset.pattern.permute.xlu0 1
  %893 = vperm.xlu0 %892, %v788
  %v894 = vpop.permute.xlu0 %893
  %v896 = vmul.f32 %v862, %v840
  %v897 = vmul.f32 %v866, %v840
  %v898 = vmul.f32 %v870, %v840
  %v899 = vmul.f32 %v874, %v840
  %v900 = vmul.f32 %v878, %v840
  %v901 = vmul.f32 %v882, %v840
  %v902 = vmul.f32 %v886, %v840
  %v903 = vmul.f32 %v890, %v840
  %v904 = vmul.f32 %v894, %v840
  %v905 = vadd.f32 %v762, %v896
  %v906 = vadd.f32 %v763, %v897
  %v907 = vadd.f32 %v764, %v898
  %v908 = vadd.f32 %v765, %v899
  %v909 = vadd.f32 %v766, %v900
  %v910 = vadd.f32 %v767, %v901
  %v911 = vadd.f32 %v768, %v902
  %v912 = vadd.f32 %v769, %v903
  %v913 = vadd.f32 %v770, %v904
  %s914 = scalar_lea.vmem %s0, 6
  %v915 = vld [vmem:[%s914] ss:$2 sm:$0xff]
  %s916 = scalar_lea.vmem %s0, 22
  %v917 = vld [vmem:[%s916] ss:$2 sm:$0xff]
  %s918 = scalar_lea.vmem %s0, 38
  %v919 = vld [vmem:[%s918] ss:$2 sm:$0xff]
  %s920 = scalar_lea.vmem %s0, 54
  %v921 = vld [vmem:[%s920] ss:$2 sm:$0xff]
  %s922 = scalar_lea.vmem %s0, 70
  %v923 = vld [vmem:[%s922] ss:$2 sm:$0xff]
  %s924 = scalar_lea.vmem %s0, 86
  %v925 = vld [vmem:[%s924] ss:$2 sm:$0xff]
  %s926 = scalar_lea.vmem %s0, 102
  %v927 = vld [vmem:[%s926] ss:$2 sm:$0xff]
  %s928 = scalar_lea.vmem %s0, 118
  %v929 = vld [vmem:[%s928] ss:$2 sm:$0xff]
  %s930 = scalar_lea.vmem %s0, 134
  %v931 = vld [vmem:[%s930] ss:$2 sm:$0x1]
  %s932 = scalar_lea.vmem %s1, 6
  %v933 = vld [vmem:[%s932] sm:$0x1]
  %935 = vset.pattern.permute.xlu0 0
  %936 = vperm.xlu0 %935, %v915
  %v937 = vpop.permute.xlu0 %936
  %940 = vset.pattern.permute.xlu0 0
  %941 = vperm.xlu0 %940, %v917
  %v942 = vpop.permute.xlu0 %941
  %945 = vset.pattern.permute.xlu0 0
  %946 = vperm.xlu0 %945, %v919
  %v947 = vpop.permute.xlu0 %946
  %950 = vset.pattern.permute.xlu0 0
  %951 = vperm.xlu0 %950, %v921
  %v952 = vpop.permute.xlu0 %951
  %955 = vset.pattern.permute.xlu0 0
  %956 = vperm.xlu0 %955, %v923
  %v957 = vpop.permute.xlu0 %956
  %960 = vset.pattern.permute.xlu0 0
  %961 = vperm.xlu0 %960, %v925
  %v962 = vpop.permute.xlu0 %961
  %965 = vset.pattern.permute.xlu0 0
  %966 = vperm.xlu0 %965, %v927
  %v967 = vpop.permute.xlu0 %966
  %970 = vset.pattern.permute.xlu0 0
  %971 = vperm.xlu0 %970, %v929
  %v972 = vpop.permute.xlu0 %971
  %975 = vset.pattern.permute.xlu0 0
  %976 = vperm.xlu0 %975, %v931
  %v977 = vpop.permute.xlu0 %976
  %v980 = vlaneseq
  %v981 = vshrl.u32 %v980, 7
  %v982 = vsub.s32 0, %v981
  %v983 = vrot.slane %v933, %v982
  %v985 = vmul.f32 %v937, %v983
  %v986 = vmul.f32 %v942, %v983
  %v987 = vmul.f32 %v947, %v983
  %v988 = vmul.f32 %v952, %v983
  %v989 = vmul.f32 %v957, %v983
  %v990 = vmul.f32 %v962, %v983
  %v991 = vmul.f32 %v967, %v983
  %v992 = vmul.f32 %v972, %v983
  %v993 = vmul.f32 %v977, %v983
  %v994 = vadd.f32 %v851, %v985
  %v995 = vadd.f32 %v852, %v986
  %v996 = vadd.f32 %v853, %v987
  %v997 = vadd.f32 %v854, %v988
  %v998 = vadd.f32 %v855, %v989
  %v999 = vadd.f32 %v856, %v990
  %v1000 = vadd.f32 %v857, %v991
  %v1001 = vadd.f32 %v858, %v992
  %v1002 = vadd.f32 %v859, %v993
  %1003 = vset.pattern.permute.xlu0 1
  %1004 = vperm.xlu0 %1003, %v915
  %v1005 = vpop.permute.xlu0 %1004
  %1007 = vset.pattern.permute.xlu0 1
  %1008 = vperm.xlu0 %1007, %v917
  %v1009 = vpop.permute.xlu0 %1008
  %1011 = vset.pattern.permute.xlu0 1
  %1012 = vperm.xlu0 %1011, %v919
  %v1013 = vpop.permute.xlu0 %1012
  %1015 = vset.pattern.permute.xlu0 1
  %1016 = vperm.xlu0 %1015, %v921
  %v1017 = vpop.permute.xlu0 %1016
  %1019 = vset.pattern.permute.xlu0 1
  %1020 = vperm.xlu0 %1019, %v923
  %v1021 = vpop.permute.xlu0 %1020
  %1023 = vset.pattern.permute.xlu0 1
  %1024 = vperm.xlu0 %1023, %v925
  %v1025 = vpop.permute.xlu0 %1024
  %1027 = vset.pattern.permute.xlu0 1
  %1028 = vperm.xlu0 %1027, %v927
  %v1029 = vpop.permute.xlu0 %1028
  %1031 = vset.pattern.permute.xlu0 1
  %1032 = vperm.xlu0 %1031, %v929
  %v1033 = vpop.permute.xlu0 %1032
  %1035 = vset.pattern.permute.xlu0 1
  %1036 = vperm.xlu0 %1035, %v931
  %v1037 = vpop.permute.xlu0 %1036
  %v1039 = vmul.f32 %v1005, %v983
  %v1040 = vmul.f32 %v1009, %v983
  %v1041 = vmul.f32 %v1013, %v983
  %v1042 = vmul.f32 %v1017, %v983
  %v1043 = vmul.f32 %v1021, %v983
  %v1044 = vmul.f32 %v1025, %v983
  %v1045 = vmul.f32 %v1029, %v983
  %v1046 = vmul.f32 %v1033, %v983
  %v1047 = vmul.f32 %v1037, %v983
  %v1048 = vadd.f32 %v905, %v1039
  %v1049 = vadd.f32 %v906, %v1040
  %v1050 = vadd.f32 %v907, %v1041
  %v1051 = vadd.f32 %v908, %v1042
  %v1052 = vadd.f32 %v909, %v1043
  %v1053 = vadd.f32 %v910, %v1044
  %v1054 = vadd.f32 %v911, %v1045
  %v1055 = vadd.f32 %v912, %v1046
  %v1056 = vadd.f32 %v913, %v1047
  %s1057 = scalar_lea.vmem %s0, 7
  %v1058 = vld [vmem:[%s1057] ss:$2 sm:$0xff]
  %s1059 = scalar_lea.vmem %s0, 23
  %v1060 = vld [vmem:[%s1059] ss:$2 sm:$0xff]
  %s1061 = scalar_lea.vmem %s0, 39
  %v1062 = vld [vmem:[%s1061] ss:$2 sm:$0xff]
  %s1063 = scalar_lea.vmem %s0, 55
  %v1064 = vld [vmem:[%s1063] ss:$2 sm:$0xff]
  %s1065 = scalar_lea.vmem %s0, 71
  %v1066 = vld [vmem:[%s1065] ss:$2 sm:$0xff]
  %s1067 = scalar_lea.vmem %s0, 87
  %v1068 = vld [vmem:[%s1067] ss:$2 sm:$0xff]
  %s1069 = scalar_lea.vmem %s0, 103
  %v1070 = vld [vmem:[%s1069] ss:$2 sm:$0xff]
  %s1071 = scalar_lea.vmem %s0, 119
  %v1072 = vld [vmem:[%s1071] ss:$2 sm:$0xff]
  %s1073 = scalar_lea.vmem %s0, 135
  %v1074 = vld [vmem:[%s1073] ss:$2 sm:$0x1]
  %s1075 = scalar_lea.vmem %s1, 7
  %v1076 = vld [vmem:[%s1075] sm:$0x1]
  %1078 = vset.pattern.permute.xlu0 0
  %1079 = vperm.xlu0 %1078, %v1058
  %v1080 = vpop.permute.xlu0 %1079
  %1083 = vset.pattern.permute.xlu0 0
  %1084 = vperm.xlu0 %1083, %v1060
  %v1085 = vpop.permute.xlu0 %1084
  %1088 = vset.pattern.permute.xlu0 0
  %1089 = vperm.xlu0 %1088, %v1062
  %v1090 = vpop.permute.xlu0 %1089
  %1093 = vset.pattern.permute.xlu0 0
  %1094 = vperm.xlu0 %1093, %v1064
  %v1095 = vpop.permute.xlu0 %1094
  %1098 = vset.pattern.permute.xlu0 0
  %1099 = vperm.xlu0 %1098, %v1066
  %v1100 = vpop.permute.xlu0 %1099
  %1103 = vset.pattern.permute.xlu0 0
  %1104 = vperm.xlu0 %1103, %v1068
  %v1105 = vpop.permute.xlu0 %1104
  %1108 = vset.pattern.permute.xlu0 0
  %1109 = vperm.xlu0 %1108, %v1070
  %v1110 = vpop.permute.xlu0 %1109
  %1113 = vset.pattern.permute.xlu0 0
  %1114 = vperm.xlu0 %1113, %v1072
  %v1115 = vpop.permute.xlu0 %1114
  %1118 = vset.pattern.permute.xlu0 0
  %1119 = vperm.xlu0 %1118, %v1074
  %v1120 = vpop.permute.xlu0 %1119
  %v1123 = vlaneseq
  %v1124 = vshrl.u32 %v1123, 7
  %v1125 = vsub.s32 0, %v1124
  %v1126 = vrot.slane %v1076, %v1125
  %v1128 = vmul.f32 %v1080, %v1126
  %v1129 = vmul.f32 %v1085, %v1126
  %v1130 = vmul.f32 %v1090, %v1126
  %v1131 = vmul.f32 %v1095, %v1126
  %v1132 = vmul.f32 %v1100, %v1126
  %v1133 = vmul.f32 %v1105, %v1126
  %v1134 = vmul.f32 %v1110, %v1126
  %v1135 = vmul.f32 %v1115, %v1126
  %v1136 = vmul.f32 %v1120, %v1126
  %v1137 = vadd.f32 %v994, %v1128
  %v1138 = vadd.f32 %v995, %v1129
  %v1139 = vadd.f32 %v996, %v1130
  %v1140 = vadd.f32 %v997, %v1131
  %v1141 = vadd.f32 %v998, %v1132
  %v1142 = vadd.f32 %v999, %v1133
  %v1143 = vadd.f32 %v1000, %v1134
  %v1144 = vadd.f32 %v1001, %v1135
  %v1145 = vadd.f32 %v1002, %v1136
  %1146 = vset.pattern.permute.xlu0 1
  %1147 = vperm.xlu0 %1146, %v1058
  %v1148 = vpop.permute.xlu0 %1147
  %1150 = vset.pattern.permute.xlu0 1
  %1151 = vperm.xlu0 %1150, %v1060
  %v1152 = vpop.permute.xlu0 %1151
  %1154 = vset.pattern.permute.xlu0 1
  %1155 = vperm.xlu0 %1154, %v1062
  %v1156 = vpop.permute.xlu0 %1155
  %1158 = vset.pattern.permute.xlu0 1
  %1159 = vperm.xlu0 %1158, %v1064
  %v1160 = vpop.permute.xlu0 %1159
  %1162 = vset.pattern.permute.xlu0 1
  %1163 = vperm.xlu0 %1162, %v1066
  %v1164 = vpop.permute.xlu0 %1163
  %1166 = vset.pattern.permute.xlu0 1
  %1167 = vperm.xlu0 %1166, %v1068
  %v1168 = vpop.permute.xlu0 %1167
  %1170 = vset.pattern.permute.xlu0 1
  %1171 = vperm.xlu0 %1170, %v1070
  %v1172 = vpop.permute.xlu0 %1171
  %1174 = vset.pattern.permute.xlu0 1
  %1175 = vperm.xlu0 %1174, %v1072
  %v1176 = vpop.permute.xlu0 %1175
  %1178 = vset.pattern.permute.xlu0 1
  %1179 = vperm.xlu0 %1178, %v1074
  %v1180 = vpop.permute.xlu0 %1179
  %v1182 = vmul.f32 %v1148, %v1126
  %v1183 = vmul.f32 %v1152, %v1126
  %v1184 = vmul.f32 %v1156, %v1126
  %v1185 = vmul.f32 %v1160, %v1126
  %v1186 = vmul.f32 %v1164, %v1126
  %v1187 = vmul.f32 %v1168, %v1126
  %v1188 = vmul.f32 %v1172, %v1126
  %v1189 = vmul.f32 %v1176, %v1126
  %v1190 = vmul.f32 %v1180, %v1126
  %v1191 = vadd.f32 %v1048, %v1182
  %v1192 = vadd.f32 %v1049, %v1183
  %v1193 = vadd.f32 %v1050, %v1184
  %v1194 = vadd.f32 %v1051, %v1185
  %v1195 = vadd.f32 %v1052, %v1186
  %v1196 = vadd.f32 %v1053, %v1187
  %v1197 = vadd.f32 %v1054, %v1188
  %v1198 = vadd.f32 %v1055, %v1189
  %v1199 = vadd.f32 %v1056, %v1190
  %s1200 = scalar_lea.vmem %s0, 8
  %v1201 = vld [vmem:[%s1200] ss:$2 sm:$0xff]
  %s1202 = scalar_lea.vmem %s0, 24
  %v1203 = vld [vmem:[%s1202] ss:$2 sm:$0xff]
  %s1204 = scalar_lea.vmem %s0, 40
  %v1205 = vld [vmem:[%s1204] ss:$2 sm:$0xff]
  %s1206 = scalar_lea.vmem %s0, 56
  %v1207 = vld [vmem:[%s1206] ss:$2 sm:$0xff]
  %s1208 = scalar_lea.vmem %s0, 72
  %v1209 = vld [vmem:[%s1208] ss:$2 sm:$0xff]
  %s1210 = scalar_lea.vmem %s0, 88
  %v1211 = vld [vmem:[%s1210] ss:$2 sm:$0xff]
  %s1212 = scalar_lea.vmem %s0, 104
  %v1213 = vld [vmem:[%s1212] ss:$2 sm:$0xff]
  %s1214 = scalar_lea.vmem %s0, 120
  %v1215 = vld [vmem:[%s1214] ss:$2 sm:$0xff]
  %s1216 = scalar_lea.vmem %s0, 136
  %v1217 = vld [vmem:[%s1216] ss:$2 sm:$0x1]
  %s1218 = scalar_lea.vmem %s1, 8
  %v1219 = vld [vmem:[%s1218] sm:$0x1]
  %1221 = vset.pattern.permute.xlu0 0
  %1222 = vperm.xlu0 %1221, %v1201
  %v1223 = vpop.permute.xlu0 %1222
  %1226 = vset.pattern.permute.xlu0 0
  %1227 = vperm.xlu0 %1226, %v1203
  %v1228 = vpop.permute.xlu0 %1227
  %1231 = vset.pattern.permute.xlu0 0
  %1232 = vperm.xlu0 %1231, %v1205
  %v1233 = vpop.permute.xlu0 %1232
  %1236 = vset.pattern.permute.xlu0 0
  %1237 = vperm.xlu0 %1236, %v1207
  %v1238 = vpop.permute.xlu0 %1237
  %1241 = vset.pattern.permute.xlu0 0
  %1242 = vperm.xlu0 %1241, %v1209
  %v1243 = vpop.permute.xlu0 %1242
  %1246 = vset.pattern.permute.xlu0 0
  %1247 = vperm.xlu0 %1246, %v1211
  %v1248 = vpop.permute.xlu0 %1247
  %1251 = vset.pattern.permute.xlu0 0
  %1252 = vperm.xlu0 %1251, %v1213
  %v1253 = vpop.permute.xlu0 %1252
  %1256 = vset.pattern.permute.xlu0 0
  %1257 = vperm.xlu0 %1256, %v1215
  %v1258 = vpop.permute.xlu0 %1257
  %1261 = vset.pattern.permute.xlu0 0
  %1262 = vperm.xlu0 %1261, %v1217
  %v1263 = vpop.permute.xlu0 %1262
  %v1266 = vlaneseq
  %v1267 = vshrl.u32 %v1266, 7
  %v1268 = vsub.s32 0, %v1267
  %v1269 = vrot.slane %v1219, %v1268
  %v1271 = vmul.f32 %v1223, %v1269
  %v1272 = vmul.f32 %v1228, %v1269
  %v1273 = vmul.f32 %v1233, %v1269
  %v1274 = vmul.f32 %v1238, %v1269
  %v1275 = vmul.f32 %v1243, %v1269
  %v1276 = vmul.f32 %v1248, %v1269
  %v1277 = vmul.f32 %v1253, %v1269
  %v1278 = vmul.f32 %v1258, %v1269
  %v1279 = vmul.f32 %v1263, %v1269
  %v1280 = vadd.f32 %v1137, %v1271
  %v1281 = vadd.f32 %v1138, %v1272
  %v1282 = vadd.f32 %v1139, %v1273
  %v1283 = vadd.f32 %v1140, %v1274
  %v1284 = vadd.f32 %v1141, %v1275
  %v1285 = vadd.f32 %v1142, %v1276
  %v1286 = vadd.f32 %v1143, %v1277
  %v1287 = vadd.f32 %v1144, %v1278
  %v1288 = vadd.f32 %v1145, %v1279
  %1289 = vset.pattern.permute.xlu0 1
  %1290 = vperm.xlu0 %1289, %v1201
  %v1291 = vpop.permute.xlu0 %1290
  %1293 = vset.pattern.permute.xlu0 1
  %1294 = vperm.xlu0 %1293, %v1203
  %v1295 = vpop.permute.xlu0 %1294
  %1297 = vset.pattern.permute.xlu0 1
  %1298 = vperm.xlu0 %1297, %v1205
  %v1299 = vpop.permute.xlu0 %1298
  %1301 = vset.pattern.permute.xlu0 1
  %1302 = vperm.xlu0 %1301, %v1207
  %v1303 = vpop.permute.xlu0 %1302
  %1305 = vset.pattern.permute.xlu0 1
  %1306 = vperm.xlu0 %1305, %v1209
  %v1307 = vpop.permute.xlu0 %1306
  %1309 = vset.pattern.permute.xlu0 1
  %1310 = vperm.xlu0 %1309, %v1211
  %v1311 = vpop.permute.xlu0 %1310
  %1313 = vset.pattern.permute.xlu0 1
  %1314 = vperm.xlu0 %1313, %v1213
  %v1315 = vpop.permute.xlu0 %1314
  %1317 = vset.pattern.permute.xlu0 1
  %1318 = vperm.xlu0 %1317, %v1215
  %v1319 = vpop.permute.xlu0 %1318
  %1321 = vset.pattern.permute.xlu0 1
  %1322 = vperm.xlu0 %1321, %v1217
  %v1323 = vpop.permute.xlu0 %1322
  %v1325 = vmul.f32 %v1291, %v1269
  %v1326 = vmul.f32 %v1295, %v1269
  %v1327 = vmul.f32 %v1299, %v1269
  %v1328 = vmul.f32 %v1303, %v1269
  %v1329 = vmul.f32 %v1307, %v1269
  %v1330 = vmul.f32 %v1311, %v1269
  %v1331 = vmul.f32 %v1315, %v1269
  %v1332 = vmul.f32 %v1319, %v1269
  %v1333 = vmul.f32 %v1323, %v1269
  %v1334 = vadd.f32 %v1191, %v1325
  %v1335 = vadd.f32 %v1192, %v1326
  %v1336 = vadd.f32 %v1193, %v1327
  %v1337 = vadd.f32 %v1194, %v1328
  %v1338 = vadd.f32 %v1195, %v1329
  %v1339 = vadd.f32 %v1196, %v1330
  %v1340 = vadd.f32 %v1197, %v1331
  %v1341 = vadd.f32 %v1198, %v1332
  %v1342 = vadd.f32 %v1199, %v1333
  %s1343 = scalar_lea.vmem %s0, 9
  %v1344 = vld [vmem:[%s1343] ss:$2 sm:$0xff]
  %s1345 = scalar_lea.vmem %s0, 25
  %v1346 = vld [vmem:[%s1345] ss:$2 sm:$0xff]
  %s1347 = scalar_lea.vmem %s0, 41
  %v1348 = vld [vmem:[%s1347] ss:$2 sm:$0xff]
  %s1349 = scalar_lea.vmem %s0, 57
  %v1350 = vld [vmem:[%s1349] ss:$2 sm:$0xff]
  %s1351 = scalar_lea.vmem %s0, 73
  %v1352 = vld [vmem:[%s1351] ss:$2 sm:$0xff]
  %s1353 = scalar_lea.vmem %s0, 89
  %v1354 = vld [vmem:[%s1353] ss:$2 sm:$0xff]
  %s1355 = scalar_lea.vmem %s0, 105
  %v1356 = vld [vmem:[%s1355] ss:$2 sm:$0xff]
  %s1357 = scalar_lea.vmem %s0, 121
  %v1358 = vld [vmem:[%s1357] ss:$2 sm:$0xff]
  %s1359 = scalar_lea.vmem %s0, 137
  %v1360 = vld [vmem:[%s1359] ss:$2 sm:$0x1]
  %s1361 = scalar_lea.vmem %s1, 9
  %v1362 = vld [vmem:[%s1361] sm:$0x1]
  %1364 = vset.pattern.permute.xlu0 0
  %1365 = vperm.xlu0 %1364, %v1344
  %v1366 = vpop.permute.xlu0 %1365
  %1369 = vset.pattern.permute.xlu0 0
  %1370 = vperm.xlu0 %1369, %v1346
  %v1371 = vpop.permute.xlu0 %1370
  %1374 = vset.pattern.permute.xlu0 0
  %1375 = vperm.xlu0 %1374, %v1348
  %v1376 = vpop.permute.xlu0 %1375
  %1379 = vset.pattern.permute.xlu0 0
  %1380 = vperm.xlu0 %1379, %v1350
  %v1381 = vpop.permute.xlu0 %1380
  %1384 = vset.pattern.permute.xlu0 0
  %1385 = vperm.xlu0 %1384, %v1352
  %v1386 = vpop.permute.xlu0 %1385
  %1389 = vset.pattern.permute.xlu0 0
  %1390 = vperm.xlu0 %1389, %v1354
  %v1391 = vpop.permute.xlu0 %1390
  %1394 = vset.pattern.permute.xlu0 0
  %1395 = vperm.xlu0 %1394, %v1356
  %v1396 = vpop.permute.xlu0 %1395
  %1399 = vset.pattern.permute.xlu0 0
  %1400 = vperm.xlu0 %1399, %v1358
  %v1401 = vpop.permute.xlu0 %1400
  %1404 = vset.pattern.permute.xlu0 0
  %1405 = vperm.xlu0 %1404, %v1360
  %v1406 = vpop.permute.xlu0 %1405
  %v1409 = vlaneseq
  %v1410 = vshrl.u32 %v1409, 7
  %v1411 = vsub.s32 0, %v1410
  %v1412 = vrot.slane %v1362, %v1411
  %v1414 = vmul.f32 %v1366, %v1412
  %v1415 = vmul.f32 %v1371, %v1412
  %v1416 = vmul.f32 %v1376, %v1412
  %v1417 = vmul.f32 %v1381, %v1412
  %v1418 = vmul.f32 %v1386, %v1412
  %v1419 = vmul.f32 %v1391, %v1412
  %v1420 = vmul.f32 %v1396, %v1412
  %v1421 = vmul.f32 %v1401, %v1412
  %v1422 = vmul.f32 %v1406, %v1412
  %v1423 = vadd.f32 %v1280, %v1414
  %v1424 = vadd.f32 %v1281, %v1415
  %v1425 = vadd.f32 %v1282, %v1416
  %v1426 = vadd.f32 %v1283, %v1417
  %v1427 = vadd.f32 %v1284, %v1418
  %v1428 = vadd.f32 %v1285, %v1419
  %v1429 = vadd.f32 %v1286, %v1420
  %v1430 = vadd.f32 %v1287, %v1421
  %v1431 = vadd.f32 %v1288, %v1422
  %1432 = vset.pattern.permute.xlu0 1
  %1433 = vperm.xlu0 %1432, %v1344
  %v1434 = vpop.permute.xlu0 %1433
  %1436 = vset.pattern.permute.xlu0 1
  %1437 = vperm.xlu0 %1436, %v1346
  %v1438 = vpop.permute.xlu0 %1437
  %1440 = vset.pattern.permute.xlu0 1
  %1441 = vperm.xlu0 %1440, %v1348
  %v1442 = vpop.permute.xlu0 %1441
  %1444 = vset.pattern.permute.xlu0 1
  %1445 = vperm.xlu0 %1444, %v1350
  %v1446 = vpop.permute.xlu0 %1445
  %1448 = vset.pattern.permute.xlu0 1
  %1449 = vperm.xlu0 %1448, %v1352
  %v1450 = vpop.permute.xlu0 %1449
  %1452 = vset.pattern.permute.xlu0 1
  %1453 = vperm.xlu0 %1452, %v1354
  %v1454 = vpop.permute.xlu0 %1453
  %1456 = vset.pattern.permute.xlu0 1
  %1457 = vperm.xlu0 %1456, %v1356
  %v1458 = vpop.permute.xlu0 %1457
  %1460 = vset.pattern.permute.xlu0 1
  %1461 = vperm.xlu0 %1460, %v1358
  %v1462 = vpop.permute.xlu0 %1461
  %1464 = vset.pattern.permute.xlu0 1
  %1465 = vperm.xlu0 %1464, %v1360
  %v1466 = vpop.permute.xlu0 %1465
  %v1468 = vmul.f32 %v1434, %v1412
  %v1469 = vmul.f32 %v1438, %v1412
  %v1470 = vmul.f32 %v1442, %v1412
  %v1471 = vmul.f32 %v1446, %v1412
  %v1472 = vmul.f32 %v1450, %v1412
  %v1473 = vmul.f32 %v1454, %v1412
  %v1474 = vmul.f32 %v1458, %v1412
  %v1475 = vmul.f32 %v1462, %v1412
  %v1476 = vmul.f32 %v1466, %v1412
  %v1477 = vadd.f32 %v1334, %v1468
  %v1478 = vadd.f32 %v1335, %v1469
  %v1479 = vadd.f32 %v1336, %v1470
  %v1480 = vadd.f32 %v1337, %v1471
  %v1481 = vadd.f32 %v1338, %v1472
  %v1482 = vadd.f32 %v1339, %v1473
  %v1483 = vadd.f32 %v1340, %v1474
  %v1484 = vadd.f32 %v1341, %v1475
  %v1485 = vadd.f32 %v1342, %v1476
  %s1486 = scalar_lea.vmem %s0, 10
  %v1487 = vld [vmem:[%s1486] ss:$2 sm:$0xff]
  %s1488 = scalar_lea.vmem %s0, 26
  %v1489 = vld [vmem:[%s1488] ss:$2 sm:$0xff]
  %s1490 = scalar_lea.vmem %s0, 42
  %v1491 = vld [vmem:[%s1490] ss:$2 sm:$0xff]
  %s1492 = scalar_lea.vmem %s0, 58
  %v1493 = vld [vmem:[%s1492] ss:$2 sm:$0xff]
  %s1494 = scalar_lea.vmem %s0, 74
  %v1495 = vld [vmem:[%s1494] ss:$2 sm:$0xff]
  %s1496 = scalar_lea.vmem %s0, 90
  %v1497 = vld [vmem:[%s1496] ss:$2 sm:$0xff]
  %s1498 = scalar_lea.vmem %s0, 106
  %v1499 = vld [vmem:[%s1498] ss:$2 sm:$0xff]
  %s1500 = scalar_lea.vmem %s0, 122
  %v1501 = vld [vmem:[%s1500] ss:$2 sm:$0xff]
  %s1502 = scalar_lea.vmem %s0, 138
  %v1503 = vld [vmem:[%s1502] ss:$2 sm:$0x1]
  %s1504 = scalar_lea.vmem %s1, 10
  %v1505 = vld [vmem:[%s1504] sm:$0x1]
  %1507 = vset.pattern.permute.xlu0 0
  %1508 = vperm.xlu0 %1507, %v1487
  %v1509 = vpop.permute.xlu0 %1508
  %1512 = vset.pattern.permute.xlu0 0
  %1513 = vperm.xlu0 %1512, %v1489
  %v1514 = vpop.permute.xlu0 %1513
  %1517 = vset.pattern.permute.xlu0 0
  %1518 = vperm.xlu0 %1517, %v1491
  %v1519 = vpop.permute.xlu0 %1518
  %1522 = vset.pattern.permute.xlu0 0
  %1523 = vperm.xlu0 %1522, %v1493
  %v1524 = vpop.permute.xlu0 %1523
  %1527 = vset.pattern.permute.xlu0 0
  %1528 = vperm.xlu0 %1527, %v1495
  %v1529 = vpop.permute.xlu0 %1528
  %1532 = vset.pattern.permute.xlu0 0
  %1533 = vperm.xlu0 %1532, %v1497
  %v1534 = vpop.permute.xlu0 %1533
  %1537 = vset.pattern.permute.xlu0 0
  %1538 = vperm.xlu0 %1537, %v1499
  %v1539 = vpop.permute.xlu0 %1538
  %1542 = vset.pattern.permute.xlu0 0
  %1543 = vperm.xlu0 %1542, %v1501
  %v1544 = vpop.permute.xlu0 %1543
  %1547 = vset.pattern.permute.xlu0 0
  %1548 = vperm.xlu0 %1547, %v1503
  %v1549 = vpop.permute.xlu0 %1548
  %v1552 = vlaneseq
  %v1553 = vshrl.u32 %v1552, 7
  %v1554 = vsub.s32 0, %v1553
  %v1555 = vrot.slane %v1505, %v1554
  %v1557 = vmul.f32 %v1509, %v1555
  %v1558 = vmul.f32 %v1514, %v1555
  %v1559 = vmul.f32 %v1519, %v1555
  %v1560 = vmul.f32 %v1524, %v1555
  %v1561 = vmul.f32 %v1529, %v1555
  %v1562 = vmul.f32 %v1534, %v1555
  %v1563 = vmul.f32 %v1539, %v1555
  %v1564 = vmul.f32 %v1544, %v1555
  %v1565 = vmul.f32 %v1549, %v1555
  %v1566 = vadd.f32 %v1423, %v1557
  %v1567 = vadd.f32 %v1424, %v1558
  %v1568 = vadd.f32 %v1425, %v1559
  %v1569 = vadd.f32 %v1426, %v1560
  %v1570 = vadd.f32 %v1427, %v1561
  %v1571 = vadd.f32 %v1428, %v1562
  %v1572 = vadd.f32 %v1429, %v1563
  %v1573 = vadd.f32 %v1430, %v1564
  %v1574 = vadd.f32 %v1431, %v1565
  %1575 = vset.pattern.permute.xlu0 1
  %1576 = vperm.xlu0 %1575, %v1487
  %v1577 = vpop.permute.xlu0 %1576
  %1579 = vset.pattern.permute.xlu0 1
  %1580 = vperm.xlu0 %1579, %v1489
  %v1581 = vpop.permute.xlu0 %1580
  %1583 = vset.pattern.permute.xlu0 1
  %1584 = vperm.xlu0 %1583, %v1491
  %v1585 = vpop.permute.xlu0 %1584
  %1587 = vset.pattern.permute.xlu0 1
  %1588 = vperm.xlu0 %1587, %v1493
  %v1589 = vpop.permute.xlu0 %1588
  %1591 = vset.pattern.permute.xlu0 1
  %1592 = vperm.xlu0 %1591, %v1495
  %v1593 = vpop.permute.xlu0 %1592
  %1595 = vset.pattern.permute.xlu0 1
  %1596 = vperm.xlu0 %1595, %v1497
  %v1597 = vpop.permute.xlu0 %1596
  %1599 = vset.pattern.permute.xlu0 1
  %1600 = vperm.xlu0 %1599, %v1499
  %v1601 = vpop.permute.xlu0 %1600
  %1603 = vset.pattern.permute.xlu0 1
  %1604 = vperm.xlu0 %1603, %v1501
  %v1605 = vpop.permute.xlu0 %1604
  %1607 = vset.pattern.permute.xlu0 1
  %1608 = vperm.xlu0 %1607, %v1503
  %v1609 = vpop.permute.xlu0 %1608
  %v1611 = vmul.f32 %v1577, %v1555
  %v1612 = vmul.f32 %v1581, %v1555
  %v1613 = vmul.f32 %v1585, %v1555
  %v1614 = vmul.f32 %v1589, %v1555
  %v1615 = vmul.f32 %v1593, %v1555
  %v1616 = vmul.f32 %v1597, %v1555
  %v1617 = vmul.f32 %v1601, %v1555
  %v1618 = vmul.f32 %v1605, %v1555
  %v1619 = vmul.f32 %v1609, %v1555
  %v1620 = vadd.f32 %v1477, %v1611
  %v1621 = vadd.f32 %v1478, %v1612
  %v1622 = vadd.f32 %v1479, %v1613
  %v1623 = vadd.f32 %v1480, %v1614
  %v1624 = vadd.f32 %v1481, %v1615
  %v1625 = vadd.f32 %v1482, %v1616
  %v1626 = vadd.f32 %v1483, %v1617
  %v1627 = vadd.f32 %v1484, %v1618
  %v1628 = vadd.f32 %v1485, %v1619
  %s1629 = scalar_lea.vmem %s0, 11
  %v1630 = vld [vmem:[%s1629] ss:$2 sm:$0xff]
  %s1631 = scalar_lea.vmem %s0, 27
  %v1632 = vld [vmem:[%s1631] ss:$2 sm:$0xff]
  %s1633 = scalar_lea.vmem %s0, 43
  %v1634 = vld [vmem:[%s1633] ss:$2 sm:$0xff]
  %s1635 = scalar_lea.vmem %s0, 59
  %v1636 = vld [vmem:[%s1635] ss:$2 sm:$0xff]
  %s1637 = scalar_lea.vmem %s0, 75
  %v1638 = vld [vmem:[%s1637] ss:$2 sm:$0xff]
  %s1639 = scalar_lea.vmem %s0, 91
  %v1640 = vld [vmem:[%s1639] ss:$2 sm:$0xff]
  %s1641 = scalar_lea.vmem %s0, 107
  %v1642 = vld [vmem:[%s1641] ss:$2 sm:$0xff]
  %s1643 = scalar_lea.vmem %s0, 123
  %v1644 = vld [vmem:[%s1643] ss:$2 sm:$0xff]
  %s1645 = scalar_lea.vmem %s0, 139
  %v1646 = vld [vmem:[%s1645] ss:$2 sm:$0x1]
  %s1647 = scalar_lea.vmem %s1, 11
  %v1648 = vld [vmem:[%s1647] sm:$0x1]
  %1650 = vset.pattern.permute.xlu0 0
  %1651 = vperm.xlu0 %1650, %v1630
  %v1652 = vpop.permute.xlu0 %1651
  %1655 = vset.pattern.permute.xlu0 0
  %1656 = vperm.xlu0 %1655, %v1632
  %v1657 = vpop.permute.xlu0 %1656
  %1660 = vset.pattern.permute.xlu0 0
  %1661 = vperm.xlu0 %1660, %v1634
  %v1662 = vpop.permute.xlu0 %1661
  %1665 = vset.pattern.permute.xlu0 0
  %1666 = vperm.xlu0 %1665, %v1636
  %v1667 = vpop.permute.xlu0 %1666
  %1670 = vset.pattern.permute.xlu0 0
  %1671 = vperm.xlu0 %1670, %v1638
  %v1672 = vpop.permute.xlu0 %1671
  %1675 = vset.pattern.permute.xlu0 0
  %1676 = vperm.xlu0 %1675, %v1640
  %v1677 = vpop.permute.xlu0 %1676
  %1680 = vset.pattern.permute.xlu0 0
  %1681 = vperm.xlu0 %1680, %v1642
  %v1682 = vpop.permute.xlu0 %1681
  %1685 = vset.pattern.permute.xlu0 0
  %1686 = vperm.xlu0 %1685, %v1644
  %v1687 = vpop.permute.xlu0 %1686
  %1690 = vset.pattern.permute.xlu0 0
  %1691 = vperm.xlu0 %1690, %v1646
  %v1692 = vpop.permute.xlu0 %1691
  %v1695 = vlaneseq
  %v1696 = vshrl.u32 %v1695, 7
  %v1697 = vsub.s32 0, %v1696
  %v1698 = vrot.slane %v1648, %v1697
  %v1700 = vmul.f32 %v1652, %v1698
  %v1701 = vmul.f32 %v1657, %v1698
  %v1702 = vmul.f32 %v1662, %v1698
  %v1703 = vmul.f32 %v1667, %v1698
  %v1704 = vmul.f32 %v1672, %v1698
  %v1705 = vmul.f32 %v1677, %v1698
  %v1706 = vmul.f32 %v1682, %v1698
  %v1707 = vmul.f32 %v1687, %v1698
  %v1708 = vmul.f32 %v1692, %v1698
  %v1709 = vadd.f32 %v1566, %v1700
  %v1710 = vadd.f32 %v1567, %v1701
  %v1711 = vadd.f32 %v1568, %v1702
  %v1712 = vadd.f32 %v1569, %v1703
  %v1713 = vadd.f32 %v1570, %v1704
  %v1714 = vadd.f32 %v1571, %v1705
  %v1715 = vadd.f32 %v1572, %v1706
  %v1716 = vadd.f32 %v1573, %v1707
  %v1717 = vadd.f32 %v1574, %v1708
  %1718 = vset.pattern.permute.xlu0 1
  %1719 = vperm.xlu0 %1718, %v1630
  %v1720 = vpop.permute.xlu0 %1719
  %1722 = vset.pattern.permute.xlu0 1
  %1723 = vperm.xlu0 %1722, %v1632
  %v1724 = vpop.permute.xlu0 %1723
  %1726 = vset.pattern.permute.xlu0 1
  %1727 = vperm.xlu0 %1726, %v1634
  %v1728 = vpop.permute.xlu0 %1727
  %1730 = vset.pattern.permute.xlu0 1
  %1731 = vperm.xlu0 %1730, %v1636
  %v1732 = vpop.permute.xlu0 %1731
  %1734 = vset.pattern.permute.xlu0 1
  %1735 = vperm.xlu0 %1734, %v1638
  %v1736 = vpop.permute.xlu0 %1735
  %1738 = vset.pattern.permute.xlu0 1
  %1739 = vperm.xlu0 %1738, %v1640
  %v1740 = vpop.permute.xlu0 %1739
  %1742 = vset.pattern.permute.xlu0 1
  %1743 = vperm.xlu0 %1742, %v1642
  %v1744 = vpop.permute.xlu0 %1743
  %1746 = vset.pattern.permute.xlu0 1
  %1747 = vperm.xlu0 %1746, %v1644
  %v1748 = vpop.permute.xlu0 %1747
  %1750 = vset.pattern.permute.xlu0 1
  %1751 = vperm.xlu0 %1750, %v1646
  %v1752 = vpop.permute.xlu0 %1751
  %v1754 = vmul.f32 %v1720, %v1698
  %v1755 = vmul.f32 %v1724, %v1698
  %v1756 = vmul.f32 %v1728, %v1698
  %v1757 = vmul.f32 %v1732, %v1698
  %v1758 = vmul.f32 %v1736, %v1698
  %v1759 = vmul.f32 %v1740, %v1698
  %v1760 = vmul.f32 %v1744, %v1698
  %v1761 = vmul.f32 %v1748, %v1698
  %v1762 = vmul.f32 %v1752, %v1698
  %v1763 = vadd.f32 %v1620, %v1754
  %v1764 = vadd.f32 %v1621, %v1755
  %v1765 = vadd.f32 %v1622, %v1756
  %v1766 = vadd.f32 %v1623, %v1757
  %v1767 = vadd.f32 %v1624, %v1758
  %v1768 = vadd.f32 %v1625, %v1759
  %v1769 = vadd.f32 %v1626, %v1760
  %v1770 = vadd.f32 %v1627, %v1761
  %v1771 = vadd.f32 %v1628, %v1762
  %s1772 = scalar_lea.vmem %s0, 12
  %v1773 = vld [vmem:[%s1772] ss:$2 sm:$0xff]
  %s1774 = scalar_lea.vmem %s0, 28
  %v1775 = vld [vmem:[%s1774] ss:$2 sm:$0xff]
  %s1776 = scalar_lea.vmem %s0, 44
  %v1777 = vld [vmem:[%s1776] ss:$2 sm:$0xff]
  %s1778 = scalar_lea.vmem %s0, 60
  %v1779 = vld [vmem:[%s1778] ss:$2 sm:$0xff]
  %s1780 = scalar_lea.vmem %s0, 76
  %v1781 = vld [vmem:[%s1780] ss:$2 sm:$0xff]
  %s1782 = scalar_lea.vmem %s0, 92
  %v1783 = vld [vmem:[%s1782] ss:$2 sm:$0xff]
  %s1784 = scalar_lea.vmem %s0, 108
  %v1785 = vld [vmem:[%s1784] ss:$2 sm:$0xff]
  %s1786 = scalar_lea.vmem %s0, 124
  %v1787 = vld [vmem:[%s1786] ss:$2 sm:$0xff]
  %s1788 = scalar_lea.vmem %s0, 140
  %v1789 = vld [vmem:[%s1788] ss:$2 sm:$0x1]
  %s1790 = scalar_lea.vmem %s1, 12
  %v1791 = vld [vmem:[%s1790] sm:$0x1]
  %1793 = vset.pattern.permute.xlu0 0
  %1794 = vperm.xlu0 %1793, %v1773
  %v1795 = vpop.permute.xlu0 %1794
  %1798 = vset.pattern.permute.xlu0 0
  %1799 = vperm.xlu0 %1798, %v1775
  %v1800 = vpop.permute.xlu0 %1799
  %1803 = vset.pattern.permute.xlu0 0
  %1804 = vperm.xlu0 %1803, %v1777
  %v1805 = vpop.permute.xlu0 %1804
  %1808 = vset.pattern.permute.xlu0 0
  %1809 = vperm.xlu0 %1808, %v1779
  %v1810 = vpop.permute.xlu0 %1809
  %1813 = vset.pattern.permute.xlu0 0
  %1814 = vperm.xlu0 %1813, %v1781
  %v1815 = vpop.permute.xlu0 %1814
  %1818 = vset.pattern.permute.xlu0 0
  %1819 = vperm.xlu0 %1818, %v1783
  %v1820 = vpop.permute.xlu0 %1819
  %1823 = vset.pattern.permute.xlu0 0
  %1824 = vperm.xlu0 %1823, %v1785
  %v1825 = vpop.permute.xlu0 %1824
  %1828 = vset.pattern.permute.xlu0 0
  %1829 = vperm.xlu0 %1828, %v1787
  %v1830 = vpop.permute.xlu0 %1829
  %1833 = vset.pattern.permute.xlu0 0
  %1834 = vperm.xlu0 %1833, %v1789
  %v1835 = vpop.permute.xlu0 %1834
  %v1838 = vlaneseq
  %v1839 = vshrl.u32 %v1838, 7
  %v1840 = vsub.s32 0, %v1839
  %v1841 = vrot.slane %v1791, %v1840
  %v1843 = vmul.f32 %v1795, %v1841
  %v1844 = vmul.f32 %v1800, %v1841
  %v1845 = vmul.f32 %v1805, %v1841
  %v1846 = vmul.f32 %v1810, %v1841
  %v1847 = vmul.f32 %v1815, %v1841
  %v1848 = vmul.f32 %v1820, %v1841
  %v1849 = vmul.f32 %v1825, %v1841
  %v1850 = vmul.f32 %v1830, %v1841
  %v1851 = vmul.f32 %v1835, %v1841
  %v1852 = vadd.f32 %v1709, %v1843
  %v1853 = vadd.f32 %v1710, %v1844
  %v1854 = vadd.f32 %v1711, %v1845
  %v1855 = vadd.f32 %v1712, %v1846
  %v1856 = vadd.f32 %v1713, %v1847
  %v1857 = vadd.f32 %v1714, %v1848
  %v1858 = vadd.f32 %v1715, %v1849
  %v1859 = vadd.f32 %v1716, %v1850
  %v1860 = vadd.f32 %v1717, %v1851
  %1861 = vset.pattern.permute.xlu0 1
  %1862 = vperm.xlu0 %1861, %v1773
  %v1863 = vpop.permute.xlu0 %1862
  %1865 = vset.pattern.permute.xlu0 1
  %1866 = vperm.xlu0 %1865, %v1775
  %v1867 = vpop.permute.xlu0 %1866
  %1869 = vset.pattern.permute.xlu0 1
  %1870 = vperm.xlu0 %1869, %v1777
  %v1871 = vpop.permute.xlu0 %1870
  %1873 = vset.pattern.permute.xlu0 1
  %1874 = vperm.xlu0 %1873, %v1779
  %v1875 = vpop.permute.xlu0 %1874
  %1877 = vset.pattern.permute.xlu0 1
  %1878 = vperm.xlu0 %1877, %v1781
  %v1879 = vpop.permute.xlu0 %1878
  %1881 = vset.pattern.permute.xlu0 1
  %1882 = vperm.xlu0 %1881, %v1783
  %v1883 = vpop.permute.xlu0 %1882
  %1885 = vset.pattern.permute.xlu0 1
  %1886 = vperm.xlu0 %1885, %v1785
  %v1887 = vpop.permute.xlu0 %1886
  %1889 = vset.pattern.permute.xlu0 1
  %1890 = vperm.xlu0 %1889, %v1787
  %v1891 = vpop.permute.xlu0 %1890
  %1893 = vset.pattern.permute.xlu0 1
  %1894 = vperm.xlu0 %1893, %v1789
  %v1895 = vpop.permute.xlu0 %1894
  %v1897 = vmul.f32 %v1863, %v1841
  %v1898 = vmul.f32 %v1867, %v1841
  %v1899 = vmul.f32 %v1871, %v1841
  %v1900 = vmul.f32 %v1875, %v1841
  %v1901 = vmul.f32 %v1879, %v1841
  %v1902 = vmul.f32 %v1883, %v1841
  %v1903 = vmul.f32 %v1887, %v1841
  %v1904 = vmul.f32 %v1891, %v1841
  %v1905 = vmul.f32 %v1895, %v1841
  %v1906 = vadd.f32 %v1763, %v1897
  %v1907 = vadd.f32 %v1764, %v1898
  %v1908 = vadd.f32 %v1765, %v1899
  %v1909 = vadd.f32 %v1766, %v1900
  %v1910 = vadd.f32 %v1767, %v1901
  %v1911 = vadd.f32 %v1768, %v1902
  %v1912 = vadd.f32 %v1769, %v1903
  %v1913 = vadd.f32 %v1770, %v1904
  %v1914 = vadd.f32 %v1771, %v1905
  %s1915 = scalar_lea.vmem %s0, 13
  %v1916 = vld [vmem:[%s1915] ss:$2 sm:$0xff]
  %s1917 = scalar_lea.vmem %s0, 29
  %v1918 = vld [vmem:[%s1917] ss:$2 sm:$0xff]
  %s1919 = scalar_lea.vmem %s0, 45
  %v1920 = vld [vmem:[%s1919] ss:$2 sm:$0xff]
  %s1921 = scalar_lea.vmem %s0, 61
  %v1922 = vld [vmem:[%s1921] ss:$2 sm:$0xff]
  %s1923 = scalar_lea.vmem %s0, 77
  %v1924 = vld [vmem:[%s1923] ss:$2 sm:$0xff]
  %s1925 = scalar_lea.vmem %s0, 93
  %v1926 = vld [vmem:[%s1925] ss:$2 sm:$0xff]
  %s1927 = scalar_lea.vmem %s0, 109
  %v1928 = vld [vmem:[%s1927] ss:$2 sm:$0xff]
  %s1929 = scalar_lea.vmem %s0, 125
  %v1930 = vld [vmem:[%s1929] ss:$2 sm:$0xff]
  %s1931 = scalar_lea.vmem %s0, 141
  %v1932 = vld [vmem:[%s1931] ss:$2 sm:$0x1]
  %s1933 = scalar_lea.vmem %s1, 13
  %v1934 = vld [vmem:[%s1933] sm:$0x1]
  %1936 = vset.pattern.permute.xlu0 0
  %1937 = vperm.xlu0 %1936, %v1916
  %v1938 = vpop.permute.xlu0 %1937
  %1941 = vset.pattern.permute.xlu0 0
  %1942 = vperm.xlu0 %1941, %v1918
  %v1943 = vpop.permute.xlu0 %1942
  %1946 = vset.pattern.permute.xlu0 0
  %1947 = vperm.xlu0 %1946, %v1920
  %v1948 = vpop.permute.xlu0 %1947
  %1951 = vset.pattern.permute.xlu0 0
  %1952 = vperm.xlu0 %1951, %v1922
  %v1953 = vpop.permute.xlu0 %1952
  %1956 = vset.pattern.permute.xlu0 0
  %1957 = vperm.xlu0 %1956, %v1924
  %v1958 = vpop.permute.xlu0 %1957
  %1961 = vset.pattern.permute.xlu0 0
  %1962 = vperm.xlu0 %1961, %v1926
  %v1963 = vpop.permute.xlu0 %1962
  %1966 = vset.pattern.permute.xlu0 0
  %1967 = vperm.xlu0 %1966, %v1928
  %v1968 = vpop.permute.xlu0 %1967
  %1971 = vset.pattern.permute.xlu0 0
  %1972 = vperm.xlu0 %1971, %v1930
  %v1973 = vpop.permute.xlu0 %1972
  %1976 = vset.pattern.permute.xlu0 0
  %1977 = vperm.xlu0 %1976, %v1932
  %v1978 = vpop.permute.xlu0 %1977
  %v1981 = vlaneseq
  %v1982 = vshrl.u32 %v1981, 7
  %v1983 = vsub.s32 0, %v1982
  %v1984 = vrot.slane %v1934, %v1983
  %v1986 = vmul.f32 %v1938, %v1984
  %v1987 = vmul.f32 %v1943, %v1984
  %v1988 = vmul.f32 %v1948, %v1984
  %v1989 = vmul.f32 %v1953, %v1984
  %v1990 = vmul.f32 %v1958, %v1984
  %v1991 = vmul.f32 %v1963, %v1984
  %v1992 = vmul.f32 %v1968, %v1984
  %v1993 = vmul.f32 %v1973, %v1984
  %v1994 = vmul.f32 %v1978, %v1984
  %v1995 = vadd.f32 %v1852, %v1986
  %v1996 = vadd.f32 %v1853, %v1987
  %v1997 = vadd.f32 %v1854, %v1988
  %v1998 = vadd.f32 %v1855, %v1989
  %v1999 = vadd.f32 %v1856, %v1990
  %v2000 = vadd.f32 %v1857, %v1991
  %v2001 = vadd.f32 %v1858, %v1992
  %v2002 = vadd.f32 %v1859, %v1993
  %v2003 = vadd.f32 %v1860, %v1994
  %2004 = vset.pattern.permute.xlu0 1
  %2005 = vperm.xlu0 %2004, %v1916
  %v2006 = vpop.permute.xlu0 %2005
  %2008 = vset.pattern.permute.xlu0 1
  %2009 = vperm.xlu0 %2008, %v1918
  %v2010 = vpop.permute.xlu0 %2009
  %2012 = vset.pattern.permute.xlu0 1
  %2013 = vperm.xlu0 %2012, %v1920
  %v2014 = vpop.permute.xlu0 %2013
  %2016 = vset.pattern.permute.xlu0 1
  %2017 = vperm.xlu0 %2016, %v1922
  %v2018 = vpop.permute.xlu0 %2017
  %2020 = vset.pattern.permute.xlu0 1
  %2021 = vperm.xlu0 %2020, %v1924
  %v2022 = vpop.permute.xlu0 %2021
  %2024 = vset.pattern.permute.xlu0 1
  %2025 = vperm.xlu0 %2024, %v1926
  %v2026 = vpop.permute.xlu0 %2025
  %2028 = vset.pattern.permute.xlu0 1
  %2029 = vperm.xlu0 %2028, %v1928
  %v2030 = vpop.permute.xlu0 %2029
  %2032 = vset.pattern.permute.xlu0 1
  %2033 = vperm.xlu0 %2032, %v1930
  %v2034 = vpop.permute.xlu0 %2033
  %2036 = vset.pattern.permute.xlu0 1
  %2037 = vperm.xlu0 %2036, %v1932
  %v2038 = vpop.permute.xlu0 %2037
  %v2040 = vmul.f32 %v2006, %v1984
  %v2041 = vmul.f32 %v2010, %v1984
  %v2042 = vmul.f32 %v2014, %v1984
  %v2043 = vmul.f32 %v2018, %v1984
  %v2044 = vmul.f32 %v2022, %v1984
  %v2045 = vmul.f32 %v2026, %v1984
  %v2046 = vmul.f32 %v2030, %v1984
  %v2047 = vmul.f32 %v2034, %v1984
  %v2048 = vmul.f32 %v2038, %v1984
  %v2049 = vadd.f32 %v1906, %v2040
  %v2050 = vadd.f32 %v1907, %v2041
  %v2051 = vadd.f32 %v1908, %v2042
  %v2052 = vadd.f32 %v1909, %v2043
  %v2053 = vadd.f32 %v1910, %v2044
  %v2054 = vadd.f32 %v1911, %v2045
  %v2055 = vadd.f32 %v1912, %v2046
  %v2056 = vadd.f32 %v1913, %v2047
  %v2057 = vadd.f32 %v1914, %v2048
  %s2058 = scalar_lea.vmem %s0, 14
  %v2059 = vld [vmem:[%s2058] ss:$2 sm:$0xff]
  %s2060 = scalar_lea.vmem %s0, 30
  %v2061 = vld [vmem:[%s2060] ss:$2 sm:$0xff]
  %s2062 = scalar_lea.vmem %s0, 46
  %v2063 = vld [vmem:[%s2062] ss:$2 sm:$0xff]
  %s2064 = scalar_lea.vmem %s0, 62
  %v2065 = vld [vmem:[%s2064] ss:$2 sm:$0xff]
  %s2066 = scalar_lea.vmem %s0, 78
  %v2067 = vld [vmem:[%s2066] ss:$2 sm:$0xff]
  %s2068 = scalar_lea.vmem %s0, 94
  %v2069 = vld [vmem:[%s2068] ss:$2 sm:$0xff]
  %s2070 = scalar_lea.vmem %s0, 110
  %v2071 = vld [vmem:[%s2070] ss:$2 sm:$0xff]
  %s2072 = scalar_lea.vmem %s0, 126
  %v2073 = vld [vmem:[%s2072] ss:$2 sm:$0xff]
  %s2074 = scalar_lea.vmem %s0, 142
  %v2075 = vld [vmem:[%s2074] ss:$2 sm:$0x1]
  %s2076 = scalar_lea.vmem %s1, 14
  %v2077 = vld [vmem:[%s2076] sm:$0x1]
  %2079 = vset.pattern.permute.xlu0 0
  %2080 = vperm.xlu0 %2079, %v2059
  %v2081 = vpop.permute.xlu0 %2080
  %2084 = vset.pattern.permute.xlu0 0
  %2085 = vperm.xlu0 %2084, %v2061
  %v2086 = vpop.permute.xlu0 %2085
  %2089 = vset.pattern.permute.xlu0 0
  %2090 = vperm.xlu0 %2089, %v2063
  %v2091 = vpop.permute.xlu0 %2090
  %2094 = vset.pattern.permute.xlu0 0
  %2095 = vperm.xlu0 %2094, %v2065
  %v2096 = vpop.permute.xlu0 %2095
  %2099 = vset.pattern.permute.xlu0 0
  %2100 = vperm.xlu0 %2099, %v2067
  %v2101 = vpop.permute.xlu0 %2100
  %2104 = vset.pattern.permute.xlu0 0
  %2105 = vperm.xlu0 %2104, %v2069
  %v2106 = vpop.permute.xlu0 %2105
  %2109 = vset.pattern.permute.xlu0 0
  %2110 = vperm.xlu0 %2109, %v2071
  %v2111 = vpop.permute.xlu0 %2110
  %2114 = vset.pattern.permute.xlu0 0
  %2115 = vperm.xlu0 %2114, %v2073
  %v2116 = vpop.permute.xlu0 %2115
  %2119 = vset.pattern.permute.xlu0 0
  %2120 = vperm.xlu0 %2119, %v2075
  %v2121 = vpop.permute.xlu0 %2120
  %v2124 = vlaneseq
  %v2125 = vshrl.u32 %v2124, 7
  %v2126 = vsub.s32 0, %v2125
  %v2127 = vrot.slane %v2077, %v2126
  %v2129 = vmul.f32 %v2081, %v2127
  %v2130 = vmul.f32 %v2086, %v2127
  %v2131 = vmul.f32 %v2091, %v2127
  %v2132 = vmul.f32 %v2096, %v2127
  %v2133 = vmul.f32 %v2101, %v2127
  %v2134 = vmul.f32 %v2106, %v2127
  %v2135 = vmul.f32 %v2111, %v2127
  %v2136 = vmul.f32 %v2116, %v2127
  %v2137 = vmul.f32 %v2121, %v2127
  %v2138 = vadd.f32 %v1995, %v2129
  %v2139 = vadd.f32 %v1996, %v2130
  %v2140 = vadd.f32 %v1997, %v2131
  %v2141 = vadd.f32 %v1998, %v2132
  %v2142 = vadd.f32 %v1999, %v2133
  %v2143 = vadd.f32 %v2000, %v2134
  %v2144 = vadd.f32 %v2001, %v2135
  %v2145 = vadd.f32 %v2002, %v2136
  %v2146 = vadd.f32 %v2003, %v2137
  %2147 = vset.pattern.permute.xlu0 1
  %2148 = vperm.xlu0 %2147, %v2059
  %v2149 = vpop.permute.xlu0 %2148
  %2151 = vset.pattern.permute.xlu0 1
  %2152 = vperm.xlu0 %2151, %v2061
  %v2153 = vpop.permute.xlu0 %2152
  %2155 = vset.pattern.permute.xlu0 1
  %2156 = vperm.xlu0 %2155, %v2063
  %v2157 = vpop.permute.xlu0 %2156
  %2159 = vset.pattern.permute.xlu0 1
  %2160 = vperm.xlu0 %2159, %v2065
  %v2161 = vpop.permute.xlu0 %2160
  %2163 = vset.pattern.permute.xlu0 1
  %2164 = vperm.xlu0 %2163, %v2067
  %v2165 = vpop.permute.xlu0 %2164
  %2167 = vset.pattern.permute.xlu0 1
  %2168 = vperm.xlu0 %2167, %v2069
  %v2169 = vpop.permute.xlu0 %2168
  %2171 = vset.pattern.permute.xlu0 1
  %2172 = vperm.xlu0 %2171, %v2071
  %v2173 = vpop.permute.xlu0 %2172
  %2175 = vset.pattern.permute.xlu0 1
  %2176 = vperm.xlu0 %2175, %v2073
  %v2177 = vpop.permute.xlu0 %2176
  %2179 = vset.pattern.permute.xlu0 1
  %2180 = vperm.xlu0 %2179, %v2075
  %v2181 = vpop.permute.xlu0 %2180
  %v2183 = vmul.f32 %v2149, %v2127
  %v2184 = vmul.f32 %v2153, %v2127
  %v2185 = vmul.f32 %v2157, %v2127
  %v2186 = vmul.f32 %v2161, %v2127
  %v2187 = vmul.f32 %v2165, %v2127
  %v2188 = vmul.f32 %v2169, %v2127
  %v2189 = vmul.f32 %v2173, %v2127
  %v2190 = vmul.f32 %v2177, %v2127
  %v2191 = vmul.f32 %v2181, %v2127
  %v2192 = vadd.f32 %v2049, %v2183
  %v2193 = vadd.f32 %v2050, %v2184
  %v2194 = vadd.f32 %v2051, %v2185
  %v2195 = vadd.f32 %v2052, %v2186
  %v2196 = vadd.f32 %v2053, %v2187
  %v2197 = vadd.f32 %v2054, %v2188
  %v2198 = vadd.f32 %v2055, %v2189
  %v2199 = vadd.f32 %v2056, %v2190
  %v2200 = vadd.f32 %v2057, %v2191
  %s2201 = scalar_lea.vmem %s0, 15
  %v2202 = vld [vmem:[%s2201] ss:$2 sm:$0xff]
  %s2203 = scalar_lea.vmem %s0, 31
  %v2204 = vld [vmem:[%s2203] ss:$2 sm:$0xff]
  %s2205 = scalar_lea.vmem %s0, 47
  %v2206 = vld [vmem:[%s2205] ss:$2 sm:$0xff]
  %s2207 = scalar_lea.vmem %s0, 63
  %v2208 = vld [vmem:[%s2207] ss:$2 sm:$0xff]
  %s2209 = scalar_lea.vmem %s0, 79
  %v2210 = vld [vmem:[%s2209] ss:$2 sm:$0xff]
  %s2211 = scalar_lea.vmem %s0, 95
  %v2212 = vld [vmem:[%s2211] ss:$2 sm:$0xff]
  %s2213 = scalar_lea.vmem %s0, 111
  %v2214 = vld [vmem:[%s2213] ss:$2 sm:$0xff]
  %s2215 = scalar_lea.vmem %s0, 127
  %v2216 = vld [vmem:[%s2215] ss:$2 sm:$0xff]
  %s2217 = scalar_lea.vmem %s0, 143
  %v2218 = vld [vmem:[%s2217] ss:$2 sm:$0x1]
  %s2219 = scalar_lea.vmem %s1, 15
  %v2220 = vld [vmem:[%s2219] sm:$0x1]
  %2222 = vset.pattern.permute.xlu0 0
  %2223 = vperm.xlu0 %2222, %v2202
  %v2224 = vpop.permute.xlu0 %2223
  %2227 = vset.pattern.permute.xlu0 0
  %2228 = vperm.xlu0 %2227, %v2204
  %v2229 = vpop.permute.xlu0 %2228
  %2232 = vset.pattern.permute.xlu0 0
  %2233 = vperm.xlu0 %2232, %v2206
  %v2234 = vpop.permute.xlu0 %2233
  %2237 = vset.pattern.permute.xlu0 0
  %2238 = vperm.xlu0 %2237, %v2208
  %v2239 = vpop.permute.xlu0 %2238
  %2242 = vset.pattern.permute.xlu0 0
  %2243 = vperm.xlu0 %2242, %v2210
  %v2244 = vpop.permute.xlu0 %2243
  %2247 = vset.pattern.permute.xlu0 0
  %2248 = vperm.xlu0 %2247, %v2212
  %v2249 = vpop.permute.xlu0 %2248
  %2252 = vset.pattern.permute.xlu0 0
  %2253 = vperm.xlu0 %2252, %v2214
  %v2254 = vpop.permute.xlu0 %2253
  %2257 = vset.pattern.permute.xlu0 0
  %2258 = vperm.xlu0 %2257, %v2216
  %v2259 = vpop.permute.xlu0 %2258
  %2262 = vset.pattern.permute.xlu0 0
  %2263 = vperm.xlu0 %2262, %v2218
  %v2264 = vpop.permute.xlu0 %2263
  %v2267 = vlaneseq
  %v2268 = vshrl.u32 %v2267, 7
  %v2269 = vsub.s32 0, %v2268
  %v2270 = vrot.slane %v2220, %v2269
  %v2272 = vmul.f32 %v2224, %v2270
  %v2273 = vmul.f32 %v2229, %v2270
  %v2274 = vmul.f32 %v2234, %v2270
  %v2275 = vmul.f32 %v2239, %v2270
  %v2276 = vmul.f32 %v2244, %v2270
  %v2277 = vmul.f32 %v2249, %v2270
  %v2278 = vmul.f32 %v2254, %v2270
  %v2279 = vmul.f32 %v2259, %v2270
  %v2280 = vmul.f32 %v2264, %v2270
  %v2281 = vadd.f32 %v2138, %v2272
  %v2282 = vadd.f32 %v2139, %v2273
  %v2283 = vadd.f32 %v2140, %v2274
  %v2284 = vadd.f32 %v2141, %v2275
  %v2285 = vadd.f32 %v2142, %v2276
  %v2286 = vadd.f32 %v2143, %v2277
  %v2287 = vadd.f32 %v2144, %v2278
  %v2288 = vadd.f32 %v2145, %v2279
  %v2289 = vadd.f32 %v2146, %v2280
  %2290 = vset.pattern.permute.xlu0 1
  %2291 = vperm.xlu0 %2290, %v2202
  %v2292 = vpop.permute.xlu0 %2291
  %2294 = vset.pattern.permute.xlu0 1
  %2295 = vperm.xlu0 %2294, %v2204
  %v2296 = vpop.permute.xlu0 %2295
  %2298 = vset.pattern.permute.xlu0 1
  %2299 = vperm.xlu0 %2298, %v2206
  %v2300 = vpop.permute.xlu0 %2299
  %2302 = vset.pattern.permute.xlu0 1
  %2303 = vperm.xlu0 %2302, %v2208
  %v2304 = vpop.permute.xlu0 %2303
  %2306 = vset.pattern.permute.xlu0 1
  %2307 = vperm.xlu0 %2306, %v2210
  %v2308 = vpop.permute.xlu0 %2307
  %2310 = vset.pattern.permute.xlu0 1
  %2311 = vperm.xlu0 %2310, %v2212
  %v2312 = vpop.permute.xlu0 %2311
  %2314 = vset.pattern.permute.xlu0 1
  %2315 = vperm.xlu0 %2314, %v2214
  %v2316 = vpop.permute.xlu0 %2315
  %2318 = vset.pattern.permute.xlu0 1
  %2319 = vperm.xlu0 %2318, %v2216
  %v2320 = vpop.permute.xlu0 %2319
  %2322 = vset.pattern.permute.xlu0 1
  %2323 = vperm.xlu0 %2322, %v2218
  %v2324 = vpop.permute.xlu0 %2323
  %v2326 = vmul.f32 %v2292, %v2270
  %v2327 = vmul.f32 %v2296, %v2270
  %v2328 = vmul.f32 %v2300, %v2270
  %v2329 = vmul.f32 %v2304, %v2270
  %v2330 = vmul.f32 %v2308, %v2270
  %v2331 = vmul.f32 %v2312, %v2270
  %v2332 = vmul.f32 %v2316, %v2270
  %v2333 = vmul.f32 %v2320, %v2270
  %v2334 = vmul.f32 %v2324, %v2270
  %v2335 = vadd.f32 %v2192, %v2326
  %v2336 = vadd.f32 %v2193, %v2327
  %v2337 = vadd.f32 %v2194, %v2328
  %v2338 = vadd.f32 %v2195, %v2329
  %v2339 = vadd.f32 %v2196, %v2330
  %v2340 = vadd.f32 %v2197, %v2331
  %v2341 = vadd.f32 %v2198, %v2332
  %v2342 = vadd.f32 %v2199, %v2333
  %v2343 = vadd.f32 %v2200, %v2334
  %v2344 = vld [vmem:[%s59] ss:$2 sm:$0xff]
  %v2345 = vld [vmem:[%s61] ss:$2 sm:$0xff]
  %v2346 = vld [vmem:[%s63] ss:$2 sm:$0xff]
  %v2347 = vld [vmem:[%s65] ss:$2 sm:$0xff]
  %v2348 = vld [vmem:[%s67] ss:$2 sm:$0xff]
  %v2349 = vld [vmem:[%s69] ss:$2 sm:$0xff]
  %v2350 = vld [vmem:[%s71] ss:$2 sm:$0xff]
  %v2351 = vld [vmem:[%s73] ss:$2 sm:$0xff]
  %s2352 = scalar_lea.vmem %s0, 144
  %v2353 = vld [vmem:[%s2352] ss:$2 sm:$0x1]
  %s2354 = scalar_lea.vmem %s1, 16
  %v2355 = vld [vmem:[%s2354] sm:$0x1]
  %2357 = vset.pattern.permute.xlu0 0
  %2358 = vperm.xlu0 %2357, %v2344
  %v2359 = vpop.permute.xlu0 %2358
  %2362 = vset.pattern.permute.xlu0 0
  %2363 = vperm.xlu0 %2362, %v2345
  %v2364 = vpop.permute.xlu0 %2363
  %2367 = vset.pattern.permute.xlu0 0
  %2368 = vperm.xlu0 %2367, %v2346
  %v2369 = vpop.permute.xlu0 %2368
  %2372 = vset.pattern.permute.xlu0 0
  %2373 = vperm.xlu0 %2372, %v2347
  %v2374 = vpop.permute.xlu0 %2373
  %2377 = vset.pattern.permute.xlu0 0
  %2378 = vperm.xlu0 %2377, %v2348
  %v2379 = vpop.permute.xlu0 %2378
  %2382 = vset.pattern.permute.xlu0 0
  %2383 = vperm.xlu0 %2382, %v2349
  %v2384 = vpop.permute.xlu0 %2383
  %2387 = vset.pattern.permute.xlu0 0
  %2388 = vperm.xlu0 %2387, %v2350
  %v2389 = vpop.permute.xlu0 %2388
  %2392 = vset.pattern.permute.xlu0 0
  %2393 = vperm.xlu0 %2392, %v2351
  %v2394 = vpop.permute.xlu0 %2393
  %2397 = vset.pattern.permute.xlu0 0
  %2398 = vperm.xlu0 %2397, %v2353
  %v2399 = vpop.permute.xlu0 %2398
  %v2402 = vlaneseq
  %v2403 = vshrl.u32 %v2402, 7
  %v2404 = vsub.s32 0, %v2403
  %v2405 = vrot.slane %v2355, %v2404
  %v2407 = vmul.f32 %v2359, %v2405
  %v2408 = vmul.f32 %v2364, %v2405
  %v2409 = vmul.f32 %v2369, %v2405
  %v2410 = vmul.f32 %v2374, %v2405
  %v2411 = vmul.f32 %v2379, %v2405
  %v2412 = vmul.f32 %v2384, %v2405
  %v2413 = vmul.f32 %v2389, %v2405
  %v2414 = vmul.f32 %v2394, %v2405
  %v2415 = vmul.f32 %v2399, %v2405
  %v2416 = vadd.f32 %v2281, %v2407
  %v2417 = vadd.f32 %v2282, %v2408
  %v2418 = vadd.f32 %v2283, %v2409
  %v2419 = vadd.f32 %v2284, %v2410
  %v2420 = vadd.f32 %v2285, %v2411
  %v2421 = vadd.f32 %v2286, %v2412
  %v2422 = vadd.f32 %v2287, %v2413
  %v2423 = vadd.f32 %v2288, %v2414
  %v2424 = vadd.f32 %v2289, %v2415
  %2425 = vset.pattern.permute.xlu0 1
  %2426 = vperm.xlu0 %2425, %v2344
  %v2427 = vpop.permute.xlu0 %2426
  %2429 = vset.pattern.permute.xlu0 1
  %2430 = vperm.xlu0 %2429, %v2345
  %v2431 = vpop.permute.xlu0 %2430
  %2433 = vset.pattern.permute.xlu0 1
  %2434 = vperm.xlu0 %2433, %v2346
  %v2435 = vpop.permute.xlu0 %2434
  %2437 = vset.pattern.permute.xlu0 1
  %2438 = vperm.xlu0 %2437, %v2347
  %v2439 = vpop.permute.xlu0 %2438
  %2441 = vset.pattern.permute.xlu0 1
  %2442 = vperm.xlu0 %2441, %v2348
  %v2443 = vpop.permute.xlu0 %2442
  %2445 = vset.pattern.permute.xlu0 1
  %2446 = vperm.xlu0 %2445, %v2349
  %v2447 = vpop.permute.xlu0 %2446
  %2449 = vset.pattern.permute.xlu0 1
  %2450 = vperm.xlu0 %2449, %v2350
  %v2451 = vpop.permute.xlu0 %2450
  %2453 = vset.pattern.permute.xlu0 1
  %2454 = vperm.xlu0 %2453, %v2351
  %v2455 = vpop.permute.xlu0 %2454
  %2457 = vset.pattern.permute.xlu0 1
  %2458 = vperm.xlu0 %2457, %v2353
  %v2459 = vpop.permute.xlu0 %2458
  %v2461 = vmul.f32 %v2427, %v2405
  %v2462 = vmul.f32 %v2431, %v2405
  %v2463 = vmul.f32 %v2435, %v2405
  %v2464 = vmul.f32 %v2439, %v2405
  %v2465 = vmul.f32 %v2443, %v2405
  %v2466 = vmul.f32 %v2447, %v2405
  %v2467 = vmul.f32 %v2451, %v2405
  %v2468 = vmul.f32 %v2455, %v2405
  %v2469 = vmul.f32 %v2459, %v2405
  %v2470 = vadd.f32 %v2335, %v2461
  %v2471 = vadd.f32 %v2336, %v2462
  %v2472 = vadd.f32 %v2337, %v2463
  %v2473 = vadd.f32 %v2338, %v2464
  %v2474 = vadd.f32 %v2339, %v2465
  %v2475 = vadd.f32 %v2340, %v2466
  %v2476 = vadd.f32 %v2341, %v2467
  %v2477 = vadd.f32 %v2342, %v2468
  %v2478 = vadd.f32 %v2343, %v2469
  %v2479 = vld [vmem:[%s201] ss:$2 sm:$0xff]
  %v2480 = vld [vmem:[%s203] ss:$2 sm:$0xff]
  %v2481 = vld [vmem:[%s205] ss:$2 sm:$0xff]
  %v2482 = vld [vmem:[%s207] ss:$2 sm:$0xff]
  %v2483 = vld [vmem:[%s209] ss:$2 sm:$0xff]
  %v2484 = vld [vmem:[%s211] ss:$2 sm:$0xff]
  %v2485 = vld [vmem:[%s213] ss:$2 sm:$0xff]
  %v2486 = vld [vmem:[%s215] ss:$2 sm:$0xff]
  %s2487 = scalar_lea.vmem %s0, 145
  %v2488 = vld [vmem:[%s2487] ss:$2 sm:$0x1]
  %s2489 = scalar_lea.vmem %s1, 17
  %v2490 = vld [vmem:[%s2489] sm:$0x1]
  %2492 = vset.pattern.permute.xlu0 0
  %2493 = vperm.xlu0 %2492, %v2479
  %v2494 = vpop.permute.xlu0 %2493
  %2497 = vset.pattern.permute.xlu0 0
  %2498 = vperm.xlu0 %2497, %v2480
  %v2499 = vpop.permute.xlu0 %2498
  %2502 = vset.pattern.permute.xlu0 0
  %2503 = vperm.xlu0 %2502, %v2481
  %v2504 = vpop.permute.xlu0 %2503
  %2507 = vset.pattern.permute.xlu0 0
  %2508 = vperm.xlu0 %2507, %v2482
  %v2509 = vpop.permute.xlu0 %2508
  %2512 = vset.pattern.permute.xlu0 0
  %2513 = vperm.xlu0 %2512, %v2483
  %v2514 = vpop.permute.xlu0 %2513
  %2517 = vset.pattern.permute.xlu0 0
  %2518 = vperm.xlu0 %2517, %v2484
  %v2519 = vpop.permute.xlu0 %2518
  %2522 = vset.pattern.permute.xlu0 0
  %2523 = vperm.xlu0 %2522, %v2485
  %v2524 = vpop.permute.xlu0 %2523
  %2527 = vset.pattern.permute.xlu0 0
  %2528 = vperm.xlu0 %2527, %v2486
  %v2529 = vpop.permute.xlu0 %2528
  %2532 = vset.pattern.permute.xlu0 0
  %2533 = vperm.xlu0 %2532, %v2488
  %v2534 = vpop.permute.xlu0 %2533
  %v2537 = vlaneseq
  %v2538 = vshrl.u32 %v2537, 7
  %v2539 = vsub.s32 0, %v2538
  %v2540 = vrot.slane %v2490, %v2539
  %v2542 = vmul.f32 %v2494, %v2540
  %v2543 = vmul.f32 %v2499, %v2540
  %v2544 = vmul.f32 %v2504, %v2540
  %v2545 = vmul.f32 %v2509, %v2540
  %v2546 = vmul.f32 %v2514, %v2540
  %v2547 = vmul.f32 %v2519, %v2540
  %v2548 = vmul.f32 %v2524, %v2540
  %v2549 = vmul.f32 %v2529, %v2540
  %v2550 = vmul.f32 %v2534, %v2540
  %v2551 = vadd.f32 %v2416, %v2542
  %v2552 = vadd.f32 %v2417, %v2543
  %v2553 = vadd.f32 %v2418, %v2544
  %v2554 = vadd.f32 %v2419, %v2545
  %v2555 = vadd.f32 %v2420, %v2546
  %v2556 = vadd.f32 %v2421, %v2547
  %v2557 = vadd.f32 %v2422, %v2548
  %v2558 = vadd.f32 %v2423, %v2549
  %v2559 = vadd.f32 %v2424, %v2550
  %2560 = vset.pattern.permute.xlu0 1
  %2561 = vperm.xlu0 %2560, %v2479
  %v2562 = vpop.permute.xlu0 %2561
  %2564 = vset.pattern.permute.xlu0 1
  %2565 = vperm.xlu0 %2564, %v2480
  %v2566 = vpop.permute.xlu0 %2565
  %2568 = vset.pattern.permute.xlu0 1
  %2569 = vperm.xlu0 %2568, %v2481
  %v2570 = vpop.permute.xlu0 %2569
  %2572 = vset.pattern.permute.xlu0 1
  %2573 = vperm.xlu0 %2572, %v2482
  %v2574 = vpop.permute.xlu0 %2573
  %2576 = vset.pattern.permute.xlu0 1
  %2577 = vperm.xlu0 %2576, %v2483
  %v2578 = vpop.permute.xlu0 %2577
  %2580 = vset.pattern.permute.xlu0 1
  %2581 = vperm.xlu0 %2580, %v2484
  %v2582 = vpop.permute.xlu0 %2581
  %2584 = vset.pattern.permute.xlu0 1
  %2585 = vperm.xlu0 %2584, %v2485
  %v2586 = vpop.permute.xlu0 %2585
  %2588 = vset.pattern.permute.xlu0 1
  %2589 = vperm.xlu0 %2588, %v2486
  %v2590 = vpop.permute.xlu0 %2589
  %2592 = vset.pattern.permute.xlu0 1
  %2593 = vperm.xlu0 %2592, %v2488
  %v2594 = vpop.permute.xlu0 %2593
  %v2596 = vmul.f32 %v2562, %v2540
  %v2597 = vmul.f32 %v2566, %v2540
  %v2598 = vmul.f32 %v2570, %v2540
  %v2599 = vmul.f32 %v2574, %v2540
  %v2600 = vmul.f32 %v2578, %v2540
  %v2601 = vmul.f32 %v2582, %v2540
  %v2602 = vmul.f32 %v2586, %v2540
  %v2603 = vmul.f32 %v2590, %v2540
  %v2604 = vmul.f32 %v2594, %v2540
  %v2605 = vadd.f32 %v2470, %v2596
  %v2606 = vadd.f32 %v2471, %v2597
  %v2607 = vadd.f32 %v2472, %v2598
  %v2608 = vadd.f32 %v2473, %v2599
  %v2609 = vadd.f32 %v2474, %v2600
  %v2610 = vadd.f32 %v2475, %v2601
  %v2611 = vadd.f32 %v2476, %v2602
  %v2612 = vadd.f32 %v2477, %v2603
  %v2613 = vadd.f32 %v2478, %v2604
  %v2614 = vld [vmem:[%s344] ss:$2 sm:$0xff]
  %v2615 = vld [vmem:[%s346] ss:$2 sm:$0xff]
  %v2616 = vld [vmem:[%s348] ss:$2 sm:$0xff]
  %v2617 = vld [vmem:[%s350] ss:$2 sm:$0xff]
  %v2618 = vld [vmem:[%s352] ss:$2 sm:$0xff]
  %v2619 = vld [vmem:[%s354] ss:$2 sm:$0xff]
  %v2620 = vld [vmem:[%s356] ss:$2 sm:$0xff]
  %v2621 = vld [vmem:[%s358] ss:$2 sm:$0xff]
  %s2622 = scalar_lea.vmem %s0, 146
  %v2623 = vld [vmem:[%s2622] ss:$2 sm:$0x1]
  %s2624 = scalar_lea.vmem %s1, 18
  %v2625 = vld [vmem:[%s2624] sm:$0x1]
  %2627 = vset.pattern.permute.xlu0 0
  %2628 = vperm.xlu0 %2627, %v2614
  %v2629 = vpop.permute.xlu0 %2628
  %2632 = vset.pattern.permute.xlu0 0
  %2633 = vperm.xlu0 %2632, %v2615
  %v2634 = vpop.permute.xlu0 %2633
  %2637 = vset.pattern.permute.xlu0 0
  %2638 = vperm.xlu0 %2637, %v2616
  %v2639 = vpop.permute.xlu0 %2638
  %2642 = vset.pattern.permute.xlu0 0
  %2643 = vperm.xlu0 %2642, %v2617
  %v2644 = vpop.permute.xlu0 %2643
  %2647 = vset.pattern.permute.xlu0 0
  %2648 = vperm.xlu0 %2647, %v2618
  %v2649 = vpop.permute.xlu0 %2648
  %2652 = vset.pattern.permute.xlu0 0
  %2653 = vperm.xlu0 %2652, %v2619
  %v2654 = vpop.permute.xlu0 %2653
  %2657 = vset.pattern.permute.xlu0 0
  %2658 = vperm.xlu0 %2657, %v2620
  %v2659 = vpop.permute.xlu0 %2658
  %2662 = vset.pattern.permute.xlu0 0
  %2663 = vperm.xlu0 %2662, %v2621
  %v2664 = vpop.permute.xlu0 %2663
  %2667 = vset.pattern.permute.xlu0 0
  %2668 = vperm.xlu0 %2667, %v2623
  %v2669 = vpop.permute.xlu0 %2668
  %v2672 = vlaneseq
  %v2673 = vshrl.u32 %v2672, 7
  %v2674 = vsub.s32 0, %v2673
  %v2675 = vrot.slane %v2625, %v2674
  %v2677 = vmul.f32 %v2629, %v2675
  %v2678 = vmul.f32 %v2634, %v2675
  %v2679 = vmul.f32 %v2639, %v2675
  %v2680 = vmul.f32 %v2644, %v2675
  %v2681 = vmul.f32 %v2649, %v2675
  %v2682 = vmul.f32 %v2654, %v2675
  %v2683 = vmul.f32 %v2659, %v2675
  %v2684 = vmul.f32 %v2664, %v2675
  %v2685 = vmul.f32 %v2669, %v2675
  %v2686 = vadd.f32 %v2551, %v2677
  %v2687 = vadd.f32 %v2552, %v2678
  %v2688 = vadd.f32 %v2553, %v2679
  %v2689 = vadd.f32 %v2554, %v2680
  %v2690 = vadd.f32 %v2555, %v2681
  %v2691 = vadd.f32 %v2556, %v2682
  %v2692 = vadd.f32 %v2557, %v2683
  %v2693 = vadd.f32 %v2558, %v2684
  %v2694 = vadd.f32 %v2559, %v2685
  %2695 = vset.pattern.permute.xlu0 1
  %2696 = vperm.xlu0 %2695, %v2614
  %v2697 = vpop.permute.xlu0 %2696
  %2699 = vset.pattern.permute.xlu0 1
  %2700 = vperm.xlu0 %2699, %v2615
  %v2701 = vpop.permute.xlu0 %2700
  %2703 = vset.pattern.permute.xlu0 1
  %2704 = vperm.xlu0 %2703, %v2616
  %v2705 = vpop.permute.xlu0 %2704
  %2707 = vset.pattern.permute.xlu0 1
  %2708 = vperm.xlu0 %2707, %v2617
  %v2709 = vpop.permute.xlu0 %2708
  %2711 = vset.pattern.permute.xlu0 1
  %2712 = vperm.xlu0 %2711, %v2618
  %v2713 = vpop.permute.xlu0 %2712
  %2715 = vset.pattern.permute.xlu0 1
  %2716 = vperm.xlu0 %2715, %v2619
  %v2717 = vpop.permute.xlu0 %2716
  %2719 = vset.pattern.permute.xlu0 1
  %2720 = vperm.xlu0 %2719, %v2620
  %v2721 = vpop.permute.xlu0 %2720
  %2723 = vset.pattern.permute.xlu0 1
  %2724 = vperm.xlu0 %2723, %v2621
  %v2725 = vpop.permute.xlu0 %2724
  %2727 = vset.pattern.permute.xlu0 1
  %2728 = vperm.xlu0 %2727, %v2623
  %v2729 = vpop.permute.xlu0 %2728
  %v2731 = vmul.f32 %v2697, %v2675
  %v2732 = vmul.f32 %v2701, %v2675
  %v2733 = vmul.f32 %v2705, %v2675
  %v2734 = vmul.f32 %v2709, %v2675
  %v2735 = vmul.f32 %v2713, %v2675
  %v2736 = vmul.f32 %v2717, %v2675
  %v2737 = vmul.f32 %v2721, %v2675
  %v2738 = vmul.f32 %v2725, %v2675
  %v2739 = vmul.f32 %v2729, %v2675
  %v2740 = vadd.f32 %v2605, %v2731
  %v2741 = vadd.f32 %v2606, %v2732
  %v2742 = vadd.f32 %v2607, %v2733
  %v2743 = vadd.f32 %v2608, %v2734
  %v2744 = vadd.f32 %v2609, %v2735
  %v2745 = vadd.f32 %v2610, %v2736
  %v2746 = vadd.f32 %v2611, %v2737
  %v2747 = vadd.f32 %v2612, %v2738
  %v2748 = vadd.f32 %v2613, %v2739
  %v2749 = vld [vmem:[%s487] ss:$2 sm:$0xff]
  %v2750 = vld [vmem:[%s489] ss:$2 sm:$0xff]
  %v2751 = vld [vmem:[%s491] ss:$2 sm:$0xff]
  %v2752 = vld [vmem:[%s493] ss:$2 sm:$0xff]
  %v2753 = vld [vmem:[%s495] ss:$2 sm:$0xff]
  %v2754 = vld [vmem:[%s497] ss:$2 sm:$0xff]
  %v2755 = vld [vmem:[%s499] ss:$2 sm:$0xff]
  %v2756 = vld [vmem:[%s501] ss:$2 sm:$0xff]
  %s2757 = scalar_lea.vmem %s0, 147
  %v2758 = vld [vmem:[%s2757] ss:$2 sm:$0x1]
  %s2759 = scalar_lea.vmem %s1, 19
  %v2760 = vld [vmem:[%s2759] sm:$0x1]
  %2762 = vset.pattern.permute.xlu0 0
  %2763 = vperm.xlu0 %2762, %v2749
  %v2764 = vpop.permute.xlu0 %2763
  %2767 = vset.pattern.permute.xlu0 0
  %2768 = vperm.xlu0 %2767, %v2750
  %v2769 = vpop.permute.xlu0 %2768
  %2772 = vset.pattern.permute.xlu0 0
  %2773 = vperm.xlu0 %2772, %v2751
  %v2774 = vpop.permute.xlu0 %2773
  %2777 = vset.pattern.permute.xlu0 0
  %2778 = vperm.xlu0 %2777, %v2752
  %v2779 = vpop.permute.xlu0 %2778
  %2782 = vset.pattern.permute.xlu0 0
  %2783 = vperm.xlu0 %2782, %v2753
  %v2784 = vpop.permute.xlu0 %2783
  %2787 = vset.pattern.permute.xlu0 0
  %2788 = vperm.xlu0 %2787, %v2754
  %v2789 = vpop.permute.xlu0 %2788
  %2792 = vset.pattern.permute.xlu0 0
  %2793 = vperm.xlu0 %2792, %v2755
  %v2794 = vpop.permute.xlu0 %2793
  %2797 = vset.pattern.permute.xlu0 0
  %2798 = vperm.xlu0 %2797, %v2756
  %v2799 = vpop.permute.xlu0 %2798
  %2802 = vset.pattern.permute.xlu0 0
  %2803 = vperm.xlu0 %2802, %v2758
  %v2804 = vpop.permute.xlu0 %2803
  %v2807 = vlaneseq
  %v2808 = vshrl.u32 %v2807, 7
  %v2809 = vsub.s32 0, %v2808
  %v2810 = vrot.slane %v2760, %v2809
  %v2812 = vmul.f32 %v2764, %v2810
  %v2813 = vmul.f32 %v2769, %v2810
  %v2814 = vmul.f32 %v2774, %v2810
  %v2815 = vmul.f32 %v2779, %v2810
  %v2816 = vmul.f32 %v2784, %v2810
  %v2817 = vmul.f32 %v2789, %v2810
  %v2818 = vmul.f32 %v2794, %v2810
  %v2819 = vmul.f32 %v2799, %v2810
  %v2820 = vmul.f32 %v2804, %v2810
  %v2821 = vadd.f32 %v2686, %v2812
  %v2822 = vadd.f32 %v2687, %v2813
  %v2823 = vadd.f32 %v2688, %v2814
  %v2824 = vadd.f32 %v2689, %v2815
  %v2825 = vadd.f32 %v2690, %v2816
  %v2826 = vadd.f32 %v2691, %v2817
  %v2827 = vadd.f32 %v2692, %v2818
  %v2828 = vadd.f32 %v2693, %v2819
  %v2829 = vadd.f32 %v2694, %v2820
  %2830 = vset.pattern.permute.xlu0 1
  %2831 = vperm.xlu0 %2830, %v2749
  %v2832 = vpop.permute.xlu0 %2831
  %2834 = vset.pattern.permute.xlu0 1
  %2835 = vperm.xlu0 %2834, %v2750
  %v2836 = vpop.permute.xlu0 %2835
  %2838 = vset.pattern.permute.xlu0 1
  %2839 = vperm.xlu0 %2838, %v2751
  %v2840 = vpop.permute.xlu0 %2839
  %2842 = vset.pattern.permute.xlu0 1
  %2843 = vperm.xlu0 %2842, %v2752
  %v2844 = vpop.permute.xlu0 %2843
  %2846 = vset.pattern.permute.xlu0 1
  %2847 = vperm.xlu0 %2846, %v2753
  %v2848 = vpop.permute.xlu0 %2847
  %2850 = vset.pattern.permute.xlu0 1
  %2851 = vperm.xlu0 %2850, %v2754
  %v2852 = vpop.permute.xlu0 %2851
  %2854 = vset.pattern.permute.xlu0 1
  %2855 = vperm.xlu0 %2854, %v2755
  %v2856 = vpop.permute.xlu0 %2855
  %2858 = vset.pattern.permute.xlu0 1
  %2859 = vperm.xlu0 %2858, %v2756
  %v2860 = vpop.permute.xlu0 %2859
  %2862 = vset.pattern.permute.xlu0 1
  %2863 = vperm.xlu0 %2862, %v2758
  %v2864 = vpop.permute.xlu0 %2863
  %v2866 = vmul.f32 %v2832, %v2810
  %v2867 = vmul.f32 %v2836, %v2810
  %v2868 = vmul.f32 %v2840, %v2810
  %v2869 = vmul.f32 %v2844, %v2810
  %v2870 = vmul.f32 %v2848, %v2810
  %v2871 = vmul.f32 %v2852, %v2810
  %v2872 = vmul.f32 %v2856, %v2810
  %v2873 = vmul.f32 %v2860, %v2810
  %v2874 = vmul.f32 %v2864, %v2810
  %v2875 = vadd.f32 %v2740, %v2866
  %v2876 = vadd.f32 %v2741, %v2867
  %v2877 = vadd.f32 %v2742, %v2868
  %v2878 = vadd.f32 %v2743, %v2869
  %v2879 = vadd.f32 %v2744, %v2870
  %v2880 = vadd.f32 %v2745, %v2871
  %v2881 = vadd.f32 %v2746, %v2872
  %v2882 = vadd.f32 %v2747, %v2873
  %v2883 = vadd.f32 %v2748, %v2874
  %v2884 = vld [vmem:[%s630] ss:$2 sm:$0xff]
  %v2885 = vld [vmem:[%s632] ss:$2 sm:$0xff]
  %v2886 = vld [vmem:[%s634] ss:$2 sm:$0xff]
  %v2887 = vld [vmem:[%s636] ss:$2 sm:$0xff]
  %v2888 = vld [vmem:[%s638] ss:$2 sm:$0xff]
  %v2889 = vld [vmem:[%s640] ss:$2 sm:$0xff]
  %v2890 = vld [vmem:[%s642] ss:$2 sm:$0xff]
  %v2891 = vld [vmem:[%s644] ss:$2 sm:$0xff]
  %s2892 = scalar_lea.vmem %s0, 148
  %v2893 = vld [vmem:[%s2892] ss:$2 sm:$0x1]
  %s2894 = scalar_lea.vmem %s1, 20
  %v2895 = vld [vmem:[%s2894] sm:$0x1]
  %2897 = vset.pattern.permute.xlu0 0
  %2898 = vperm.xlu0 %2897, %v2884
  %v2899 = vpop.permute.xlu0 %2898
  %2902 = vset.pattern.permute.xlu0 0
  %2903 = vperm.xlu0 %2902, %v2885
  %v2904 = vpop.permute.xlu0 %2903
  %2907 = vset.pattern.permute.xlu0 0
  %2908 = vperm.xlu0 %2907, %v2886
  %v2909 = vpop.permute.xlu0 %2908
  %2912 = vset.pattern.permute.xlu0 0
  %2913 = vperm.xlu0 %2912, %v2887
  %v2914 = vpop.permute.xlu0 %2913
  %2917 = vset.pattern.permute.xlu0 0
  %2918 = vperm.xlu0 %2917, %v2888
  %v2919 = vpop.permute.xlu0 %2918
  %2922 = vset.pattern.permute.xlu0 0
  %2923 = vperm.xlu0 %2922, %v2889
  %v2924 = vpop.permute.xlu0 %2923
  %2927 = vset.pattern.permute.xlu0 0
  %2928 = vperm.xlu0 %2927, %v2890
  %v2929 = vpop.permute.xlu0 %2928
  %2932 = vset.pattern.permute.xlu0 0
  %2933 = vperm.xlu0 %2932, %v2891
  %v2934 = vpop.permute.xlu0 %2933
  %2937 = vset.pattern.permute.xlu0 0
  %2938 = vperm.xlu0 %2937, %v2893
  %v2939 = vpop.permute.xlu0 %2938
  %v2942 = vlaneseq
  %v2943 = vshrl.u32 %v2942, 7
  %v2944 = vsub.s32 0, %v2943
  %v2945 = vrot.slane %v2895, %v2944
  %v2947 = vmul.f32 %v2899, %v2945
  %v2948 = vmul.f32 %v2904, %v2945
  %v2949 = vmul.f32 %v2909, %v2945
  %v2950 = vmul.f32 %v2914, %v2945
  %v2951 = vmul.f32 %v2919, %v2945
  %v2952 = vmul.f32 %v2924, %v2945
  %v2953 = vmul.f32 %v2929, %v2945
  %v2954 = vmul.f32 %v2934, %v2945
  %v2955 = vmul.f32 %v2939, %v2945
  %v2956 = vadd.f32 %v2821, %v2947
  %v2957 = vadd.f32 %v2822, %v2948
  %v2958 = vadd.f32 %v2823, %v2949
  %v2959 = vadd.f32 %v2824, %v2950
  %v2960 = vadd.f32 %v2825, %v2951
  %v2961 = vadd.f32 %v2826, %v2952
  %v2962 = vadd.f32 %v2827, %v2953
  %v2963 = vadd.f32 %v2828, %v2954
  %v2964 = vadd.f32 %v2829, %v2955
  %2965 = vset.pattern.permute.xlu0 1
  %2966 = vperm.xlu0 %2965, %v2884
  %v2967 = vpop.permute.xlu0 %2966
  %2969 = vset.pattern.permute.xlu0 1
  %2970 = vperm.xlu0 %2969, %v2885
  %v2971 = vpop.permute.xlu0 %2970
  %2973 = vset.pattern.permute.xlu0 1
  %2974 = vperm.xlu0 %2973, %v2886
  %v2975 = vpop.permute.xlu0 %2974
  %2977 = vset.pattern.permute.xlu0 1
  %2978 = vperm.xlu0 %2977, %v2887
  %v2979 = vpop.permute.xlu0 %2978
  %2981 = vset.pattern.permute.xlu0 1
  %2982 = vperm.xlu0 %2981, %v2888
  %v2983 = vpop.permute.xlu0 %2982
  %2985 = vset.pattern.permute.xlu0 1
  %2986 = vperm.xlu0 %2985, %v2889
  %v2987 = vpop.permute.xlu0 %2986
  %2989 = vset.pattern.permute.xlu0 1
  %2990 = vperm.xlu0 %2989, %v2890
  %v2991 = vpop.permute.xlu0 %2990
  %2993 = vset.pattern.permute.xlu0 1
  %2994 = vperm.xlu0 %2993, %v2891
  %v2995 = vpop.permute.xlu0 %2994
  %2997 = vset.pattern.permute.xlu0 1
  %2998 = vperm.xlu0 %2997, %v2893
  %v2999 = vpop.permute.xlu0 %2998
  %v3001 = vmul.f32 %v2967, %v2945
  %v3002 = vmul.f32 %v2971, %v2945
  %v3003 = vmul.f32 %v2975, %v2945
  %v3004 = vmul.f32 %v2979, %v2945
  %v3005 = vmul.f32 %v2983, %v2945
  %v3006 = vmul.f32 %v2987, %v2945
  %v3007 = vmul.f32 %v2991, %v2945
  %v3008 = vmul.f32 %v2995, %v2945
  %v3009 = vmul.f32 %v2999, %v2945
  %v3010 = vadd.f32 %v2875, %v3001
  %v3011 = vadd.f32 %v2876, %v3002
  %v3012 = vadd.f32 %v2877, %v3003
  %v3013 = vadd.f32 %v2878, %v3004
  %v3014 = vadd.f32 %v2879, %v3005
  %v3015 = vadd.f32 %v2880, %v3006
  %v3016 = vadd.f32 %v2881, %v3007
  %v3017 = vadd.f32 %v2882, %v3008
  %v3018 = vadd.f32 %v2883, %v3009
  %v3019 = vld [vmem:[%s773] ss:$2 sm:$0xff]
  %v3020 = vld [vmem:[%s775] ss:$2 sm:$0xff]
  %v3021 = vld [vmem:[%s777] ss:$2 sm:$0xff]
  %v3022 = vld [vmem:[%s779] ss:$2 sm:$0xff]
  %v3023 = vld [vmem:[%s781] ss:$2 sm:$0xff]
  %v3024 = vld [vmem:[%s783] ss:$2 sm:$0xff]
  %v3025 = vld [vmem:[%s785] ss:$2 sm:$0xff]
  %v3026 = vld [vmem:[%s787] ss:$2 sm:$0xff]
  %s3027 = scalar_lea.vmem %s0, 149
  %v3028 = vld [vmem:[%s3027] ss:$2 sm:$0x1]
  %s3029 = scalar_lea.vmem %s1, 21
  %v3030 = vld [vmem:[%s3029] sm:$0x1]
  %3032 = vset.pattern.permute.xlu0 0
  %3033 = vperm.xlu0 %3032, %v3019
  %v3034 = vpop.permute.xlu0 %3033
  %3037 = vset.pattern.permute.xlu0 0
  %3038 = vperm.xlu0 %3037, %v3020
  %v3039 = vpop.permute.xlu0 %3038
  %3042 = vset.pattern.permute.xlu0 0
  %3043 = vperm.xlu0 %3042, %v3021
  %v3044 = vpop.permute.xlu0 %3043
  %3047 = vset.pattern.permute.xlu0 0
  %3048 = vperm.xlu0 %3047, %v3022
  %v3049 = vpop.permute.xlu0 %3048
  %3052 = vset.pattern.permute.xlu0 0
  %3053 = vperm.xlu0 %3052, %v3023
  %v3054 = vpop.permute.xlu0 %3053
  %3057 = vset.pattern.permute.xlu0 0
  %3058 = vperm.xlu0 %3057, %v3024
  %v3059 = vpop.permute.xlu0 %3058
  %3062 = vset.pattern.permute.xlu0 0
  %3063 = vperm.xlu0 %3062, %v3025
  %v3064 = vpop.permute.xlu0 %3063
  %3067 = vset.pattern.permute.xlu0 0
  %3068 = vperm.xlu0 %3067, %v3026
  %v3069 = vpop.permute.xlu0 %3068
  %3072 = vset.pattern.permute.xlu0 0
  %3073 = vperm.xlu0 %3072, %v3028
  %v3074 = vpop.permute.xlu0 %3073
  %v3077 = vlaneseq
  %v3078 = vshrl.u32 %v3077, 7
  %v3079 = vsub.s32 0, %v3078
  %v3080 = vrot.slane %v3030, %v3079
  %v3082 = vmul.f32 %v3034, %v3080
  %v3083 = vmul.f32 %v3039, %v3080
  %v3084 = vmul.f32 %v3044, %v3080
  %v3085 = vmul.f32 %v3049, %v3080
  %v3086 = vmul.f32 %v3054, %v3080
  %v3087 = vmul.f32 %v3059, %v3080
  %v3088 = vmul.f32 %v3064, %v3080
  %v3089 = vmul.f32 %v3069, %v3080
  %v3090 = vmul.f32 %v3074, %v3080
  %v3091 = vadd.f32 %v2956, %v3082
  %v3092 = vadd.f32 %v2957, %v3083
  %v3093 = vadd.f32 %v2958, %v3084
  %v3094 = vadd.f32 %v2959, %v3085
  %v3095 = vadd.f32 %v2960, %v3086
  %v3096 = vadd.f32 %v2961, %v3087
  %v3097 = vadd.f32 %v2962, %v3088
  %v3098 = vadd.f32 %v2963, %v3089
  %v3099 = vadd.f32 %v2964, %v3090
  %3100 = vset.pattern.permute.xlu0 1
  %3101 = vperm.xlu0 %3100, %v3019
  %v3102 = vpop.permute.xlu0 %3101
  %3104 = vset.pattern.permute.xlu0 1
  %3105 = vperm.xlu0 %3104, %v3020
  %v3106 = vpop.permute.xlu0 %3105
  %3108 = vset.pattern.permute.xlu0 1
  %3109 = vperm.xlu0 %3108, %v3021
  %v3110 = vpop.permute.xlu0 %3109
  %3112 = vset.pattern.permute.xlu0 1
  %3113 = vperm.xlu0 %3112, %v3022
  %v3114 = vpop.permute.xlu0 %3113
  %3116 = vset.pattern.permute.xlu0 1
  %3117 = vperm.xlu0 %3116, %v3023
  %v3118 = vpop.permute.xlu0 %3117
  %3120 = vset.pattern.permute.xlu0 1
  %3121 = vperm.xlu0 %3120, %v3024
  %v3122 = vpop.permute.xlu0 %3121
  %3124 = vset.pattern.permute.xlu0 1
  %3125 = vperm.xlu0 %3124, %v3025
  %v3126 = vpop.permute.xlu0 %3125
  %3128 = vset.pattern.permute.xlu0 1
  %3129 = vperm.xlu0 %3128, %v3026
  %v3130 = vpop.permute.xlu0 %3129
  %3132 = vset.pattern.permute.xlu0 1
  %3133 = vperm.xlu0 %3132, %v3028
  %v3134 = vpop.permute.xlu0 %3133
  %v3136 = vmul.f32 %v3102, %v3080
  %v3137 = vmul.f32 %v3106, %v3080
  %v3138 = vmul.f32 %v3110, %v3080
  %v3139 = vmul.f32 %v3114, %v3080
  %v3140 = vmul.f32 %v3118, %v3080
  %v3141 = vmul.f32 %v3122, %v3080
  %v3142 = vmul.f32 %v3126, %v3080
  %v3143 = vmul.f32 %v3130, %v3080
  %v3144 = vmul.f32 %v3134, %v3080
  %v3145 = vadd.f32 %v3010, %v3136
  %v3146 = vadd.f32 %v3011, %v3137
  %v3147 = vadd.f32 %v3012, %v3138
  %v3148 = vadd.f32 %v3013, %v3139
  %v3149 = vadd.f32 %v3014, %v3140
  %v3150 = vadd.f32 %v3015, %v3141
  %v3151 = vadd.f32 %v3016, %v3142
  %v3152 = vadd.f32 %v3017, %v3143
  %v3153 = vadd.f32 %v3018, %v3144
  %v3154 = vld [vmem:[%s916] ss:$2 sm:$0xff]
  %v3155 = vld [vmem:[%s918] ss:$2 sm:$0xff]
  %v3156 = vld [vmem:[%s920] ss:$2 sm:$0xff]
  %v3157 = vld [vmem:[%s922] ss:$2 sm:$0xff]
  %v3158 = vld [vmem:[%s924] ss:$2 sm:$0xff]
  %v3159 = vld [vmem:[%s926] ss:$2 sm:$0xff]
  %v3160 = vld [vmem:[%s928] ss:$2 sm:$0xff]
  %v3161 = vld [vmem:[%s930] ss:$2 sm:$0xff]
  %s3162 = scalar_lea.vmem %s0, 150
  %v3163 = vld [vmem:[%s3162] ss:$2 sm:$0x1]
  %s3164 = scalar_lea.vmem %s1, 22
  %v3165 = vld [vmem:[%s3164] sm:$0x1]
  %3167 = vset.pattern.permute.xlu0 0
  %3168 = vperm.xlu0 %3167, %v3154
  %v3169 = vpop.permute.xlu0 %3168
  %3172 = vset.pattern.permute.xlu0 0
  %3173 = vperm.xlu0 %3172, %v3155
  %v3174 = vpop.permute.xlu0 %3173
  %3177 = vset.pattern.permute.xlu0 0
  %3178 = vperm.xlu0 %3177, %v3156
  %v3179 = vpop.permute.xlu0 %3178
  %3182 = vset.pattern.permute.xlu0 0
  %3183 = vperm.xlu0 %3182, %v3157
  %v3184 = vpop.permute.xlu0 %3183
  %3187 = vset.pattern.permute.xlu0 0
  %3188 = vperm.xlu0 %3187, %v3158
  %v3189 = vpop.permute.xlu0 %3188
  %3192 = vset.pattern.permute.xlu0 0
  %3193 = vperm.xlu0 %3192, %v3159
  %v3194 = vpop.permute.xlu0 %3193
  %3197 = vset.pattern.permute.xlu0 0
  %3198 = vperm.xlu0 %3197, %v3160
  %v3199 = vpop.permute.xlu0 %3198
  %3202 = vset.pattern.permute.xlu0 0
  %3203 = vperm.xlu0 %3202, %v3161
  %v3204 = vpop.permute.xlu0 %3203
  %3207 = vset.pattern.permute.xlu0 0
  %3208 = vperm.xlu0 %3207, %v3163
  %v3209 = vpop.permute.xlu0 %3208
  %v3212 = vlaneseq
  %v3213 = vshrl.u32 %v3212, 7
  %v3214 = vsub.s32 0, %v3213
  %v3215 = vrot.slane %v3165, %v3214
  %v3217 = vmul.f32 %v3169, %v3215
  %v3218 = vmul.f32 %v3174, %v3215
  %v3219 = vmul.f32 %v3179, %v3215
  %v3220 = vmul.f32 %v3184, %v3215
  %v3221 = vmul.f32 %v3189, %v3215
  %v3222 = vmul.f32 %v3194, %v3215
  %v3223 = vmul.f32 %v3199, %v3215
  %v3224 = vmul.f32 %v3204, %v3215
  %v3225 = vmul.f32 %v3209, %v3215
  %v3226 = vadd.f32 %v3091, %v3217
  %v3227 = vadd.f32 %v3092, %v3218
  %v3228 = vadd.f32 %v3093, %v3219
  %v3229 = vadd.f32 %v3094, %v3220
  %v3230 = vadd.f32 %v3095, %v3221
  %v3231 = vadd.f32 %v3096, %v3222
  %v3232 = vadd.f32 %v3097, %v3223
  %v3233 = vadd.f32 %v3098, %v3224
  %v3234 = vadd.f32 %v3099, %v3225
  %3235 = vset.pattern.permute.xlu0 1
  %3236 = vperm.xlu0 %3235, %v3154
  %v3237 = vpop.permute.xlu0 %3236
  %3239 = vset.pattern.permute.xlu0 1
  %3240 = vperm.xlu0 %3239, %v3155
  %v3241 = vpop.permute.xlu0 %3240
  %3243 = vset.pattern.permute.xlu0 1
  %3244 = vperm.xlu0 %3243, %v3156
  %v3245 = vpop.permute.xlu0 %3244
  %3247 = vset.pattern.permute.xlu0 1
  %3248 = vperm.xlu0 %3247, %v3157
  %v3249 = vpop.permute.xlu0 %3248
  %3251 = vset.pattern.permute.xlu0 1
  %3252 = vperm.xlu0 %3251, %v3158
  %v3253 = vpop.permute.xlu0 %3252
  %3255 = vset.pattern.permute.xlu0 1
  %3256 = vperm.xlu0 %3255, %v3159
  %v3257 = vpop.permute.xlu0 %3256
  %3259 = vset.pattern.permute.xlu0 1
  %3260 = vperm.xlu0 %3259, %v3160
  %v3261 = vpop.permute.xlu0 %3260
  %3263 = vset.pattern.permute.xlu0 1
  %3264 = vperm.xlu0 %3263, %v3161
  %v3265 = vpop.permute.xlu0 %3264
  %3267 = vset.pattern.permute.xlu0 1
  %3268 = vperm.xlu0 %3267, %v3163
  %v3269 = vpop.permute.xlu0 %3268
  %v3271 = vmul.f32 %v3237, %v3215
  %v3272 = vmul.f32 %v3241, %v3215
  %v3273 = vmul.f32 %v3245, %v3215
  %v3274 = vmul.f32 %v3249, %v3215
  %v3275 = vmul.f32 %v3253, %v3215
  %v3276 = vmul.f32 %v3257, %v3215
  %v3277 = vmul.f32 %v3261, %v3215
  %v3278 = vmul.f32 %v3265, %v3215
  %v3279 = vmul.f32 %v3269, %v3215
  %v3280 = vadd.f32 %v3145, %v3271
  %v3281 = vadd.f32 %v3146, %v3272
  %v3282 = vadd.f32 %v3147, %v3273
  %v3283 = vadd.f32 %v3148, %v3274
  %v3284 = vadd.f32 %v3149, %v3275
  %v3285 = vadd.f32 %v3150, %v3276
  %v3286 = vadd.f32 %v3151, %v3277
  %v3287 = vadd.f32 %v3152, %v3278
  %v3288 = vadd.f32 %v3153, %v3279
  %v3289 = vld [vmem:[%s1059] ss:$2 sm:$0xff]
  %v3290 = vld [vmem:[%s1061] ss:$2 sm:$0xff]
  %v3291 = vld [vmem:[%s1063] ss:$2 sm:$0xff]
  %v3292 = vld [vmem:[%s1065] ss:$2 sm:$0xff]
  %v3293 = vld [vmem:[%s1067] ss:$2 sm:$0xff]
  %v3294 = vld [vmem:[%s1069] ss:$2 sm:$0xff]
  %v3295 = vld [vmem:[%s1071] ss:$2 sm:$0xff]
  %v3296 = vld [vmem:[%s1073] ss:$2 sm:$0xff]
  %s3297 = scalar_lea.vmem %s0, 151
  %v3298 = vld [vmem:[%s3297] ss:$2 sm:$0x1]
  %s3299 = scalar_lea.vmem %s1, 23
  %v3300 = vld [vmem:[%s3299] sm:$0x1]
  %3302 = vset.pattern.permute.xlu0 0
  %3303 = vperm.xlu0 %3302, %v3289
  %v3304 = vpop.permute.xlu0 %3303
  %3307 = vset.pattern.permute.xlu0 0
  %3308 = vperm.xlu0 %3307, %v3290
  %v3309 = vpop.permute.xlu0 %3308
  %3312 = vset.pattern.permute.xlu0 0
  %3313 = vperm.xlu0 %3312, %v3291
  %v3314 = vpop.permute.xlu0 %3313
  %3317 = vset.pattern.permute.xlu0 0
  %3318 = vperm.xlu0 %3317, %v3292
  %v3319 = vpop.permute.xlu0 %3318
  %3322 = vset.pattern.permute.xlu0 0
  %3323 = vperm.xlu0 %3322, %v3293
  %v3324 = vpop.permute.xlu0 %3323
  %3327 = vset.pattern.permute.xlu0 0
  %3328 = vperm.xlu0 %3327, %v3294
  %v3329 = vpop.permute.xlu0 %3328
  %3332 = vset.pattern.permute.xlu0 0
  %3333 = vperm.xlu0 %3332, %v3295
  %v3334 = vpop.permute.xlu0 %3333
  %3337 = vset.pattern.permute.xlu0 0
  %3338 = vperm.xlu0 %3337, %v3296
  %v3339 = vpop.permute.xlu0 %3338
  %3342 = vset.pattern.permute.xlu0 0
  %3343 = vperm.xlu0 %3342, %v3298
  %v3344 = vpop.permute.xlu0 %3343
  %v3347 = vlaneseq
  %v3348 = vshrl.u32 %v3347, 7
  %v3349 = vsub.s32 0, %v3348
  %v3350 = vrot.slane %v3300, %v3349
  %v3352 = vmul.f32 %v3304, %v3350
  %v3353 = vmul.f32 %v3309, %v3350
  %v3354 = vmul.f32 %v3314, %v3350
  %v3355 = vmul.f32 %v3319, %v3350
  %v3356 = vmul.f32 %v3324, %v3350
  %v3357 = vmul.f32 %v3329, %v3350
  %v3358 = vmul.f32 %v3334, %v3350
  %v3359 = vmul.f32 %v3339, %v3350
  %v3360 = vmul.f32 %v3344, %v3350
  %v3361 = vadd.f32 %v3226, %v3352
  %v3362 = vadd.f32 %v3227, %v3353
  %v3363 = vadd.f32 %v3228, %v3354
  %v3364 = vadd.f32 %v3229, %v3355
  %v3365 = vadd.f32 %v3230, %v3356
  %v3366 = vadd.f32 %v3231, %v3357
  %v3367 = vadd.f32 %v3232, %v3358
  %v3368 = vadd.f32 %v3233, %v3359
  %v3369 = vadd.f32 %v3234, %v3360
  %3370 = vset.pattern.permute.xlu0 1
  %3371 = vperm.xlu0 %3370, %v3289
  %v3372 = vpop.permute.xlu0 %3371
  %3374 = vset.pattern.permute.xlu0 1
  %3375 = vperm.xlu0 %3374, %v3290
  %v3376 = vpop.permute.xlu0 %3375
  %3378 = vset.pattern.permute.xlu0 1
  %3379 = vperm.xlu0 %3378, %v3291
  %v3380 = vpop.permute.xlu0 %3379
  %3382 = vset.pattern.permute.xlu0 1
  %3383 = vperm.xlu0 %3382, %v3292
  %v3384 = vpop.permute.xlu0 %3383
  %3386 = vset.pattern.permute.xlu0 1
  %3387 = vperm.xlu0 %3386, %v3293
  %v3388 = vpop.permute.xlu0 %3387
  %3390 = vset.pattern.permute.xlu0 1
  %3391 = vperm.xlu0 %3390, %v3294
  %v3392 = vpop.permute.xlu0 %3391
  %3394 = vset.pattern.permute.xlu0 1
  %3395 = vperm.xlu0 %3394, %v3295
  %v3396 = vpop.permute.xlu0 %3395
  %3398 = vset.pattern.permute.xlu0 1
  %3399 = vperm.xlu0 %3398, %v3296
  %v3400 = vpop.permute.xlu0 %3399
  %3402 = vset.pattern.permute.xlu0 1
  %3403 = vperm.xlu0 %3402, %v3298
  %v3404 = vpop.permute.xlu0 %3403
  %v3406 = vmul.f32 %v3372, %v3350
  %v3407 = vmul.f32 %v3376, %v3350
  %v3408 = vmul.f32 %v3380, %v3350
  %v3409 = vmul.f32 %v3384, %v3350
  %v3410 = vmul.f32 %v3388, %v3350
  %v3411 = vmul.f32 %v3392, %v3350
  %v3412 = vmul.f32 %v3396, %v3350
  %v3413 = vmul.f32 %v3400, %v3350
  %v3414 = vmul.f32 %v3404, %v3350
  %v3415 = vadd.f32 %v3280, %v3406
  %v3416 = vadd.f32 %v3281, %v3407
  %v3417 = vadd.f32 %v3282, %v3408
  %v3418 = vadd.f32 %v3283, %v3409
  %v3419 = vadd.f32 %v3284, %v3410
  %v3420 = vadd.f32 %v3285, %v3411
  %v3421 = vadd.f32 %v3286, %v3412
  %v3422 = vadd.f32 %v3287, %v3413
  %v3423 = vadd.f32 %v3288, %v3414
  %v3424 = vld [vmem:[%s1202] ss:$2 sm:$0xff]
  %v3425 = vld [vmem:[%s1204] ss:$2 sm:$0xff]
  %v3426 = vld [vmem:[%s1206] ss:$2 sm:$0xff]
  %v3427 = vld [vmem:[%s1208] ss:$2 sm:$0xff]
  %v3428 = vld [vmem:[%s1210] ss:$2 sm:$0xff]
  %v3429 = vld [vmem:[%s1212] ss:$2 sm:$0xff]
  %v3430 = vld [vmem:[%s1214] ss:$2 sm:$0xff]
  %v3431 = vld [vmem:[%s1216] ss:$2 sm:$0xff]
  %s3432 = scalar_lea.vmem %s0, 152
  %v3433 = vld [vmem:[%s3432] ss:$2 sm:$0x1]
  %s3434 = scalar_lea.vmem %s1, 24
  %v3435 = vld [vmem:[%s3434] sm:$0x1]
  %3437 = vset.pattern.permute.xlu0 0
  %3438 = vperm.xlu0 %3437, %v3424
  %v3439 = vpop.permute.xlu0 %3438
  %3442 = vset.pattern.permute.xlu0 0
  %3443 = vperm.xlu0 %3442, %v3425
  %v3444 = vpop.permute.xlu0 %3443
  %3447 = vset.pattern.permute.xlu0 0
  %3448 = vperm.xlu0 %3447, %v3426
  %v3449 = vpop.permute.xlu0 %3448
  %3452 = vset.pattern.permute.xlu0 0
  %3453 = vperm.xlu0 %3452, %v3427
  %v3454 = vpop.permute.xlu0 %3453
  %3457 = vset.pattern.permute.xlu0 0
  %3458 = vperm.xlu0 %3457, %v3428
  %v3459 = vpop.permute.xlu0 %3458
  %3462 = vset.pattern.permute.xlu0 0
  %3463 = vperm.xlu0 %3462, %v3429
  %v3464 = vpop.permute.xlu0 %3463
  %3467 = vset.pattern.permute.xlu0 0
  %3468 = vperm.xlu0 %3467, %v3430
  %v3469 = vpop.permute.xlu0 %3468
  %3472 = vset.pattern.permute.xlu0 0
  %3473 = vperm.xlu0 %3472, %v3431
  %v3474 = vpop.permute.xlu0 %3473
  %3477 = vset.pattern.permute.xlu0 0
  %3478 = vperm.xlu0 %3477, %v3433
  %v3479 = vpop.permute.xlu0 %3478
  %v3482 = vlaneseq
  %v3483 = vshrl.u32 %v3482, 7
  %v3484 = vsub.s32 0, %v3483
  %v3485 = vrot.slane %v3435, %v3484
  %v3487 = vmul.f32 %v3439, %v3485
  %v3488 = vmul.f32 %v3444, %v3485
  %v3489 = vmul.f32 %v3449, %v3485
  %v3490 = vmul.f32 %v3454, %v3485
  %v3491 = vmul.f32 %v3459, %v3485
  %v3492 = vmul.f32 %v3464, %v3485
  %v3493 = vmul.f32 %v3469, %v3485
  %v3494 = vmul.f32 %v3474, %v3485
  %v3495 = vmul.f32 %v3479, %v3485
  %v3496 = vadd.f32 %v3361, %v3487
  %v3497 = vadd.f32 %v3362, %v3488
  %v3498 = vadd.f32 %v3363, %v3489
  %v3499 = vadd.f32 %v3364, %v3490
  %v3500 = vadd.f32 %v3365, %v3491
  %v3501 = vadd.f32 %v3366, %v3492
  %v3502 = vadd.f32 %v3367, %v3493
  %v3503 = vadd.f32 %v3368, %v3494
  %v3504 = vadd.f32 %v3369, %v3495
  %3505 = vset.pattern.permute.xlu0 1
  %3506 = vperm.xlu0 %3505, %v3424
  %v3507 = vpop.permute.xlu0 %3506
  %3509 = vset.pattern.permute.xlu0 1
  %3510 = vperm.xlu0 %3509, %v3425
  %v3511 = vpop.permute.xlu0 %3510
  %3513 = vset.pattern.permute.xlu0 1
  %3514 = vperm.xlu0 %3513, %v3426
  %v3515 = vpop.permute.xlu0 %3514
  %3517 = vset.pattern.permute.xlu0 1
  %3518 = vperm.xlu0 %3517, %v3427
  %v3519 = vpop.permute.xlu0 %3518
  %3521 = vset.pattern.permute.xlu0 1
  %3522 = vperm.xlu0 %3521, %v3428
  %v3523 = vpop.permute.xlu0 %3522
  %3525 = vset.pattern.permute.xlu0 1
  %3526 = vperm.xlu0 %3525, %v3429
  %v3527 = vpop.permute.xlu0 %3526
  %3529 = vset.pattern.permute.xlu0 1
  %3530 = vperm.xlu0 %3529, %v3430
  %v3531 = vpop.permute.xlu0 %3530
  %3533 = vset.pattern.permute.xlu0 1
  %3534 = vperm.xlu0 %3533, %v3431
  %v3535 = vpop.permute.xlu0 %3534
  %3537 = vset.pattern.permute.xlu0 1
  %3538 = vperm.xlu0 %3537, %v3433
  %v3539 = vpop.permute.xlu0 %3538
  %v3541 = vmul.f32 %v3507, %v3485
  %v3542 = vmul.f32 %v3511, %v3485
  %v3543 = vmul.f32 %v3515, %v3485
  %v3544 = vmul.f32 %v3519, %v3485
  %v3545 = vmul.f32 %v3523, %v3485
  %v3546 = vmul.f32 %v3527, %v3485
  %v3547 = vmul.f32 %v3531, %v3485
  %v3548 = vmul.f32 %v3535, %v3485
  %v3549 = vmul.f32 %v3539, %v3485
  %v3550 = vadd.f32 %v3415, %v3541
  %v3551 = vadd.f32 %v3416, %v3542
  %v3552 = vadd.f32 %v3417, %v3543
  %v3553 = vadd.f32 %v3418, %v3544
  %v3554 = vadd.f32 %v3419, %v3545
  %v3555 = vadd.f32 %v3420, %v3546
  %v3556 = vadd.f32 %v3421, %v3547
  %v3557 = vadd.f32 %v3422, %v3548
  %v3558 = vadd.f32 %v3423, %v3549
  %v3559 = vld [vmem:[%s1345] ss:$2 sm:$0xff]
  %v3560 = vld [vmem:[%s1347] ss:$2 sm:$0xff]
  %v3561 = vld [vmem:[%s1349] ss:$2 sm:$0xff]
  %v3562 = vld [vmem:[%s1351] ss:$2 sm:$0xff]
  %v3563 = vld [vmem:[%s1353] ss:$2 sm:$0xff]
  %v3564 = vld [vmem:[%s1355] ss:$2 sm:$0xff]
  %v3565 = vld [vmem:[%s1357] ss:$2 sm:$0xff]
  %v3566 = vld [vmem:[%s1359] ss:$2 sm:$0xff]
  %s3567 = scalar_lea.vmem %s0, 153
  %v3568 = vld [vmem:[%s3567] ss:$2 sm:$0x1]
  %s3569 = scalar_lea.vmem %s1, 25
  %v3570 = vld [vmem:[%s3569] sm:$0x1]
  %3572 = vset.pattern.permute.xlu0 0
  %3573 = vperm.xlu0 %3572, %v3559
  %v3574 = vpop.permute.xlu0 %3573
  %3577 = vset.pattern.permute.xlu0 0
  %3578 = vperm.xlu0 %3577, %v3560
  %v3579 = vpop.permute.xlu0 %3578
  %3582 = vset.pattern.permute.xlu0 0
  %3583 = vperm.xlu0 %3582, %v3561
  %v3584 = vpop.permute.xlu0 %3583
  %3587 = vset.pattern.permute.xlu0 0
  %3588 = vperm.xlu0 %3587, %v3562
  %v3589 = vpop.permute.xlu0 %3588
  %3592 = vset.pattern.permute.xlu0 0
  %3593 = vperm.xlu0 %3592, %v3563
  %v3594 = vpop.permute.xlu0 %3593
  %3597 = vset.pattern.permute.xlu0 0
  %3598 = vperm.xlu0 %3597, %v3564
  %v3599 = vpop.permute.xlu0 %3598
  %3602 = vset.pattern.permute.xlu0 0
  %3603 = vperm.xlu0 %3602, %v3565
  %v3604 = vpop.permute.xlu0 %3603
  %3607 = vset.pattern.permute.xlu0 0
  %3608 = vperm.xlu0 %3607, %v3566
  %v3609 = vpop.permute.xlu0 %3608
  %3612 = vset.pattern.permute.xlu0 0
  %3613 = vperm.xlu0 %3612, %v3568
  %v3614 = vpop.permute.xlu0 %3613
  %v3617 = vlaneseq
  %v3618 = vshrl.u32 %v3617, 7
  %v3619 = vsub.s32 0, %v3618
  %v3620 = vrot.slane %v3570, %v3619
  %v3622 = vmul.f32 %v3574, %v3620
  %v3623 = vmul.f32 %v3579, %v3620
  %v3624 = vmul.f32 %v3584, %v3620
  %v3625 = vmul.f32 %v3589, %v3620
  %v3626 = vmul.f32 %v3594, %v3620
  %v3627 = vmul.f32 %v3599, %v3620
  %v3628 = vmul.f32 %v3604, %v3620
  %v3629 = vmul.f32 %v3609, %v3620
  %v3630 = vmul.f32 %v3614, %v3620
  %v3631 = vadd.f32 %v3496, %v3622
  %v3632 = vadd.f32 %v3497, %v3623
  %v3633 = vadd.f32 %v3498, %v3624
  %v3634 = vadd.f32 %v3499, %v3625
  %v3635 = vadd.f32 %v3500, %v3626
  %v3636 = vadd.f32 %v3501, %v3627
  %v3637 = vadd.f32 %v3502, %v3628
  %v3638 = vadd.f32 %v3503, %v3629
  %v3639 = vadd.f32 %v3504, %v3630
  %3640 = vset.pattern.permute.xlu0 1
  %3641 = vperm.xlu0 %3640, %v3559
  %v3642 = vpop.permute.xlu0 %3641
  %3644 = vset.pattern.permute.xlu0 1
  %3645 = vperm.xlu0 %3644, %v3560
  %v3646 = vpop.permute.xlu0 %3645
  %3648 = vset.pattern.permute.xlu0 1
  %3649 = vperm.xlu0 %3648, %v3561
  %v3650 = vpop.permute.xlu0 %3649
  %3652 = vset.pattern.permute.xlu0 1
  %3653 = vperm.xlu0 %3652, %v3562
  %v3654 = vpop.permute.xlu0 %3653
  %3656 = vset.pattern.permute.xlu0 1
  %3657 = vperm.xlu0 %3656, %v3563
  %v3658 = vpop.permute.xlu0 %3657
  %3660 = vset.pattern.permute.xlu0 1
  %3661 = vperm.xlu0 %3660, %v3564
  %v3662 = vpop.permute.xlu0 %3661
  %3664 = vset.pattern.permute.xlu0 1
  %3665 = vperm.xlu0 %3664, %v3565
  %v3666 = vpop.permute.xlu0 %3665
  %3668 = vset.pattern.permute.xlu0 1
  %3669 = vperm.xlu0 %3668, %v3566
  %v3670 = vpop.permute.xlu0 %3669
  %3672 = vset.pattern.permute.xlu0 1
  %3673 = vperm.xlu0 %3672, %v3568
  %v3674 = vpop.permute.xlu0 %3673
  %v3676 = vmul.f32 %v3642, %v3620
  %v3677 = vmul.f32 %v3646, %v3620
  %v3678 = vmul.f32 %v3650, %v3620
  %v3679 = vmul.f32 %v3654, %v3620
  %v3680 = vmul.f32 %v3658, %v3620
  %v3681 = vmul.f32 %v3662, %v3620
  %v3682 = vmul.f32 %v3666, %v3620
  %v3683 = vmul.f32 %v3670, %v3620
  %v3684 = vmul.f32 %v3674, %v3620
  %v3685 = vadd.f32 %v3550, %v3676
  %v3686 = vadd.f32 %v3551, %v3677
  %v3687 = vadd.f32 %v3552, %v3678
  %v3688 = vadd.f32 %v3553, %v3679
  %v3689 = vadd.f32 %v3554, %v3680
  %v3690 = vadd.f32 %v3555, %v3681
  %v3691 = vadd.f32 %v3556, %v3682
  %v3692 = vadd.f32 %v3557, %v3683
  %v3693 = vadd.f32 %v3558, %v3684
  %v3694 = vld [vmem:[%s1488] ss:$2 sm:$0xff]
  %v3695 = vld [vmem:[%s1490] ss:$2 sm:$0xff]
  %v3696 = vld [vmem:[%s1492] ss:$2 sm:$0xff]
  %v3697 = vld [vmem:[%s1494] ss:$2 sm:$0xff]
  %v3698 = vld [vmem:[%s1496] ss:$2 sm:$0xff]
  %v3699 = vld [vmem:[%s1498] ss:$2 sm:$0xff]
  %v3700 = vld [vmem:[%s1500] ss:$2 sm:$0xff]
  %v3701 = vld [vmem:[%s1502] ss:$2 sm:$0xff]
  %s3702 = scalar_lea.vmem %s0, 154
  %v3703 = vld [vmem:[%s3702] ss:$2 sm:$0x1]
  %s3704 = scalar_lea.vmem %s1, 26
  %v3705 = vld [vmem:[%s3704] sm:$0x1]
  %3707 = vset.pattern.permute.xlu0 0
  %3708 = vperm.xlu0 %3707, %v3694
  %v3709 = vpop.permute.xlu0 %3708
  %3712 = vset.pattern.permute.xlu0 0
  %3713 = vperm.xlu0 %3712, %v3695
  %v3714 = vpop.permute.xlu0 %3713
  %3717 = vset.pattern.permute.xlu0 0
  %3718 = vperm.xlu0 %3717, %v3696
  %v3719 = vpop.permute.xlu0 %3718
  %3722 = vset.pattern.permute.xlu0 0
  %3723 = vperm.xlu0 %3722, %v3697
  %v3724 = vpop.permute.xlu0 %3723
  %3727 = vset.pattern.permute.xlu0 0
  %3728 = vperm.xlu0 %3727, %v3698
  %v3729 = vpop.permute.xlu0 %3728
  %3732 = vset.pattern.permute.xlu0 0
  %3733 = vperm.xlu0 %3732, %v3699
  %v3734 = vpop.permute.xlu0 %3733
  %3737 = vset.pattern.permute.xlu0 0
  %3738 = vperm.xlu0 %3737, %v3700
  %v3739 = vpop.permute.xlu0 %3738
  %3742 = vset.pattern.permute.xlu0 0
  %3743 = vperm.xlu0 %3742, %v3701
  %v3744 = vpop.permute.xlu0 %3743
  %3747 = vset.pattern.permute.xlu0 0
  %3748 = vperm.xlu0 %3747, %v3703
  %v3749 = vpop.permute.xlu0 %3748
  %v3752 = vlaneseq
  %v3753 = vshrl.u32 %v3752, 7
  %v3754 = vsub.s32 0, %v3753
  %v3755 = vrot.slane %v3705, %v3754
  %v3757 = vmul.f32 %v3709, %v3755
  %v3758 = vmul.f32 %v3714, %v3755
  %v3759 = vmul.f32 %v3719, %v3755
  %v3760 = vmul.f32 %v3724, %v3755
  %v3761 = vmul.f32 %v3729, %v3755
  %v3762 = vmul.f32 %v3734, %v3755
  %v3763 = vmul.f32 %v3739, %v3755
  %v3764 = vmul.f32 %v3744, %v3755
  %v3765 = vmul.f32 %v3749, %v3755
  %v3766 = vadd.f32 %v3631, %v3757
  %v3767 = vadd.f32 %v3632, %v3758
  %v3768 = vadd.f32 %v3633, %v3759
  %v3769 = vadd.f32 %v3634, %v3760
  %v3770 = vadd.f32 %v3635, %v3761
  %v3771 = vadd.f32 %v3636, %v3762
  %v3772 = vadd.f32 %v3637, %v3763
  %v3773 = vadd.f32 %v3638, %v3764
  %v3774 = vadd.f32 %v3639, %v3765
  %3775 = vset.pattern.permute.xlu0 1
  %3776 = vperm.xlu0 %3775, %v3694
  %v3777 = vpop.permute.xlu0 %3776
  %3779 = vset.pattern.permute.xlu0 1
  %3780 = vperm.xlu0 %3779, %v3695
  %v3781 = vpop.permute.xlu0 %3780
  %3783 = vset.pattern.permute.xlu0 1
  %3784 = vperm.xlu0 %3783, %v3696
  %v3785 = vpop.permute.xlu0 %3784
  %3787 = vset.pattern.permute.xlu0 1
  %3788 = vperm.xlu0 %3787, %v3697
  %v3789 = vpop.permute.xlu0 %3788
  %3791 = vset.pattern.permute.xlu0 1
  %3792 = vperm.xlu0 %3791, %v3698
  %v3793 = vpop.permute.xlu0 %3792
  %3795 = vset.pattern.permute.xlu0 1
  %3796 = vperm.xlu0 %3795, %v3699
  %v3797 = vpop.permute.xlu0 %3796
  %3799 = vset.pattern.permute.xlu0 1
  %3800 = vperm.xlu0 %3799, %v3700
  %v3801 = vpop.permute.xlu0 %3800
  %3803 = vset.pattern.permute.xlu0 1
  %3804 = vperm.xlu0 %3803, %v3701
  %v3805 = vpop.permute.xlu0 %3804
  %3807 = vset.pattern.permute.xlu0 1
  %3808 = vperm.xlu0 %3807, %v3703
  %v3809 = vpop.permute.xlu0 %3808
  %v3811 = vmul.f32 %v3777, %v3755
  %v3812 = vmul.f32 %v3781, %v3755
  %v3813 = vmul.f32 %v3785, %v3755
  %v3814 = vmul.f32 %v3789, %v3755
  %v3815 = vmul.f32 %v3793, %v3755
  %v3816 = vmul.f32 %v3797, %v3755
  %v3817 = vmul.f32 %v3801, %v3755
  %v3818 = vmul.f32 %v3805, %v3755
  %v3819 = vmul.f32 %v3809, %v3755
  %v3820 = vadd.f32 %v3685, %v3811
  %v3821 = vadd.f32 %v3686, %v3812
  %v3822 = vadd.f32 %v3687, %v3813
  %v3823 = vadd.f32 %v3688, %v3814
  %v3824 = vadd.f32 %v3689, %v3815
  %v3825 = vadd.f32 %v3690, %v3816
  %v3826 = vadd.f32 %v3691, %v3817
  %v3827 = vadd.f32 %v3692, %v3818
  %v3828 = vadd.f32 %v3693, %v3819
  %v3829 = vld [vmem:[%s1631] ss:$2 sm:$0xff]
  %v3830 = vld [vmem:[%s1633] ss:$2 sm:$0xff]
  %v3831 = vld [vmem:[%s1635] ss:$2 sm:$0xff]
  %v3832 = vld [vmem:[%s1637] ss:$2 sm:$0xff]
  %v3833 = vld [vmem:[%s1639] ss:$2 sm:$0xff]
  %v3834 = vld [vmem:[%s1641] ss:$2 sm:$0xff]
  %v3835 = vld [vmem:[%s1643] ss:$2 sm:$0xff]
  %v3836 = vld [vmem:[%s1645] ss:$2 sm:$0xff]
  %s3837 = scalar_lea.vmem %s0, 155
  %v3838 = vld [vmem:[%s3837] ss:$2 sm:$0x1]
  %s3839 = scalar_lea.vmem %s1, 27
  %v3840 = vld [vmem:[%s3839] sm:$0x1]
  %3842 = vset.pattern.permute.xlu0 0
  %3843 = vperm.xlu0 %3842, %v3829
  %v3844 = vpop.permute.xlu0 %3843
  %3847 = vset.pattern.permute.xlu0 0
  %3848 = vperm.xlu0 %3847, %v3830
  %v3849 = vpop.permute.xlu0 %3848
  %3852 = vset.pattern.permute.xlu0 0
  %3853 = vperm.xlu0 %3852, %v3831
  %v3854 = vpop.permute.xlu0 %3853
  %3857 = vset.pattern.permute.xlu0 0
  %3858 = vperm.xlu0 %3857, %v3832
  %v3859 = vpop.permute.xlu0 %3858
  %3862 = vset.pattern.permute.xlu0 0
  %3863 = vperm.xlu0 %3862, %v3833
  %v3864 = vpop.permute.xlu0 %3863
  %3867 = vset.pattern.permute.xlu0 0
  %3868 = vperm.xlu0 %3867, %v3834
  %v3869 = vpop.permute.xlu0 %3868
  %3872 = vset.pattern.permute.xlu0 0
  %3873 = vperm.xlu0 %3872, %v3835
  %v3874 = vpop.permute.xlu0 %3873
  %3877 = vset.pattern.permute.xlu0 0
  %3878 = vperm.xlu0 %3877, %v3836
  %v3879 = vpop.permute.xlu0 %3878
  %3882 = vset.pattern.permute.xlu0 0
  %3883 = vperm.xlu0 %3882, %v3838
  %v3884 = vpop.permute.xlu0 %3883
  %v3887 = vlaneseq
  %v3888 = vshrl.u32 %v3887, 7
  %v3889 = vsub.s32 0, %v3888
  %v3890 = vrot.slane %v3840, %v3889
  %v3892 = vmul.f32 %v3844, %v3890
  %v3893 = vmul.f32 %v3849, %v3890
  %v3894 = vmul.f32 %v3854, %v3890
  %v3895 = vmul.f32 %v3859, %v3890
  %v3896 = vmul.f32 %v3864, %v3890
  %v3897 = vmul.f32 %v3869, %v3890
  %v3898 = vmul.f32 %v3874, %v3890
  %v3899 = vmul.f32 %v3879, %v3890
  %v3900 = vmul.f32 %v3884, %v3890
  %v3901 = vadd.f32 %v3766, %v3892
  %v3902 = vadd.f32 %v3767, %v3893
  %v3903 = vadd.f32 %v3768, %v3894
  %v3904 = vadd.f32 %v3769, %v3895
  %v3905 = vadd.f32 %v3770, %v3896
  %v3906 = vadd.f32 %v3771, %v3897
  %v3907 = vadd.f32 %v3772, %v3898
  %v3908 = vadd.f32 %v3773, %v3899
  %v3909 = vadd.f32 %v3774, %v3900
  %3910 = vset.pattern.permute.xlu0 1
  %3911 = vperm.xlu0 %3910, %v3829
  %v3912 = vpop.permute.xlu0 %3911
  %3914 = vset.pattern.permute.xlu0 1
  %3915 = vperm.xlu0 %3914, %v3830
  %v3916 = vpop.permute.xlu0 %3915
  %3918 = vset.pattern.permute.xlu0 1
  %3919 = vperm.xlu0 %3918, %v3831
  %v3920 = vpop.permute.xlu0 %3919
  %3922 = vset.pattern.permute.xlu0 1
  %3923 = vperm.xlu0 %3922, %v3832
  %v3924 = vpop.permute.xlu0 %3923
  %3926 = vset.pattern.permute.xlu0 1
  %3927 = vperm.xlu0 %3926, %v3833
  %v3928 = vpop.permute.xlu0 %3927
  %3930 = vset.pattern.permute.xlu0 1
  %3931 = vperm.xlu0 %3930, %v3834
  %v3932 = vpop.permute.xlu0 %3931
  %3934 = vset.pattern.permute.xlu0 1
  %3935 = vperm.xlu0 %3934, %v3835
  %v3936 = vpop.permute.xlu0 %3935
  %3938 = vset.pattern.permute.xlu0 1
  %3939 = vperm.xlu0 %3938, %v3836
  %v3940 = vpop.permute.xlu0 %3939
  %3942 = vset.pattern.permute.xlu0 1
  %3943 = vperm.xlu0 %3942, %v3838
  %v3944 = vpop.permute.xlu0 %3943
  %v3946 = vmul.f32 %v3912, %v3890
  %v3947 = vmul.f32 %v3916, %v3890
  %v3948 = vmul.f32 %v3920, %v3890
  %v3949 = vmul.f32 %v3924, %v3890
  %v3950 = vmul.f32 %v3928, %v3890
  %v3951 = vmul.f32 %v3932, %v3890
  %v3952 = vmul.f32 %v3936, %v3890
  %v3953 = vmul.f32 %v3940, %v3890
  %v3954 = vmul.f32 %v3944, %v3890
  %v3955 = vadd.f32 %v3820, %v3946
  %v3956 = vadd.f32 %v3821, %v3947
  %v3957 = vadd.f32 %v3822, %v3948
  %v3958 = vadd.f32 %v3823, %v3949
  %v3959 = vadd.f32 %v3824, %v3950
  %v3960 = vadd.f32 %v3825, %v3951
  %v3961 = vadd.f32 %v3826, %v3952
  %v3962 = vadd.f32 %v3827, %v3953
  %v3963 = vadd.f32 %v3828, %v3954
  %v3964 = vld [vmem:[%s1774] ss:$2 sm:$0xff]
  %v3965 = vld [vmem:[%s1776] ss:$2 sm:$0xff]
  %v3966 = vld [vmem:[%s1778] ss:$2 sm:$0xff]
  %v3967 = vld [vmem:[%s1780] ss:$2 sm:$0xff]
  %v3968 = vld [vmem:[%s1782] ss:$2 sm:$0xff]
  %v3969 = vld [vmem:[%s1784] ss:$2 sm:$0xff]
  %v3970 = vld [vmem:[%s1786] ss:$2 sm:$0xff]
  %v3971 = vld [vmem:[%s1788] ss:$2 sm:$0xff]
  %s3972 = scalar_lea.vmem %s0, 156
  %v3973 = vld [vmem:[%s3972] ss:$2 sm:$0x1]
  %s3974 = scalar_lea.vmem %s1, 28
  %v3975 = vld [vmem:[%s3974] sm:$0x1]
  %3977 = vset.pattern.permute.xlu0 0
  %3978 = vperm.xlu0 %3977, %v3964
  %v3979 = vpop.permute.xlu0 %3978
  %3982 = vset.pattern.permute.xlu0 0
  %3983 = vperm.xlu0 %3982, %v3965
  %v3984 = vpop.permute.xlu0 %3983
  %3987 = vset.pattern.permute.xlu0 0
  %3988 = vperm.xlu0 %3987, %v3966
  %v3989 = vpop.permute.xlu0 %3988
  %3992 = vset.pattern.permute.xlu0 0
  %3993 = vperm.xlu0 %3992, %v3967
  %v3994 = vpop.permute.xlu0 %3993
  %3997 = vset.pattern.permute.xlu0 0
  %3998 = vperm.xlu0 %3997, %v3968
  %v3999 = vpop.permute.xlu0 %3998
  %4002 = vset.pattern.permute.xlu0 0
  %4003 = vperm.xlu0 %4002, %v3969
  %v4004 = vpop.permute.xlu0 %4003
  %4007 = vset.pattern.permute.xlu0 0
  %4008 = vperm.xlu0 %4007, %v3970
  %v4009 = vpop.permute.xlu0 %4008
  %4012 = vset.pattern.permute.xlu0 0
  %4013 = vperm.xlu0 %4012, %v3971
  %v4014 = vpop.permute.xlu0 %4013
  %4017 = vset.pattern.permute.xlu0 0
  %4018 = vperm.xlu0 %4017, %v3973
  %v4019 = vpop.permute.xlu0 %4018
  %v4022 = vlaneseq
  %v4023 = vshrl.u32 %v4022, 7
  %v4024 = vsub.s32 0, %v4023
  %v4025 = vrot.slane %v3975, %v4024
  %v4027 = vmul.f32 %v3979, %v4025
  %v4028 = vmul.f32 %v3984, %v4025
  %v4029 = vmul.f32 %v3989, %v4025
  %v4030 = vmul.f32 %v3994, %v4025
  %v4031 = vmul.f32 %v3999, %v4025
  %v4032 = vmul.f32 %v4004, %v4025
  %v4033 = vmul.f32 %v4009, %v4025
  %v4034 = vmul.f32 %v4014, %v4025
  %v4035 = vmul.f32 %v4019, %v4025
  %v4036 = vadd.f32 %v3901, %v4027
  %v4037 = vadd.f32 %v3902, %v4028
  %v4038 = vadd.f32 %v3903, %v4029
  %v4039 = vadd.f32 %v3904, %v4030
  %v4040 = vadd.f32 %v3905, %v4031
  %v4041 = vadd.f32 %v3906, %v4032
  %v4042 = vadd.f32 %v3907, %v4033
  %v4043 = vadd.f32 %v3908, %v4034
  %v4044 = vadd.f32 %v3909, %v4035
  %4045 = vset.pattern.permute.xlu0 1
  %4046 = vperm.xlu0 %4045, %v3964
  %v4047 = vpop.permute.xlu0 %4046
  %4049 = vset.pattern.permute.xlu0 1
  %4050 = vperm.xlu0 %4049, %v3965
  %v4051 = vpop.permute.xlu0 %4050
  %4053 = vset.pattern.permute.xlu0 1
  %4054 = vperm.xlu0 %4053, %v3966
  %v4055 = vpop.permute.xlu0 %4054
  %4057 = vset.pattern.permute.xlu0 1
  %4058 = vperm.xlu0 %4057, %v3967
  %v4059 = vpop.permute.xlu0 %4058
  %4061 = vset.pattern.permute.xlu0 1
  %4062 = vperm.xlu0 %4061, %v3968
  %v4063 = vpop.permute.xlu0 %4062
  %4065 = vset.pattern.permute.xlu0 1
  %4066 = vperm.xlu0 %4065, %v3969
  %v4067 = vpop.permute.xlu0 %4066
  %4069 = vset.pattern.permute.xlu0 1
  %4070 = vperm.xlu0 %4069, %v3970
  %v4071 = vpop.permute.xlu0 %4070
  %4073 = vset.pattern.permute.xlu0 1
  %4074 = vperm.xlu0 %4073, %v3971
  %v4075 = vpop.permute.xlu0 %4074
  %4077 = vset.pattern.permute.xlu0 1
  %4078 = vperm.xlu0 %4077, %v3973
  %v4079 = vpop.permute.xlu0 %4078
  %v4081 = vmul.f32 %v4047, %v4025
  %v4082 = vmul.f32 %v4051, %v4025
  %v4083 = vmul.f32 %v4055, %v4025
  %v4084 = vmul.f32 %v4059, %v4025
  %v4085 = vmul.f32 %v4063, %v4025
  %v4086 = vmul.f32 %v4067, %v4025
  %v4087 = vmul.f32 %v4071, %v4025
  %v4088 = vmul.f32 %v4075, %v4025
  %v4089 = vmul.f32 %v4079, %v4025
  %v4090 = vadd.f32 %v3955, %v4081
  %v4091 = vadd.f32 %v3956, %v4082
  %v4092 = vadd.f32 %v3957, %v4083
  %v4093 = vadd.f32 %v3958, %v4084
  %v4094 = vadd.f32 %v3959, %v4085
  %v4095 = vadd.f32 %v3960, %v4086
  %v4096 = vadd.f32 %v3961, %v4087
  %v4097 = vadd.f32 %v3962, %v4088
  %v4098 = vadd.f32 %v3963, %v4089
  %v4099 = vld [vmem:[%s1917] ss:$2 sm:$0xff]
  %v4100 = vld [vmem:[%s1919] ss:$2 sm:$0xff]
  %v4101 = vld [vmem:[%s1921] ss:$2 sm:$0xff]
  %v4102 = vld [vmem:[%s1923] ss:$2 sm:$0xff]
  %v4103 = vld [vmem:[%s1925] ss:$2 sm:$0xff]
  %v4104 = vld [vmem:[%s1927] ss:$2 sm:$0xff]
  %v4105 = vld [vmem:[%s1929] ss:$2 sm:$0xff]
  %v4106 = vld [vmem:[%s1931] ss:$2 sm:$0xff]
  %s4107 = scalar_lea.vmem %s0, 157
  %v4108 = vld [vmem:[%s4107] ss:$2 sm:$0x1]
  %s4109 = scalar_lea.vmem %s1, 29
  %v4110 = vld [vmem:[%s4109] sm:$0x1]
  %4112 = vset.pattern.permute.xlu0 0
  %4113 = vperm.xlu0 %4112, %v4099
  %v4114 = vpop.permute.xlu0 %4113
  %4117 = vset.pattern.permute.xlu0 0
  %4118 = vperm.xlu0 %4117, %v4100
  %v4119 = vpop.permute.xlu0 %4118
  %4122 = vset.pattern.permute.xlu0 0
  %4123 = vperm.xlu0 %4122, %v4101
  %v4124 = vpop.permute.xlu0 %4123
  %4127 = vset.pattern.permute.xlu0 0
  %4128 = vperm.xlu0 %4127, %v4102
  %v4129 = vpop.permute.xlu0 %4128
  %4132 = vset.pattern.permute.xlu0 0
  %4133 = vperm.xlu0 %4132, %v4103
  %v4134 = vpop.permute.xlu0 %4133
  %4137 = vset.pattern.permute.xlu0 0
  %4138 = vperm.xlu0 %4137, %v4104
  %v4139 = vpop.permute.xlu0 %4138
  %4142 = vset.pattern.permute.xlu0 0
  %4143 = vperm.xlu0 %4142, %v4105
  %v4144 = vpop.permute.xlu0 %4143
  %4147 = vset.pattern.permute.xlu0 0
  %4148 = vperm.xlu0 %4147, %v4106
  %v4149 = vpop.permute.xlu0 %4148
  %4152 = vset.pattern.permute.xlu0 0
  %4153 = vperm.xlu0 %4152, %v4108
  %v4154 = vpop.permute.xlu0 %4153
  %v4157 = vlaneseq
  %v4158 = vshrl.u32 %v4157, 7
  %v4159 = vsub.s32 0, %v4158
  %v4160 = vrot.slane %v4110, %v4159
  %v4162 = vmul.f32 %v4114, %v4160
  %v4163 = vmul.f32 %v4119, %v4160
  %v4164 = vmul.f32 %v4124, %v4160
  %v4165 = vmul.f32 %v4129, %v4160
  %v4166 = vmul.f32 %v4134, %v4160
  %v4167 = vmul.f32 %v4139, %v4160
  %v4168 = vmul.f32 %v4144, %v4160
  %v4169 = vmul.f32 %v4149, %v4160
  %v4170 = vmul.f32 %v4154, %v4160
  %v4171 = vadd.f32 %v4036, %v4162
  %v4172 = vadd.f32 %v4037, %v4163
  %v4173 = vadd.f32 %v4038, %v4164
  %v4174 = vadd.f32 %v4039, %v4165
  %v4175 = vadd.f32 %v4040, %v4166
  %v4176 = vadd.f32 %v4041, %v4167
  %v4177 = vadd.f32 %v4042, %v4168
  %v4178 = vadd.f32 %v4043, %v4169
  %v4179 = vadd.f32 %v4044, %v4170
  %4180 = vset.pattern.permute.xlu0 1
  %4181 = vperm.xlu0 %4180, %v4099
  %v4182 = vpop.permute.xlu0 %4181
  %4184 = vset.pattern.permute.xlu0 1
  %4185 = vperm.xlu0 %4184, %v4100
  %v4186 = vpop.permute.xlu0 %4185
  %4188 = vset.pattern.permute.xlu0 1
  %4189 = vperm.xlu0 %4188, %v4101
  %v4190 = vpop.permute.xlu0 %4189
  %4192 = vset.pattern.permute.xlu0 1
  %4193 = vperm.xlu0 %4192, %v4102
  %v4194 = vpop.permute.xlu0 %4193
  %4196 = vset.pattern.permute.xlu0 1
  %4197 = vperm.xlu0 %4196, %v4103
  %v4198 = vpop.permute.xlu0 %4197
  %4200 = vset.pattern.permute.xlu0 1
  %4201 = vperm.xlu0 %4200, %v4104
  %v4202 = vpop.permute.xlu0 %4201
  %4204 = vset.pattern.permute.xlu0 1
  %4205 = vperm.xlu0 %4204, %v4105
  %v4206 = vpop.permute.xlu0 %4205
  %4208 = vset.pattern.permute.xlu0 1
  %4209 = vperm.xlu0 %4208, %v4106
  %v4210 = vpop.permute.xlu0 %4209
  %4212 = vset.pattern.permute.xlu0 1
  %4213 = vperm.xlu0 %4212, %v4108
  %v4214 = vpop.permute.xlu0 %4213
  %v4216 = vmul.f32 %v4182, %v4160
  %v4217 = vmul.f32 %v4186, %v4160
  %v4218 = vmul.f32 %v4190, %v4160
  %v4219 = vmul.f32 %v4194, %v4160
  %v4220 = vmul.f32 %v4198, %v4160
  %v4221 = vmul.f32 %v4202, %v4160
  %v4222 = vmul.f32 %v4206, %v4160
  %v4223 = vmul.f32 %v4210, %v4160
  %v4224 = vmul.f32 %v4214, %v4160
  %v4225 = vadd.f32 %v4090, %v4216
  %v4226 = vadd.f32 %v4091, %v4217
  %v4227 = vadd.f32 %v4092, %v4218
  %v4228 = vadd.f32 %v4093, %v4219
  %v4229 = vadd.f32 %v4094, %v4220
  %v4230 = vadd.f32 %v4095, %v4221
  %v4231 = vadd.f32 %v4096, %v4222
  %v4232 = vadd.f32 %v4097, %v4223
  %v4233 = vadd.f32 %v4098, %v4224
  %v4234 = vld [vmem:[%s2060] ss:$2 sm:$0xff]
  %v4235 = vld [vmem:[%s2062] ss:$2 sm:$0xff]
  %v4236 = vld [vmem:[%s2064] ss:$2 sm:$0xff]
  %v4237 = vld [vmem:[%s2066] ss:$2 sm:$0xff]
  %v4238 = vld [vmem:[%s2068] ss:$2 sm:$0xff]
  %v4239 = vld [vmem:[%s2070] ss:$2 sm:$0xff]
  %v4240 = vld [vmem:[%s2072] ss:$2 sm:$0xff]
  %v4241 = vld [vmem:[%s2074] ss:$2 sm:$0xff]
  %s4242 = scalar_lea.vmem %s0, 158
  %v4243 = vld [vmem:[%s4242] ss:$2 sm:$0x1]
  %s4244 = scalar_lea.vmem %s1, 30
  %v4245 = vld [vmem:[%s4244] sm:$0x1]
  %4247 = vset.pattern.permute.xlu0 0
  %4248 = vperm.xlu0 %4247, %v4234
  %v4249 = vpop.permute.xlu0 %4248
  %4252 = vset.pattern.permute.xlu0 0
  %4253 = vperm.xlu0 %4252, %v4235
  %v4254 = vpop.permute.xlu0 %4253
  %4257 = vset.pattern.permute.xlu0 0
  %4258 = vperm.xlu0 %4257, %v4236
  %v4259 = vpop.permute.xlu0 %4258
  %4262 = vset.pattern.permute.xlu0 0
  %4263 = vperm.xlu0 %4262, %v4237
  %v4264 = vpop.permute.xlu0 %4263
  %4267 = vset.pattern.permute.xlu0 0
  %4268 = vperm.xlu0 %4267, %v4238
  %v4269 = vpop.permute.xlu0 %4268
  %4272 = vset.pattern.permute.xlu0 0
  %4273 = vperm.xlu0 %4272, %v4239
  %v4274 = vpop.permute.xlu0 %4273
  %4277 = vset.pattern.permute.xlu0 0
  %4278 = vperm.xlu0 %4277, %v4240
  %v4279 = vpop.permute.xlu0 %4278
  %4282 = vset.pattern.permute.xlu0 0
  %4283 = vperm.xlu0 %4282, %v4241
  %v4284 = vpop.permute.xlu0 %4283
  %4287 = vset.pattern.permute.xlu0 0
  %4288 = vperm.xlu0 %4287, %v4243
  %v4289 = vpop.permute.xlu0 %4288
  %v4292 = vlaneseq
  %v4293 = vshrl.u32 %v4292, 7
  %v4294 = vsub.s32 0, %v4293
  %v4295 = vrot.slane %v4245, %v4294
  %v4297 = vmul.f32 %v4249, %v4295
  %v4298 = vmul.f32 %v4254, %v4295
  %v4299 = vmul.f32 %v4259, %v4295
  %v4300 = vmul.f32 %v4264, %v4295
  %v4301 = vmul.f32 %v4269, %v4295
  %v4302 = vmul.f32 %v4274, %v4295
  %v4303 = vmul.f32 %v4279, %v4295
  %v4304 = vmul.f32 %v4284, %v4295
  %v4305 = vmul.f32 %v4289, %v4295
  %v4306 = vadd.f32 %v4171, %v4297
  %v4307 = vadd.f32 %v4172, %v4298
  %v4308 = vadd.f32 %v4173, %v4299
  %v4309 = vadd.f32 %v4174, %v4300
  %v4310 = vadd.f32 %v4175, %v4301
  %v4311 = vadd.f32 %v4176, %v4302
  %v4312 = vadd.f32 %v4177, %v4303
  %v4313 = vadd.f32 %v4178, %v4304
  %v4314 = vadd.f32 %v4179, %v4305
  %4315 = vset.pattern.permute.xlu0 1
  %4316 = vperm.xlu0 %4315, %v4234
  %v4317 = vpop.permute.xlu0 %4316
  %4319 = vset.pattern.permute.xlu0 1
  %4320 = vperm.xlu0 %4319, %v4235
  %v4321 = vpop.permute.xlu0 %4320
  %4323 = vset.pattern.permute.xlu0 1
  %4324 = vperm.xlu0 %4323, %v4236
  %v4325 = vpop.permute.xlu0 %4324
  %4327 = vset.pattern.permute.xlu0 1
  %4328 = vperm.xlu0 %4327, %v4237
  %v4329 = vpop.permute.xlu0 %4328
  %4331 = vset.pattern.permute.xlu0 1
  %4332 = vperm.xlu0 %4331, %v4238
  %v4333 = vpop.permute.xlu0 %4332
  %4335 = vset.pattern.permute.xlu0 1
  %4336 = vperm.xlu0 %4335, %v4239
  %v4337 = vpop.permute.xlu0 %4336
  %4339 = vset.pattern.permute.xlu0 1
  %4340 = vperm.xlu0 %4339, %v4240
  %v4341 = vpop.permute.xlu0 %4340
  %4343 = vset.pattern.permute.xlu0 1
  %4344 = vperm.xlu0 %4343, %v4241
  %v4345 = vpop.permute.xlu0 %4344
  %4347 = vset.pattern.permute.xlu0 1
  %4348 = vperm.xlu0 %4347, %v4243
  %v4349 = vpop.permute.xlu0 %4348
  %v4351 = vmul.f32 %v4317, %v4295
  %v4352 = vmul.f32 %v4321, %v4295
  %v4353 = vmul.f32 %v4325, %v4295
  %v4354 = vmul.f32 %v4329, %v4295
  %v4355 = vmul.f32 %v4333, %v4295
  %v4356 = vmul.f32 %v4337, %v4295
  %v4357 = vmul.f32 %v4341, %v4295
  %v4358 = vmul.f32 %v4345, %v4295
  %v4359 = vmul.f32 %v4349, %v4295
  %v4360 = vadd.f32 %v4225, %v4351
  %v4361 = vadd.f32 %v4226, %v4352
  %v4362 = vadd.f32 %v4227, %v4353
  %v4363 = vadd.f32 %v4228, %v4354
  %v4364 = vadd.f32 %v4229, %v4355
  %v4365 = vadd.f32 %v4230, %v4356
  %v4366 = vadd.f32 %v4231, %v4357
  %v4367 = vadd.f32 %v4232, %v4358
  %v4368 = vadd.f32 %v4233, %v4359
  %v4369 = vld [vmem:[%s2] sm:$0x1]
  %v4370 = vld [vmem:[%s2 + $0x1] sm:$0x1]
  %v4371 = vld [vmem:[%s2 + $0x2] sm:$0x1]
  %v4372 = vlaneseq
  %v4373 = vshrl.u32 %v4372, 7
  %v4374 = vsub.s32 0, %v4373
  %v4375 = vrot.slane %v4369, %v4374
  %v4376 = vadd.f32 %v4306, %v4375
  %v4377 = vadd.f32 %v4307, %v4375
  %v4378 = vadd.f32 %v4308, %v4375
  %v4379 = vadd.f32 %v4309, %v4375
  %v4380 = vadd.f32 %v4310, %v4375
  %v4381 = vadd.f32 %v4311, %v4375
  %v4382 = vadd.f32 %v4312, %v4375
  %v4383 = vadd.f32 %v4313, %v4375
  %v4384 = vadd.f32 %v4314, %v4375
  %v4385 = vadd.f32 %v4360, %v4375
  %v4386 = vadd.f32 %v4361, %v4375
  %v4387 = vadd.f32 %v4362, %v4375
  %v4388 = vadd.f32 %v4363, %v4375
  %v4389 = vadd.f32 %v4364, %v4375
  %v4390 = vadd.f32 %v4365, %v4375
  %v4391 = vadd.f32 %v4366, %v4375
  %v4392 = vadd.f32 %v4367, %v4375
  %v4393 = vadd.f32 %v4368, %v4375
  %vm4394 = vcmask 31744
  %v4395 = vsel %vm4394, %v4376, 0.0
  %v4396 = vsel %vm4394, %v4377, 0.0
  %v4397 = vadd.f32 %v4395, %v4396
  %v4398 = vsel %vm4394, %v4378, 0.0
  %v4399 = vadd.f32 %v4397, %v4398
  %v4400 = vsel %vm4394, %v4379, 0.0
  %v4401 = vadd.f32 %v4399, %v4400
  %v4402 = vsel %vm4394, %v4380, 0.0
  %v4403 = vadd.f32 %v4401, %v4402
  %v4404 = vsel %vm4394, %v4381, 0.0
  %v4405 = vadd.f32 %v4403, %v4404
  %v4406 = vsel %vm4394, %v4382, 0.0
  %v4407 = vadd.f32 %v4405, %v4406
  %v4408 = vsel %vm4394, %v4383, 0.0
  %v4409 = vadd.f32 %v4407, %v4408
  %vm4410 = vcmask 24576
  %v4411 = vsel %vm4410, %v4384, 0.0
  %v4412 = vadd.f32 %v4409, %v4411
  %v4413 = vrot.slane %v4412, 4
  %v4414 = vadd.f32 %v4412, %v4413
  %v4415 = vrot.slane %v4414, 2
  %v4416 = vadd.f32 %v4414, %v4415
  %v4417 = vrot.slane %v4416, 1
  %v4418 = vadd.f32 %v4416, %v4417
  %v4419 = vadd.f32 %v4418, 0.0
  %v4420 = vsel %vm4394, %v4385, 0.0
  %v4421 = vsel %vm4394, %v4386, 0.0
  %v4422 = vadd.f32 %v4420, %v4421
  %v4423 = vsel %vm4394, %v4387, 0.0
  %v4424 = vadd.f32 %v4422, %v4423
  %v4425 = vsel %vm4394, %v4388, 0.0
  %v4426 = vadd.f32 %v4424, %v4425
  %v4427 = vsel %vm4394, %v4389, 0.0
  %v4428 = vadd.f32 %v4426, %v4427
  %v4429 = vsel %vm4394, %v4390, 0.0
  %v4430 = vadd.f32 %v4428, %v4429
  %v4431 = vsel %vm4394, %v4391, 0.0
  %v4432 = vadd.f32 %v4430, %v4431
  %v4433 = vsel %vm4394, %v4392, 0.0
  %v4434 = vadd.f32 %v4432, %v4433
  %v4435 = vsel %vm4410, %v4393, 0.0
  %v4436 = vadd.f32 %v4434, %v4435
  %v4437 = vrot.slane %v4436, 4
  %v4438 = vadd.f32 %v4436, %v4437
  %v4439 = vrot.slane %v4438, 2
  %v4440 = vadd.f32 %v4438, %v4439
  %v4441 = vrot.slane %v4440, 1
  %v4442 = vadd.f32 %v4440, %v4441
  %v4443 = vadd.f32 %v4419, %v4442
  %v4444 = vrcp.pop 130.0
  %v4445 = vmul.f32 %v4443, %v4444
  %v4446 = vsub.f32 %v4376, %v4445
  %v4447 = vsub.f32 %v4377, %v4445
  %v4448 = vsub.f32 %v4378, %v4445
  %v4449 = vsub.f32 %v4379, %v4445
  %v4450 = vsub.f32 %v4380, %v4445
  %v4451 = vsub.f32 %v4381, %v4445
  %v4452 = vsub.f32 %v4382, %v4445
  %v4453 = vsub.f32 %v4383, %v4445
  %v4454 = vsub.f32 %v4384, %v4445
  %v4455 = vmul.f32 %v4446, %v4446
  %v4456 = vmul.f32 %v4447, %v4447
  %v4457 = vmul.f32 %v4448, %v4448
  %v4458 = vmul.f32 %v4449, %v4449
  %v4459 = vmul.f32 %v4450, %v4450
  %v4460 = vmul.f32 %v4451, %v4451
  %v4461 = vmul.f32 %v4452, %v4452
  %v4462 = vmul.f32 %v4453, %v4453
  %v4463 = vmul.f32 %v4454, %v4454
  %v4464 = vsel %vm4394, %v4455, 0.0
  %v4465 = vsel %vm4394, %v4456, 0.0
  %v4466 = vadd.f32 %v4464, %v4465
  %v4467 = vsel %vm4394, %v4457, 0.0
  %v4468 = vadd.f32 %v4466, %v4467
  %v4469 = vsel %vm4394, %v4458, 0.0
  %v4470 = vadd.f32 %v4468, %v4469
  %v4471 = vsel %vm4394, %v4459, 0.0
  %v4472 = vadd.f32 %v4470, %v4471
  %v4473 = vsel %vm4394, %v4460, 0.0
  %v4474 = vadd.f32 %v4472, %v4473
  %v4475 = vsel %vm4394, %v4461, 0.0
  %v4476 = vadd.f32 %v4474, %v4475
  %v4477 = vsel %vm4394, %v4462, 0.0
  %v4478 = vadd.f32 %v4476, %v4477
  %v4479 = vsel %vm4410, %v4463, 0.0
  %v4480 = vadd.f32 %v4478, %v4479
  %v4481 = vrot.slane %v4480, 4
  %v4482 = vadd.f32 %v4480, %v4481
  %v4483 = vrot.slane %v4482, 2
  %v4484 = vadd.f32 %v4482, %v4483
  %v4485 = vrot.slane %v4484, 1
  %v4486 = vadd.f32 %v4484, %v4485
  %v4487 = vadd.f32 %v4486, 0.0
  %v4488 = vsub.f32 %v4385, %v4445
  %v4489 = vsub.f32 %v4386, %v4445
  %v4490 = vsub.f32 %v4387, %v4445
  %v4491 = vsub.f32 %v4388, %v4445
  %v4492 = vsub.f32 %v4389, %v4445
  %v4493 = vsub.f32 %v4390, %v4445
  %v4494 = vsub.f32 %v4391, %v4445
  %v4495 = vsub.f32 %v4392, %v4445
  %v4496 = vsub.f32 %v4393, %v4445
  %v4497 = vmul.f32 %v4488, %v4488
  %v4498 = vmul.f32 %v4489, %v4489
  %v4499 = vmul.f32 %v4490, %v4490
  %v4500 = vmul.f32 %v4491, %v4491
  %v4501 = vmul.f32 %v4492, %v4492
  %v4502 = vmul.f32 %v4493, %v4493
  %v4503 = vmul.f32 %v4494, %v4494
  %v4504 = vmul.f32 %v4495, %v4495
  %v4505 = vmul.f32 %v4496, %v4496
  %v4506 = vsel %vm4394, %v4497, 0.0
  %v4507 = vsel %vm4394, %v4498, 0.0
  %v4508 = vadd.f32 %v4506, %v4507
  %v4509 = vsel %vm4394, %v4499, 0.0
  %v4510 = vadd.f32 %v4508, %v4509
  %v4511 = vsel %vm4394, %v4500, 0.0
  %v4512 = vadd.f32 %v4510, %v4511
  %v4513 = vsel %vm4394, %v4501, 0.0
  %v4514 = vadd.f32 %v4512, %v4513
  %v4515 = vsel %vm4394, %v4502, 0.0
  %v4516 = vadd.f32 %v4514, %v4515
  %v4517 = vsel %vm4394, %v4503, 0.0
  %v4518 = vadd.f32 %v4516, %v4517
  %v4519 = vsel %vm4394, %v4504, 0.0
  %v4520 = vadd.f32 %v4518, %v4519
  %v4521 = vsel %vm4410, %v4505, 0.0
  %v4522 = vadd.f32 %v4520, %v4521
  %v4523 = vrot.slane %v4522, 4
  %v4524 = vadd.f32 %v4522, %v4523
  %v4525 = vrot.slane %v4524, 2
  %v4526 = vadd.f32 %v4524, %v4525
  %v4527 = vrot.slane %v4526, 1
  %v4528 = vadd.f32 %v4526, %v4527
  %v4529 = vadd.f32 %v4487, %v4528
  %v4530 = vmul.f32 %v4529, %v4444
  %v4531 = vadd.f32 %v4530, 1e-05
  %v4532 = vrsqrt.pop %v4531
  %v4533 = vmul.f32 %v4446, %v4532
  %v4534 = vmul.f32 %v4447, %v4532
  %v4535 = vmul.f32 %v4448, %v4532
  %v4536 = vmul.f32 %v4449, %v4532
  %v4537 = vmul.f32 %v4450, %v4532
  %v4538 = vmul.f32 %v4451, %v4532
  %v4539 = vmul.f32 %v4452, %v4532
  %v4540 = vmul.f32 %v4453, %v4532
  %v4541 = vmul.f32 %v4454, %v4532
  %v4542 = vlaneseq
  %v4543 = vshrl.u32 %v4542, 7
  %v4544 = vsub.s32 0, %v4543
  %v4545 = vrot.slane %v4370, %v4544
  %v4546 = vmul.f32 %v4533, %v4545
  %v4547 = vmul.f32 %v4534, %v4545
  %v4548 = vmul.f32 %v4535, %v4545
  %v4549 = vmul.f32 %v4536, %v4545
  %v4550 = vmul.f32 %v4537, %v4545
  %v4551 = vmul.f32 %v4538, %v4545
  %v4552 = vmul.f32 %v4539, %v4545
  %v4553 = vmul.f32 %v4540, %v4545
  %v4554 = vmul.f32 %v4541, %v4545
  %v4555 = vlaneseq
  %v4556 = vshrl.u32 %v4555, 7
  %v4557 = vsub.s32 0, %v4556
  %v4558 = vrot.slane %v4371, %v4557
  %v4559 = vadd.f32 %v4546, %v4558
  %v4560 = vadd.f32 %v4547, %v4558
  %v4561 = vadd.f32 %v4548, %v4558
  %v4562 = vadd.f32 %v4549, %v4558
  %v4563 = vadd.f32 %v4550, %v4558
  %v4564 = vadd.f32 %v4551, %v4558
  %v4565 = vadd.f32 %v4552, %v4558
  %v4566 = vadd.f32 %v4553, %v4558
  %v4567 = vadd.f32 %v4554, %v4558
  %vm4568 = vcmp.ge.f32.partialorder %v4559, 0.0
  %vm4569 = vcmp.ge.f32.partialorder %v4560, 0.0
  %vm4570 = vcmp.ge.f32.partialorder %v4561, 0.0
  %vm4571 = vcmp.ge.f32.partialorder %v4562, 0.0
  %vm4572 = vcmp.ge.f32.partialorder %v4563, 0.0
  %vm4573 = vcmp.ge.f32.partialorder %v4564, 0.0
  %vm4574 = vcmp.ge.f32.partialorder %v4565, 0.0
  %vm4575 = vcmp.ge.f32.partialorder %v4566, 0.0
  %vm4576 = vcmp.ge.f32.partialorder %v4567, 0.0
  %v4577 = vmul.f32 %v4559, 0.2
  %v4578 = vmul.f32 %v4560, 0.2
  %v4579 = vmul.f32 %v4561, 0.2
  %v4580 = vmul.f32 %v4562, 0.2
  %v4581 = vmul.f32 %v4563, 0.2
  %v4582 = vmul.f32 %v4564, 0.2
  %v4583 = vmul.f32 %v4565, 0.2
  %v4584 = vmul.f32 %v4566, 0.2
  %v4585 = vmul.f32 %v4567, 0.2
  %v4586 = vsel %vm4568, %v4559, %v4577
  %v4587 = vsel %vm4569, %v4560, %v4578
  %v4588 = vsel %vm4570, %v4561, %v4579
  %v4589 = vsel %vm4571, %v4562, %v4580
  %v4590 = vsel %vm4572, %v4563, %v4581
  %v4591 = vsel %vm4573, %v4564, %v4582
  %v4592 = vsel %vm4574, %v4565, %v4583
  %v4593 = vsel %vm4575, %v4566, %v4584
  %v4594 = vsel %vm4576, %v4567, %v4585
  %v4595 = vmul.f32 %v4488, %v4532
  %v4596 = vmul.f32 %v4489, %v4532
  %v4597 = vmul.f32 %v4490, %v4532
  %v4598 = vmul.f32 %v4491, %v4532
  %v4599 = vmul.f32 %v4492, %v4532
  %v4600 = vmul.f32 %v4493, %v4532
  %v4601 = vmul.f32 %v4494, %v4532
  %v4602 = vmul.f32 %v4495, %v4532
  %v4603 = vmul.f32 %v4496, %v4532
  %v4604 = vmul.f32 %v4595, %v4545
  %v4605 = vmul.f32 %v4596, %v4545
  %v4606 = vmul.f32 %v4597, %v4545
  %v4607 = vmul.f32 %v4598, %v4545
  %v4608 = vmul.f32 %v4599, %v4545
  %v4609 = vmul.f32 %v4600, %v4545
  %v4610 = vmul.f32 %v4601, %v4545
  %v4611 = vmul.f32 %v4602, %v4545
  %v4612 = vmul.f32 %v4603, %v4545
  %v4613 = vadd.f32 %v4604, %v4558
  %v4614 = vadd.f32 %v4605, %v4558
  %v4615 = vadd.f32 %v4606, %v4558
  %v4616 = vadd.f32 %v4607, %v4558
  %v4617 = vadd.f32 %v4608, %v4558
  %v4618 = vadd.f32 %v4609, %v4558
  %v4619 = vadd.f32 %v4610, %v4558
  %v4620 = vadd.f32 %v4611, %v4558
  %v4621 = vadd.f32 %v4612, %v4558
  %vm4622 = vcmp.ge.f32.partialorder %v4613, 0.0
  %vm4623 = vcmp.ge.f32.partialorder %v4614, 0.0
  %vm4624 = vcmp.ge.f32.partialorder %v4615, 0.0
  %vm4625 = vcmp.ge.f32.partialorder %v4616, 0.0
  %vm4626 = vcmp.ge.f32.partialorder %v4617, 0.0
  %vm4627 = vcmp.ge.f32.partialorder %v4618, 0.0
  %vm4628 = vcmp.ge.f32.partialorder %v4619, 0.0
  %vm4629 = vcmp.ge.f32.partialorder %v4620, 0.0
  %vm4630 = vcmp.ge.f32.partialorder %v4621, 0.0
  %v4631 = vmul.f32 %v4613, 0.2
  %v4632 = vmul.f32 %v4614, 0.2
  %v4633 = vmul.f32 %v4615, 0.2
  %v4634 = vmul.f32 %v4616, 0.2
  %v4635 = vmul.f32 %v4617, 0.2
  %v4636 = vmul.f32 %v4618, 0.2
  %v4637 = vmul.f32 %v4619, 0.2
  %v4638 = vmul.f32 %v4620, 0.2
  %v4639 = vmul.f32 %v4621, 0.2
  %v4640 = vsel %vm4622, %v4613, %v4631
  %v4641 = vsel %vm4623, %v4614, %v4632
  %v4642 = vsel %vm4624, %v4615, %v4633
  %v4643 = vsel %vm4625, %v4616, %v4634
  %v4644 = vsel %vm4626, %v4617, %v4635
  %v4645 = vsel %vm4627, %v4618, %v4636
  %v4646 = vsel %vm4628, %v4619, %v4637
  %v4647 = vsel %vm4629, %v4620, %v4638
  %v4648 = vsel %vm4630, %v4621, %v4639
  %4649 = vst.msk [vmem:[#allocation2] sm:$0xff] %vm4394, %v4586
  %4650 = vst.msk [vmem:[#allocation2 + $0x8] sm:$0xff] %vm4394, %v4587
  %4651 = vst.msk [vmem:[#allocation2 + $0x10] sm:$0xff] %vm4394, %v4588
  %4652 = vst.msk [vmem:[#allocation2 + $0x18] sm:$0xff] %vm4394, %v4589
  %4653 = vst.msk [vmem:[#allocation2 + $0x20] sm:$0xff] %vm4394, %v4590
  %4654 = vst.msk [vmem:[#allocation2 + $0x28] sm:$0xff] %vm4394, %v4591
  %4655 = vst.msk [vmem:[#allocation2 + $0x30] sm:$0xff] %vm4394, %v4592
  %4656 = vst.msk [vmem:[#allocation2 + $0x38] sm:$0xff] %vm4394, %v4593
  %4657 = vst.msk [vmem:[#allocation2 + $0x40] sm:$0x1] %vm4410, %v4594
  %4667 = vrot.lane.b32.xlu0 %v4640, 4
  %v4668 = vpop.permute.xlu0 %4667
  %4669 = vrot.lane.b32.xlu0 %v4641, 4
  %v4670 = vpop.permute.xlu0 %4669
  %4671 = vrot.lane.b32.xlu0 %v4642, 4
  %v4672 = vpop.permute.xlu0 %4671
  %4673 = vrot.lane.b32.xlu0 %v4643, 4
  %v4674 = vpop.permute.xlu0 %4673
  %4675 = vrot.lane.b32.xlu0 %v4644, 4
  %v4676 = vpop.permute.xlu0 %4675
  %4677 = vrot.lane.b32.xlu0 %v4645, 4
  %v4678 = vpop.permute.xlu0 %4677
  %4679 = vrot.lane.b32.xlu0 %v4646, 4
  %v4680 = vpop.permute.xlu0 %4679
  %4681 = vrot.lane.b32.xlu0 %v4647, 4
  %v4682 = vpop.permute.xlu0 %4681
  %4683 = vrot.lane.b32.xlu0 %v4648, 4
  %v4684 = vpop.permute.xlu0 %4683
  %vm4694 = vcmask 64544
  %4695 = vst.msk [vmem:[#allocation2] sm:$0xff] %vm4694, %v4668
  %4696 = vst.msk [vmem:[#allocation2 + $0x8] sm:$0xff] %vm4694, %v4670
  %4697 = vst.msk [vmem:[#allocation2 + $0x10] sm:$0xff] %vm4694, %v4672
  %4698 = vst.msk [vmem:[#allocation2 + $0x18] sm:$0xff] %vm4694, %v4674
  %4699 = vst.msk [vmem:[#allocation2 + $0x20] sm:$0xff] %vm4694, %v4676
  %4700 = vst.msk [vmem:[#allocation2 + $0x28] sm:$0xff] %vm4694, %v4678
  %4701 = vst.msk [vmem:[#allocation2 + $0x30] sm:$0xff] %vm4694, %v4680
  %4702 = vst.msk [vmem:[#allocation2 + $0x38] sm:$0xff] %vm4694, %v4682
  %vm4703 = vcmask 57376
  %4704 = vst.msk [vmem:[#allocation2 + $0x40] sm:$0x1] %vm4703, %v4684
  %v4705 = vld [vmem:[#allocation2] ss:$2 sm:$0xff]
  %s4706 = scalar_lea.vmem [#allocation2], 16
  %v4707 = vld [vmem:[%s4706] ss:$2 sm:$0xff]
  %s4708 = scalar_lea.vmem [#allocation2], 32
  %v4709 = vld [vmem:[%s4708] ss:$2 sm:$0xff]
  %s4710 = scalar_lea.vmem [#allocation2], 48
  %v4711 = vld [vmem:[%s4710] ss:$2 sm:$0x7f]
  %v4712 = vld [vmem:[%s3] sm:$0xf]
  %s4713 = scalar_lea.vmem [#allocation2], 1
  %v4714 = vld [vmem:[%s4713] ss:$2 sm:$0xff]
  %s4715 = scalar_lea.vmem [#allocation2], 17
  %v4716 = vld [vmem:[%s4715] ss:$2 sm:$0xff]
  %s4717 = scalar_lea.vmem [#allocation2], 33
  %v4718 = vld [vmem:[%s4717] ss:$2 sm:$0xff]
  %s4719 = scalar_lea.vmem [#allocation2], 49
  %v4720 = vld [vmem:[%s4719] ss:$2 sm:$0x7f]
  %s4721 = scalar_lea.vmem %s3, 4
  %v4722 = vld [vmem:[%s4721] sm:$0xf]
  %v4724 = vsel %vm4394, %v4714, 0
  %v4727 = vsel %vm4394, %v4716, 0
  %v4730 = vsel %vm4394, %v4718, 0
  %v4733 = vsel %vm4394, %v4720, 0
  %vm4735 = vcmask 1043456
  %v4737 = vsel %vm4735, %v4722, 0
  %4739 = vmatprep.subr.mxu0 0.0
  %4740 = vmatpush1.msra.mxu0 %v4737
  %4741 = vmatprep.subr.mxu0 0.0
  %4742 = vmatpush1.msra.mxu0 0.0
  %4743 = vmatprep.subr.mxu0 0.0
  %4744 = vmatpush1.msra.mxu0 0.0
  %4745 = vmatprep.subr.mxu0 0.0
  %4746 = vmatpush1.msra.mxu0 0.0
  %4747 = vmatprep.subr.mxu0 0.0
  %4748 = vmatpush1.msra.mxu0 0.0
  %4749 = vmatprep.subr.mxu0 0.0
  %4750 = vmatpush1.msra.mxu0 0.0
  %4751 = vmatprep.subr.mxu0 0.0
  %4752 = vmatpush1.msra.mxu0 0.0
  %4753 = vmatprep.subr.mxu0 0.0
  %4754 = vmatpush1.msra.mxu0 0.0
  %4755 = vmatprep.subr.mxu0 0.0
  %4756 = vmatpush1.msra.mxu0 0.0
  %4757 = vmatprep.subr.mxu0 0.0
  %4758 = vmatpush1.msra.mxu0 0.0
  %4759 = vmatprep.subr.mxu0 0.0
  %4760 = vmatpush1.msra.mxu0 0.0
  %4761 = vmatprep.subr.mxu0 0.0
  %4762 = vmatpush1.msra.mxu0 0.0
  %4763 = vmatprep.subr.mxu0 0.0
  %4764 = vmatpush1.msra.mxu0 0.0
  %4765 = vmatprep.subr.mxu0 0.0
  %4766 = vmatpush1.msra.mxu0 0.0
  %4767 = vmatprep.subr.mxu0 0.0
  %4768 = vmatpush1.msra.mxu0 0.0
  %4769 = vmatprep.subr.mxu0 0.0
  %4770 = vmatpush1.msra.mxu0 0.0
  %4771 = vmatprep.subr.mxu0 0.0
  %4772 = vmatpush1.msra.mxu0 0.0
  %4773 = vmatprep.subr.mxu0 0.0
  %4774 = vmatpush1.msra.mxu0 0.0
  %4775 = vmatprep.subr.mxu0 0.0
  %4776 = vmatpush1.msra.mxu0 0.0
  %4777 = vmatprep.subr.mxu0 0.0
  %4778 = vmatpush1.msra.mxu0 0.0
  %4779 = vmatprep.subr.mxu0 0.0
  %4780 = vmatpush1.msra.mxu0 0.0
  %4781 = vmatprep.subr.mxu0 0.0
  %4782 = vmatpush1.msra.mxu0 0.0
  %4783 = vmatprep.subr.mxu0 0.0
  %4784 = vmatpush1.msra.mxu0 0.0
  %4785 = vmatprep.subr.mxu0 0.0
  %4786 = vmatpush1.msra.mxu0 0.0
  %4787 = vmatprep.subr.mxu0 0.0
  %4788 = vmatpush1.msra.mxu0 0.0
  %4789 = vmatprep.subr.mxu0 0.0
  %4790 = vmatpush1.msra.mxu0 0.0
  %4791 = vmatprep.subr.mxu0 0.0
  %4792 = vmatpush1.msra.mxu0 0.0
  %4793 = vmatprep.subr.mxu0 0.0
  %4794 = vmatpush1.msra.mxu0 0.0
  %4795 = vmatprep.subr.mxu0 0.0
  %4796 = vmatpush1.msra.mxu0 0.0
  %4797 = vmatprep.subr.mxu0 0.0
  %4798 = vmatpush1.msra.mxu0 0.0
  %4799 = vmatprep.subr.mxu0 0.0
  %4800 = vmatpush1.msra.mxu0 0.0
  %4801 = vmatprep.subr.mxu0 0.0
  %4802 = vmatpush1.msra.mxu0 0.0
  %4803 = vmatprep.mubr.f32.mxu0 0.0
  %4804 = vmatmul.mubr.f32.gmra.mrb[0].mxu0 %v4724
  %v4805 = vpop.f32.mrb[0].mxu0
  %v4806 = vadd.f32 0.0, %v4805
  %v4807 = vpop.f32.mrb[0].mxu0
  %4808 = vmatprep.mubr.f32.mxu0 0.0
  %4809 = vmatmul.mubr.f32.gmra.mrb[0].mxu0 %v4727
  %v4810 = vpop.f32.mrb[0].mxu0
  %v4811 = vadd.f32 0.0, %v4810
  %v4812 = vpop.f32.mrb[0].mxu0
  %4813 = vmatprep.mubr.f32.mxu0 0.0
  %4814 = vmatmul.mubr.f32.gmra.mrb[0].mxu0 %v4730
  %v4815 = vpop.f32.mrb[0].mxu0
  %v4816 = vadd.f32 0.0, %v4815
  %v4817 = vpop.f32.mrb[0].mxu0
  %4818 = vmatprep.mubr.f32.mxu0 0.0
  %4819 = vmatmul.mubr.f32.gmra.mrb[0].mxu0 %v4733
  %v4820 = vpop.f32.mrb[0].mxu0
  %v4821 = vadd.f32 0.0, %v4820
  %v4822 = vpop.f32.mrb[0].mxu0
  %4823 = vdwg.mxu0
  %v4825 = vsel %vm4394, %v4705, 0
  %v4828 = vsel %vm4394, %v4707, 0
  %v4831 = vsel %vm4394, %v4709, 0
  %v4834 = vsel %vm4394, %v4711, 0
  %v4837 = vsel %vm4735, %v4712, 0
  %4839 = vmatprep.subr.mxu0 0.0
  %4840 = vmatpush1.msra.mxu0 %v4837
  %4841 = vmatprep.subr.mxu0 0.0
  %4842 = vmatpush1.msra.mxu0 0.0
  %4843 = vmatprep.subr.mxu0 0.0
  %4844 = vmatpush1.msra.mxu0 0.0
  %4845 = vmatprep.subr.mxu0 0.0
  %4846 = vmatpush1.msra.mxu0 0.0
  %4847 = vmatprep.subr.mxu0 0.0
  %4848 = vmatpush1.msra.mxu0 0.0
  %4849 = vmatprep.subr.mxu0 0.0
  %4850 = vmatpush1.msra.mxu0 0.0
  %4851 = vmatprep.subr.mxu0 0.0
  %4852 = vmatpush1.msra.mxu0 0.0
  %4853 = vmatprep.subr.mxu0 0.0
  %4854 = vmatpush1.msra.mxu0 0.0
  %4855 = vmatprep.subr.mxu0 0.0
  %4856 = vmatpush1.msra.mxu0 0.0
  %4857 = vmatprep.subr.mxu0 0.0
  %4858 = vmatpush1.msra.mxu0 0.0
  %4859 = vmatprep.subr.mxu0 0.0
  %4860 = vmatpush1.msra.mxu0 0.0
  %4861 = vmatprep.subr.mxu0 0.0
  %4862 = vmatpush1.msra.mxu0 0.0
  %4863 = vmatprep.subr.mxu0 0.0
  %4864 = vmatpush1.msra.mxu0 0.0
  %4865 = vmatprep.subr.mxu0 0.0
  %4866 = vmatpush1.msra.mxu0 0.0
  %4867 = vmatprep.subr.mxu0 0.0
  %4868 = vmatpush1.msra.mxu0 0.0
  %4869 = vmatprep.subr.mxu0 0.0
  %4870 = vmatpush1.msra.mxu0 0.0
  %4871 = vmatprep.subr.mxu0 0.0
  %4872 = vmatpush1.msra.mxu0 0.0
  %4873 = vmatprep.subr.mxu0 0.0
  %4874 = vmatpush1.msra.mxu0 0.0
  %4875 = vmatprep.subr.mxu0 0.0
  %4876 = vmatpush1.msra.mxu0 0.0
  %4877 = vmatprep.subr.mxu0 0.0
  %4878 = vmatpush1.msra.mxu0 0.0
  %4879 = vmatprep.subr.mxu0 0.0
  %4880 = vmatpush1.msra.mxu0 0.0
  %4881 = vmatprep.subr.mxu0 0.0
  %4882 = vmatpush1.msra.mxu0 0.0
  %4883 = vmatprep.subr.mxu0 0.0
  %4884 = vmatpush1.msra.mxu0 0.0
  %4885 = vmatprep.subr.mxu0 0.0
  %4886 = vmatpush1.msra.mxu0 0.0
  %4887 = vmatprep.subr.mxu0 0.0
  %4888 = vmatpush1.msra.mxu0 0.0
  %4889 = vmatprep.subr.mxu0 0.0
  %4890 = vmatpush1.msra.mxu0 0.0
  %4891 = vmatprep.subr.mxu0 0.0
  %4892 = vmatpush1.msra.mxu0 0.0
  %4893 = vmatprep.subr.mxu0 0.0
  %4894 = vmatpush1.msra.mxu0 0.0
  %4895 = vmatprep.subr.mxu0 0.0
  %4896 = vmatpush1.msra.mxu0 0.0
  %4897 = vmatprep.subr.mxu0 0.0
  %4898 = vmatpush1.msra.mxu0 0.0
  %4899 = vmatprep.subr.mxu0 0.0
  %4900 = vmatpush1.msra.mxu0 0.0
  %4901 = vmatprep.subr.mxu0 0.0
  %4902 = vmatpush1.msra.mxu0 0.0
  %4903 = vmatprep.mubr.f32.mxu0 0.0
  %4904 = vmatmul.mubr.f32.gmra.mrb[0].mxu0 %v4825
  %v4905 = vpop.f32.mrb[0].mxu0
  %v4906 = vadd.f32 %v4806, %v4905
  %v4907 = vpop.f32.mrb[0].mxu0
  %4908 = vmatprep.mubr.f32.mxu0 0.0
  %4909 = vmatmul.mubr.f32.gmra.mrb[0].mxu0 %v4828
  %v4910 = vpop.f32.mrb[0].mxu0
  %v4911 = vadd.f32 %v4811, %v4910
  %v4912 = vpop.f32.mrb[0].mxu0
  %4913 = vmatprep.mubr.f32.mxu0 0.0
  %4914 = vmatmul.mubr.f32.gmra.mrb[0].mxu0 %v4831
  %v4915 = vpop.f32.mrb[0].mxu0
  %v4916 = vadd.f32 %v4816, %v4915
  %v4917 = vpop.f32.mrb[0].mxu0
  %4918 = vmatprep.mubr.f32.mxu0 0.0
  %4919 = vmatmul.mubr.f32.gmra.mrb[0].mxu0 %v4834
  %v4920 = vpop.f32.mrb[0].mxu0
  %v4921 = vadd.f32 %v4821, %v4920
  %v4922 = vpop.f32.mrb[0].mxu0
  %4923 = vdwg.mxu0
  %4924 = vrot.lane.b32.xlu0 %v4714, 124
  %v4925 = vpop.permute.xlu0 %4924
  %4926 = vrot.lane.b32.xlu0 %v4716, 124
  %v4927 = vpop.permute.xlu0 %4926
  %4928 = vrot.lane.b32.xlu0 %v4718, 124
  %v4929 = vpop.permute.xlu0 %4928
  %4930 = vrot.lane.b32.xlu0 %v4720, 124
  %v4931 = vpop.permute.xlu0 %4930
  %v4932 = vsel %vm4394, %v4925, 0
  %v4934 = vsel %vm4394, %v4927, 0
  %v4936 = vsel %vm4394, %v4929, 0
  %v4938 = vsel %vm4394, %v4931, 0
  %4940 = vmatprep.subr.mxu0 0.0
  %4941 = vmatpush1.msra.mxu0 %v4737
  %4942 = vmatprep.subr.mxu0 0.0
  %4943 = vmatpush1.msra.mxu0 0.0
  %4944 = vmatprep.subr.mxu0 0.0
  %4945 = vmatpush1.msra.mxu0 0.0
  %4946 = vmatprep.subr.mxu0 0.0
  %4947 = vmatpush1.msra.mxu0 0.0
  %4948 = vmatprep.subr.mxu0 0.0
  %4949 = vmatpush1.msra.mxu0 0.0
  %4950 = vmatprep.subr.mxu0 0.0
  %4951 = vmatpush1.msra.mxu0 0.0
  %4952 = vmatprep.subr.mxu0 0.0
  %4953 = vmatpush1.msra.mxu0 0.0
  %4954 = vmatprep.subr.mxu0 0.0
  %4955 = vmatpush1.msra.mxu0 0.0
  %4956 = vmatprep.subr.mxu0 0.0
  %4957 = vmatpush1.msra.mxu0 0.0
  %4958 = vmatprep.subr.mxu0 0.0
  %4959 = vmatpush1.msra.mxu0 0.0
  %4960 = vmatprep.subr.mxu0 0.0
  %4961 = vmatpush1.msra.mxu0 0.0
  %4962 = vmatprep.subr.mxu0 0.0
  %4963 = vmatpush1.msra.mxu0 0.0
  %4964 = vmatprep.subr.mxu0 0.0
  %4965 = vmatpush1.msra.mxu0 0.0
  %4966 = vmatprep.subr.mxu0 0.0
  %4967 = vmatpush1.msra.mxu0 0.0
  %4968 = vmatprep.subr.mxu0 0.0
  %4969 = vmatpush1.msra.mxu0 0.0
  %4970 = vmatprep.subr.mxu0 0.0
  %4971 = vmatpush1.msra.mxu0 0.0
  %4972 = vmatprep.subr.mxu0 0.0
  %4973 = vmatpush1.msra.mxu0 0.0
  %4974 = vmatprep.subr.mxu0 0.0
  %4975 = vmatpush1.msra.mxu0 0.0
  %4976 = vmatprep.subr.mxu0 0.0
  %4977 = vmatpush1.msra.mxu0 0.0
  %4978 = vmatprep.subr.mxu0 0.0
  %4979 = vmatpush1.msra.mxu0 0.0
  %4980 = vmatprep.subr.mxu0 0.0
  %4981 = vmatpush1.msra.mxu0 0.0
  %4982 = vmatprep.subr.mxu0 0.0
  %4983 = vmatpush1.msra.mxu0 0.0
  %4984 = vmatprep.subr.mxu0 0.0
  %4985 = vmatpush1.msra.mxu0 0.0
  %4986 = vmatprep.subr.mxu0 0.0
  %4987 = vmatpush1.msra.mxu0 0.0
  %4988 = vmatprep.subr.mxu0 0.0
  %4989 = vmatpush1.msra.mxu0 0.0
  %4990 = vmatprep.subr.mxu0 0.0
  %4991 = vmatpush1.msra.mxu0 0.0
  %4992 = vmatprep.subr.mxu0 0.0
  %4993 = vmatpush1.msra.mxu0 0.0
  %4994 = vmatprep.subr.mxu0 0.0
  %4995 = vmatpush1.msra.mxu0 0.0
  %4996 = vmatprep.subr.mxu0 0.0
  %4997 = vmatpush1.msra.mxu0 0.0
  %4998 = vmatprep.subr.mxu0 0.0
  %4999 = vmatpush1.msra.mxu0 0.0
  %5000 = vmatprep.subr.mxu0 0.0
  %5001 = vmatpush1.msra.mxu0 0.0
  %5002 = vmatprep.subr.mxu0 0.0
  %5003 = vmatpush1.msra.mxu0 0.0
  %5004 = vmatprep.mubr.f32.mxu0 0.0
  %5005 = vmatmul.mubr.f32.gmra.mrb[0].mxu0 %v4932
  %v5006 = vpop.f32.mrb[0].mxu0
  %v5007 = vadd.f32 0.0, %v5006
  %v5008 = vpop.f32.mrb[0].mxu0
  %5009 = vmatprep.mubr.f32.mxu0 0.0
  %5010 = vmatmul.mubr.f32.gmra.mrb[0].mxu0 %v4934
  %v5011 = vpop.f32.mrb[0].mxu0
  %v5012 = vadd.f32 0.0, %v5011
  %v5013 = vpop.f32.mrb[0].mxu0
  %5014 = vmatprep.mubr.f32.mxu0 0.0
  %5015 = vmatmul.mubr.f32.gmra.mrb[0].mxu0 %v4936
  %v5016 = vpop.f32.mrb[0].mxu0
  %v5017 = vadd.f32 0.0, %v5016
  %v5018 = vpop.f32.mrb[0].mxu0
  %5019 = vmatprep.mubr.f32.mxu0 0.0
  %5020 = vmatmul.mubr.f32.gmra.mrb[0].mxu0 %v4938
  %v5021 = vpop.f32.mrb[0].mxu0
  %v5022 = vadd.f32 0.0, %v5021
  %v5023 = vpop.f32.mrb[0].mxu0
  %5024 = vdwg.mxu0
  %5025 = vrot.lane.b32.xlu0 %v4705, 124
  %v5026 = vpop.permute.xlu0 %5025
  %5027 = vrot.lane.b32.xlu0 %v4707, 124
  %v5028 = vpop.permute.xlu0 %5027
  %5029 = vrot.lane.b32.xlu0 %v4709, 124
  %v5030 = vpop.permute.xlu0 %5029
  %5031 = vrot.lane.b32.xlu0 %v4711, 124
  %v5032 = vpop.permute.xlu0 %5031
  %v5033 = vsel %vm4394, %v5026, 0
  %v5035 = vsel %vm4394, %v5028, 0
  %v5037 = vsel %vm4394, %v5030, 0
  %v5039 = vsel %vm4394, %v5032, 0
  %5041 = vmatprep.subr.mxu0 0.0
  %5042 = vmatpush1.msra.mxu0 %v4837
  %5043 = vmatprep.subr.mxu0 0.0
  %5044 = vmatpush1.msra.mxu0 0.0
  %5045 = vmatprep.subr.mxu0 0.0
  %5046 = vmatpush1.msra.mxu0 0.0
  %5047 = vmatprep.subr.mxu0 0.0
  %5048 = vmatpush1.msra.mxu0 0.0
  %5049 = vmatprep.subr.mxu0 0.0
  %5050 = vmatpush1.msra.mxu0 0.0
  %5051 = vmatprep.subr.mxu0 0.0
  %5052 = vmatpush1.msra.mxu0 0.0
  %5053 = vmatprep.subr.mxu0 0.0
  %5054 = vmatpush1.msra.mxu0 0.0
  %5055 = vmatprep.subr.mxu0 0.0
  %5056 = vmatpush1.msra.mxu0 0.0
  %5057 = vmatprep.subr.mxu0 0.0
  %5058 = vmatpush1.msra.mxu0 0.0
  %5059 = vmatprep.subr.mxu0 0.0
  %5060 = vmatpush1.msra.mxu0 0.0
  %5061 = vmatprep.subr.mxu0 0.0
  %5062 = vmatpush1.msra.mxu0 0.0
  %5063 = vmatprep.subr.mxu0 0.0
  %5064 = vmatpush1.msra.mxu0 0.0
  %5065 = vmatprep.subr.mxu0 0.0
  %5066 = vmatpush1.msra.mxu0 0.0
  %5067 = vmatprep.subr.mxu0 0.0
  %5068 = vmatpush1.msra.mxu0 0.0
  %5069 = vmatprep.subr.mxu0 0.0
  %5070 = vmatpush1.msra.mxu0 0.0
  %5071 = vmatprep.subr.mxu0 0.0
  %5072 = vmatpush1.msra.mxu0 0.0
  %5073 = vmatprep.subr.mxu0 0.0
  %5074 = vmatpush1.msra.mxu0 0.0
  %5075 = vmatprep.subr.mxu0 0.0
  %5076 = vmatpush1.msra.mxu0 0.0
  %5077 = vmatprep.subr.mxu0 0.0
  %5078 = vmatpush1.msra.mxu0 0.0
  %5079 = vmatprep.subr.mxu0 0.0
  %5080 = vmatpush1.msra.mxu0 0.0
  %5081 = vmatprep.subr.mxu0 0.0
  %5082 = vmatpush1.msra.mxu0 0.0
  %5083 = vmatprep.subr.mxu0 0.0
  %5084 = vmatpush1.msra.mxu0 0.0
  %5085 = vmatprep.subr.mxu0 0.0
  %5086 = vmatpush1.msra.mxu0 0.0
  %5087 = vmatprep.subr.mxu0 0.0
  %5088 = vmatpush1.msra.mxu0 0.0
  %5089 = vmatprep.subr.mxu0 0.0
  %5090 = vmatpush1.msra.mxu0 0.0
  %5091 = vmatprep.subr.mxu0 0.0
  %5092 = vmatpush1.msra.mxu0 0.0
  %5093 = vmatprep.subr.mxu0 0.0
  %5094 = vmatpush1.msra.mxu0 0.0
  %5095 = vmatprep.subr.mxu0 0.0
  %5096 = vmatpush1.msra.mxu0 0.0
  %5097 = vmatprep.subr.mxu0 0.0
  %5098 = vmatpush1.msra.mxu0 0.0
  %5099 = vmatprep.subr.mxu0 0.0
  %5100 = vmatpush1.msra.mxu0 0.0
  %5101 = vmatprep.subr.mxu0 0.0
  %5102 = vmatpush1.msra.mxu0 0.0
  %5103 = vmatprep.subr.mxu0 0.0
  %5104 = vmatpush1.msra.mxu0 0.0
  %5105 = vmatprep.mubr.f32.mxu0 0.0
  %5106 = vmatmul.mubr.f32.gmra.mrb[0].mxu0 %v5033
  %v5107 = vpop.f32.mrb[0].mxu0
  %v5108 = vadd.f32 %v5007, %v5107
  %v5109 = vpop.f32.mrb[0].mxu0
  %5110 = vmatprep.mubr.f32.mxu0 0.0
  %5111 = vmatmul.mubr.f32.gmra.mrb[0].mxu0 %v5035
  %v5112 = vpop.f32.mrb[0].mxu0
  %v5113 = vadd.f32 %v5012, %v5112
  %v5114 = vpop.f32.mrb[0].mxu0
  %5115 = vmatprep.mubr.f32.mxu0 0.0
  %5116 = vmatmul.mubr.f32.gmra.mrb[0].mxu0 %v5037
  %v5117 = vpop.f32.mrb[0].mxu0
  %v5118 = vadd.f32 %v5017, %v5117
  %v5119 = vpop.f32.mrb[0].mxu0
  %5120 = vmatprep.mubr.f32.mxu0 0.0
  %5121 = vmatmul.mubr.f32.gmra.mrb[0].mxu0 %v5039
  %v5122 = vpop.f32.mrb[0].mxu0
  %v5123 = vadd.f32 %v5022, %v5122
  %v5124 = vpop.f32.mrb[0].mxu0
  %5125 = vdwg.mxu0
  %s5126 = scalar_lea.vmem [#allocation2], 2
  %v5127 = vld [vmem:[%s5126] ss:$2 sm:$0xff]
  %s5128 = scalar_lea.vmem [#allocation2], 18
  %v5129 = vld [vmem:[%s5128] ss:$2 sm:$0xff]
  %s5130 = scalar_lea.vmem [#allocation2], 34
  %v5131 = vld [vmem:[%s5130] ss:$2 sm:$0xff]
  %s5132 = scalar_lea.vmem [#allocation2], 50
  %v5133 = vld [vmem:[%s5132] ss:$2 sm:$0x7f]
  %s5134 = scalar_lea.vmem %s3, 8
  %v5135 = vld [vmem:[%s5134] sm:$0xf]
  %v5137 = vsel %vm4394, %v5127, 0
  %v5140 = vsel %vm4394, %v5129, 0
  %v5143 = vsel %vm4394, %v5131, 0
  %v5146 = vsel %vm4394, %v5133, 0
  %v5149 = vsel %vm4735, %v5135, 0
  %5151 = vmatprep.subr.mxu0 0.0
  %5152 = vmatpush1.msra.mxu0 %v5149
  %5153 = vmatprep.subr.mxu0 0.0
  %5154 = vmatpush1.msra.mxu0 0.0
  %5155 = vmatprep.subr.mxu0 0.0
  %5156 = vmatpush1.msra.mxu0 0.0
  %5157 = vmatprep.subr.mxu0 0.0
  %5158 = vmatpush1.msra.mxu0 0.0
  %5159 = vmatprep.subr.mxu0 0.0
  %5160 = vmatpush1.msra.mxu0 0.0
  %5161 = vmatprep.subr.mxu0 0.0
  %5162 = vmatpush1.msra.mxu0 0.0
  %5163 = vmatprep.subr.mxu0 0.0
  %5164 = vmatpush1.msra.mxu0 0.0
  %5165 = vmatprep.subr.mxu0 0.0
  %5166 = vmatpush1.msra.mxu0 0.0
  %5167 = vmatprep.subr.mxu0 0.0
  %5168 = vmatpush1.msra.mxu0 0.0
  %5169 = vmatprep.subr.mxu0 0.0
  %5170 = vmatpush1.msra.mxu0 0.0
  %5171 = vmatprep.subr.mxu0 0.0
  %5172 = vmatpush1.msra.mxu0 0.0
  %5173 = vmatprep.subr.mxu0 0.0
  %5174 = vmatpush1.msra.mxu0 0.0
  %5175 = vmatprep.subr.mxu0 0.0
  %5176 = vmatpush1.msra.mxu0 0.0
  %5177 = vmatprep.subr.mxu0 0.0
  %5178 = vmatpush1.msra.mxu0 0.0
  %5179 = vmatprep.subr.mxu0 0.0
  %5180 = vmatpush1.msra.mxu0 0.0
  %5181 = vmatprep.subr.mxu0 0.0
  %5182 = vmatpush1.msra.mxu0 0.0
  %5183 = vmatprep.subr.mxu0 0.0
  %5184 = vmatpush1.msra.mxu0 0.0
  %5185 = vmatprep.subr.mxu0 0.0
  %5186 = vmatpush1.msra.mxu0 0.0
  %5187 = vmatprep.subr.mxu0 0.0
  %5188 = vmatpush1.msra.mxu0 0.0
  %5189 = vmatprep.subr.mxu0 0.0
  %5190 = vmatpush1.msra.mxu0 0.0
  %5191 = vmatprep.subr.mxu0 0.0
  %5192 = vmatpush1.msra.mxu0 0.0
  %5193 = vmatprep.subr.mxu0 0.0
  %5194 = vmatpush1.msra.mxu0 0.0
  %5195 = vmatprep.subr.mxu0 0.0
  %5196 = vmatpush1.msra.mxu0 0.0
  %5197 = vmatprep.subr.mxu0 0.0
  %5198 = vmatpush1.msra.mxu0 0.0
  %5199 = vmatprep.subr.mxu0 0.0
  %5200 = vmatpush1.msra.mxu0 0.0
  %5201 = vmatprep.subr.mxu0 0.0
  %5202 = vmatpush1.msra.mxu0 0.0
  %5203 = vmatprep.subr.mxu0 0.0
  %5204 = vmatpush1.msra.mxu0 0.0
  %5205 = vmatprep.subr.mxu0 0.0
  %5206 = vmatpush1.msra.mxu0 0.0
  %5207 = vmatprep.subr.mxu0 0.0
  %5208 = vmatpush1.msra.mxu0 0.0
  %5209 = vmatprep.subr.mxu0 0.0
  %5210 = vmatpush1.msra.mxu0 0.0
  %5211 = vmatprep.subr.mxu0 0.0
  %5212 = vmatpush1.msra.mxu0 0.0
  %5213 = vmatprep.subr.mxu0 0.0
  %5214 = vmatpush1.msra.mxu0 0.0
  %5215 = vmatprep.mubr.f32.mxu0 0.0
  %5216 = vmatmul.mubr.f32.gmra.mrb[0].mxu0 %v5137
  %v5217 = vpop.f32.mrb[0].mxu0
  %v5218 = vadd.f32 0.0, %v5217
  %v5219 = vpop.f32.mrb[0].mxu0
  %5220 = vmatprep.mubr.f32.mxu0 0.0
  %5221 = vmatmul.mubr.f32.gmra.mrb[0].mxu0 %v5140
  %v5222 = vpop.f32.mrb[0].mxu0
  %v5223 = vadd.f32 0.0, %v5222
  %v5224 = vpop.f32.mrb[0].mxu0
  %5225 = vmatprep.mubr.f32.mxu0 0.0
  %5226 = vmatmul.mubr.f32.gmra.mrb[0].mxu0 %v5143
  %v5227 = vpop.f32.mrb[0].mxu0
  %v5228 = vadd.f32 0.0, %v5227
  %v5229 = vpop.f32.mrb[0].mxu0
  %5230 = vmatprep.mubr.f32.mxu0 0.0
  %5231 = vmatmul.mubr.f32.gmra.mrb[0].mxu0 %v5146
  %v5232 = vpop.f32.mrb[0].mxu0
  %v5233 = vadd.f32 0.0, %v5232
  %v5234 = vpop.f32.mrb[0].mxu0
  %5235 = vdwg.mxu0
  %v5236 = vadd.f32 %v4906, %v5218
  %v5237 = vadd.f32 %v4911, %v5223
  %v5238 = vadd.f32 %v4916, %v5228
  %v5239 = vadd.f32 %v4921, %v5233
  %5240 = vrot.lane.b32.xlu0 %v5127, 124
  %v5241 = vpop.permute.xlu0 %5240
  %5242 = vrot.lane.b32.xlu0 %v5129, 124
  %v5243 = vpop.permute.xlu0 %5242
  %5244 = vrot.lane.b32.xlu0 %v5131, 124
  %v5245 = vpop.permute.xlu0 %5244
  %5246 = vrot.lane.b32.xlu0 %v5133, 124
  %v5247 = vpop.permute.xlu0 %5246
  %v5248 = vsel %vm4394, %v5241, 0
  %v5250 = vsel %vm4394, %v5243, 0
  %v5252 = vsel %vm4394, %v5245, 0
  %v5254 = vsel %vm4394, %v5247, 0
  %5256 = vmatprep.subr.mxu0 0.0
  %5257 = vmatpush1.msra.mxu0 %v5149
  %5258 = vmatprep.subr.mxu0 0.0
  %5259 = vmatpush1.msra.mxu0 0.0
  %5260 = vmatprep.subr.mxu0 0.0
  %5261 = vmatpush1.msra.mxu0 0.0
  %5262 = vmatprep.subr.mxu0 0.0
  %5263 = vmatpush1.msra.mxu0 0.0
  %5264 = vmatprep.subr.mxu0 0.0
  %5265 = vmatpush1.msra.mxu0 0.0
  %5266 = vmatprep.subr.mxu0 0.0
  %5267 = vmatpush1.msra.mxu0 0.0
  %5268 = vmatprep.subr.mxu0 0.0
  %5269 = vmatpush1.msra.mxu0 0.0
  %5270 = vmatprep.subr.mxu0 0.0
  %5271 = vmatpush1.msra.mxu0 0.0
  %5272 = vmatprep.subr.mxu0 0.0
  %5273 = vmatpush1.msra.mxu0 0.0
  %5274 = vmatprep.subr.mxu0 0.0
  %5275 = vmatpush1.msra.mxu0 0.0
  %5276 = vmatprep.subr.mxu0 0.0
  %5277 = vmatpush1.msra.mxu0 0.0
  %5278 = vmatprep.subr.mxu0 0.0
  %5279 = vmatpush1.msra.mxu0 0.0
  %5280 = vmatprep.subr.mxu0 0.0
  %5281 = vmatpush1.msra.mxu0 0.0
  %5282 = vmatprep.subr.mxu0 0.0
  %5283 = vmatpush1.msra.mxu0 0.0
  %5284 = vmatprep.subr.mxu0 0.0
  %5285 = vmatpush1.msra.mxu0 0.0
  %5286 = vmatprep.subr.mxu0 0.0
  %5287 = vmatpush1.msra.mxu0 0.0
  %5288 = vmatprep.subr.mxu0 0.0
  %5289 = vmatpush1.msra.mxu0 0.0
  %5290 = vmatprep.subr.mxu0 0.0
  %5291 = vmatpush1.msra.mxu0 0.0
  %5292 = vmatprep.subr.mxu0 0.0
  %5293 = vmatpush1.msra.mxu0 0.0
  %5294 = vmatprep.subr.mxu0 0.0
  %5295 = vmatpush1.msra.mxu0 0.0
  %5296 = vmatprep.subr.mxu0 0.0
  %5297 = vmatpush1.msra.mxu0 0.0
  %5298 = vmatprep.subr.mxu0 0.0
  %5299 = vmatpush1.msra.mxu0 0.0
  %5300 = vmatprep.subr.mxu0 0.0
  %5301 = vmatpush1.msra.mxu0 0.0
  %5302 = vmatprep.subr.mxu0 0.0
  %5303 = vmatpush1.msra.mxu0 0.0
  %5304 = vmatprep.subr.mxu0 0.0
  %5305 = vmatpush1.msra.mxu0 0.0
  %5306 = vmatprep.subr.mxu0 0.0
  %5307 = vmatpush1.msra.mxu0 0.0
  %5308 = vmatprep.subr.mxu0 0.0
  %5309 = vmatpush1.msra.mxu0 0.0
  %5310 = vmatprep.subr.mxu0 0.0
  %5311 = vmatpush1.msra.mxu0 0.0
  %5312 = vmatprep.subr.mxu0 0.0
  %5313 = vmatpush1.msra.mxu0 0.0
  %5314 = vmatprep.subr.mxu0 0.0
  %5315 = vmatpush1.msra.mxu0 0.0
  %5316 = vmatprep.subr.mxu0 0.0
  %5317 = vmatpush1.msra.mxu0 0.0
  %5318 = vmatprep.subr.mxu0 0.0
  %5319 = vmatpush1.msra.mxu0 0.0
  %5320 = vmatprep.mubr.f32.mxu0 0.0
  %5321 = vmatmul.mubr.f32.gmra.mrb[0].mxu0 %v5248
  %v5322 = vpop.f32.mrb[0].mxu0
  %v5323 = vadd.f32 0.0, %v5322
  %v5324 = vpop.f32.mrb[0].mxu0
  %5325 = vmatprep.mubr.f32.mxu0 0.0
  %5326 = vmatmul.mubr.f32.gmra.mrb[0].mxu0 %v5250
  %v5327 = vpop.f32.mrb[0].mxu0
  %v5328 = vadd.f32 0.0, %v5327
  %v5329 = vpop.f32.mrb[0].mxu0
  %5330 = vmatprep.mubr.f32.mxu0 0.0
  %5331 = vmatmul.mubr.f32.gmra.mrb[0].mxu0 %v5252
  %v5332 = vpop.f32.mrb[0].mxu0
  %v5333 = vadd.f32 0.0, %v5332
  %v5334 = vpop.f32.mrb[0].mxu0
  %5335 = vmatprep.mubr.f32.mxu0 0.0
  %5336 = vmatmul.mubr.f32.gmra.mrb[0].mxu0 %v5254
  %v5337 = vpop.f32.mrb[0].mxu0
  %v5338 = vadd.f32 0.0, %v5337
  %v5339 = vpop.f32.mrb[0].mxu0
  %5340 = vdwg.mxu0
  %v5341 = vadd.f32 %v5108, %v5323
  %v5342 = vadd.f32 %v5113, %v5328
  %v5343 = vadd.f32 %v5118, %v5333
  %v5344 = vadd.f32 %v5123, %v5338
  %s5345 = scalar_lea.vmem [#allocation2], 3
  %v5346 = vld [vmem:[%s5345] ss:$2 sm:$0xff]
  %s5347 = scalar_lea.vmem [#allocation2], 19
  %v5348 = vld [vmem:[%s5347] ss:$2 sm:$0xff]
  %s5349 = scalar_lea.vmem [#allocation2], 35
  %v5350 = vld [vmem:[%s5349] ss:$2 sm:$0xff]
  %s5351 = scalar_lea.vmem [#allocation2], 51
  %v5352 = vld [vmem:[%s5351] ss:$2 sm:$0x7f]
  %s5353 = scalar_lea.vmem %s3, 12
  %v5354 = vld [vmem:[%s5353] sm:$0xf]
  %v5356 = vsel %vm4394, %v5346, 0
  %v5359 = vsel %vm4394, %v5348, 0
  %v5362 = vsel %vm4394, %v5350, 0
  %v5365 = vsel %vm4394, %v5352, 0
  %v5368 = vsel %vm4735, %v5354, 0
  %5370 = vmatprep.subr.mxu0 0.0
  %5371 = vmatpush1.msra.mxu0 %v5368
  %5372 = vmatprep.subr.mxu0 0.0
  %5373 = vmatpush1.msra.mxu0 0.0
  %5374 = vmatprep.subr.mxu0 0.0
  %5375 = vmatpush1.msra.mxu0 0.0
  %5376 = vmatprep.subr.mxu0 0.0
  %5377 = vmatpush1.msra.mxu0 0.0
  %5378 = vmatprep.subr.mxu0 0.0
  %5379 = vmatpush1.msra.mxu0 0.0
  %5380 = vmatprep.subr.mxu0 0.0
  %5381 = vmatpush1.msra.mxu0 0.0
  %5382 = vmatprep.subr.mxu0 0.0
  %5383 = vmatpush1.msra.mxu0 0.0
  %5384 = vmatprep.subr.mxu0 0.0
  %5385 = vmatpush1.msra.mxu0 0.0
  %5386 = vmatprep.subr.mxu0 0.0
  %5387 = vmatpush1.msra.mxu0 0.0
  %5388 = vmatprep.subr.mxu0 0.0
  %5389 = vmatpush1.msra.mxu0 0.0
  %5390 = vmatprep.subr.mxu0 0.0
  %5391 = vmatpush1.msra.mxu0 0.0
  %5392 = vmatprep.subr.mxu0 0.0
  %5393 = vmatpush1.msra.mxu0 0.0
  %5394 = vmatprep.subr.mxu0 0.0
  %5395 = vmatpush1.msra.mxu0 0.0
  %5396 = vmatprep.subr.mxu0 0.0
  %5397 = vmatpush1.msra.mxu0 0.0
  %5398 = vmatprep.subr.mxu0 0.0
  %5399 = vmatpush1.msra.mxu0 0.0
  %5400 = vmatprep.subr.mxu0 0.0
  %5401 = vmatpush1.msra.mxu0 0.0
  %5402 = vmatprep.subr.mxu0 0.0
  %5403 = vmatpush1.msra.mxu0 0.0
  %5404 = vmatprep.subr.mxu0 0.0
  %5405 = vmatpush1.msra.mxu0 0.0
  %5406 = vmatprep.subr.mxu0 0.0
  %5407 = vmatpush1.msra.mxu0 0.0
  %5408 = vmatprep.subr.mxu0 0.0
  %5409 = vmatpush1.msra.mxu0 0.0
  %5410 = vmatprep.subr.mxu0 0.0
  %5411 = vmatpush1.msra.mxu0 0.0
  %5412 = vmatprep.subr.mxu0 0.0
  %5413 = vmatpush1.msra.mxu0 0.0
  %5414 = vmatprep.subr.mxu0 0.0
  %5415 = vmatpush1.msra.mxu0 0.0
  %5416 = vmatprep.subr.mxu0 0.0
  %5417 = vmatpush1.msra.mxu0 0.0
  %5418 = vmatprep.subr.mxu0 0.0
  %5419 = vmatpush1.msra.mxu0 0.0
  %5420 = vmatprep.subr.mxu0 0.0
  %5421 = vmatpush1.msra.mxu0 0.0
  %5422 = vmatprep.subr.mxu0 0.0
  %5423 = vmatpush1.msra.mxu0 0.0
  %5424 = vmatprep.subr.mxu0 0.0
  %5425 = vmatpush1.msra.mxu0 0.0
  %5426 = vmatprep.subr.mxu0 0.0
  %5427 = vmatpush1.msra.mxu0 0.0
  %5428 = vmatprep.subr.mxu0 0.0
  %5429 = vmatpush1.msra.mxu0 0.0
  %5430 = vmatprep.subr.mxu0 0.0
  %5431 = vmatpush1.msra.mxu0 0.0
  %5432 = vmatprep.subr.mxu0 0.0
  %5433 = vmatpush1.msra.mxu0 0.0
  %5434 = vmatprep.mubr.f32.mxu0 0.0
  %5435 = vmatmul.mubr.f32.gmra.mrb[0].mxu0 %v5356
  %v5436 = vpop.f32.mrb[0].mxu0
  %v5437 = vadd.f32 0.0, %v5436
  %v5438 = vpop.f32.mrb[0].mxu0
  %5439 = vmatprep.mubr.f32.mxu0 0.0
  %5440 = vmatmul.mubr.f32.gmra.mrb[0].mxu0 %v5359
  %v5441 = vpop.f32.mrb[0].mxu0
  %v5442 = vadd.f32 0.0, %v5441
  %v5443 = vpop.f32.mrb[0].mxu0
  %5444 = vmatprep.mubr.f32.mxu0 0.0
  %5445 = vmatmul.mubr.f32.gmra.mrb[0].mxu0 %v5362
  %v5446 = vpop.f32.mrb[0].mxu0
  %v5447 = vadd.f32 0.0, %v5446
  %v5448 = vpop.f32.mrb[0].mxu0
  %5449 = vmatprep.mubr.f32.mxu0 0.0
  %5450 = vmatmul.mubr.f32.gmra.mrb[0].mxu0 %v5365
  %v5451 = vpop.f32.mrb[0].mxu0
  %v5452 = vadd.f32 0.0, %v5451
  %v5453 = vpop.f32.mrb[0].mxu0
  %5454 = vdwg.mxu0
  %v5455 = vadd.f32 %v5236, %v5437
  %v5456 = vadd.f32 %v5237, %v5442
  %v5457 = vadd.f32 %v5238, %v5447
  %v5458 = vadd.f32 %v5239, %v5452
  %5459 = vrot.lane.b32.xlu0 %v5346, 124
  %v5460 = vpop.permute.xlu0 %5459
  %5461 = vrot.lane.b32.xlu0 %v5348, 124
  %v5462 = vpop.permute.xlu0 %5461
  %5463 = vrot.lane.b32.xlu0 %v5350, 124
  %v5464 = vpop.permute.xlu0 %5463
  %5465 = vrot.lane.b32.xlu0 %v5352, 124
  %v5466 = vpop.permute.xlu0 %5465
  %v5467 = vsel %vm4394, %v5460, 0
  %v5469 = vsel %vm4394, %v5462, 0
  %v5471 = vsel %vm4394, %v5464, 0
  %v5473 = vsel %vm4394, %v5466, 0
  %5475 = vmatprep.subr.mxu0 0.0
  %5476 = vmatpush1.msra.mxu0 %v5368
  %5477 = vmatprep.subr.mxu0 0.0
  %5478 = vmatpush1.msra.mxu0 0.0
  %5479 = vmatprep.subr.mxu0 0.0
  %5480 = vmatpush1.msra.mxu0 0.0
  %5481 = vmatprep.subr.mxu0 0.0
  %5482 = vmatpush1.msra.mxu0 0.0
  %5483 = vmatprep.subr.mxu0 0.0
  %5484 = vmatpush1.msra.mxu0 0.0
  %5485 = vmatprep.subr.mxu0 0.0
  %5486 = vmatpush1.msra.mxu0 0.0
  %5487 = vmatprep.subr.mxu0 0.0
  %5488 = vmatpush1.msra.mxu0 0.0
  %5489 = vmatprep.subr.mxu0 0.0
  %5490 = vmatpush1.msra.mxu0 0.0
  %5491 = vmatprep.subr.mxu0 0.0
  %5492 = vmatpush1.msra.mxu0 0.0
  %5493 = vmatprep.subr.mxu0 0.0
  %5494 = vmatpush1.msra.mxu0 0.0
  %5495 = vmatprep.subr.mxu0 0.0
  %5496 = vmatpush1.msra.mxu0 0.0
  %5497 = vmatprep.subr.mxu0 0.0
  %5498 = vmatpush1.msra.mxu0 0.0
  %5499 = vmatprep.subr.mxu0 0.0
  %5500 = vmatpush1.msra.mxu0 0.0
  %5501 = vmatprep.subr.mxu0 0.0
  %5502 = vmatpush1.msra.mxu0 0.0
  %5503 = vmatprep.subr.mxu0 0.0
  %5504 = vmatpush1.msra.mxu0 0.0
  %5505 = vmatprep.subr.mxu0 0.0
  %5506 = vmatpush1.msra.mxu0 0.0
  %5507 = vmatprep.subr.mxu0 0.0
  %5508 = vmatpush1.msra.mxu0 0.0
  %5509 = vmatprep.subr.mxu0 0.0
  %5510 = vmatpush1.msra.mxu0 0.0
  %5511 = vmatprep.subr.mxu0 0.0
  %5512 = vmatpush1.msra.mxu0 0.0
  %5513 = vmatprep.subr.mxu0 0.0
  %5514 = vmatpush1.msra.mxu0 0.0
  %5515 = vmatprep.subr.mxu0 0.0
  %5516 = vmatpush1.msra.mxu0 0.0
  %5517 = vmatprep.subr.mxu0 0.0
  %5518 = vmatpush1.msra.mxu0 0.0
  %5519 = vmatprep.subr.mxu0 0.0
  %5520 = vmatpush1.msra.mxu0 0.0
  %5521 = vmatprep.subr.mxu0 0.0
  %5522 = vmatpush1.msra.mxu0 0.0
  %5523 = vmatprep.subr.mxu0 0.0
  %5524 = vmatpush1.msra.mxu0 0.0
  %5525 = vmatprep.subr.mxu0 0.0
  %5526 = vmatpush1.msra.mxu0 0.0
  %5527 = vmatprep.subr.mxu0 0.0
  %5528 = vmatpush1.msra.mxu0 0.0
  %5529 = vmatprep.subr.mxu0 0.0
  %5530 = vmatpush1.msra.mxu0 0.0
  %5531 = vmatprep.subr.mxu0 0.0
  %5532 = vmatpush1.msra.mxu0 0.0
  %5533 = vmatprep.subr.mxu0 0.0
  %5534 = vmatpush1.msra.mxu0 0.0
  %5535 = vmatprep.subr.mxu0 0.0
  %5536 = vmatpush1.msra.mxu0 0.0
  %5537 = vmatprep.subr.mxu0 0.0
  %5538 = vmatpush1.msra.mxu0 0.0
  %5539 = vmatprep.mubr.f32.mxu0 0.0
  %5540 = vmatmul.mubr.f32.gmra.mrb[0].mxu0 %v5467
  %v5541 = vpop.f32.mrb[0].mxu0
  %v5542 = vadd.f32 0.0, %v5541
  %v5543 = vpop.f32.mrb[0].mxu0
  %5544 = vmatprep.mubr.f32.mxu0 0.0
  %5545 = vmatmul.mubr.f32.gmra.mrb[0].mxu0 %v5469
  %v5546 = vpop.f32.mrb[0].mxu0
  %v5547 = vadd.f32 0.0, %v5546
  %v5548 = vpop.f32.mrb[0].mxu0
  %5549 = vmatprep.mubr.f32.mxu0 0.0
  %5550 = vmatmul.mubr.f32.gmra.mrb[0].mxu0 %v5471
  %v5551 = vpop.f32.mrb[0].mxu0
  %v5552 = vadd.f32 0.0, %v5551
  %v5553 = vpop.f32.mrb[0].mxu0
  %5554 = vmatprep.mubr.f32.mxu0 0.0
  %5555 = vmatmul.mubr.f32.gmra.mrb[0].mxu0 %v5473
  %v5556 = vpop.f32.mrb[0].mxu0
  %v5557 = vadd.f32 0.0, %v5556
  %v5558 = vpop.f32.mrb[0].mxu0
  %5559 = vdwg.mxu0
  %v5560 = vadd.f32 %v5341, %v5542
  %v5561 = vadd.f32 %v5342, %v5547
  %v5562 = vadd.f32 %v5343, %v5552
  %v5563 = vadd.f32 %v5344, %v5557
  %s5564 = scalar_lea.vmem [#allocation2], 4
  %v5565 = vld [vmem:[%s5564] ss:$2 sm:$0xff]
  %s5566 = scalar_lea.vmem [#allocation2], 20
  %v5567 = vld [vmem:[%s5566] ss:$2 sm:$0xff]
  %s5568 = scalar_lea.vmem [#allocation2], 36
  %v5569 = vld [vmem:[%s5568] ss:$2 sm:$0xff]
  %s5570 = scalar_lea.vmem [#allocation2], 52
  %v5571 = vld [vmem:[%s5570] ss:$2 sm:$0x7f]
  %s5572 = scalar_lea.vmem %s3, 16
  %v5573 = vld [vmem:[%s5572] sm:$0xf]
  %v5575 = vsel %vm4394, %v5565, 0
  %v5578 = vsel %vm4394, %v5567, 0
  %v5581 = vsel %vm4394, %v5569, 0
  %v5584 = vsel %vm4394, %v5571, 0
  %v5587 = vsel %vm4735, %v5573, 0
  %5589 = vmatprep.subr.mxu0 0.0
  %5590 = vmatpush1.msra.mxu0 %v5587
  %5591 = vmatprep.subr.mxu0 0.0
  %5592 = vmatpush1.msra.mxu0 0.0
  %5593 = vmatprep.subr.mxu0 0.0
  %5594 = vmatpush1.msra.mxu0 0.0
  %5595 = vmatprep.subr.mxu0 0.0
  %5596 = vmatpush1.msra.mxu0 0.0
  %5597 = vmatprep.subr.mxu0 0.0
  %5598 = vmatpush1.msra.mxu0 0.0
  %5599 = vmatprep.subr.mxu0 0.0
  %5600 = vmatpush1.msra.mxu0 0.0
  %5601 = vmatprep.subr.mxu0 0.0
  %5602 = vmatpush1.msra.mxu0 0.0
  %5603 = vmatprep.subr.mxu0 0.0
  %5604 = vmatpush1.msra.mxu0 0.0
  %5605 = vmatprep.subr.mxu0 0.0
  %5606 = vmatpush1.msra.mxu0 0.0
  %5607 = vmatprep.subr.mxu0 0.0
  %5608 = vmatpush1.msra.mxu0 0.0
  %5609 = vmatprep.subr.mxu0 0.0
  %5610 = vmatpush1.msra.mxu0 0.0
  %5611 = vmatprep.subr.mxu0 0.0
  %5612 = vmatpush1.msra.mxu0 0.0
  %5613 = vmatprep.subr.mxu0 0.0
  %5614 = vmatpush1.msra.mxu0 0.0
  %5615 = vmatprep.subr.mxu0 0.0
  %5616 = vmatpush1.msra.mxu0 0.0
  %5617 = vmatprep.subr.mxu0 0.0
  %5618 = vmatpush1.msra.mxu0 0.0
  %5619 = vmatprep.subr.mxu0 0.0
  %5620 = vmatpush1.msra.mxu0 0.0
  %5621 = vmatprep.subr.mxu0 0.0
  %5622 = vmatpush1.msra.mxu0 0.0
  %5623 = vmatprep.subr.mxu0 0.0
  %5624 = vmatpush1.msra.mxu0 0.0
  %5625 = vmatprep.subr.mxu0 0.0
  %5626 = vmatpush1.msra.mxu0 0.0
  %5627 = vmatprep.subr.mxu0 0.0
  %5628 = vmatpush1.msra.mxu0 0.0
  %5629 = vmatprep.subr.mxu0 0.0
  %5630 = vmatpush1.msra.mxu0 0.0
  %5631 = vmatprep.subr.mxu0 0.0
  %5632 = vmatpush1.msra.mxu0 0.0
  %5633 = vmatprep.subr.mxu0 0.0
  %5634 = vmatpush1.msra.mxu0 0.0
  %5635 = vmatprep.subr.mxu0 0.0
  %5636 = vmatpush1.msra.mxu0 0.0
  %5637 = vmatprep.subr.mxu0 0.0
  %5638 = vmatpush1.msra.mxu0 0.0
  %5639 = vmatprep.subr.mxu0 0.0
  %5640 = vmatpush1.msra.mxu0 0.0
  %5641 = vmatprep.subr.mxu0 0.0
  %5642 = vmatpush1.msra.mxu0 0.0
  %5643 = vmatprep.subr.mxu0 0.0
  %5644 = vmatpush1.msra.mxu0 0.0
  %5645 = vmatprep.subr.mxu0 0.0
  %5646 = vmatpush1.msra.mxu0 0.0
  %5647 = vmatprep.subr.mxu0 0.0
  %5648 = vmatpush1.msra.mxu0 0.0
  %5649 = vmatprep.subr.mxu0 0.0
  %5650 = vmatpush1.msra.mxu0 0.0
  %5651 = vmatprep.subr.mxu0 0.0
  %5652 = vmatpush1.msra.mxu0 0.0
  %5653 = vmatprep.mubr.f32.mxu0 0.0
  %5654 = vmatmul.mubr.f32.gmra.mrb[0].mxu0 %v5575
  %v5655 = vpop.f32.mrb[0].mxu0
  %v5656 = vadd.f32 0.0, %v5655
  %v5657 = vpop.f32.mrb[0].mxu0
  %5658 = vmatprep.mubr.f32.mxu0 0.0
  %5659 = vmatmul.mubr.f32.gmra.mrb[0].mxu0 %v5578
  %v5660 = vpop.f32.mrb[0].mxu0
  %v5661 = vadd.f32 0.0, %v5660
  %v5662 = vpop.f32.mrb[0].mxu0
  %5663 = vmatprep.mubr.f32.mxu0 0.0
  %5664 = vmatmul.mubr.f32.gmra.mrb[0].mxu0 %v5581
  %v5665 = vpop.f32.mrb[0].mxu0
  %v5666 = vadd.f32 0.0, %v5665
  %v5667 = vpop.f32.mrb[0].mxu0
  %5668 = vmatprep.mubr.f32.mxu0 0.0
  %5669 = vmatmul.mubr.f32.gmra.mrb[0].mxu0 %v5584
  %v5670 = vpop.f32.mrb[0].mxu0
  %v5671 = vadd.f32 0.0, %v5670
  %v5672 = vpop.f32.mrb[0].mxu0
  %5673 = vdwg.mxu0
  %v5674 = vadd.f32 %v5455, %v5656
  %v5675 = vadd.f32 %v5456, %v5661
  %v5676 = vadd.f32 %v5457, %v5666
  %v5677 = vadd.f32 %v5458, %v5671
  %5678 = vrot.lane.b32.xlu0 %v5565, 124
  %v5679 = vpop.permute.xlu0 %5678
  %5680 = vrot.lane.b32.xlu0 %v5567, 124
  %v5681 = vpop.permute.xlu0 %5680
  %5682 = vrot.lane.b32.xlu0 %v5569, 124
  %v5683 = vpop.permute.xlu0 %5682
  %5684 = vrot.lane.b32.xlu0 %v5571, 124
  %v5685 = vpop.permute.xlu0 %5684
  %v5686 = vsel %vm4394, %v5679, 0
  %v5688 = vsel %vm4394, %v5681, 0
  %v5690 = vsel %vm4394, %v5683, 0
  %v5692 = vsel %vm4394, %v5685, 0
  %5694 = vmatprep.subr.mxu0 0.0
  %5695 = vmatpush1.msra.mxu0 %v5587
  %5696 = vmatprep.subr.mxu0 0.0
  %5697 = vmatpush1.msra.mxu0 0.0
  %5698 = vmatprep.subr.mxu0 0.0
  %5699 = vmatpush1.msra.mxu0 0.0
  %5700 = vmatprep.subr.mxu0 0.0
  %5701 = vmatpush1.msra.mxu0 0.0
  %5702 = vmatprep.subr.mxu0 0.0
  %5703 = vmatpush1.msra.mxu0 0.0
  %5704 = vmatprep.subr.mxu0 0.0
  %5705 = vmatpush1.msra.mxu0 0.0
  %5706 = vmatprep.subr.mxu0 0.0
  %5707 = vmatpush1.msra.mxu0 0.0
  %5708 = vmatprep.subr.mxu0 0.0
  %5709 = vmatpush1.msra.mxu0 0.0
  %5710 = vmatprep.subr.mxu0 0.0
  %5711 = vmatpush1.msra.mxu0 0.0
  %5712 = vmatprep.subr.mxu0 0.0
  %5713 = vmatpush1.msra.mxu0 0.0
  %5714 = vmatprep.subr.mxu0 0.0
  %5715 = vmatpush1.msra.mxu0 0.0
  %5716 = vmatprep.subr.mxu0 0.0
  %5717 = vmatpush1.msra.mxu0 0.0
  %5718 = vmatprep.subr.mxu0 0.0
  %5719 = vmatpush1.msra.mxu0 0.0
  %5720 = vmatprep.subr.mxu0 0.0
  %5721 = vmatpush1.msra.mxu0 0.0
  %5722 = vmatprep.subr.mxu0 0.0
  %5723 = vmatpush1.msra.mxu0 0.0
  %5724 = vmatprep.subr.mxu0 0.0
  %5725 = vmatpush1.msra.mxu0 0.0
  %5726 = vmatprep.subr.mxu0 0.0
  %5727 = vmatpush1.msra.mxu0 0.0
  %5728 = vmatprep.subr.mxu0 0.0
  %5729 = vmatpush1.msra.mxu0 0.0
  %5730 = vmatprep.subr.mxu0 0.0
  %5731 = vmatpush1.msra.mxu0 0.0
  %5732 = vmatprep.subr.mxu0 0.0
  %5733 = vmatpush1.msra.mxu0 0.0
  %5734 = vmatprep.subr.mxu0 0.0
  %5735 = vmatpush1.msra.mxu0 0.0
  %5736 = vmatprep.subr.mxu0 0.0
  %5737 = vmatpush1.msra.mxu0 0.0
  %5738 = vmatprep.subr.mxu0 0.0
  %5739 = vmatpush1.msra.mxu0 0.0
  %5740 = vmatprep.subr.mxu0 0.0
  %5741 = vmatpush1.msra.mxu0 0.0
  %5742 = vmatprep.subr.mxu0 0.0
  %5743 = vmatpush1.msra.mxu0 0.0
  %5744 = vmatprep.subr.mxu0 0.0
  %5745 = vmatpush1.msra.mxu0 0.0
  %5746 = vmatprep.subr.mxu0 0.0
  %5747 = vmatpush1.msra.mxu0 0.0
  %5748 = vmatprep.subr.mxu0 0.0
  %5749 = vmatpush1.msra.mxu0 0.0
  %5750 = vmatprep.subr.mxu0 0.0
  %5751 = vmatpush1.msra.mxu0 0.0
  %5752 = vmatprep.subr.mxu0 0.0
  %5753 = vmatpush1.msra.mxu0 0.0
  %5754 = vmatprep.subr.mxu0 0.0
  %5755 = vmatpush1.msra.mxu0 0.0
  %5756 = vmatprep.subr.mxu0 0.0
  %5757 = vmatpush1.msra.mxu0 0.0
  %5758 = vmatprep.mubr.f32.mxu0 0.0
  %5759 = vmatmul.mubr.f32.gmra.mrb[0].mxu0 %v5686
  %v5760 = vpop.f32.mrb[0].mxu0
  %v5761 = vadd.f32 0.0, %v5760
  %v5762 = vpop.f32.mrb[0].mxu0
  %5763 = vmatprep.mubr.f32.mxu0 0.0
  %5764 = vmatmul.mubr.f32.gmra.mrb[0].mxu0 %v5688
  %v5765 = vpop.f32.mrb[0].mxu0
  %v5766 = vadd.f32 0.0, %v5765
  %v5767 = vpop.f32.mrb[0].mxu0
  %5768 = vmatprep.mubr.f32.mxu0 0.0
  %5769 = vmatmul.mubr.f32.gmra.mrb[0].mxu0 %v5690
  %v5770 = vpop.f32.mrb[0].mxu0
  %v5771 = vadd.f32 0.0, %v5770
  %v5772 = vpop.f32.mrb[0].mxu0
  %5773 = vmatprep.mubr.f32.mxu0 0.0
  %5774 = vmatmul.mubr.f32.gmra.mrb[0].mxu0 %v5692
  %v5775 = vpop.f32.mrb[0].mxu0
  %v5776 = vadd.f32 0.0, %v5775
  %v5777 = vpop.f32.mrb[0].mxu0
  %5778 = vdwg.mxu0
  %v5779 = vadd.f32 %v5560, %v5761
  %v5780 = vadd.f32 %v5561, %v5766
  %v5781 = vadd.f32 %v5562, %v5771
  %v5782 = vadd.f32 %v5563, %v5776
  %v5783 = vld [vmem:[%s4] sm:$0x1]
  %v5784 = vld [vmem:[%s4 + $0x1] sm:$0x1]
  %v5785 = vld [vmem:[%s4 + $0x2] sm:$0x1]
  %v5786 = vlaneseq
  %v5787 = vshrl.u32 %v5786, 7
  %v5788 = vsub.s32 0, %v5787
  %v5789 = vrot.slane %v5783, %v5788
  %v5790 = vadd.f32 %v5674, %v5789
  %v5791 = vadd.f32 %v5675, %v5789
  %v5792 = vadd.f32 %v5676, %v5789
  %v5793 = vadd.f32 %v5677, %v5789
  %v5794 = vadd.f32 %v5779, %v5789
  %v5795 = vadd.f32 %v5780, %v5789
  %v5796 = vadd.f32 %v5781, %v5789
  %v5797 = vadd.f32 %v5782, %v5789
  %vm5798 = vcmask 64512
  %v5799 = vsel %vm5798, %v5790, 0.0
  %v5800 = vsel %vm5798, %v5791, 0.0
  %v5801 = vadd.f32 %v5799, %v5800
  %v5802 = vsel %vm5798, %v5792, 0.0
  %v5803 = vadd.f32 %v5801, %v5802
  %vm5804 = vcmask 63488
  %v5805 = vsel %vm5804, %v5793, 0.0
  %v5806 = vadd.f32 %v5803, %v5805
  %v5807 = vrot.slane %v5806, 4
  %v5808 = vadd.f32 %v5806, %v5807
  %v5809 = vrot.slane %v5808, 2
  %v5810 = vadd.f32 %v5808, %v5809
  %v5811 = vrot.slane %v5810, 1
  %v5812 = vadd.f32 %v5810, %v5811
  %v5813 = vadd.f32 %v5812, 0.0
  %v5814 = vsel %vm5798, %v5794, 0.0
  %v5815 = vsel %vm5798, %v5795, 0.0
  %v5816 = vadd.f32 %v5814, %v5815
  %v5817 = vsel %vm5798, %v5796, 0.0
  %v5818 = vadd.f32 %v5816, %v5817
  %v5819 = vsel %vm5804, %v5797, 0.0
  %v5820 = vadd.f32 %v5818, %v5819
  %v5821 = vrot.slane %v5820, 4
  %v5822 = vadd.f32 %v5820, %v5821
  %v5823 = vrot.slane %v5822, 2
  %v5824 = vadd.f32 %v5822, %v5823
  %v5825 = vrot.slane %v5824, 1
  %v5826 = vadd.f32 %v5824, %v5825
  %v5827 = vadd.f32 %v5813, %v5826
  %v5828 = vrcp.pop 62.0
  %v5829 = vmul.f32 %v5827, %v5828
  %v5830 = vsub.f32 %v5790, %v5829
  %v5831 = vsub.f32 %v5791, %v5829
  %v5832 = vsub.f32 %v5792, %v5829
  %v5833 = vsub.f32 %v5793, %v5829
  %v5834 = vmul.f32 %v5830, %v5830
  %v5835 = vmul.f32 %v5831, %v5831
  %v5836 = vmul.f32 %v5832, %v5832
  %v5837 = vmul.f32 %v5833, %v5833
  %v5838 = vsel %vm5798, %v5834, 0.0
  %v5839 = vsel %vm5798, %v5835, 0.0
  %v5840 = vadd.f32 %v5838, %v5839
  %v5841 = vsel %vm5798, %v5836, 0.0
  %v5842 = vadd.f32 %v5840, %v5841
  %v5843 = vsel %vm5804, %v5837, 0.0
  %v5844 = vadd.f32 %v5842, %v5843
  %v5845 = vrot.slane %v5844, 4
  %v5846 = vadd.f32 %v5844, %v5845
  %v5847 = vrot.slane %v5846, 2
  %v5848 = vadd.f32 %v5846, %v5847
  %v5849 = vrot.slane %v5848, 1
  %v5850 = vadd.f32 %v5848, %v5849
  %v5851 = vadd.f32 %v5850, 0.0
  %v5852 = vsub.f32 %v5794, %v5829
  %v5853 = vsub.f32 %v5795, %v5829
  %v5854 = vsub.f32 %v5796, %v5829
  %v5855 = vsub.f32 %v5797, %v5829
  %v5856 = vmul.f32 %v5852, %v5852
  %v5857 = vmul.f32 %v5853, %v5853
  %v5858 = vmul.f32 %v5854, %v5854
  %v5859 = vmul.f32 %v5855, %v5855
  %v5860 = vsel %vm5798, %v5856, 0.0
  %v5861 = vsel %vm5798, %v5857, 0.0
  %v5862 = vadd.f32 %v5860, %v5861
  %v5863 = vsel %vm5798, %v5858, 0.0
  %v5864 = vadd.f32 %v5862, %v5863
  %v5865 = vsel %vm5804, %v5859, 0.0
  %v5866 = vadd.f32 %v5864, %v5865
  %v5867 = vrot.slane %v5866, 4
  %v5868 = vadd.f32 %v5866, %v5867
  %v5869 = vrot.slane %v5868, 2
  %v5870 = vadd.f32 %v5868, %v5869
  %v5871 = vrot.slane %v5870, 1
  %v5872 = vadd.f32 %v5870, %v5871
  %v5873 = vadd.f32 %v5851, %v5872
  %v5874 = vmul.f32 %v5873, %v5828
  %v5875 = vadd.f32 %v5874, 1e-05
  %v5876 = vrsqrt.pop %v5875
  %v5877 = vmul.f32 %v5830, %v5876
  %v5878 = vmul.f32 %v5831, %v5876
  %v5879 = vmul.f32 %v5832, %v5876
  %v5880 = vmul.f32 %v5833, %v5876
  %v5881 = vlaneseq
  %v5882 = vshrl.u32 %v5881, 7
  %v5883 = vsub.s32 0, %v5882
  %v5884 = vrot.slane %v5784, %v5883
  %v5885 = vmul.f32 %v5877, %v5884
  %v5886 = vmul.f32 %v5878, %v5884
  %v5887 = vmul.f32 %v5879, %v5884
  %v5888 = vmul.f32 %v5880, %v5884
  %v5889 = vlaneseq
  %v5890 = vshrl.u32 %v5889, 7
  %v5891 = vsub.s32 0, %v5890
  %v5892 = vrot.slane %v5785, %v5891
  %v5893 = vadd.f32 %v5885, %v5892
  %v5894 = vadd.f32 %v5886, %v5892
  %v5895 = vadd.f32 %v5887, %v5892
  %v5896 = vadd.f32 %v5888, %v5892
  %vm5897 = vcmp.ge.f32.partialorder %v5893, 0.0
  %vm5898 = vcmp.ge.f32.partialorder %v5894, 0.0
  %vm5899 = vcmp.ge.f32.partialorder %v5895, 0.0
  %vm5900 = vcmp.ge.f32.partialorder %v5896, 0.0
  %v5901 = vmul.f32 %v5893, 0.2
  %v5902 = vmul.f32 %v5894, 0.2
  %v5903 = vmul.f32 %v5895, 0.2
  %v5904 = vmul.f32 %v5896, 0.2
  %v5905 = vsel %vm5897, %v5893, %v5901
  %v5906 = vsel %vm5898, %v5894, %v5902
  %v5907 = vsel %vm5899, %v5895, %v5903
  %v5908 = vsel %vm5900, %v5896, %v5904
  %v5909 = vmul.f32 %v5852, %v5876
  %v5910 = vmul.f32 %v5853, %v5876
  %v5911 = vmul.f32 %v5854, %v5876
  %v5912 = vmul.f32 %v5855, %v5876
  %v5913 = vmul.f32 %v5909, %v5884
  %v5914 = vmul.f32 %v5910, %v5884
  %v5915 = vmul.f32 %v5911, %v5884
  %v5916 = vmul.f32 %v5912, %v5884
  %v5917 = vadd.f32 %v5913, %v5892
  %v5918 = vadd.f32 %v5914, %v5892
  %v5919 = vadd.f32 %v5915, %v5892
  %v5920 = vadd.f32 %v5916, %v5892
  %vm5921 = vcmp.ge.f32.partialorder %v5917, 0.0
  %vm5922 = vcmp.ge.f32.partialorder %v5918, 0.0
  %vm5923 = vcmp.ge.f32.partialorder %v5919, 0.0
  %vm5924 = vcmp.ge.f32.partialorder %v5920, 0.0
  %v5925 = vmul.f32 %v5917, 0.2
  %v5926 = vmul.f32 %v5918, 0.2
  %v5927 = vmul.f32 %v5919, 0.2
  %v5928 = vmul.f32 %v5920, 0.2
  %v5929 = vsel %vm5921, %v5917, %v5925
  %v5930 = vsel %vm5922, %v5918, %v5926
  %v5931 = vsel %vm5923, %v5919, %v5927
  %v5932 = vsel %vm5924, %v5920, %v5928
  %5933 = vst.msk [vmem:[#allocation3] sm:$0xff] %vm5798, %v5905
  %5934 = vst.msk [vmem:[#allocation3 + $0x8] sm:$0xff] %vm5798, %v5906
  %5935 = vst.msk [vmem:[#allocation3 + $0x10] sm:$0xff] %vm5798, %v5907
  %5936 = vst.msk [vmem:[#allocation3 + $0x18] sm:$0x7f] %vm5804, %v5908
  %5941 = vrot.lane.b32.xlu0 %v5929, 8
  %v5942 = vpop.permute.xlu0 %5941
  %5943 = vrot.lane.b32.xlu0 %v5930, 8
  %v5944 = vpop.permute.xlu0 %5943
  %5945 = vrot.lane.b32.xlu0 %v5931, 8
  %v5946 = vpop.permute.xlu0 %5945
  %5947 = vrot.lane.b32.xlu0 %v5932, 8
  %v5948 = vpop.permute.xlu0 %5947
  %vm5953 = vcmask 130112
  %5954 = vst.msk [vmem:[#allocation3] sm:$0xff] %vm5953, %v5942
  %5955 = vst.msk [vmem:[#allocation3 + $0x8] sm:$0xff] %vm5953, %v5944
  %5956 = vst.msk [vmem:[#allocation3 + $0x10] sm:$0xff] %vm5953, %v5946
  %vm5957 = vcmask 129088
  %5958 = vst.msk [vmem:[#allocation3 + $0x18] sm:$0x7f] %vm5957, %v5948
  %v5959 = vld [vmem:[#allocation3] ss:$2 sm:$0xff]
  %s5960 = scalar_lea.vmem [#allocation3], 16
  %v5961 = vld [vmem:[%s5960] ss:$2 sm:$0x3f]
  %v5962 = vld [vmem:[%s5] sm:$0xff]
  %s5963 = scalar_lea.vmem [#allocation3], 1
  %v5964 = vld [vmem:[%s5963] ss:$2 sm:$0xff]
  %s5965 = scalar_lea.vmem [#allocation3], 17
  %v5966 = vld [vmem:[%s5965] ss:$2 sm:$0x3f]
  %s5967 = scalar_lea.vmem %s5, 8
  %v5968 = vld [vmem:[%s5967] sm:$0xff]
  %v5970 = vsel %vm5798, %v5964, 0
  %v5973 = vsel %vm5798, %v5966, 0
  %5975 = vmatprep.subr.mxu0 0.0
  %5976 = vmatpush1.msra.mxu0 %v5968
  %5977 = vmatprep.subr.mxu0 0.0
  %5978 = vmatpush1.msra.mxu0 0.0
  %5979 = vmatprep.subr.mxu0 0.0
  %5980 = vmatpush1.msra.mxu0 0.0
  %5981 = vmatprep.subr.mxu0 0.0
  %5982 = vmatpush1.msra.mxu0 0.0
  %5983 = vmatprep.subr.mxu0 0.0
  %5984 = vmatpush1.msra.mxu0 0.0
  %5985 = vmatprep.subr.mxu0 0.0
  %5986 = vmatpush1.msra.mxu0 0.0
  %5987 = vmatprep.subr.mxu0 0.0
  %5988 = vmatpush1.msra.mxu0 0.0
  %5989 = vmatprep.subr.mxu0 0.0
  %5990 = vmatpush1.msra.mxu0 0.0
  %5991 = vmatprep.subr.mxu0 0.0
  %5992 = vmatpush1.msra.mxu0 0.0
  %5993 = vmatprep.subr.mxu0 0.0
  %5994 = vmatpush1.msra.mxu0 0.0
  %5995 = vmatprep.subr.mxu0 0.0
  %5996 = vmatpush1.msra.mxu0 0.0
  %5997 = vmatprep.subr.mxu0 0.0
  %5998 = vmatpush1.msra.mxu0 0.0
  %5999 = vmatprep.subr.mxu0 0.0
  %6000 = vmatpush1.msra.mxu0 0.0
  %6001 = vmatprep.subr.mxu0 0.0
  %6002 = vmatpush1.msra.mxu0 0.0
  %6003 = vmatprep.subr.mxu0 0.0
  %6004 = vmatpush1.msra.mxu0 0.0
  %6005 = vmatprep.subr.mxu0 0.0
  %6006 = vmatpush1.msra.mxu0 0.0
  %6007 = vmatprep.subr.mxu0 0.0
  %6008 = vmatpush1.msra.mxu0 0.0
  %6009 = vmatprep.subr.mxu0 0.0
  %6010 = vmatpush1.msra.mxu0 0.0
  %6011 = vmatprep.subr.mxu0 0.0
  %6012 = vmatpush1.msra.mxu0 0.0
  %6013 = vmatprep.subr.mxu0 0.0
  %6014 = vmatpush1.msra.mxu0 0.0
  %6015 = vmatprep.subr.mxu0 0.0
  %6016 = vmatpush1.msra.mxu0 0.0
  %6017 = vmatprep.subr.mxu0 0.0
  %6018 = vmatpush1.msra.mxu0 0.0
  %6019 = vmatprep.subr.mxu0 0.0
  %6020 = vmatpush1.msra.mxu0 0.0
  %6021 = vmatprep.subr.mxu0 0.0
  %6022 = vmatpush1.msra.mxu0 0.0
  %6023 = vmatprep.subr.mxu0 0.0
  %6024 = vmatpush1.msra.mxu0 0.0
  %6025 = vmatprep.subr.mxu0 0.0
  %6026 = vmatpush1.msra.mxu0 0.0
  %6027 = vmatprep.subr.mxu0 0.0
  %6028 = vmatpush1.msra.mxu0 0.0
  %6029 = vmatprep.subr.mxu0 0.0
  %6030 = vmatpush1.msra.mxu0 0.0
  %6031 = vmatprep.subr.mxu0 0.0
  %6032 = vmatpush1.msra.mxu0 0.0
  %6033 = vmatprep.subr.mxu0 0.0
  %6034 = vmatpush1.msra.mxu0 0.0
  %6035 = vmatprep.subr.mxu0 0.0
  %6036 = vmatpush1.msra.mxu0 0.0
  %6037 = vmatprep.subr.mxu0 0.0
  %6038 = vmatpush1.msra.mxu0 0.0
  %6039 = vmatprep.mubr.f32.mxu0 0.0
  %6040 = vmatmul.mubr.f32.gmra.mrb[0].mxu0 %v5970
  %v6041 = vpop.f32.mrb[0].mxu0
  %v6042 = vadd.f32 0.0, %v6041
  %v6043 = vpop.f32.mrb[0].mxu0
  %6044 = vmatprep.mubr.f32.mxu0 0.0
  %6045 = vmatmul.mubr.f32.gmra.mrb[0].mxu0 %v5973
  %v6046 = vpop.f32.mrb[0].mxu0
  %v6047 = vadd.f32 0.0, %v6046
  %v6048 = vpop.f32.mrb[0].mxu0
  %6049 = vdwg.mxu0
  %v6051 = vsel %vm5798, %v5959, 0
  %v6054 = vsel %vm5798, %v5961, 0
  %6056 = vmatprep.subr.mxu0 0.0
  %6057 = vmatpush1.msra.mxu0 %v5962
  %6058 = vmatprep.subr.mxu0 0.0
  %6059 = vmatpush1.msra.mxu0 0.0
  %6060 = vmatprep.subr.mxu0 0.0
  %6061 = vmatpush1.msra.mxu0 0.0
  %6062 = vmatprep.subr.mxu0 0.0
  %6063 = vmatpush1.msra.mxu0 0.0
  %6064 = vmatprep.subr.mxu0 0.0
  %6065 = vmatpush1.msra.mxu0 0.0
  %6066 = vmatprep.subr.mxu0 0.0
  %6067 = vmatpush1.msra.mxu0 0.0
  %6068 = vmatprep.subr.mxu0 0.0
  %6069 = vmatpush1.msra.mxu0 0.0
  %6070 = vmatprep.subr.mxu0 0.0
  %6071 = vmatpush1.msra.mxu0 0.0
  %6072 = vmatprep.subr.mxu0 0.0
  %6073 = vmatpush1.msra.mxu0 0.0
  %6074 = vmatprep.subr.mxu0 0.0
  %6075 = vmatpush1.msra.mxu0 0.0
  %6076 = vmatprep.subr.mxu0 0.0
  %6077 = vmatpush1.msra.mxu0 0.0
  %6078 = vmatprep.subr.mxu0 0.0
  %6079 = vmatpush1.msra.mxu0 0.0
  %6080 = vmatprep.subr.mxu0 0.0
  %6081 = vmatpush1.msra.mxu0 0.0
  %6082 = vmatprep.subr.mxu0 0.0
  %6083 = vmatpush1.msra.mxu0 0.0
  %6084 = vmatprep.subr.mxu0 0.0
  %6085 = vmatpush1.msra.mxu0 0.0
  %6086 = vmatprep.subr.mxu0 0.0
  %6087 = vmatpush1.msra.mxu0 0.0
  %6088 = vmatprep.subr.mxu0 0.0
  %6089 = vmatpush1.msra.mxu0 0.0
  %6090 = vmatprep.subr.mxu0 0.0
  %6091 = vmatpush1.msra.mxu0 0.0
  %6092 = vmatprep.subr.mxu0 0.0
  %6093 = vmatpush1.msra.mxu0 0.0
  %6094 = vmatprep.subr.mxu0 0.0
  %6095 = vmatpush1.msra.mxu0 0.0
  %6096 = vmatprep.subr.mxu0 0.0
  %6097 = vmatpush1.msra.mxu0 0.0
  %6098 = vmatprep.subr.mxu0 0.0
  %6099 = vmatpush1.msra.mxu0 0.0
  %6100 = vmatprep.subr.mxu0 0.0
  %6101 = vmatpush1.msra.mxu0 0.0
  %6102 = vmatprep.subr.mxu0 0.0
  %6103 = vmatpush1.msra.mxu0 0.0
  %6104 = vmatprep.subr.mxu0 0.0
  %6105 = vmatpush1.msra.mxu0 0.0
  %6106 = vmatprep.subr.mxu0 0.0
  %6107 = vmatpush1.msra.mxu0 0.0
  %6108 = vmatprep.subr.mxu0 0.0
  %6109 = vmatpush1.msra.mxu0 0.0
  %6110 = vmatprep.subr.mxu0 0.0
  %6111 = vmatpush1.msra.mxu0 0.0
  %6112 = vmatprep.subr.mxu0 0.0
  %6113 = vmatpush1.msra.mxu0 0.0
  %6114 = vmatprep.subr.mxu0 0.0
  %6115 = vmatpush1.msra.mxu0 0.0
  %6116 = vmatprep.subr.mxu0 0.0
  %6117 = vmatpush1.msra.mxu0 0.0
  %6118 = vmatprep.subr.mxu0 0.0
  %6119 = vmatpush1.msra.mxu0 0.0
  %6120 = vmatprep.mubr.f32.mxu0 0.0
  %6121 = vmatmul.mubr.f32.gmra.mrb[0].mxu0 %v6051
  %v6122 = vpop.f32.mrb[0].mxu0
  %v6123 = vadd.f32 %v6042, %v6122
  %v6124 = vpop.f32.mrb[0].mxu0
  %6125 = vmatprep.mubr.f32.mxu0 0.0
  %6126 = vmatmul.mubr.f32.gmra.mrb[0].mxu0 %v6054
  %v6127 = vpop.f32.mrb[0].mxu0
  %v6128 = vadd.f32 %v6047, %v6127
  %v6129 = vpop.f32.mrb[0].mxu0
  %6130 = vdwg.mxu0
  %6131 = vrot.lane.b32.xlu0 %v5964, 120
  %v6132 = vpop.permute.xlu0 %6131
  %6133 = vrot.lane.b32.xlu0 %v5966, 120
  %v6134 = vpop.permute.xlu0 %6133
  %v6135 = vsel %vm5798, %v6132, 0
  %v6137 = vsel %vm5798, %v6134, 0
  %6139 = vmatprep.subr.mxu0 0.0
  %6140 = vmatpush1.msra.mxu0 %v5968
  %6141 = vmatprep.subr.mxu0 0.0
  %6142 = vmatpush1.msra.mxu0 0.0
  %6143 = vmatprep.subr.mxu0 0.0
  %6144 = vmatpush1.msra.mxu0 0.0
  %6145 = vmatprep.subr.mxu0 0.0
  %6146 = vmatpush1.msra.mxu0 0.0
  %6147 = vmatprep.subr.mxu0 0.0
  %6148 = vmatpush1.msra.mxu0 0.0
  %6149 = vmatprep.subr.mxu0 0.0
  %6150 = vmatpush1.msra.mxu0 0.0
  %6151 = vmatprep.subr.mxu0 0.0
  %6152 = vmatpush1.msra.mxu0 0.0
  %6153 = vmatprep.subr.mxu0 0.0
  %6154 = vmatpush1.msra.mxu0 0.0
  %6155 = vmatprep.subr.mxu0 0.0
  %6156 = vmatpush1.msra.mxu0 0.0
  %6157 = vmatprep.subr.mxu0 0.0
  %6158 = vmatpush1.msra.mxu0 0.0
  %6159 = vmatprep.subr.mxu0 0.0
  %6160 = vmatpush1.msra.mxu0 0.0
  %6161 = vmatprep.subr.mxu0 0.0
  %6162 = vmatpush1.msra.mxu0 0.0
  %6163 = vmatprep.subr.mxu0 0.0
  %6164 = vmatpush1.msra.mxu0 0.0
  %6165 = vmatprep.subr.mxu0 0.0
  %6166 = vmatpush1.msra.mxu0 0.0
  %6167 = vmatprep.subr.mxu0 0.0
  %6168 = vmatpush1.msra.mxu0 0.0
  %6169 = vmatprep.subr.mxu0 0.0
  %6170 = vmatpush1.msra.mxu0 0.0
  %6171 = vmatprep.subr.mxu0 0.0
  %6172 = vmatpush1.msra.mxu0 0.0
  %6173 = vmatprep.subr.mxu0 0.0
  %6174 = vmatpush1.msra.mxu0 0.0
  %6175 = vmatprep.subr.mxu0 0.0
  %6176 = vmatpush1.msra.mxu0 0.0
  %6177 = vmatprep.subr.mxu0 0.0
  %6178 = vmatpush1.msra.mxu0 0.0
  %6179 = vmatprep.subr.mxu0 0.0
  %6180 = vmatpush1.msra.mxu0 0.0
  %6181 = vmatprep.subr.mxu0 0.0
  %6182 = vmatpush1.msra.mxu0 0.0
  %6183 = vmatprep.subr.mxu0 0.0
  %6184 = vmatpush1.msra.mxu0 0.0
  %6185 = vmatprep.subr.mxu0 0.0
  %6186 = vmatpush1.msra.mxu0 0.0
  %6187 = vmatprep.subr.mxu0 0.0
  %6188 = vmatpush1.msra.mxu0 0.0
  %6189 = vmatprep.subr.mxu0 0.0
  %6190 = vmatpush1.msra.mxu0 0.0
  %6191 = vmatprep.subr.mxu0 0.0
  %6192 = vmatpush1.msra.mxu0 0.0
  %6193 = vmatprep.subr.mxu0 0.0
  %6194 = vmatpush1.msra.mxu0 0.0
  %6195 = vmatprep.subr.mxu0 0.0
  %6196 = vmatpush1.msra.mxu0 0.0
  %6197 = vmatprep.subr.mxu0 0.0
  %6198 = vmatpush1.msra.mxu0 0.0
  %6199 = vmatprep.subr.mxu0 0.0
  %6200 = vmatpush1.msra.mxu0 0.0
  %6201 = vmatprep.subr.mxu0 0.0
  %6202 = vmatpush1.msra.mxu0 0.0
  %6203 = vmatprep.mubr.f32.mxu0 0.0
  %6204 = vmatmul.mubr.f32.gmra.mrb[0].mxu0 %v6135
  %v6205 = vpop.f32.mrb[0].mxu0
  %v6206 = vadd.f32 0.0, %v6205
  %v6207 = vpop.f32.mrb[0].mxu0
  %6208 = vmatprep.mubr.f32.mxu0 0.0
  %6209 = vmatmul.mubr.f32.gmra.mrb[0].mxu0 %v6137
  %v6210 = vpop.f32.mrb[0].mxu0
  %v6211 = vadd.f32 0.0, %v6210
  %v6212 = vpop.f32.mrb[0].mxu0
  %6213 = vdwg.mxu0
  %6214 = vrot.lane.b32.xlu0 %v5959, 120
  %v6215 = vpop.permute.xlu0 %6214
  %6216 = vrot.lane.b32.xlu0 %v5961, 120
  %v6217 = vpop.permute.xlu0 %6216
  %v6218 = vsel %vm5798, %v6215, 0
  %v6220 = vsel %vm5798, %v6217, 0
  %6222 = vmatprep.subr.mxu0 0.0
  %6223 = vmatpush1.msra.mxu0 %v5962
  %6224 = vmatprep.subr.mxu0 0.0
  %6225 = vmatpush1.msra.mxu0 0.0
  %6226 = vmatprep.subr.mxu0 0.0
  %6227 = vmatpush1.msra.mxu0 0.0
  %6228 = vmatprep.subr.mxu0 0.0
  %6229 = vmatpush1.msra.mxu0 0.0
  %6230 = vmatprep.subr.mxu0 0.0
  %6231 = vmatpush1.msra.mxu0 0.0
  %6232 = vmatprep.subr.mxu0 0.0
  %6233 = vmatpush1.msra.mxu0 0.0
  %6234 = vmatprep.subr.mxu0 0.0
  %6235 = vmatpush1.msra.mxu0 0.0
  %6236 = vmatprep.subr.mxu0 0.0
  %6237 = vmatpush1.msra.mxu0 0.0
  %6238 = vmatprep.subr.mxu0 0.0
  %6239 = vmatpush1.msra.mxu0 0.0
  %6240 = vmatprep.subr.mxu0 0.0
  %6241 = vmatpush1.msra.mxu0 0.0
  %6242 = vmatprep.subr.mxu0 0.0
  %6243 = vmatpush1.msra.mxu0 0.0
  %6244 = vmatprep.subr.mxu0 0.0
  %6245 = vmatpush1.msra.mxu0 0.0
  %6246 = vmatprep.subr.mxu0 0.0
  %6247 = vmatpush1.msra.mxu0 0.0
  %6248 = vmatprep.subr.mxu0 0.0
  %6249 = vmatpush1.msra.mxu0 0.0
  %6250 = vmatprep.subr.mxu0 0.0
  %6251 = vmatpush1.msra.mxu0 0.0
  %6252 = vmatprep.subr.mxu0 0.0
  %6253 = vmatpush1.msra.mxu0 0.0
  %6254 = vmatprep.subr.mxu0 0.0
  %6255 = vmatpush1.msra.mxu0 0.0
  %6256 = vmatprep.subr.mxu0 0.0
  %6257 = vmatpush1.msra.mxu0 0.0
  %6258 = vmatprep.subr.mxu0 0.0
  %6259 = vmatpush1.msra.mxu0 0.0
  %6260 = vmatprep.subr.mxu0 0.0
  %6261 = vmatpush1.msra.mxu0 0.0
  %6262 = vmatprep.subr.mxu0 0.0
  %6263 = vmatpush1.msra.mxu0 0.0
  %6264 = vmatprep.subr.mxu0 0.0
  %6265 = vmatpush1.msra.mxu0 0.0
  %6266 = vmatprep.subr.mxu0 0.0
  %6267 = vmatpush1.msra.mxu0 0.0
  %6268 = vmatprep.subr.mxu0 0.0
  %6269 = vmatpush1.msra.mxu0 0.0
  %6270 = vmatprep.subr.mxu0 0.0
  %6271 = vmatpush1.msra.mxu0 0.0
  %6272 = vmatprep.subr.mxu0 0.0
  %6273 = vmatpush1.msra.mxu0 0.0
  %6274 = vmatprep.subr.mxu0 0.0
  %6275 = vmatpush1.msra.mxu0 0.0
  %6276 = vmatprep.subr.mxu0 0.0
  %6277 = vmatpush1.msra.mxu0 0.0
  %6278 = vmatprep.subr.mxu0 0.0
  %6279 = vmatpush1.msra.mxu0 0.0
  %6280 = vmatprep.subr.mxu0 0.0
  %6281 = vmatpush1.msra.mxu0 0.0
  %6282 = vmatprep.subr.mxu0 0.0
  %6283 = vmatpush1.msra.mxu0 0.0
  %6284 = vmatprep.subr.mxu0 0.0
  %6285 = vmatpush1.msra.mxu0 0.0
  %6286 = vmatprep.mubr.f32.mxu0 0.0
  %6287 = vmatmul.mubr.f32.gmra.mrb[0].mxu0 %v6218
  %v6288 = vpop.f32.mrb[0].mxu0
  %v6289 = vadd.f32 %v6206, %v6288
  %v6290 = vpop.f32.mrb[0].mxu0
  %6291 = vmatprep.mubr.f32.mxu0 0.0
  %6292 = vmatmul.mubr.f32.gmra.mrb[0].mxu0 %v6220
  %v6293 = vpop.f32.mrb[0].mxu0
  %v6294 = vadd.f32 %v6211, %v6293
  %v6295 = vpop.f32.mrb[0].mxu0
  %6296 = vdwg.mxu0
  %s6297 = scalar_lea.vmem [#allocation3], 2
  %v6298 = vld [vmem:[%s6297] ss:$2 sm:$0xff]
  %s6299 = scalar_lea.vmem [#allocation3], 18
  %v6300 = vld [vmem:[%s6299] ss:$2 sm:$0x3f]
  %s6301 = scalar_lea.vmem %s5, 16
  %v6302 = vld [vmem:[%s6301] sm:$0xff]
  %v6304 = vsel %vm5798, %v6298, 0
  %v6307 = vsel %vm5798, %v6300, 0
  %6309 = vmatprep.subr.mxu0 0.0
  %6310 = vmatpush1.msra.mxu0 %v6302
  %6311 = vmatprep.subr.mxu0 0.0
  %6312 = vmatpush1.msra.mxu0 0.0
  %6313 = vmatprep.subr.mxu0 0.0
  %6314 = vmatpush1.msra.mxu0 0.0
  %6315 = vmatprep.subr.mxu0 0.0
  %6316 = vmatpush1.msra.mxu0 0.0
  %6317 = vmatprep.subr.mxu0 0.0
  %6318 = vmatpush1.msra.mxu0 0.0
  %6319 = vmatprep.subr.mxu0 0.0
  %6320 = vmatpush1.msra.mxu0 0.0
  %6321 = vmatprep.subr.mxu0 0.0
  %6322 = vmatpush1.msra.mxu0 0.0
  %6323 = vmatprep.subr.mxu0 0.0
  %6324 = vmatpush1.msra.mxu0 0.0
  %6325 = vmatprep.subr.mxu0 0.0
  %6326 = vmatpush1.msra.mxu0 0.0
  %6327 = vmatprep.subr.mxu0 0.0
  %6328 = vmatpush1.msra.mxu0 0.0
  %6329 = vmatprep.subr.mxu0 0.0
  %6330 = vmatpush1.msra.mxu0 0.0
  %6331 = vmatprep.subr.mxu0 0.0
  %6332 = vmatpush1.msra.mxu0 0.0
  %6333 = vmatprep.subr.mxu0 0.0
  %6334 = vmatpush1.msra.mxu0 0.0
  %6335 = vmatprep.subr.mxu0 0.0
  %6336 = vmatpush1.msra.mxu0 0.0
  %6337 = vmatprep.subr.mxu0 0.0
  %6338 = vmatpush1.msra.mxu0 0.0
  %6339 = vmatprep.subr.mxu0 0.0
  %6340 = vmatpush1.msra.mxu0 0.0
  %6341 = vmatprep.subr.mxu0 0.0
  %6342 = vmatpush1.msra.mxu0 0.0
  %6343 = vmatprep.subr.mxu0 0.0
  %6344 = vmatpush1.msra.mxu0 0.0
  %6345 = vmatprep.subr.mxu0 0.0
  %6346 = vmatpush1.msra.mxu0 0.0
  %6347 = vmatprep.subr.mxu0 0.0
  %6348 = vmatpush1.msra.mxu0 0.0
  %6349 = vmatprep.subr.mxu0 0.0
  %6350 = vmatpush1.msra.mxu0 0.0
  %6351 = vmatprep.subr.mxu0 0.0
  %6352 = vmatpush1.msra.mxu0 0.0
  %6353 = vmatprep.subr.mxu0 0.0
  %6354 = vmatpush1.msra.mxu0 0.0
  %6355 = vmatprep.subr.mxu0 0.0
  %6356 = vmatpush1.msra.mxu0 0.0
  %6357 = vmatprep.subr.mxu0 0.0
  %6358 = vmatpush1.msra.mxu0 0.0
  %6359 = vmatprep.subr.mxu0 0.0
  %6360 = vmatpush1.msra.mxu0 0.0
  %6361 = vmatprep.subr.mxu0 0.0
  %6362 = vmatpush1.msra.mxu0 0.0
  %6363 = vmatprep.subr.mxu0 0.0
  %6364 = vmatpush1.msra.mxu0 0.0
  %6365 = vmatprep.subr.mxu0 0.0
  %6366 = vmatpush1.msra.mxu0 0.0
  %6367 = vmatprep.subr.mxu0 0.0
  %6368 = vmatpush1.msra.mxu0 0.0
  %6369 = vmatprep.subr.mxu0 0.0
  %6370 = vmatpush1.msra.mxu0 0.0
  %6371 = vmatprep.subr.mxu0 0.0
  %6372 = vmatpush1.msra.mxu0 0.0
  %6373 = vmatprep.mubr.f32.mxu0 0.0
  %6374 = vmatmul.mubr.f32.gmra.mrb[0].mxu0 %v6304
  %v6375 = vpop.f32.mrb[0].mxu0
  %v6376 = vadd.f32 0.0, %v6375
  %v6377 = vpop.f32.mrb[0].mxu0
  %6378 = vmatprep.mubr.f32.mxu0 0.0
  %6379 = vmatmul.mubr.f32.gmra.mrb[0].mxu0 %v6307
  %v6380 = vpop.f32.mrb[0].mxu0
  %v6381 = vadd.f32 0.0, %v6380
  %v6382 = vpop.f32.mrb[0].mxu0
  %6383 = vdwg.mxu0
  %v6384 = vadd.f32 %v6123, %v6376
  %v6385 = vadd.f32 %v6128, %v6381
  %6386 = vrot.lane.b32.xlu0 %v6298, 120
  %v6387 = vpop.permute.xlu0 %6386
  %6388 = vrot.lane.b32.xlu0 %v6300, 120
  %v6389 = vpop.permute.xlu0 %6388
  %v6390 = vsel %vm5798, %v6387, 0
  %v6392 = vsel %vm5798, %v6389, 0
  %6394 = vmatprep.subr.mxu0 0.0
  %6395 = vmatpush1.msra.mxu0 %v6302
  %6396 = vmatprep.subr.mxu0 0.0
  %6397 = vmatpush1.msra.mxu0 0.0
  %6398 = vmatprep.subr.mxu0 0.0
  %6399 = vmatpush1.msra.mxu0 0.0
  %6400 = vmatprep.subr.mxu0 0.0
  %6401 = vmatpush1.msra.mxu0 0.0
  %6402 = vmatprep.subr.mxu0 0.0
  %6403 = vmatpush1.msra.mxu0 0.0
  %6404 = vmatprep.subr.mxu0 0.0
  %6405 = vmatpush1.msra.mxu0 0.0
  %6406 = vmatprep.subr.mxu0 0.0
  %6407 = vmatpush1.msra.mxu0 0.0
  %6408 = vmatprep.subr.mxu0 0.0
  %6409 = vmatpush1.msra.mxu0 0.0
  %6410 = vmatprep.subr.mxu0 0.0
  %6411 = vmatpush1.msra.mxu0 0.0
  %6412 = vmatprep.subr.mxu0 0.0
  %6413 = vmatpush1.msra.mxu0 0.0
  %6414 = vmatprep.subr.mxu0 0.0
  %6415 = vmatpush1.msra.mxu0 0.0
  %6416 = vmatprep.subr.mxu0 0.0
  %6417 = vmatpush1.msra.mxu0 0.0
  %6418 = vmatprep.subr.mxu0 0.0
  %6419 = vmatpush1.msra.mxu0 0.0
  %6420 = vmatprep.subr.mxu0 0.0
  %6421 = vmatpush1.msra.mxu0 0.0
  %6422 = vmatprep.subr.mxu0 0.0
  %6423 = vmatpush1.msra.mxu0 0.0
  %6424 = vmatprep.subr.mxu0 0.0
  %6425 = vmatpush1.msra.mxu0 0.0
  %6426 = vmatprep.subr.mxu0 0.0
  %6427 = vmatpush1.msra.mxu0 0.0
  %6428 = vmatprep.subr.mxu0 0.0
  %6429 = vmatpush1.msra.mxu0 0.0
  %6430 = vmatprep.subr.mxu0 0.0
  %6431 = vmatpush1.msra.mxu0 0.0
  %6432 = vmatprep.subr.mxu0 0.0
  %6433 = vmatpush1.msra.mxu0 0.0
  %6434 = vmatprep.subr.mxu0 0.0
  %6435 = vmatpush1.msra.mxu0 0.0
  %6436 = vmatprep.subr.mxu0 0.0
  %6437 = vmatpush1.msra.mxu0 0.0
  %6438 = vmatprep.subr.mxu0 0.0
  %6439 = vmatpush1.msra.mxu0 0.0
  %6440 = vmatprep.subr.mxu0 0.0
  %6441 = vmatpush1.msra.mxu0 0.0
  %6442 = vmatprep.subr.mxu0 0.0
  %6443 = vmatpush1.msra.mxu0 0.0
  %6444 = vmatprep.subr.mxu0 0.0
  %6445 = vmatpush1.msra.mxu0 0.0
  %6446 = vmatprep.subr.mxu0 0.0
  %6447 = vmatpush1.msra.mxu0 0.0
  %6448 = vmatprep.subr.mxu0 0.0
  %6449 = vmatpush1.msra.mxu0 0.0
  %6450 = vmatprep.subr.mxu0 0.0
  %6451 = vmatpush1.msra.mxu0 0.0
  %6452 = vmatprep.subr.mxu0 0.0
  %6453 = vmatpush1.msra.mxu0 0.0
  %6454 = vmatprep.subr.mxu0 0.0
  %6455 = vmatpush1.msra.mxu0 0.0
  %6456 = vmatprep.subr.mxu0 0.0
  %6457 = vmatpush1.msra.mxu0 0.0
  %6458 = vmatprep.mubr.f32.mxu0 0.0
  %6459 = vmatmul.mubr.f32.gmra.mrb[0].mxu0 %v6390
  %v6460 = vpop.f32.mrb[0].mxu0
  %v6461 = vadd.f32 0.0, %v6460
  %v6462 = vpop.f32.mrb[0].mxu0
  %6463 = vmatprep.mubr.f32.mxu0 0.0
  %6464 = vmatmul.mubr.f32.gmra.mrb[0].mxu0 %v6392
  %v6465 = vpop.f32.mrb[0].mxu0
  %v6466 = vadd.f32 0.0, %v6465
  %v6467 = vpop.f32.mrb[0].mxu0
  %6468 = vdwg.mxu0
  %v6469 = vadd.f32 %v6289, %v6461
  %v6470 = vadd.f32 %v6294, %v6466
  %s6471 = scalar_lea.vmem [#allocation3], 3
  %v6472 = vld [vmem:[%s6471] ss:$2 sm:$0xff]
  %s6473 = scalar_lea.vmem [#allocation3], 19
  %v6474 = vld [vmem:[%s6473] ss:$2 sm:$0x3f]
  %s6475 = scalar_lea.vmem %s5, 24
  %v6476 = vld [vmem:[%s6475] sm:$0xff]
  %v6478 = vsel %vm5798, %v6472, 0
  %v6481 = vsel %vm5798, %v6474, 0
  %6483 = vmatprep.subr.mxu0 0.0
  %6484 = vmatpush1.msra.mxu0 %v6476
  %6485 = vmatprep.subr.mxu0 0.0
  %6486 = vmatpush1.msra.mxu0 0.0
  %6487 = vmatprep.subr.mxu0 0.0
  %6488 = vmatpush1.msra.mxu0 0.0
  %6489 = vmatprep.subr.mxu0 0.0
  %6490 = vmatpush1.msra.mxu0 0.0
  %6491 = vmatprep.subr.mxu0 0.0
  %6492 = vmatpush1.msra.mxu0 0.0
  %6493 = vmatprep.subr.mxu0 0.0
  %6494 = vmatpush1.msra.mxu0 0.0
  %6495 = vmatprep.subr.mxu0 0.0
  %6496 = vmatpush1.msra.mxu0 0.0
  %6497 = vmatprep.subr.mxu0 0.0
  %6498 = vmatpush1.msra.mxu0 0.0
  %6499 = vmatprep.subr.mxu0 0.0
  %6500 = vmatpush1.msra.mxu0 0.0
  %6501 = vmatprep.subr.mxu0 0.0
  %6502 = vmatpush1.msra.mxu0 0.0
  %6503 = vmatprep.subr.mxu0 0.0
  %6504 = vmatpush1.msra.mxu0 0.0
  %6505 = vmatprep.subr.mxu0 0.0
  %6506 = vmatpush1.msra.mxu0 0.0
  %6507 = vmatprep.subr.mxu0 0.0
  %6508 = vmatpush1.msra.mxu0 0.0
  %6509 = vmatprep.subr.mxu0 0.0
  %6510 = vmatpush1.msra.mxu0 0.0
  %6511 = vmatprep.subr.mxu0 0.0
  %6512 = vmatpush1.msra.mxu0 0.0
  %6513 = vmatprep.subr.mxu0 0.0
  %6514 = vmatpush1.msra.mxu0 0.0
  %6515 = vmatprep.subr.mxu0 0.0
  %6516 = vmatpush1.msra.mxu0 0.0
  %6517 = vmatprep.subr.mxu0 0.0
  %6518 = vmatpush1.msra.mxu0 0.0
  %6519 = vmatprep.subr.mxu0 0.0
  %6520 = vmatpush1.msra.mxu0 0.0
  %6521 = vmatprep.subr.mxu0 0.0
  %6522 = vmatpush1.msra.mxu0 0.0
  %6523 = vmatprep.subr.mxu0 0.0
  %6524 = vmatpush1.msra.mxu0 0.0
  %6525 = vmatprep.subr.mxu0 0.0
  %6526 = vmatpush1.msra.mxu0 0.0
  %6527 = vmatprep.subr.mxu0 0.0
  %6528 = vmatpush1.msra.mxu0 0.0
  %6529 = vmatprep.subr.mxu0 0.0
  %6530 = vmatpush1.msra.mxu0 0.0
  %6531 = vmatprep.subr.mxu0 0.0
  %6532 = vmatpush1.msra.mxu0 0.0
  %6533 = vmatprep.subr.mxu0 0.0
  %6534 = vmatpush1.msra.mxu0 0.0
  %6535 = vmatprep.subr.mxu0 0.0
  %6536 = vmatpush1.msra.mxu0 0.0
  %6537 = vmatprep.subr.mxu0 0.0
  %6538 = vmatpush1.msra.mxu0 0.0
  %6539 = vmatprep.subr.mxu0 0.0
  %6540 = vmatpush1.msra.mxu0 0.0
  %6541 = vmatprep.subr.mxu0 0.0
  %6542 = vmatpush1.msra.mxu0 0.0
  %6543 = vmatprep.subr.mxu0 0.0
  %6544 = vmatpush1.msra.mxu0 0.0
  %6545 = vmatprep.subr.mxu0 0.0
  %6546 = vmatpush1.msra.mxu0 0.0
  %6547 = vmatprep.mubr.f32.mxu0 0.0
  %6548 = vmatmul.mubr.f32.gmra.mrb[0].mxu0 %v6478
  %v6549 = vpop.f32.mrb[0].mxu0
  %v6550 = vadd.f32 0.0, %v6549
  %v6551 = vpop.f32.mrb[0].mxu0
  %6552 = vmatprep.mubr.f32.mxu0 0.0
  %6553 = vmatmul.mubr.f32.gmra.mrb[0].mxu0 %v6481
  %v6554 = vpop.f32.mrb[0].mxu0
  %v6555 = vadd.f32 0.0, %v6554
  %v6556 = vpop.f32.mrb[0].mxu0
  %6557 = vdwg.mxu0
  %v6558 = vadd.f32 %v6384, %v6550
  %v6559 = vadd.f32 %v6385, %v6555
  %6560 = vrot.lane.b32.xlu0 %v6472, 120
  %v6561 = vpop.permute.xlu0 %6560
  %6562 = vrot.lane.b32.xlu0 %v6474, 120
  %v6563 = vpop.permute.xlu0 %6562
  %v6564 = vsel %vm5798, %v6561, 0
  %v6566 = vsel %vm5798, %v6563, 0
  %6568 = vmatprep.subr.mxu0 0.0
  %6569 = vmatpush1.msra.mxu0 %v6476
  %6570 = vmatprep.subr.mxu0 0.0
  %6571 = vmatpush1.msra.mxu0 0.0
  %6572 = vmatprep.subr.mxu0 0.0
  %6573 = vmatpush1.msra.mxu0 0.0
  %6574 = vmatprep.subr.mxu0 0.0
  %6575 = vmatpush1.msra.mxu0 0.0
  %6576 = vmatprep.subr.mxu0 0.0
  %6577 = vmatpush1.msra.mxu0 0.0
  %6578 = vmatprep.subr.mxu0 0.0
  %6579 = vmatpush1.msra.mxu0 0.0
  %6580 = vmatprep.subr.mxu0 0.0
  %6581 = vmatpush1.msra.mxu0 0.0
  %6582 = vmatprep.subr.mxu0 0.0
  %6583 = vmatpush1.msra.mxu0 0.0
  %6584 = vmatprep.subr.mxu0 0.0
  %6585 = vmatpush1.msra.mxu0 0.0
  %6586 = vmatprep.subr.mxu0 0.0
  %6587 = vmatpush1.msra.mxu0 0.0
  %6588 = vmatprep.subr.mxu0 0.0
  %6589 = vmatpush1.msra.mxu0 0.0
  %6590 = vmatprep.subr.mxu0 0.0
  %6591 = vmatpush1.msra.mxu0 0.0
  %6592 = vmatprep.subr.mxu0 0.0
  %6593 = vmatpush1.msra.mxu0 0.0
  %6594 = vmatprep.subr.mxu0 0.0
  %6595 = vmatpush1.msra.mxu0 0.0
  %6596 = vmatprep.subr.mxu0 0.0
  %6597 = vmatpush1.msra.mxu0 0.0
  %6598 = vmatprep.subr.mxu0 0.0
  %6599 = vmatpush1.msra.mxu0 0.0
  %6600 = vmatprep.subr.mxu0 0.0
  %6601 = vmatpush1.msra.mxu0 0.0
  %6602 = vmatprep.subr.mxu0 0.0
  %6603 = vmatpush1.msra.mxu0 0.0
  %6604 = vmatprep.subr.mxu0 0.0
  %6605 = vmatpush1.msra.mxu0 0.0
  %6606 = vmatprep.subr.mxu0 0.0
  %6607 = vmatpush1.msra.mxu0 0.0
  %6608 = vmatprep.subr.mxu0 0.0
  %6609 = vmatpush1.msra.mxu0 0.0
  %6610 = vmatprep.subr.mxu0 0.0
  %6611 = vmatpush1.msra.mxu0 0.0
  %6612 = vmatprep.subr.mxu0 0.0
  %6613 = vmatpush1.msra.mxu0 0.0
  %6614 = vmatprep.subr.mxu0 0.0
  %6615 = vmatpush1.msra.mxu0 0.0
  %6616 = vmatprep.subr.mxu0 0.0
  %6617 = vmatpush1.msra.mxu0 0.0
  %6618 = vmatprep.subr.mxu0 0.0
  %6619 = vmatpush1.msra.mxu0 0.0
  %6620 = vmatprep.subr.mxu0 0.0
  %6621 = vmatpush1.msra.mxu0 0.0
  %6622 = vmatprep.subr.mxu0 0.0
  %6623 = vmatpush1.msra.mxu0 0.0
  %6624 = vmatprep.subr.mxu0 0.0
  %6625 = vmatpush1.msra.mxu0 0.0
  %6626 = vmatprep.subr.mxu0 0.0
  %6627 = vmatpush1.msra.mxu0 0.0
  %6628 = vmatprep.subr.mxu0 0.0
  %6629 = vmatpush1.msra.mxu0 0.0
  %6630 = vmatprep.subr.mxu0 0.0
  %6631 = vmatpush1.msra.mxu0 0.0
  %6632 = vmatprep.mubr.f32.mxu0 0.0
  %6633 = vmatmul.mubr.f32.gmra.mrb[0].mxu0 %v6564
  %v6634 = vpop.f32.mrb[0].mxu0
  %v6635 = vadd.f32 0.0, %v6634
  %v6636 = vpop.f32.mrb[0].mxu0
  %6637 = vmatprep.mubr.f32.mxu0 0.0
  %6638 = vmatmul.mubr.f32.gmra.mrb[0].mxu0 %v6566
  %v6639 = vpop.f32.mrb[0].mxu0
  %v6640 = vadd.f32 0.0, %v6639
  %v6641 = vpop.f32.mrb[0].mxu0
  %6642 = vdwg.mxu0
  %v6643 = vadd.f32 %v6469, %v6635
  %v6644 = vadd.f32 %v6470, %v6640
  %s6645 = scalar_lea.vmem [#allocation3], 4
  %v6646 = vld [vmem:[%s6645] ss:$2 sm:$0xff]
  %s6647 = scalar_lea.vmem [#allocation3], 20
  %v6648 = vld [vmem:[%s6647] ss:$2 sm:$0x3f]
  %s6649 = scalar_lea.vmem %s5, 32
  %v6650 = vld [vmem:[%s6649] sm:$0xff]
  %v6652 = vsel %vm5798, %v6646, 0
  %v6655 = vsel %vm5798, %v6648, 0
  %6657 = vmatprep.subr.mxu0 0.0
  %6658 = vmatpush1.msra.mxu0 %v6650
  %6659 = vmatprep.subr.mxu0 0.0
  %6660 = vmatpush1.msra.mxu0 0.0
  %6661 = vmatprep.subr.mxu0 0.0
  %6662 = vmatpush1.msra.mxu0 0.0
  %6663 = vmatprep.subr.mxu0 0.0
  %6664 = vmatpush1.msra.mxu0 0.0
  %6665 = vmatprep.subr.mxu0 0.0
  %6666 = vmatpush1.msra.mxu0 0.0
  %6667 = vmatprep.subr.mxu0 0.0
  %6668 = vmatpush1.msra.mxu0 0.0
  %6669 = vmatprep.subr.mxu0 0.0
  %6670 = vmatpush1.msra.mxu0 0.0
  %6671 = vmatprep.subr.mxu0 0.0
  %6672 = vmatpush1.msra.mxu0 0.0
  %6673 = vmatprep.subr.mxu0 0.0
  %6674 = vmatpush1.msra.mxu0 0.0
  %6675 = vmatprep.subr.mxu0 0.0
  %6676 = vmatpush1.msra.mxu0 0.0
  %6677 = vmatprep.subr.mxu0 0.0
  %6678 = vmatpush1.msra.mxu0 0.0
  %6679 = vmatprep.subr.mxu0 0.0
  %6680 = vmatpush1.msra.mxu0 0.0
  %6681 = vmatprep.subr.mxu0 0.0
  %6682 = vmatpush1.msra.mxu0 0.0
  %6683 = vmatprep.subr.mxu0 0.0
  %6684 = vmatpush1.msra.mxu0 0.0
  %6685 = vmatprep.subr.mxu0 0.0
  %6686 = vmatpush1.msra.mxu0 0.0
  %6687 = vmatprep.subr.mxu0 0.0
  %6688 = vmatpush1.msra.mxu0 0.0
  %6689 = vmatprep.subr.mxu0 0.0
  %6690 = vmatpush1.msra.mxu0 0.0
  %6691 = vmatprep.subr.mxu0 0.0
  %6692 = vmatpush1.msra.mxu0 0.0
  %6693 = vmatprep.subr.mxu0 0.0
  %6694 = vmatpush1.msra.mxu0 0.0
  %6695 = vmatprep.subr.mxu0 0.0
  %6696 = vmatpush1.msra.mxu0 0.0
  %6697 = vmatprep.subr.mxu0 0.0
  %6698 = vmatpush1.msra.mxu0 0.0
  %6699 = vmatprep.subr.mxu0 0.0
  %6700 = vmatpush1.msra.mxu0 0.0
  %6701 = vmatprep.subr.mxu0 0.0
  %6702 = vmatpush1.msra.mxu0 0.0
  %6703 = vmatprep.subr.mxu0 0.0
  %6704 = vmatpush1.msra.mxu0 0.0
  %6705 = vmatprep.subr.mxu0 0.0
  %6706 = vmatpush1.msra.mxu0 0.0
  %6707 = vmatprep.subr.mxu0 0.0
  %6708 = vmatpush1.msra.mxu0 0.0
  %6709 = vmatprep.subr.mxu0 0.0
  %6710 = vmatpush1.msra.mxu0 0.0
  %6711 = vmatprep.subr.mxu0 0.0
  %6712 = vmatpush1.msra.mxu0 0.0
  %6713 = vmatprep.subr.mxu0 0.0
  %6714 = vmatpush1.msra.mxu0 0.0
  %6715 = vmatprep.subr.mxu0 0.0
  %6716 = vmatpush1.msra.mxu0 0.0
  %6717 = vmatprep.subr.mxu0 0.0
  %6718 = vmatpush1.msra.mxu0 0.0
  %6719 = vmatprep.subr.mxu0 0.0
  %6720 = vmatpush1.msra.mxu0 0.0
  %6721 = vmatprep.mubr.f32.mxu0 0.0
  %6722 = vmatmul.mubr.f32.gmra.mrb[0].mxu0 %v6652
  %v6723 = vpop.f32.mrb[0].mxu0
  %v6724 = vadd.f32 0.0, %v6723
  %v6725 = vpop.f32.mrb[0].mxu0
  %6726 = vmatprep.mubr.f32.mxu0 0.0
  %6727 = vmatmul.mubr.f32.gmra.mrb[0].mxu0 %v6655
  %v6728 = vpop.f32.mrb[0].mxu0
  %v6729 = vadd.f32 0.0, %v6728
  %v6730 = vpop.f32.mrb[0].mxu0
  %6731 = vdwg.mxu0
  %v6732 = vadd.f32 %v6558, %v6724
  %v6733 = vadd.f32 %v6559, %v6729
  %6734 = vrot.lane.b32.xlu0 %v6646, 120
  %v6735 = vpop.permute.xlu0 %6734
  %6736 = vrot.lane.b32.xlu0 %v6648, 120
  %v6737 = vpop.permute.xlu0 %6736
  %v6738 = vsel %vm5798, %v6735, 0
  %v6740 = vsel %vm5798, %v6737, 0
  %6742 = vmatprep.subr.mxu0 0.0
  %6743 = vmatpush1.msra.mxu0 %v6650
  %6744 = vmatprep.subr.mxu0 0.0
  %6745 = vmatpush1.msra.mxu0 0.0
  %6746 = vmatprep.subr.mxu0 0.0
  %6747 = vmatpush1.msra.mxu0 0.0
  %6748 = vmatprep.subr.mxu0 0.0
  %6749 = vmatpush1.msra.mxu0 0.0
  %6750 = vmatprep.subr.mxu0 0.0
  %6751 = vmatpush1.msra.mxu0 0.0
  %6752 = vmatprep.subr.mxu0 0.0
  %6753 = vmatpush1.msra.mxu0 0.0
  %6754 = vmatprep.subr.mxu0 0.0
  %6755 = vmatpush1.msra.mxu0 0.0
  %6756 = vmatprep.subr.mxu0 0.0
  %6757 = vmatpush1.msra.mxu0 0.0
  %6758 = vmatprep.subr.mxu0 0.0
  %6759 = vmatpush1.msra.mxu0 0.0
  %6760 = vmatprep.subr.mxu0 0.0
  %6761 = vmatpush1.msra.mxu0 0.0
  %6762 = vmatprep.subr.mxu0 0.0
  %6763 = vmatpush1.msra.mxu0 0.0
  %6764 = vmatprep.subr.mxu0 0.0
  %6765 = vmatpush1.msra.mxu0 0.0
  %6766 = vmatprep.subr.mxu0 0.0
  %6767 = vmatpush1.msra.mxu0 0.0
  %6768 = vmatprep.subr.mxu0 0.0
  %6769 = vmatpush1.msra.mxu0 0.0
  %6770 = vmatprep.subr.mxu0 0.0
  %6771 = vmatpush1.msra.mxu0 0.0
  %6772 = vmatprep.subr.mxu0 0.0
  %6773 = vmatpush1.msra.mxu0 0.0
  %6774 = vmatprep.subr.mxu0 0.0
  %6775 = vmatpush1.msra.mxu0 0.0
  %6776 = vmatprep.subr.mxu0 0.0
  %6777 = vmatpush1.msra.mxu0 0.0
  %6778 = vmatprep.subr.mxu0 0.0
  %6779 = vmatpush1.msra.mxu0 0.0
  %6780 = vmatprep.subr.mxu0 0.0
  %6781 = vmatpush1.msra.mxu0 0.0
  %6782 = vmatprep.subr.mxu0 0.0
  %6783 = vmatpush1.msra.mxu0 0.0
  %6784 = vmatprep.subr.mxu0 0.0
  %6785 = vmatpush1.msra.mxu0 0.0
  %6786 = vmatprep.subr.mxu0 0.0
  %6787 = vmatpush1.msra.mxu0 0.0
  %6788 = vmatprep.subr.mxu0 0.0
  %6789 = vmatpush1.msra.mxu0 0.0
  %6790 = vmatprep.subr.mxu0 0.0
  %6791 = vmatpush1.msra.mxu0 0.0
  %6792 = vmatprep.subr.mxu0 0.0
  %6793 = vmatpush1.msra.mxu0 0.0
  %6794 = vmatprep.subr.mxu0 0.0
  %6795 = vmatpush1.msra.mxu0 0.0
  %6796 = vmatprep.subr.mxu0 0.0
  %6797 = vmatpush1.msra.mxu0 0.0
  %6798 = vmatprep.subr.mxu0 0.0
  %6799 = vmatpush1.msra.mxu0 0.0
  %6800 = vmatprep.subr.mxu0 0.0
  %6801 = vmatpush1.msra.mxu0 0.0
  %6802 = vmatprep.subr.mxu0 0.0
  %6803 = vmatpush1.msra.mxu0 0.0
  %6804 = vmatprep.subr.mxu0 0.0
  %6805 = vmatpush1.msra.mxu0 0.0
  %6806 = vmatprep.mubr.f32.mxu0 0.0
  %6807 = vmatmul.mubr.f32.gmra.mrb[0].mxu0 %v6738
  %v6808 = vpop.f32.mrb[0].mxu0
  %v6809 = vadd.f32 0.0, %v6808
  %v6810 = vpop.f32.mrb[0].mxu0
  %6811 = vmatprep.mubr.f32.mxu0 0.0
  %6812 = vmatmul.mubr.f32.gmra.mrb[0].mxu0 %v6740
  %v6813 = vpop.f32.mrb[0].mxu0
  %v6814 = vadd.f32 0.0, %v6813
  %v6815 = vpop.f32.mrb[0].mxu0
  %6816 = vdwg.mxu0
  %v6817 = vadd.f32 %v6643, %v6809
  %v6818 = vadd.f32 %v6644, %v6814
  %v6819 = vld [vmem:[%s6] sm:$0x1]
  %v6820 = vld [vmem:[%s6 + $0x1] sm:$0x1]
  %v6821 = vld [vmem:[%s6 + $0x2] sm:$0x1]
  %v6822 = vlaneseq
  %v6823 = vshrl.u32 %v6822, 7
  %v6824 = vsub.s32 0, %v6823
  %v6825 = vrot.slane %v6819, %v6824
  %v6826 = vadd.f32 %v6732, %v6825
  %v6827 = vadd.f32 %v6733, %v6825
  %v6828 = vadd.f32 %v6817, %v6825
  %v6829 = vadd.f32 %v6818, %v6825
  %vm6830 = vcmask 130048
  %v6831 = vsel %vm6830, %v6826, 0.0
  %vm6832 = vcmask 128000
  %v6833 = vsel %vm6832, %v6827, 0.0
  %v6834 = vadd.f32 %v6831, %v6833
  %v6835 = vrot.slane %v6834, 4
  %v6836 = vadd.f32 %v6834, %v6835
  %v6837 = vrot.slane %v6836, 2
  %v6838 = vadd.f32 %v6836, %v6837
  %v6839 = vrot.slane %v6838, 1
  %v6840 = vadd.f32 %v6838, %v6839
  %v6841 = vadd.f32 %v6840, 0.0
  %v6842 = vsel %vm6830, %v6828, 0.0
  %v6843 = vsel %vm6832, %v6829, 0.0
  %v6844 = vadd.f32 %v6842, %v6843
  %v6845 = vrot.slane %v6844, 4
  %v6846 = vadd.f32 %v6844, %v6845
  %v6847 = vrot.slane %v6846, 2
  %v6848 = vadd.f32 %v6846, %v6847
  %v6849 = vrot.slane %v6848, 1
  %v6850 = vadd.f32 %v6848, %v6849
  %v6851 = vadd.f32 %v6841, %v6850
  %v6852 = vrcp.pop 28.0
  %v6853 = vmul.f32 %v6851, %v6852
  %v6854 = vsub.f32 %v6826, %v6853
  %v6855 = vsub.f32 %v6827, %v6853
  %v6856 = vmul.f32 %v6854, %v6854
  %v6857 = vmul.f32 %v6855, %v6855
  %v6858 = vsel %vm6830, %v6856, 0.0
  %v6859 = vsel %vm6832, %v6857, 0.0
  %v6860 = vadd.f32 %v6858, %v6859
  %v6861 = vrot.slane %v6860, 4
  %v6862 = vadd.f32 %v6860, %v6861
  %v6863 = vrot.slane %v6862, 2
  %v6864 = vadd.f32 %v6862, %v6863
  %v6865 = vrot.slane %v6864, 1
  %v6866 = vadd.f32 %v6864, %v6865
  %v6867 = vadd.f32 %v6866, 0.0
  %v6868 = vsub.f32 %v6828, %v6853
  %v6869 = vsub.f32 %v6829, %v6853
  %v6870 = vmul.f32 %v6868, %v6868
  %v6871 = vmul.f32 %v6869, %v6869
  %v6872 = vsel %vm6830, %v6870, 0.0
  %v6873 = vsel %vm6832, %v6871, 0.0
  %v6874 = vadd.f32 %v6872, %v6873
  %v6875 = vrot.slane %v6874, 4
  %v6876 = vadd.f32 %v6874, %v6875
  %v6877 = vrot.slane %v6876, 2
  %v6878 = vadd.f32 %v6876, %v6877
  %v6879 = vrot.slane %v6878, 1
  %v6880 = vadd.f32 %v6878, %v6879
  %v6881 = vadd.f32 %v6867, %v6880
  %v6882 = vmul.f32 %v6881, %v6852
  %v6883 = vadd.f32 %v6882, 1e-05
  %v6884 = vrsqrt.pop %v6883
  %v6885 = vmul.f32 %v6854, %v6884
  %v6886 = vmul.f32 %v6855, %v6884
  %v6887 = vlaneseq
  %v6888 = vshrl.u32 %v6887, 7
  %v6889 = vsub.s32 0, %v6888
  %v6890 = vrot.slane %v6820, %v6889
  %v6891 = vmul.f32 %v6885, %v6890
  %v6892 = vmul.f32 %v6886, %v6890
  %v6893 = vlaneseq
  %v6894 = vshrl.u32 %v6893, 7
  %v6895 = vsub.s32 0, %v6894
  %v6896 = vrot.slane %v6821, %v6895
  %v6897 = vadd.f32 %v6891, %v6896
  %v6898 = vadd.f32 %v6892, %v6896
  %vm6899 = vcmp.ge.f32.partialorder %v6897, 0.0
  %vm6900 = vcmp.ge.f32.partialorder %v6898, 0.0
  %v6901 = vmul.f32 %v6897, 0.2
  %v6902 = vmul.f32 %v6898, 0.2
  %v6903 = vsel %vm6899, %v6897, %v6901
  %v6904 = vsel %vm6900, %v6898, %v6902
  %v6905 = vmul.f32 %v6868, %v6884
  %v6906 = vmul.f32 %v6869, %v6884
  %v6907 = vmul.f32 %v6905, %v6890
  %v6908 = vmul.f32 %v6906, %v6890
  %v6909 = vadd.f32 %v6907, %v6896
  %v6910 = vadd.f32 %v6908, %v6896
  %vm6911 = vcmp.ge.f32.partialorder %v6909, 0.0
  %vm6912 = vcmp.ge.f32.partialorder %v6910, 0.0
  %v6913 = vmul.f32 %v6909, 0.2
  %v6914 = vmul.f32 %v6910, 0.2
  %v6915 = vsel %vm6911, %v6909, %v6913
  %v6916 = vsel %vm6912, %v6910, %v6914
  %6917 = vst.msk [vmem:[#allocation4] sm:$0xff] %vm6830, %v6903
  %6918 = vst.msk [vmem:[#allocation4 + $0x8] sm:$0x3f] %vm6832, %v6904
  %6921 = vrot.lane.b32.xlu0 %v6915, 16
  %v6922 = vpop.permute.xlu0 %6921
  %6923 = vrot.lane.b32.xlu0 %v6916, 16
  %v6924 = vpop.permute.xlu0 %6923
  %vm6927 = vcmask 261248
  %6928 = vst.msk [vmem:[#allocation4] sm:$0xff] %vm6927, %v6922
  %vm6929 = vcmask 259200
  %6930 = vst.msk [vmem:[#allocation4 + $0x8] sm:$0x3f] %vm6929, %v6924
  %v6931 = vld [vmem:[#allocation4] ss:$2 sm:$0x1f]
  %v6932 = vld [vmem:[%s7] sm:$0xff]
  %v6933 = vld [vmem:[%s7 + $0x8] sm:$0xff]
  %s6934 = scalar_lea.vmem [#allocation4], 1
  %v6935 = vld [vmem:[%s6934] ss:$2 sm:$0x1f]
  %s6936 = scalar_lea.vmem %s7, 16
  %v6937 = vld [vmem:[%s6936] sm:$0xff]
  %v6938 = vld [vmem:[%s6936 + $0x8] sm:$0xff]
  %v6940 = vsel %vm6830, %v6935, 0
  %6942 = vmatprep.subr.mxu0 0.0
  %6943 = vmatpush1.msra.mxu0 %v6937
  %6944 = vmatprep.subr.mxu0 0.0
  %6945 = vmatpush1.msra.mxu0 %v6938
  %6946 = vmatprep.subr.mxu0 0.0
  %6947 = vmatpush1.msra.mxu0 0.0
  %6948 = vmatprep.subr.mxu0 0.0
  %6949 = vmatpush1.msra.mxu0 0.0
  %6950 = vmatprep.subr.mxu0 0.0
  %6951 = vmatpush1.msra.mxu0 0.0
  %6952 = vmatprep.subr.mxu0 0.0
  %6953 = vmatpush1.msra.mxu0 0.0
  %6954 = vmatprep.subr.mxu0 0.0
  %6955 = vmatpush1.msra.mxu0 0.0
  %6956 = vmatprep.subr.mxu0 0.0
  %6957 = vmatpush1.msra.mxu0 0.0
  %6958 = vmatprep.subr.mxu0 0.0
  %6959 = vmatpush1.msra.mxu0 0.0
  %6960 = vmatprep.subr.mxu0 0.0
  %6961 = vmatpush1.msra.mxu0 0.0
  %6962 = vmatprep.subr.mxu0 0.0
  %6963 = vmatpush1.msra.mxu0 0.0
  %6964 = vmatprep.subr.mxu0 0.0
  %6965 = vmatpush1.msra.mxu0 0.0
  %6966 = vmatprep.subr.mxu0 0.0
  %6967 = vmatpush1.msra.mxu0 0.0
  %6968 = vmatprep.subr.mxu0 0.0
  %6969 = vmatpush1.msra.mxu0 0.0
  %6970 = vmatprep.subr.mxu0 0.0
  %6971 = vmatpush1.msra.mxu0 0.0
  %6972 = vmatprep.subr.mxu0 0.0
  %6973 = vmatpush1.msra.mxu0 0.0
  %6974 = vmatprep.subr.mxu0 0.0
  %6975 = vmatpush1.msra.mxu0 0.0
  %6976 = vmatprep.subr.mxu0 0.0
  %6977 = vmatpush1.msra.mxu0 0.0
  %6978 = vmatprep.subr.mxu0 0.0
  %6979 = vmatpush1.msra.mxu0 0.0
  %6980 = vmatprep.subr.mxu0 0.0
  %6981 = vmatpush1.msra.mxu0 0.0
  %6982 = vmatprep.subr.mxu0 0.0
  %6983 = vmatpush1.msra.mxu0 0.0
  %6984 = vmatprep.subr.mxu0 0.0
  %6985 = vmatpush1.msra.mxu0 0.0
  %6986 = vmatprep.subr.mxu0 0.0
  %6987 = vmatpush1.msra.mxu0 0.0
  %6988 = vmatprep.subr.mxu0 0.0
  %6989 = vmatpush1.msra.mxu0 0.0
  %6990 = vmatprep.subr.mxu0 0.0
  %6991 = vmatpush1.msra.mxu0 0.0
  %6992 = vmatprep.subr.mxu0 0.0
  %6993 = vmatpush1.msra.mxu0 0.0
  %6994 = vmatprep.subr.mxu0 0.0
  %6995 = vmatpush1.msra.mxu0 0.0
  %6996 = vmatprep.subr.mxu0 0.0
  %6997 = vmatpush1.msra.mxu0 0.0
  %6998 = vmatprep.subr.mxu0 0.0
  %6999 = vmatpush1.msra.mxu0 0.0
  %7000 = vmatprep.subr.mxu0 0.0
  %7001 = vmatpush1.msra.mxu0 0.0
  %7002 = vmatprep.subr.mxu0 0.0
  %7003 = vmatpush1.msra.mxu0 0.0
  %7004 = vmatprep.subr.mxu0 0.0
  %7005 = vmatpush1.msra.mxu0 0.0
  %7006 = vmatprep.mubr.f32.mxu0 0.0
  %7007 = vmatmul.mubr.f32.gmra.mrb[0].mxu0 %v6940
  %v7008 = vpop.f32.mrb[0].mxu0
  %v7009 = vadd.f32 0.0, %v7008
  %v7010 = vpop.f32.mrb[0].mxu0
  %7011 = vdwg.mxu0
  %v7013 = vsel %vm6830, %v6931, 0
  %7015 = vmatprep.subr.mxu0 0.0
  %7016 = vmatpush1.msra.mxu0 %v6932
  %7017 = vmatprep.subr.mxu0 0.0
  %7018 = vmatpush1.msra.mxu0 %v6933
  %7019 = vmatprep.subr.mxu0 0.0
  %7020 = vmatpush1.msra.mxu0 0.0
  %7021 = vmatprep.subr.mxu0 0.0
  %7022 = vmatpush1.msra.mxu0 0.0
  %7023 = vmatprep.subr.mxu0 0.0
  %7024 = vmatpush1.msra.mxu0 0.0
  %7025 = vmatprep.subr.mxu0 0.0
  %7026 = vmatpush1.msra.mxu0 0.0
  %7027 = vmatprep.subr.mxu0 0.0
  %7028 = vmatpush1.msra.mxu0 0.0
  %7029 = vmatprep.subr.mxu0 0.0
  %7030 = vmatpush1.msra.mxu0 0.0
  %7031 = vmatprep.subr.mxu0 0.0
  %7032 = vmatpush1.msra.mxu0 0.0
  %7033 = vmatprep.subr.mxu0 0.0
  %7034 = vmatpush1.msra.mxu0 0.0
  %7035 = vmatprep.subr.mxu0 0.0
  %7036 = vmatpush1.msra.mxu0 0.0
  %7037 = vmatprep.subr.mxu0 0.0
  %7038 = vmatpush1.msra.mxu0 0.0
  %7039 = vmatprep.subr.mxu0 0.0
  %7040 = vmatpush1.msra.mxu0 0.0
  %7041 = vmatprep.subr.mxu0 0.0
  %7042 = vmatpush1.msra.mxu0 0.0
  %7043 = vmatprep.subr.mxu0 0.0
  %7044 = vmatpush1.msra.mxu0 0.0
  %7045 = vmatprep.subr.mxu0 0.0
  %7046 = vmatpush1.msra.mxu0 0.0
  %7047 = vmatprep.subr.mxu0 0.0
  %7048 = vmatpush1.msra.mxu0 0.0
  %7049 = vmatprep.subr.mxu0 0.0
  %7050 = vmatpush1.msra.mxu0 0.0
  %7051 = vmatprep.subr.mxu0 0.0
  %7052 = vmatpush1.msra.mxu0 0.0
  %7053 = vmatprep.subr.mxu0 0.0
  %7054 = vmatpush1.msra.mxu0 0.0
  %7055 = vmatprep.subr.mxu0 0.0
  %7056 = vmatpush1.msra.mxu0 0.0
  %7057 = vmatprep.subr.mxu0 0.0
  %7058 = vmatpush1.msra.mxu0 0.0
  %7059 = vmatprep.subr.mxu0 0.0
  %7060 = vmatpush1.msra.mxu0 0.0
  %7061 = vmatprep.subr.mxu0 0.0
  %7062 = vmatpush1.msra.mxu0 0.0
  %7063 = vmatprep.subr.mxu0 0.0
  %7064 = vmatpush1.msra.mxu0 0.0
  %7065 = vmatprep.subr.mxu0 0.0
  %7066 = vmatpush1.msra.mxu0 0.0
  %7067 = vmatprep.subr.mxu0 0.0
  %7068 = vmatpush1.msra.mxu0 0.0
  %7069 = vmatprep.subr.mxu0 0.0
  %7070 = vmatpush1.msra.mxu0 0.0
  %7071 = vmatprep.subr.mxu0 0.0
  %7072 = vmatpush1.msra.mxu0 0.0
  %7073 = vmatprep.subr.mxu0 0.0
  %7074 = vmatpush1.msra.mxu0 0.0
  %7075 = vmatprep.subr.mxu0 0.0
  %7076 = vmatpush1.msra.mxu0 0.0
  %7077 = vmatprep.subr.mxu0 0.0
  %7078 = vmatpush1.msra.mxu0 0.0
  %7079 = vmatprep.mubr.f32.mxu0 0.0
  %7080 = vmatmul.mubr.f32.gmra.mrb[0].mxu0 %v7013
  %v7081 = vpop.f32.mrb[0].mxu0
  %v7082 = vadd.f32 %v7009, %v7081
  %v7083 = vpop.f32.mrb[0].mxu0
  %7084 = vdwg.mxu0
  %7085 = vrot.lane.b32.xlu0 %v6935, 112
  %v7086 = vpop.permute.xlu0 %7085
  %v7087 = vsel %vm6830, %v7086, 0
  %7089 = vmatprep.subr.mxu0 0.0
  %7090 = vmatpush1.msra.mxu0 %v6937
  %7091 = vmatprep.subr.mxu0 0.0
  %7092 = vmatpush1.msra.mxu0 %v6938
  %7093 = vmatprep.subr.mxu0 0.0
  %7094 = vmatpush1.msra.mxu0 0.0
  %7095 = vmatprep.subr.mxu0 0.0
  %7096 = vmatpush1.msra.mxu0 0.0
  %7097 = vmatprep.subr.mxu0 0.0
  %7098 = vmatpush1.msra.mxu0 0.0
  %7099 = vmatprep.subr.mxu0 0.0
  %7100 = vmatpush1.msra.mxu0 0.0
  %7101 = vmatprep.subr.mxu0 0.0
  %7102 = vmatpush1.msra.mxu0 0.0
  %7103 = vmatprep.subr.mxu0 0.0
  %7104 = vmatpush1.msra.mxu0 0.0
  %7105 = vmatprep.subr.mxu0 0.0
  %7106 = vmatpush1.msra.mxu0 0.0
  %7107 = vmatprep.subr.mxu0 0.0
  %7108 = vmatpush1.msra.mxu0 0.0
  %7109 = vmatprep.subr.mxu0 0.0
  %7110 = vmatpush1.msra.mxu0 0.0
  %7111 = vmatprep.subr.mxu0 0.0
  %7112 = vmatpush1.msra.mxu0 0.0
  %7113 = vmatprep.subr.mxu0 0.0
  %7114 = vmatpush1.msra.mxu0 0.0
  %7115 = vmatprep.subr.mxu0 0.0
  %7116 = vmatpush1.msra.mxu0 0.0
  %7117 = vmatprep.subr.mxu0 0.0
  %7118 = vmatpush1.msra.mxu0 0.0
  %7119 = vmatprep.subr.mxu0 0.0
  %7120 = vmatpush1.msra.mxu0 0.0
  %7121 = vmatprep.subr.mxu0 0.0
  %7122 = vmatpush1.msra.mxu0 0.0
  %7123 = vmatprep.subr.mxu0 0.0
  %7124 = vmatpush1.msra.mxu0 0.0
  %7125 = vmatprep.subr.mxu0 0.0
  %7126 = vmatpush1.msra.mxu0 0.0
  %7127 = vmatprep.subr.mxu0 0.0
  %7128 = vmatpush1.msra.mxu0 0.0
  %7129 = vmatprep.subr.mxu0 0.0
  %7130 = vmatpush1.msra.mxu0 0.0
  %7131 = vmatprep.subr.mxu0 0.0
  %7132 = vmatpush1.msra.mxu0 0.0
  %7133 = vmatprep.subr.mxu0 0.0
  %7134 = vmatpush1.msra.mxu0 0.0
  %7135 = vmatprep.subr.mxu0 0.0
  %7136 = vmatpush1.msra.mxu0 0.0
  %7137 = vmatprep.subr.mxu0 0.0
  %7138 = vmatpush1.msra.mxu0 0.0
  %7139 = vmatprep.subr.mxu0 0.0
  %7140 = vmatpush1.msra.mxu0 0.0
  %7141 = vmatprep.subr.mxu0 0.0
  %7142 = vmatpush1.msra.mxu0 0.0
  %7143 = vmatprep.subr.mxu0 0.0
  %7144 = vmatpush1.msra.mxu0 0.0
  %7145 = vmatprep.subr.mxu0 0.0
  %7146 = vmatpush1.msra.mxu0 0.0
  %7147 = vmatprep.subr.mxu0 0.0
  %7148 = vmatpush1.msra.mxu0 0.0
  %7149 = vmatprep.subr.mxu0 0.0
  %7150 = vmatpush1.msra.mxu0 0.0
  %7151 = vmatprep.subr.mxu0 0.0
  %7152 = vmatpush1.msra.mxu0 0.0
  %7153 = vmatprep.mubr.f32.mxu0 0.0
  %7154 = vmatmul.mubr.f32.gmra.mrb[0].mxu0 %v7087
  %v7155 = vpop.f32.mrb[0].mxu0
  %v7156 = vadd.f32 0.0, %v7155
  %v7157 = vpop.f32.mrb[0].mxu0
  %7158 = vdwg.mxu0
  %7159 = vrot.lane.b32.xlu0 %v6931, 112
  %v7160 = vpop.permute.xlu0 %7159
  %v7161 = vsel %vm6830, %v7160, 0
  %7163 = vmatprep.subr.mxu0 0.0
  %7164 = vmatpush1.msra.mxu0 %v6932
  %7165 = vmatprep.subr.mxu0 0.0
  %7166 = vmatpush1.msra.mxu0 %v6933
  %7167 = vmatprep.subr.mxu0 0.0
  %7168 = vmatpush1.msra.mxu0 0.0
  %7169 = vmatprep.subr.mxu0 0.0
  %7170 = vmatpush1.msra.mxu0 0.0
  %7171 = vmatprep.subr.mxu0 0.0
  %7172 = vmatpush1.msra.mxu0 0.0
  %7173 = vmatprep.subr.mxu0 0.0
  %7174 = vmatpush1.msra.mxu0 0.0
  %7175 = vmatprep.subr.mxu0 0.0
  %7176 = vmatpush1.msra.mxu0 0.0
  %7177 = vmatprep.subr.mxu0 0.0
  %7178 = vmatpush1.msra.mxu0 0.0
  %7179 = vmatprep.subr.mxu0 0.0
  %7180 = vmatpush1.msra.mxu0 0.0
  %7181 = vmatprep.subr.mxu0 0.0
  %7182 = vmatpush1.msra.mxu0 0.0
  %7183 = vmatprep.subr.mxu0 0.0
  %7184 = vmatpush1.msra.mxu0 0.0
  %7185 = vmatprep.subr.mxu0 0.0
  %7186 = vmatpush1.msra.mxu0 0.0
  %7187 = vmatprep.subr.mxu0 0.0
  %7188 = vmatpush1.msra.mxu0 0.0
  %7189 = vmatprep.subr.mxu0 0.0
  %7190 = vmatpush1.msra.mxu0 0.0
  %7191 = vmatprep.subr.mxu0 0.0
  %7192 = vmatpush1.msra.mxu0 0.0
  %7193 = vmatprep.subr.mxu0 0.0
  %7194 = vmatpush1.msra.mxu0 0.0
  %7195 = vmatprep.subr.mxu0 0.0
  %7196 = vmatpush1.msra.mxu0 0.0
  %7197 = vmatprep.subr.mxu0 0.0
  %7198 = vmatpush1.msra.mxu0 0.0
  %7199 = vmatprep.subr.mxu0 0.0
  %7200 = vmatpush1.msra.mxu0 0.0
  %7201 = vmatprep.subr.mxu0 0.0
  %7202 = vmatpush1.msra.mxu0 0.0
  %7203 = vmatprep.subr.mxu0 0.0
  %7204 = vmatpush1.msra.mxu0 0.0
  %7205 = vmatprep.subr.mxu0 0.0
  %7206 = vmatpush1.msra.mxu0 0.0
  %7207 = vmatprep.subr.mxu0 0.0
  %7208 = vmatpush1.msra.mxu0 0.0
  %7209 = vmatprep.subr.mxu0 0.0
  %7210 = vmatpush1.msra.mxu0 0.0
  %7211 = vmatprep.subr.mxu0 0.0
  %7212 = vmatpush1.msra.mxu0 0.0
  %7213 = vmatprep.subr.mxu0 0.0
  %7214 = vmatpush1.msra.mxu0 0.0
  %7215 = vmatprep.subr.mxu0 0.0
  %7216 = vmatpush1.msra.mxu0 0.0
  %7217 = vmatprep.subr.mxu0 0.0
  %7218 = vmatpush1.msra.mxu0 0.0
  %7219 = vmatprep.subr.mxu0 0.0
  %7220 = vmatpush1.msra.mxu0 0.0
  %7221 = vmatprep.subr.mxu0 0.0
  %7222 = vmatpush1.msra.mxu0 0.0
  %7223 = vmatprep.subr.mxu0 0.0
  %7224 = vmatpush1.msra.mxu0 0.0
  %7225 = vmatprep.subr.mxu0 0.0
  %7226 = vmatpush1.msra.mxu0 0.0
  %7227 = vmatprep.mubr.f32.mxu0 0.0
  %7228 = vmatmul.mubr.f32.gmra.mrb[0].mxu0 %v7161
  %v7229 = vpop.f32.mrb[0].mxu0
  %v7230 = vadd.f32 %v7156, %v7229
  %v7231 = vpop.f32.mrb[0].mxu0
  %7232 = vdwg.mxu0
  %s7233 = scalar_lea.vmem [#allocation4], 2
  %v7234 = vld [vmem:[%s7233] ss:$2 sm:$0x1f]
  %s7235 = scalar_lea.vmem %s7, 32
  %v7236 = vld [vmem:[%s7235] sm:$0xff]
  %v7237 = vld [vmem:[%s7235 + $0x8] sm:$0xff]
  %v7239 = vsel %vm6830, %v7234, 0
  %7241 = vmatprep.subr.mxu0 0.0
  %7242 = vmatpush1.msra.mxu0 %v7236
  %7243 = vmatprep.subr.mxu0 0.0
  %7244 = vmatpush1.msra.mxu0 %v7237
  %7245 = vmatprep.subr.mxu0 0.0
  %7246 = vmatpush1.msra.mxu0 0.0
  %7247 = vmatprep.subr.mxu0 0.0
  %7248 = vmatpush1.msra.mxu0 0.0
  %7249 = vmatprep.subr.mxu0 0.0
  %7250 = vmatpush1.msra.mxu0 0.0
  %7251 = vmatprep.subr.mxu0 0.0
  %7252 = vmatpush1.msra.mxu0 0.0
  %7253 = vmatprep.subr.mxu0 0.0
  %7254 = vmatpush1.msra.mxu0 0.0
  %7255 = vmatprep.subr.mxu0 0.0
  %7256 = vmatpush1.msra.mxu0 0.0
  %7257 = vmatprep.subr.mxu0 0.0
  %7258 = vmatpush1.msra.mxu0 0.0
  %7259 = vmatprep.subr.mxu0 0.0
  %7260 = vmatpush1.msra.mxu0 0.0
  %7261 = vmatprep.subr.mxu0 0.0
  %7262 = vmatpush1.msra.mxu0 0.0
  %7263 = vmatprep.subr.mxu0 0.0
  %7264 = vmatpush1.msra.mxu0 0.0
  %7265 = vmatprep.subr.mxu0 0.0
  %7266 = vmatpush1.msra.mxu0 0.0
  %7267 = vmatprep.subr.mxu0 0.0
  %7268 = vmatpush1.msra.mxu0 0.0
  %7269 = vmatprep.subr.mxu0 0.0
  %7270 = vmatpush1.msra.mxu0 0.0
  %7271 = vmatprep.subr.mxu0 0.0
  %7272 = vmatpush1.msra.mxu0 0.0
  %7273 = vmatprep.subr.mxu0 0.0
  %7274 = vmatpush1.msra.mxu0 0.0
  %7275 = vmatprep.subr.mxu0 0.0
  %7276 = vmatpush1.msra.mxu0 0.0
  %7277 = vmatprep.subr.mxu0 0.0
  %7278 = vmatpush1.msra.mxu0 0.0
  %7279 = vmatprep.subr.mxu0 0.0
  %7280 = vmatpush1.msra.mxu0 0.0
  %7281 = vmatprep.subr.mxu0 0.0
  %7282 = vmatpush1.msra.mxu0 0.0
  %7283 = vmatprep.subr.mxu0 0.0
  %7284 = vmatpush1.msra.mxu0 0.0
  %7285 = vmatprep.subr.mxu0 0.0
  %7286 = vmatpush1.msra.mxu0 0.0
  %7287 = vmatprep.subr.mxu0 0.0
  %7288 = vmatpush1.msra.mxu0 0.0
  %7289 = vmatprep.subr.mxu0 0.0
  %7290 = vmatpush1.msra.mxu0 0.0
  %7291 = vmatprep.subr.mxu0 0.0
  %7292 = vmatpush1.msra.mxu0 0.0
  %7293 = vmatprep.subr.mxu0 0.0
  %7294 = vmatpush1.msra.mxu0 0.0
  %7295 = vmatprep.subr.mxu0 0.0
  %7296 = vmatpush1.msra.mxu0 0.0
  %7297 = vmatprep.subr.mxu0 0.0
  %7298 = vmatpush1.msra.mxu0 0.0
  %7299 = vmatprep.subr.mxu0 0.0
  %7300 = vmatpush1.msra.mxu0 0.0
  %7301 = vmatprep.subr.mxu0 0.0
  %7302 = vmatpush1.msra.mxu0 0.0
  %7303 = vmatprep.subr.mxu0 0.0
  %7304 = vmatpush1.msra.mxu0 0.0
  %7305 = vmatprep.mubr.f32.mxu0 0.0
  %7306 = vmatmul.mubr.f32.gmra.mrb[0].mxu0 %v7239
  %v7307 = vpop.f32.mrb[0].mxu0
  %v7308 = vadd.f32 0.0, %v7307
  %v7309 = vpop.f32.mrb[0].mxu0
  %7310 = vdwg.mxu0
  %v7311 = vadd.f32 %v7082, %v7308
  %7312 = vrot.lane.b32.xlu0 %v7234, 112
  %v7313 = vpop.permute.xlu0 %7312
  %v7314 = vsel %vm6830, %v7313, 0
  %7316 = vmatprep.subr.mxu0 0.0
  %7317 = vmatpush1.msra.mxu0 %v7236
  %7318 = vmatprep.subr.mxu0 0.0
  %7319 = vmatpush1.msra.mxu0 %v7237
  %7320 = vmatprep.subr.mxu0 0.0
  %7321 = vmatpush1.msra.mxu0 0.0
  %7322 = vmatprep.subr.mxu0 0.0
  %7323 = vmatpush1.msra.mxu0 0.0
  %7324 = vmatprep.subr.mxu0 0.0
  %7325 = vmatpush1.msra.mxu0 0.0
  %7326 = vmatprep.subr.mxu0 0.0
  %7327 = vmatpush1.msra.mxu0 0.0
  %7328 = vmatprep.subr.mxu0 0.0
  %7329 = vmatpush1.msra.mxu0 0.0
  %7330 = vmatprep.subr.mxu0 0.0
  %7331 = vmatpush1.msra.mxu0 0.0
  %7332 = vmatprep.subr.mxu0 0.0
  %7333 = vmatpush1.msra.mxu0 0.0
  %7334 = vmatprep.subr.mxu0 0.0
  %7335 = vmatpush1.msra.mxu0 0.0
  %7336 = vmatprep.subr.mxu0 0.0
  %7337 = vmatpush1.msra.mxu0 0.0
  %7338 = vmatprep.subr.mxu0 0.0
  %7339 = vmatpush1.msra.mxu0 0.0
  %7340 = vmatprep.subr.mxu0 0.0
  %7341 = vmatpush1.msra.mxu0 0.0
  %7342 = vmatprep.subr.mxu0 0.0
  %7343 = vmatpush1.msra.mxu0 0.0
  %7344 = vmatprep.subr.mxu0 0.0
  %7345 = vmatpush1.msra.mxu0 0.0
  %7346 = vmatprep.subr.mxu0 0.0
  %7347 = vmatpush1.msra.mxu0 0.0
  %7348 = vmatprep.subr.mxu0 0.0
  %7349 = vmatpush1.msra.mxu0 0.0
  %7350 = vmatprep.subr.mxu0 0.0
  %7351 = vmatpush1.msra.mxu0 0.0
  %7352 = vmatprep.subr.mxu0 0.0
  %7353 = vmatpush1.msra.mxu0 0.0
  %7354 = vmatprep.subr.mxu0 0.0
  %7355 = vmatpush1.msra.mxu0 0.0
  %7356 = vmatprep.subr.mxu0 0.0
  %7357 = vmatpush1.msra.mxu0 0.0
  %7358 = vmatprep.subr.mxu0 0.0
  %7359 = vmatpush1.msra.mxu0 0.0
  %7360 = vmatprep.subr.mxu0 0.0
  %7361 = vmatpush1.msra.mxu0 0.0
  %7362 = vmatprep.subr.mxu0 0.0
  %7363 = vmatpush1.msra.mxu0 0.0
  %7364 = vmatprep.subr.mxu0 0.0
  %7365 = vmatpush1.msra.mxu0 0.0
  %7366 = vmatprep.subr.mxu0 0.0
  %7367 = vmatpush1.msra.mxu0 0.0
  %7368 = vmatprep.subr.mxu0 0.0
  %7369 = vmatpush1.msra.mxu0 0.0
  %7370 = vmatprep.subr.mxu0 0.0
  %7371 = vmatpush1.msra.mxu0 0.0
  %7372 = vmatprep.subr.mxu0 0.0
  %7373 = vmatpush1.msra.mxu0 0.0
  %7374 = vmatprep.subr.mxu0 0.0
  %7375 = vmatpush1.msra.mxu0 0.0
  %7376 = vmatprep.subr.mxu0 0.0
  %7377 = vmatpush1.msra.mxu0 0.0
  %7378 = vmatprep.subr.mxu0 0.0
  %7379 = vmatpush1.msra.mxu0 0.0
  %7380 = vmatprep.mubr.f32.mxu0 0.0
  %7381 = vmatmul.mubr.f32.gmra.mrb[0].mxu0 %v7314
  %v7382 = vpop.f32.mrb[0].mxu0
  %v7383 = vadd.f32 0.0, %v7382
  %v7384 = vpop.f32.mrb[0].mxu0
  %7385 = vdwg.mxu0
  %v7386 = vadd.f32 %v7230, %v7383
  %s7387 = scalar_lea.vmem [#allocation4], 3
  %v7388 = vld [vmem:[%s7387] ss:$2 sm:$0x1f]
  %s7389 = scalar_lea.vmem %s7, 48
  %v7390 = vld [vmem:[%s7389] sm:$0xff]
  %v7391 = vld [vmem:[%s7389 + $0x8] sm:$0xff]
  %v7393 = vsel %vm6830, %v7388, 0
  %7395 = vmatprep.subr.mxu0 0.0
  %7396 = vmatpush1.msra.mxu0 %v7390
  %7397 = vmatprep.subr.mxu0 0.0
  %7398 = vmatpush1.msra.mxu0 %v7391
  %7399 = vmatprep.subr.mxu0 0.0
  %7400 = vmatpush1.msra.mxu0 0.0
  %7401 = vmatprep.subr.mxu0 0.0
  %7402 = vmatpush1.msra.mxu0 0.0
  %7403 = vmatprep.subr.mxu0 0.0
  %7404 = vmatpush1.msra.mxu0 0.0
  %7405 = vmatprep.subr.mxu0 0.0
  %7406 = vmatpush1.msra.mxu0 0.0
  %7407 = vmatprep.subr.mxu0 0.0
  %7408 = vmatpush1.msra.mxu0 0.0
  %7409 = vmatprep.subr.mxu0 0.0
  %7410 = vmatpush1.msra.mxu0 0.0
  %7411 = vmatprep.subr.mxu0 0.0
  %7412 = vmatpush1.msra.mxu0 0.0
  %7413 = vmatprep.subr.mxu0 0.0
  %7414 = vmatpush1.msra.mxu0 0.0
  %7415 = vmatprep.subr.mxu0 0.0
  %7416 = vmatpush1.msra.mxu0 0.0
  %7417 = vmatprep.subr.mxu0 0.0
  %7418 = vmatpush1.msra.mxu0 0.0
  %7419 = vmatprep.subr.mxu0 0.0
  %7420 = vmatpush1.msra.mxu0 0.0
  %7421 = vmatprep.subr.mxu0 0.0
  %7422 = vmatpush1.msra.mxu0 0.0
  %7423 = vmatprep.subr.mxu0 0.0
  %7424 = vmatpush1.msra.mxu0 0.0
  %7425 = vmatprep.subr.mxu0 0.0
  %7426 = vmatpush1.msra.mxu0 0.0
  %7427 = vmatprep.subr.mxu0 0.0
  %7428 = vmatpush1.msra.mxu0 0.0
  %7429 = vmatprep.subr.mxu0 0.0
  %7430 = vmatpush1.msra.mxu0 0.0
  %7431 = vmatprep.subr.mxu0 0.0
  %7432 = vmatpush1.msra.mxu0 0.0
  %7433 = vmatprep.subr.mxu0 0.0
  %7434 = vmatpush1.msra.mxu0 0.0
  %7435 = vmatprep.subr.mxu0 0.0
  %7436 = vmatpush1.msra.mxu0 0.0
  %7437 = vmatprep.subr.mxu0 0.0
  %7438 = vmatpush1.msra.mxu0 0.0
  %7439 = vmatprep.subr.mxu0 0.0
  %7440 = vmatpush1.msra.mxu0 0.0
  %7441 = vmatprep.subr.mxu0 0.0
  %7442 = vmatpush1.msra.mxu0 0.0
  %7443 = vmatprep.subr.mxu0 0.0
  %7444 = vmatpush1.msra.mxu0 0.0
  %7445 = vmatprep.subr.mxu0 0.0
  %7446 = vmatpush1.msra.mxu0 0.0
  %7447 = vmatprep.subr.mxu0 0.0
  %7448 = vmatpush1.msra.mxu0 0.0
  %7449 = vmatprep.subr.mxu0 0.0
  %7450 = vmatpush1.msra.mxu0 0.0
  %7451 = vmatprep.subr.mxu0 0.0
  %7452 = vmatpush1.msra.mxu0 0.0
  %7453 = vmatprep.subr.mxu0 0.0
  %7454 = vmatpush1.msra.mxu0 0.0
  %7455 = vmatprep.subr.mxu0 0.0
  %7456 = vmatpush1.msra.mxu0 0.0
  %7457 = vmatprep.subr.mxu0 0.0
  %7458 = vmatpush1.msra.mxu0 0.0
  %7459 = vmatprep.mubr.f32.mxu0 0.0
  %7460 = vmatmul.mubr.f32.gmra.mrb[0].mxu0 %v7393
  %v7461 = vpop.f32.mrb[0].mxu0
  %v7462 = vadd.f32 0.0, %v7461
  %v7463 = vpop.f32.mrb[0].mxu0
  %7464 = vdwg.mxu0
  %v7465 = vadd.f32 %v7311, %v7462
  %7466 = vrot.lane.b32.xlu0 %v7388, 112
  %v7467 = vpop.permute.xlu0 %7466
  %v7468 = vsel %vm6830, %v7467, 0
  %7470 = vmatprep.subr.mxu0 0.0
  %7471 = vmatpush1.msra.mxu0 %v7390
  %7472 = vmatprep.subr.mxu0 0.0
  %7473 = vmatpush1.msra.mxu0 %v7391
  %7474 = vmatprep.subr.mxu0 0.0
  %7475 = vmatpush1.msra.mxu0 0.0
  %7476 = vmatprep.subr.mxu0 0.0
  %7477 = vmatpush1.msra.mxu0 0.0
  %7478 = vmatprep.subr.mxu0 0.0
  %7479 = vmatpush1.msra.mxu0 0.0
  %7480 = vmatprep.subr.mxu0 0.0
  %7481 = vmatpush1.msra.mxu0 0.0
  %7482 = vmatprep.subr.mxu0 0.0
  %7483 = vmatpush1.msra.mxu0 0.0
  %7484 = vmatprep.subr.mxu0 0.0
  %7485 = vmatpush1.msra.mxu0 0.0
  %7486 = vmatprep.subr.mxu0 0.0
  %7487 = vmatpush1.msra.mxu0 0.0
  %7488 = vmatprep.subr.mxu0 0.0
  %7489 = vmatpush1.msra.mxu0 0.0
  %7490 = vmatprep.subr.mxu0 0.0
  %7491 = vmatpush1.msra.mxu0 0.0
  %7492 = vmatprep.subr.mxu0 0.0
  %7493 = vmatpush1.msra.mxu0 0.0
  %7494 = vmatprep.subr.mxu0 0.0
  %7495 = vmatpush1.msra.mxu0 0.0
  %7496 = vmatprep.subr.mxu0 0.0
  %7497 = vmatpush1.msra.mxu0 0.0
  %7498 = vmatprep.subr.mxu0 0.0
  %7499 = vmatpush1.msra.mxu0 0.0
  %7500 = vmatprep.subr.mxu0 0.0
  %7501 = vmatpush1.msra.mxu0 0.0
  %7502 = vmatprep.subr.mxu0 0.0
  %7503 = vmatpush1.msra.mxu0 0.0
  %7504 = vmatprep.subr.mxu0 0.0
  %7505 = vmatpush1.msra.mxu0 0.0
  %7506 = vmatprep.subr.mxu0 0.0
  %7507 = vmatpush1.msra.mxu0 0.0
  %7508 = vmatprep.subr.mxu0 0.0
  %7509 = vmatpush1.msra.mxu0 0.0
  %7510 = vmatprep.subr.mxu0 0.0
  %7511 = vmatpush1.msra.mxu0 0.0
  %7512 = vmatprep.subr.mxu0 0.0
  %7513 = vmatpush1.msra.mxu0 0.0
  %7514 = vmatprep.subr.mxu0 0.0
  %7515 = vmatpush1.msra.mxu0 0.0
  %7516 = vmatprep.subr.mxu0 0.0
  %7517 = vmatpush1.msra.mxu0 0.0
  %7518 = vmatprep.subr.mxu0 0.0
  %7519 = vmatpush1.msra.mxu0 0.0
  %7520 = vmatprep.subr.mxu0 0.0
  %7521 = vmatpush1.msra.mxu0 0.0
  %7522 = vmatprep.subr.mxu0 0.0
  %7523 = vmatpush1.msra.mxu0 0.0
  %7524 = vmatprep.subr.mxu0 0.0
  %7525 = vmatpush1.msra.mxu0 0.0
  %7526 = vmatprep.subr.mxu0 0.0
  %7527 = vmatpush1.msra.mxu0 0.0
  %7528 = vmatprep.subr.mxu0 0.0
  %7529 = vmatpush1.msra.mxu0 0.0
  %7530 = vmatprep.subr.mxu0 0.0
  %7531 = vmatpush1.msra.mxu0 0.0
  %7532 = vmatprep.subr.mxu0 0.0
  %7533 = vmatpush1.msra.mxu0 0.0
  %7534 = vmatprep.mubr.f32.mxu0 0.0
  %7535 = vmatmul.mubr.f32.gmra.mrb[0].mxu0 %v7468
  %v7536 = vpop.f32.mrb[0].mxu0
  %v7537 = vadd.f32 0.0, %v7536
  %v7538 = vpop.f32.mrb[0].mxu0
  %7539 = vdwg.mxu0
  %v7540 = vadd.f32 %v7386, %v7537
  %s7541 = scalar_lea.vmem [#allocation4], 4
  %v7542 = vld [vmem:[%s7541] ss:$2 sm:$0x1f]
  %s7543 = scalar_lea.vmem %s7, 64
  %v7544 = vld [vmem:[%s7543] sm:$0xff]
  %v7545 = vld [vmem:[%s7543 + $0x8] sm:$0xff]
  %v7547 = vsel %vm6830, %v7542, 0
  %7549 = vmatprep.subr.mxu0 0.0
  %7550 = vmatpush1.msra.mxu0 %v7544
  %7551 = vmatprep.subr.mxu0 0.0
  %7552 = vmatpush1.msra.mxu0 %v7545
  %7553 = vmatprep.subr.mxu0 0.0
  %7554 = vmatpush1.msra.mxu0 0.0
  %7555 = vmatprep.subr.mxu0 0.0
  %7556 = vmatpush1.msra.mxu0 0.0
  %7557 = vmatprep.subr.mxu0 0.0
  %7558 = vmatpush1.msra.mxu0 0.0
  %7559 = vmatprep.subr.mxu0 0.0
  %7560 = vmatpush1.msra.mxu0 0.0
  %7561 = vmatprep.subr.mxu0 0.0
  %7562 = vmatpush1.msra.mxu0 0.0
  %7563 = vmatprep.subr.mxu0 0.0
  %7564 = vmatpush1.msra.mxu0 0.0
  %7565 = vmatprep.subr.mxu0 0.0
  %7566 = vmatpush1.msra.mxu0 0.0
  %7567 = vmatprep.subr.mxu0 0.0
  %7568 = vmatpush1.msra.mxu0 0.0
  %7569 = vmatprep.subr.mxu0 0.0
  %7570 = vmatpush1.msra.mxu0 0.0
  %7571 = vmatprep.subr.mxu0 0.0
  %7572 = vmatpush1.msra.mxu0 0.0
  %7573 = vmatprep.subr.mxu0 0.0
  %7574 = vmatpush1.msra.mxu0 0.0
  %7575 = vmatprep.subr.mxu0 0.0
  %7576 = vmatpush1.msra.mxu0 0.0
  %7577 = vmatprep.subr.mxu0 0.0
  %7578 = vmatpush1.msra.mxu0 0.0
  %7579 = vmatprep.subr.mxu0 0.0
  %7580 = vmatpush1.msra.mxu0 0.0
  %7581 = vmatprep.subr.mxu0 0.0
  %7582 = vmatpush1.msra.mxu0 0.0
  %7583 = vmatprep.subr.mxu0 0.0
  %7584 = vmatpush1.msra.mxu0 0.0
  %7585 = vmatprep.subr.mxu0 0.0
  %7586 = vmatpush1.msra.mxu0 0.0
  %7587 = vmatprep.subr.mxu0 0.0
  %7588 = vmatpush1.msra.mxu0 0.0
  %7589 = vmatprep.subr.mxu0 0.0
  %7590 = vmatpush1.msra.mxu0 0.0
  %7591 = vmatprep.subr.mxu0 0.0
  %7592 = vmatpush1.msra.mxu0 0.0
  %7593 = vmatprep.subr.mxu0 0.0
  %7594 = vmatpush1.msra.mxu0 0.0
  %7595 = vmatprep.subr.mxu0 0.0
  %7596 = vmatpush1.msra.mxu0 0.0
  %7597 = vmatprep.subr.mxu0 0.0
  %7598 = vmatpush1.msra.mxu0 0.0
  %7599 = vmatprep.subr.mxu0 0.0
  %7600 = vmatpush1.msra.mxu0 0.0
  %7601 = vmatprep.subr.mxu0 0.0
  %7602 = vmatpush1.msra.mxu0 0.0
  %7603 = vmatprep.subr.mxu0 0.0
  %7604 = vmatpush1.msra.mxu0 0.0
  %7605 = vmatprep.subr.mxu0 0.0
  %7606 = vmatpush1.msra.mxu0 0.0
  %7607 = vmatprep.subr.mxu0 0.0
  %7608 = vmatpush1.msra.mxu0 0.0
  %7609 = vmatprep.subr.mxu0 0.0
  %7610 = vmatpush1.msra.mxu0 0.0
  %7611 = vmatprep.subr.mxu0 0.0
  %7612 = vmatpush1.msra.mxu0 0.0
  %7613 = vmatprep.mubr.f32.mxu0 0.0
  %7614 = vmatmul.mubr.f32.gmra.mrb[0].mxu0 %v7547
  %v7615 = vpop.f32.mrb[0].mxu0
  %v7616 = vadd.f32 0.0, %v7615
  %v7617 = vpop.f32.mrb[0].mxu0
  %7618 = vdwg.mxu0
  %v7619 = vadd.f32 %v7465, %v7616
  %7620 = vrot.lane.b32.xlu0 %v7542, 112
  %v7621 = vpop.permute.xlu0 %7620
  %v7622 = vsel %vm6830, %v7621, 0
  %7624 = vmatprep.subr.mxu0 0.0
  %7625 = vmatpush1.msra.mxu0 %v7544
  %7626 = vmatprep.subr.mxu0 0.0
  %7627 = vmatpush1.msra.mxu0 %v7545
  %7628 = vmatprep.subr.mxu0 0.0
  %7629 = vmatpush1.msra.mxu0 0.0
  %7630 = vmatprep.subr.mxu0 0.0
  %7631 = vmatpush1.msra.mxu0 0.0
  %7632 = vmatprep.subr.mxu0 0.0
  %7633 = vmatpush1.msra.mxu0 0.0
  %7634 = vmatprep.subr.mxu0 0.0
  %7635 = vmatpush1.msra.mxu0 0.0
  %7636 = vmatprep.subr.mxu0 0.0
  %7637 = vmatpush1.msra.mxu0 0.0
  %7638 = vmatprep.subr.mxu0 0.0
  %7639 = vmatpush1.msra.mxu0 0.0
  %7640 = vmatprep.subr.mxu0 0.0
  %7641 = vmatpush1.msra.mxu0 0.0
  %7642 = vmatprep.subr.mxu0 0.0
  %7643 = vmatpush1.msra.mxu0 0.0
  %7644 = vmatprep.subr.mxu0 0.0
  %7645 = vmatpush1.msra.mxu0 0.0
  %7646 = vmatprep.subr.mxu0 0.0
  %7647 = vmatpush1.msra.mxu0 0.0
  %7648 = vmatprep.subr.mxu0 0.0
  %7649 = vmatpush1.msra.mxu0 0.0
  %7650 = vmatprep.subr.mxu0 0.0
  %7651 = vmatpush1.msra.mxu0 0.0
  %7652 = vmatprep.subr.mxu0 0.0
  %7653 = vmatpush1.msra.mxu0 0.0
  %7654 = vmatprep.subr.mxu0 0.0
  %7655 = vmatpush1.msra.mxu0 0.0
  %7656 = vmatprep.subr.mxu0 0.0
  %7657 = vmatpush1.msra.mxu0 0.0
  %7658 = vmatprep.subr.mxu0 0.0
  %7659 = vmatpush1.msra.mxu0 0.0
  %7660 = vmatprep.subr.mxu0 0.0
  %7661 = vmatpush1.msra.mxu0 0.0
  %7662 = vmatprep.subr.mxu0 0.0
  %7663 = vmatpush1.msra.mxu0 0.0
  %7664 = vmatprep.subr.mxu0 0.0
  %7665 = vmatpush1.msra.mxu0 0.0
  %7666 = vmatprep.subr.mxu0 0.0
  %7667 = vmatpush1.msra.mxu0 0.0
  %7668 = vmatprep.subr.mxu0 0.0
  %7669 = vmatpush1.msra.mxu0 0.0
  %7670 = vmatprep.subr.mxu0 0.0
  %7671 = vmatpush1.msra.mxu0 0.0
  %7672 = vmatprep.subr.mxu0 0.0
  %7673 = vmatpush1.msra.mxu0 0.0
  %7674 = vmatprep.subr.mxu0 0.0
  %7675 = vmatpush1.msra.mxu0 0.0
  %7676 = vmatprep.subr.mxu0 0.0
  %7677 = vmatpush1.msra.mxu0 0.0
  %7678 = vmatprep.subr.mxu0 0.0
  %7679 = vmatpush1.msra.mxu0 0.0
  %7680 = vmatprep.subr.mxu0 0.0
  %7681 = vmatpush1.msra.mxu0 0.0
  %7682 = vmatprep.subr.mxu0 0.0
  %7683 = vmatpush1.msra.mxu0 0.0
  %7684 = vmatprep.subr.mxu0 0.0
  %7685 = vmatpush1.msra.mxu0 0.0
  %7686 = vmatprep.subr.mxu0 0.0
  %7687 = vmatpush1.msra.mxu0 0.0
  %7688 = vmatprep.mubr.f32.mxu0 0.0
  %7689 = vmatmul.mubr.f32.gmra.mrb[0].mxu0 %v7622
  %v7690 = vpop.f32.mrb[0].mxu0
  %v7691 = vadd.f32 0.0, %v7690
  %v7692 = vpop.f32.mrb[0].mxu0
  %7693 = vdwg.mxu0
  %v7694 = vadd.f32 %v7540, %v7691
  %v7695 = vld [vmem:[%s8] sm:$0x1]
  %v7696 = vld [vmem:[%s8 + $0x1] sm:$0x1]
  %v7697 = vld [vmem:[%s8 + $0x2] sm:$0x1]
  %v7698 = vlaneseq
  %v7699 = vshrl.u32 %v7698, 7
  %v7700 = vsub.s32 0, %v7699
  %v7701 = vrot.slane %v7695, %v7700
  %v7702 = vadd.f32 %v7619, %v7701
  %v7703 = vadd.f32 %v7694, %v7701
  %vm7704 = vcmask 258048
  %v7705 = vsel %vm7704, %v7702, 0.0
  %v7706 = vrot.slane %v7705, 4
  %v7707 = vadd.f32 %v7705, %v7706
  %v7708 = vrot.slane %v7707, 2
  %v7709 = vadd.f32 %v7707, %v7708
  %v7710 = vrot.slane %v7709, 1
  %v7711 = vadd.f32 %v7709, %v7710
  %v7712 = vadd.f32 %v7711, 0.0
  %v7713 = vsel %vm7704, %v7703, 0.0
  %v7714 = vrot.slane %v7713, 4
  %v7715 = vadd.f32 %v7713, %v7714
  %v7716 = vrot.slane %v7715, 2
  %v7717 = vadd.f32 %v7715, %v7716
  %v7718 = vrot.slane %v7717, 1
  %v7719 = vadd.f32 %v7717, %v7718
  %v7720 = vadd.f32 %v7712, %v7719
  %v7721 = vrcp.pop 10.0
  %v7722 = vmul.f32 %v7720, %v7721
  %v7723 = vsub.f32 %v7702, %v7722
  %v7724 = vmul.f32 %v7723, %v7723
  %v7725 = vsel %vm7704, %v7724, 0.0
  %v7726 = vrot.slane %v7725, 4
  %v7727 = vadd.f32 %v7725, %v7726
  %v7728 = vrot.slane %v7727, 2
  %v7729 = vadd.f32 %v7727, %v7728
  %v7730 = vrot.slane %v7729, 1
  %v7731 = vadd.f32 %v7729, %v7730
  %v7732 = vadd.f32 %v7731, 0.0
  %v7733 = vsub.f32 %v7703, %v7722
  %v7734 = vmul.f32 %v7733, %v7733
  %v7735 = vsel %vm7704, %v7734, 0.0
  %v7736 = vrot.slane %v7735, 4
  %v7737 = vadd.f32 %v7735, %v7736
  %v7738 = vrot.slane %v7737, 2
  %v7739 = vadd.f32 %v7737, %v7738
  %v7740 = vrot.slane %v7739, 1
  %v7741 = vadd.f32 %v7739, %v7740
  %v7742 = vadd.f32 %v7732, %v7741
  %v7743 = vmul.f32 %v7742, %v7721
  %v7744 = vadd.f32 %v7743, 1e-05
  %v7745 = vrsqrt.pop %v7744
  %v7746 = vmul.f32 %v7723, %v7745
  %v7747 = vlaneseq
  %v7748 = vshrl.u32 %v7747, 7
  %v7749 = vsub.s32 0, %v7748
  %v7750 = vrot.slane %v7696, %v7749
  %v7751 = vmul.f32 %v7746, %v7750
  %v7752 = vlaneseq
  %v7753 = vshrl.u32 %v7752, 7
  %v7754 = vsub.s32 0, %v7753
  %v7755 = vrot.slane %v7697, %v7754
  %v7756 = vadd.f32 %v7751, %v7755
  %vm7757 = vcmp.ge.f32.partialorder %v7756, 0.0
  %v7758 = vmul.f32 %v7756, 0.2
  %v7759 = vsel %vm7757, %v7756, %v7758
  %v7760 = vmul.f32 %v7733, %v7745
  %v7761 = vmul.f32 %v7760, %v7750
  %v7762 = vadd.f32 %v7761, %v7755
  %vm7763 = vcmp.ge.f32.partialorder %v7762, 0.0
  %v7764 = vmul.f32 %v7762, 0.2
  %v7765 = vsel %vm7763, %v7762, %v7764
  %v7766 = vld [vmem:[%s9] sm:$0xff]
  %v7767 = vld [vmem:[%s9 + $0x8] sm:$0xff]
  %v7768 = vld [vmem:[%s9 + $0x10] sm:$0xff]
  %v7769 = vld [vmem:[%s9 + $0x18] sm:$0xff]
  %vm7770 = vcmask 261120
  %v7772 = vsel %vm7770, %v7759, 0
  %7774 = vmatprep.subr.mxu0 0.0
  %7775 = vmatpush1.msra.mxu0 %v7766
  %7776 = vmatprep.subr.mxu0 0.0
  %7777 = vmatpush1.msra.mxu0 %v7767
  %7778 = vmatprep.subr.mxu0 0.0
  %7779 = vmatpush1.msra.mxu0 %v7768
  %7780 = vmatprep.subr.mxu0 0.0
  %7781 = vmatpush1.msra.mxu0 %v7769
  %7782 = vmatprep.subr.mxu0 0.0
  %7783 = vmatpush1.msra.mxu0 0.0
  %7784 = vmatprep.subr.mxu0 0.0
  %7785 = vmatpush1.msra.mxu0 0.0
  %7786 = vmatprep.subr.mxu0 0.0
  %7787 = vmatpush1.msra.mxu0 0.0
  %7788 = vmatprep.subr.mxu0 0.0
  %7789 = vmatpush1.msra.mxu0 0.0
  %7790 = vmatprep.subr.mxu0 0.0
  %7791 = vmatpush1.msra.mxu0 0.0
  %7792 = vmatprep.subr.mxu0 0.0
  %7793 = vmatpush1.msra.mxu0 0.0
  %7794 = vmatprep.subr.mxu0 0.0
  %7795 = vmatpush1.msra.mxu0 0.0
  %7796 = vmatprep.subr.mxu0 0.0
  %7797 = vmatpush1.msra.mxu0 0.0
  %7798 = vmatprep.subr.mxu0 0.0
  %7799 = vmatpush1.msra.mxu0 0.0
  %7800 = vmatprep.subr.mxu0 0.0
  %7801 = vmatpush1.msra.mxu0 0.0
  %7802 = vmatprep.subr.mxu0 0.0
  %7803 = vmatpush1.msra.mxu0 0.0
  %7804 = vmatprep.subr.mxu0 0.0
  %7805 = vmatpush1.msra.mxu0 0.0
  %7806 = vmatprep.subr.mxu0 0.0
  %7807 = vmatpush1.msra.mxu0 0.0
  %7808 = vmatprep.subr.mxu0 0.0
  %7809 = vmatpush1.msra.mxu0 0.0
  %7810 = vmatprep.subr.mxu0 0.0
  %7811 = vmatpush1.msra.mxu0 0.0
  %7812 = vmatprep.subr.mxu0 0.0
  %7813 = vmatpush1.msra.mxu0 0.0
  %7814 = vmatprep.subr.mxu0 0.0
  %7815 = vmatpush1.msra.mxu0 0.0
  %7816 = vmatprep.subr.mxu0 0.0
  %7817 = vmatpush1.msra.mxu0 0.0
  %7818 = vmatprep.subr.mxu0 0.0
  %7819 = vmatpush1.msra.mxu0 0.0
  %7820 = vmatprep.subr.mxu0 0.0
  %7821 = vmatpush1.msra.mxu0 0.0
  %7822 = vmatprep.subr.mxu0 0.0
  %7823 = vmatpush1.msra.mxu0 0.0
  %7824 = vmatprep.subr.mxu0 0.0
  %7825 = vmatpush1.msra.mxu0 0.0
  %7826 = vmatprep.subr.mxu0 0.0
  %7827 = vmatpush1.msra.mxu0 0.0
  %7828 = vmatprep.subr.mxu0 0.0
  %7829 = vmatpush1.msra.mxu0 0.0
  %7830 = vmatprep.subr.mxu0 0.0
  %7831 = vmatpush1.msra.mxu0 0.0
  %7832 = vmatprep.subr.mxu0 0.0
  %7833 = vmatpush1.msra.mxu0 0.0
  %7834 = vmatprep.subr.mxu0 0.0
  %7835 = vmatpush1.msra.mxu0 0.0
  %7836 = vmatprep.subr.mxu0 0.0
  %7837 = vmatpush1.msra.mxu0 0.0
  %7838 = vmatprep.mubr.f32.mxu0 0.0
  %7839 = vmatmul.mubr.f32.gmra.mrb[0].mxu0 %v7772
  %v7840 = vpop.f32.mrb[0].mxu0
  %v7841 = vadd.f32 0.0, %v7840
  %v7842 = vpop.f32.mrb[0].mxu0
  %7843 = vdwg.mxu0
  %v7845 = vsel %vm7770, %v7765, 0
  %7847 = vmatprep.subr.mxu0 0.0
  %7848 = vmatpush1.msra.mxu0 %v7766
  %7849 = vmatprep.subr.mxu0 0.0
  %7850 = vmatpush1.msra.mxu0 %v7767
  %7851 = vmatprep.subr.mxu0 0.0
  %7852 = vmatpush1.msra.mxu0 %v7768
  %7853 = vmatprep.subr.mxu0 0.0
  %7854 = vmatpush1.msra.mxu0 %v7769
  %7855 = vmatprep.subr.mxu0 0.0
  %7856 = vmatpush1.msra.mxu0 0.0
  %7857 = vmatprep.subr.mxu0 0.0
  %7858 = vmatpush1.msra.mxu0 0.0
  %7859 = vmatprep.subr.mxu0 0.0
  %7860 = vmatpush1.msra.mxu0 0.0
  %7861 = vmatprep.subr.mxu0 0.0
  %7862 = vmatpush1.msra.mxu0 0.0
  %7863 = vmatprep.subr.mxu0 0.0
  %7864 = vmatpush1.msra.mxu0 0.0
  %7865 = vmatprep.subr.mxu0 0.0
  %7866 = vmatpush1.msra.mxu0 0.0
  %7867 = vmatprep.subr.mxu0 0.0
  %7868 = vmatpush1.msra.mxu0 0.0
  %7869 = vmatprep.subr.mxu0 0.0
  %7870 = vmatpush1.msra.mxu0 0.0
  %7871 = vmatprep.subr.mxu0 0.0
  %7872 = vmatpush1.msra.mxu0 0.0
  %7873 = vmatprep.subr.mxu0 0.0
  %7874 = vmatpush1.msra.mxu0 0.0
  %7875 = vmatprep.subr.mxu0 0.0
  %7876 = vmatpush1.msra.mxu0 0.0
  %7877 = vmatprep.subr.mxu0 0.0
  %7878 = vmatpush1.msra.mxu0 0.0
  %7879 = vmatprep.subr.mxu0 0.0
  %7880 = vmatpush1.msra.mxu0 0.0
  %7881 = vmatprep.subr.mxu0 0.0
  %7882 = vmatpush1.msra.mxu0 0.0
  %7883 = vmatprep.subr.mxu0 0.0
  %7884 = vmatpush1.msra.mxu0 0.0
  %7885 = vmatprep.subr.mxu0 0.0
  %7886 = vmatpush1.msra.mxu0 0.0
  %7887 = vmatprep.subr.mxu0 0.0
  %7888 = vmatpush1.msra.mxu0 0.0
  %7889 = vmatprep.subr.mxu0 0.0
  %7890 = vmatpush1.msra.mxu0 0.0
  %7891 = vmatprep.subr.mxu0 0.0
  %7892 = vmatpush1.msra.mxu0 0.0
  %7893 = vmatprep.subr.mxu0 0.0
  %7894 = vmatpush1.msra.mxu0 0.0
  %7895 = vmatprep.subr.mxu0 0.0
  %7896 = vmatpush1.msra.mxu0 0.0
  %7897 = vmatprep.subr.mxu0 0.0
  %7898 = vmatpush1.msra.mxu0 0.0
  %7899 = vmatprep.subr.mxu0 0.0
  %7900 = vmatpush1.msra.mxu0 0.0
  %7901 = vmatprep.subr.mxu0 0.0
  %7902 = vmatpush1.msra.mxu0 0.0
  %7903 = vmatprep.subr.mxu0 0.0
  %7904 = vmatpush1.msra.mxu0 0.0
  %7905 = vmatprep.subr.mxu0 0.0
  %7906 = vmatpush1.msra.mxu0 0.0
  %7907 = vmatprep.subr.mxu0 0.0
  %7908 = vmatpush1.msra.mxu0 0.0
  %7909 = vmatprep.subr.mxu0 0.0
  %7910 = vmatpush1.msra.mxu0 0.0
  %7911 = vmatprep.mubr.f32.mxu0 0.0
  %7912 = vmatmul.mubr.f32.gmra.mrb[0].mxu0 %v7845
  %v7913 = vpop.f32.mrb[0].mxu0
  %v7914 = vadd.f32 0.0, %v7913
  %v7915 = vpop.f32.mrb[0].mxu0
  %7916 = vdwg.mxu0
  %v7917 = vld [vmem:[%s10] sm:$0xff]
  %v7918 = vld [vmem:[%s10 + $0x8] sm:$0xff]
  %v7919 = vld [vmem:[%s11] sm:$0x1]
  %v7921 = vrot.slane %v7914, 7
  %vm7923 = vcmask 1040384
  %v7924 = vsel %vm7923, %v7841, %v7921
  %v7926 = vsel %vm6830, 0.0, 0
  %7928 = vmatprep.subr.mxu0 0.0
  %7929 = vmatpush1.msra.mxu0 %v7917
  %7930 = vmatprep.subr.mxu0 0.0
  %7931 = vmatpush1.msra.mxu0 %v7918
  %7932 = vmatprep.subr.mxu0 0.0
  %7933 = vmatpush1.msra.mxu0 0.0
  %7934 = vmatprep.subr.mxu0 0.0
  %7935 = vmatpush1.msra.mxu0 0.0
  %7936 = vmatprep.subr.mxu0 0.0
  %7937 = vmatpush1.msra.mxu0 0.0
  %7938 = vmatprep.subr.mxu0 0.0
  %7939 = vmatpush1.msra.mxu0 0.0
  %7940 = vmatprep.subr.mxu0 0.0
  %7941 = vmatpush1.msra.mxu0 0.0
  %7942 = vmatprep.subr.mxu0 0.0
  %7943 = vmatpush1.msra.mxu0 0.0
  %7944 = vmatprep.subr.mxu0 0.0
  %7945 = vmatpush1.msra.mxu0 0.0
  %7946 = vmatprep.subr.mxu0 0.0
  %7947 = vmatpush1.msra.mxu0 0.0
  %7948 = vmatprep.subr.mxu0 0.0
  %7949 = vmatpush1.msra.mxu0 0.0
  %7950 = vmatprep.subr.mxu0 0.0
  %7951 = vmatpush1.msra.mxu0 0.0
  %7952 = vmatprep.subr.mxu0 0.0
  %7953 = vmatpush1.msra.mxu0 0.0
  %7954 = vmatprep.subr.mxu0 0.0
  %7955 = vmatpush1.msra.mxu0 0.0
  %7956 = vmatprep.subr.mxu0 0.0
  %7957 = vmatpush1.msra.mxu0 0.0
  %7958 = vmatprep.subr.mxu0 0.0
  %7959 = vmatpush1.msra.mxu0 0.0
  %7960 = vmatprep.subr.mxu0 0.0
  %7961 = vmatpush1.msra.mxu0 0.0
  %7962 = vmatprep.subr.mxu0 0.0
  %7963 = vmatpush1.msra.mxu0 0.0
  %7964 = vmatprep.subr.mxu0 0.0
  %7965 = vmatpush1.msra.mxu0 0.0
  %7966 = vmatprep.subr.mxu0 0.0
  %7967 = vmatpush1.msra.mxu0 0.0
  %7968 = vmatprep.subr.mxu0 0.0
  %7969 = vmatpush1.msra.mxu0 0.0
  %7970 = vmatprep.subr.mxu0 0.0
  %7971 = vmatpush1.msra.mxu0 0.0
  %7972 = vmatprep.subr.mxu0 0.0
  %7973 = vmatpush1.msra.mxu0 0.0
  %7974 = vmatprep.subr.mxu0 0.0
  %7975 = vmatpush1.msra.mxu0 0.0
  %7976 = vmatprep.subr.mxu0 0.0
  %7977 = vmatpush1.msra.mxu0 0.0
  %7978 = vmatprep.subr.mxu0 0.0
  %7979 = vmatpush1.msra.mxu0 0.0
  %7980 = vmatprep.subr.mxu0 0.0
  %7981 = vmatpush1.msra.mxu0 0.0
  %7982 = vmatprep.subr.mxu0 0.0
  %7983 = vmatpush1.msra.mxu0 0.0
  %7984 = vmatprep.subr.mxu0 0.0
  %7985 = vmatpush1.msra.mxu0 0.0
  %7986 = vmatprep.subr.mxu0 0.0
  %7987 = vmatpush1.msra.mxu0 0.0
  %7988 = vmatprep.subr.mxu0 0.0
  %7989 = vmatpush1.msra.mxu0 0.0
  %7990 = vmatprep.subr.mxu0 0.0
  %7991 = vmatpush1.msra.mxu0 0.0
  %7992 = vmatprep.mubr.f32.mxu0 0.0
  %7993 = vmatmul.mubr.f32.gmra.mrb[0].mxu0 %v7926
  %v7994 = vpop.f32.mrb[0].mxu0
  %v7995 = vadd.f32 0.0, %v7994
  %v7996 = vpop.f32.mrb[0].mxu0
  %7997 = vdwg.mxu0
  %v7998 = vadd.f32 %v7924, %v7995
  %v8000 = vlaneseq
  %v8001 = vshrl.u32 %v8000, 7
  %v8002 = vsub.s32 0, %v8001
  %v8003 = vrot.slane %v7919, %v8002
  %v8005 = vadd.f32 %v7998, %v8003
  %v8006 = vxor.u32 %v8005, 2147483648
  %v8007 = vmul.f32 %v8006, 1.442695
  %v8008 = vpow.pop %v8007
  %v8009 = vadd.f32 %v8008, 1.0
  %v8010 = vrcp.pop %v8009
  %v8011 = vmul.f32 1.0, %v8010
  %v8012 = vtanh.pop %v8005
  %v8013 = vmul.f32 %v8011, 0.0
  %8015 = vrot.lane.b32.xlu0 %v8012, 96
  %v8016 = vpop.permute.xlu0 %8015
  %v8018 = vmul.f32 %v8011, %v8016
  %8020 = vrot.lane.b32.xlu0 %v8018, 16
  %v8021 = vpop.permute.xlu0 %8020
  %v8023 = vadd.f32 %v8013, %v8021
  %v8024 = vtanh.pop %v8023
  %8026 = vrot.lane.b32.xlu0 %v8024, 32
  %v8027 = vpop.permute.xlu0 %8026
  %v8029 = vmul.f32 %v8011, %v8027
  %v8031 = vrot.slane %v7841, 1
  %v8033 = vsel %vm7923, %v8031, %v7914
  %8035 = vrot.lane.b32.xlu0 %v8029, 80
  %v8036 = vpop.permute.xlu0 %8035
  %v8037 = vsel %vm6830, %v8036, 0
  %8039 = vmatprep.subr.mxu0 0.0
  %8040 = vmatpush1.msra.mxu0 %v7917
  %8041 = vmatprep.subr.mxu0 0.0
  %8042 = vmatpush1.msra.mxu0 %v7918
  %8043 = vmatprep.subr.mxu0 0.0
  %8044 = vmatpush1.msra.mxu0 0.0
  %8045 = vmatprep.subr.mxu0 0.0
  %8046 = vmatpush1.msra.mxu0 0.0
  %8047 = vmatprep.subr.mxu0 0.0
  %8048 = vmatpush1.msra.mxu0 0.0
  %8049 = vmatprep.subr.mxu0 0.0
  %8050 = vmatpush1.msra.mxu0 0.0
  %8051 = vmatprep.subr.mxu0 0.0
  %8052 = vmatpush1.msra.mxu0 0.0
  %8053 = vmatprep.subr.mxu0 0.0
  %8054 = vmatpush1.msra.mxu0 0.0
  %8055 = vmatprep.subr.mxu0 0.0
  %8056 = vmatpush1.msra.mxu0 0.0
  %8057 = vmatprep.subr.mxu0 0.0
  %8058 = vmatpush1.msra.mxu0 0.0
  %8059 = vmatprep.subr.mxu0 0.0
  %8060 = vmatpush1.msra.mxu0 0.0
  %8061 = vmatprep.subr.mxu0 0.0
  %8062 = vmatpush1.msra.mxu0 0.0
  %8063 = vmatprep.subr.mxu0 0.0
  %8064 = vmatpush1.msra.mxu0 0.0
  %8065 = vmatprep.subr.mxu0 0.0
  %8066 = vmatpush1.msra.mxu0 0.0
  %8067 = vmatprep.subr.mxu0 0.0
  %8068 = vmatpush1.msra.mxu0 0.0
  %8069 = vmatprep.subr.mxu0 0.0
  %8070 = vmatpush1.msra.mxu0 0.0
  %8071 = vmatprep.subr.mxu0 0.0
  %8072 = vmatpush1.msra.mxu0 0.0
  %8073 = vmatprep.subr.mxu0 0.0
  %8074 = vmatpush1.msra.mxu0 0.0
  %8075 = vmatprep.subr.mxu0 0.0
  %8076 = vmatpush1.msra.mxu0 0.0
  %8077 = vmatprep.subr.mxu0 0.0
  %8078 = vmatpush1.msra.mxu0 0.0
  %8079 = vmatprep.subr.mxu0 0.0
  %8080 = vmatpush1.msra.mxu0 0.0
  %8081 = vmatprep.subr.mxu0 0.0
  %8082 = vmatpush1.msra.mxu0 0.0
  %8083 = vmatprep.subr.mxu0 0.0
  %8084 = vmatpush1.msra.mxu0 0.0
  %8085 = vmatprep.subr.mxu0 0.0
  %8086 = vmatpush1.msra.mxu0 0.0
  %8087 = vmatprep.subr.mxu0 0.0
  %8088 = vmatpush1.msra.mxu0 0.0
  %8089 = vmatprep.subr.mxu0 0.0
  %8090 = vmatpush1.msra.mxu0 0.0
  %8091 = vmatprep.subr.mxu0 0.0
  %8092 = vmatpush1.msra.mxu0 0.0
  %8093 = vmatprep.subr.mxu0 0.0
  %8094 = vmatpush1.msra.mxu0 0.0
  %8095 = vmatprep.subr.mxu0 0.0
  %8096 = vmatpush1.msra.mxu0 0.0
  %8097 = vmatprep.subr.mxu0 0.0
  %8098 = vmatpush1.msra.mxu0 0.0
  %8099 = vmatprep.subr.mxu0 0.0
  %8100 = vmatpush1.msra.mxu0 0.0
  %8101 = vmatprep.subr.mxu0 0.0
  %8102 = vmatpush1.msra.mxu0 0.0
  %8103 = vmatprep.mubr.f32.mxu0 0.0
  %8104 = vmatmul.mubr.f32.gmra.mrb[0].mxu0 %v8037
  %v8105 = vpop.f32.mrb[0].mxu0
  %v8106 = vadd.f32 0.0, %v8105
  %v8107 = vpop.f32.mrb[0].mxu0
  %8108 = vdwg.mxu0
  %v8109 = vadd.f32 %v8033, %v8106
  %v8110 = vadd.f32 %v8109, %v8003
  %v8111 = vxor.u32 %v8110, 2147483648
  %v8112 = vmul.f32 %v8111, 1.442695
  %v8113 = vpow.pop %v8112
  %v8114 = vadd.f32 %v8113, 1.0
  %v8115 = vrcp.pop %v8114
  %v8116 = vmul.f32 1.0, %v8115
  %v8117 = vtanh.pop %v8110
  %v8118 = vmul.f32 %v8116, %v8023
  %8120 = vrot.lane.b32.xlu0 %v8117, 96
  %v8121 = vpop.permute.xlu0 %8120
  %v8123 = vmul.f32 %v8116, %v8121
  %8125 = vrot.lane.b32.xlu0 %v8123, 16
  %v8126 = vpop.permute.xlu0 %8125
  %v8128 = vadd.f32 %v8118, %v8126
  %v8129 = vtanh.pop %v8128
  %8131 = vrot.lane.b32.xlu0 %v8129, 32
  %v8132 = vpop.permute.xlu0 %8131
  %v8134 = vmul.f32 %v8116, %v8132
  %v8135 = vrot.slane %v7841, 2
  %v8137 = vrot.slane %v7914, 1
  %v8139 = vsel %vm7923, %v8135, %v8137
  %8141 = vrot.lane.b32.xlu0 %v8134, 80
  %v8142 = vpop.permute.xlu0 %8141
  %v8143 = vsel %vm6830, %v8142, 0
  %8145 = vmatprep.subr.mxu0 0.0
  %8146 = vmatpush1.msra.mxu0 %v7917
  %8147 = vmatprep.subr.mxu0 0.0
  %8148 = vmatpush1.msra.mxu0 %v7918
  %8149 = vmatprep.subr.mxu0 0.0
  %8150 = vmatpush1.msra.mxu0 0.0
  %8151 = vmatprep.subr.mxu0 0.0
  %8152 = vmatpush1.msra.mxu0 0.0
  %8153 = vmatprep.subr.mxu0 0.0
  %8154 = vmatpush1.msra.mxu0 0.0
  %8155 = vmatprep.subr.mxu0 0.0
  %8156 = vmatpush1.msra.mxu0 0.0
  %8157 = vmatprep.subr.mxu0 0.0
  %8158 = vmatpush1.msra.mxu0 0.0
  %8159 = vmatprep.subr.mxu0 0.0
  %8160 = vmatpush1.msra.mxu0 0.0
  %8161 = vmatprep.subr.mxu0 0.0
  %8162 = vmatpush1.msra.mxu0 0.0
  %8163 = vmatprep.subr.mxu0 0.0
  %8164 = vmatpush1.msra.mxu0 0.0
  %8165 = vmatprep.subr.mxu0 0.0
  %8166 = vmatpush1.msra.mxu0 0.0
  %8167 = vmatprep.subr.mxu0 0.0
  %8168 = vmatpush1.msra.mxu0 0.0
  %8169 = vmatprep.subr.mxu0 0.0
  %8170 = vmatpush1.msra.mxu0 0.0
  %8171 = vmatprep.subr.mxu0 0.0
  %8172 = vmatpush1.msra.mxu0 0.0
  %8173 = vmatprep.subr.mxu0 0.0
  %8174 = vmatpush1.msra.mxu0 0.0
  %8175 = vmatprep.subr.mxu0 0.0
  %8176 = vmatpush1.msra.mxu0 0.0
  %8177 = vmatprep.subr.mxu0 0.0
  %8178 = vmatpush1.msra.mxu0 0.0
  %8179 = vmatprep.subr.mxu0 0.0
  %8180 = vmatpush1.msra.mxu0 0.0
  %8181 = vmatprep.subr.mxu0 0.0
  %8182 = vmatpush1.msra.mxu0 0.0
  %8183 = vmatprep.subr.mxu0 0.0
  %8184 = vmatpush1.msra.mxu0 0.0
  %8185 = vmatprep.subr.mxu0 0.0
  %8186 = vmatpush1.msra.mxu0 0.0
  %8187 = vmatprep.subr.mxu0 0.0
  %8188 = vmatpush1.msra.mxu0 0.0
  %8189 = vmatprep.subr.mxu0 0.0
  %8190 = vmatpush1.msra.mxu0 0.0
  %8191 = vmatprep.subr.mxu0 0.0
  %8192 = vmatpush1.msra.mxu0 0.0
  %8193 = vmatprep.subr.mxu0 0.0
  %8194 = vmatpush1.msra.mxu0 0.0
  %8195 = vmatprep.subr.mxu0 0.0
  %8196 = vmatpush1.msra.mxu0 0.0
  %8197 = vmatprep.subr.mxu0 0.0
  %8198 = vmatpush1.msra.mxu0 0.0
  %8199 = vmatprep.subr.mxu0 0.0
  %8200 = vmatpush1.msra.mxu0 0.0
  %8201 = vmatprep.subr.mxu0 0.0
  %8202 = vmatpush1.msra.mxu0 0.0
  %8203 = vmatprep.subr.mxu0 0.0
  %8204 = vmatpush1.msra.mxu0 0.0
  %8205 = vmatprep.subr.mxu0 0.0
  %8206 = vmatpush1.msra.mxu0 0.0
  %8207 = vmatprep.subr.mxu0 0.0
  %8208 = vmatpush1.msra.mxu0 0.0
  %8209 = vmatprep.mubr.f32.mxu0 0.0
  %8210 = vmatmul.mubr.f32.gmra.mrb[0].mxu0 %v8143
  %v8211 = vpop.f32.mrb[0].mxu0
  %v8212 = vadd.f32 0.0, %v8211
  %v8213 = vpop.f32.mrb[0].mxu0
  %8214 = vdwg.mxu0
  %v8215 = vadd.f32 %v8139, %v8212
  %v8216 = vadd.f32 %v8215, %v8003
  %v8217 = vxor.u32 %v8216, 2147483648
  %v8218 = vmul.f32 %v8217, 1.442695
  %v8219 = vpow.pop %v8218
  %v8220 = vadd.f32 %v8219, 1.0
  %v8221 = vrcp.pop %v8220
  %v8222 = vmul.f32 1.0, %v8221
  %v8223 = vtanh.pop %v8216
  %v8224 = vmul.f32 %v8222, %v8128
  %8226 = vrot.lane.b32.xlu0 %v8223, 96
  %v8227 = vpop.permute.xlu0 %8226
  %v8229 = vmul.f32 %v8222, %v8227
  %8231 = vrot.lane.b32.xlu0 %v8229, 16
  %v8232 = vpop.permute.xlu0 %8231
  %v8234 = vadd.f32 %v8224, %v8232
  %v8235 = vtanh.pop %v8234
  %8237 = vrot.lane.b32.xlu0 %v8235, 32
  %v8238 = vpop.permute.xlu0 %8237
  %v8240 = vmul.f32 %v8222, %v8238
  %v8241 = vrot.slane %v7841, 3
  %v8243 = vrot.slane %v7914, 2
  %v8245 = vsel %vm7923, %v8241, %v8243
  %8247 = vrot.lane.b32.xlu0 %v8240, 80
  %v8248 = vpop.permute.xlu0 %8247
  %v8249 = vsel %vm6830, %v8248, 0
  %8251 = vmatprep.subr.mxu0 0.0
  %8252 = vmatpush1.msra.mxu0 %v7917
  %8253 = vmatprep.subr.mxu0 0.0
  %8254 = vmatpush1.msra.mxu0 %v7918
  %8255 = vmatprep.subr.mxu0 0.0
  %8256 = vmatpush1.msra.mxu0 0.0
  %8257 = vmatprep.subr.mxu0 0.0
  %8258 = vmatpush1.msra.mxu0 0.0
  %8259 = vmatprep.subr.mxu0 0.0
  %8260 = vmatpush1.msra.mxu0 0.0
  %8261 = vmatprep.subr.mxu0 0.0
  %8262 = vmatpush1.msra.mxu0 0.0
  %8263 = vmatprep.subr.mxu0 0.0
  %8264 = vmatpush1.msra.mxu0 0.0
  %8265 = vmatprep.subr.mxu0 0.0
  %8266 = vmatpush1.msra.mxu0 0.0
  %8267 = vmatprep.subr.mxu0 0.0
  %8268 = vmatpush1.msra.mxu0 0.0
  %8269 = vmatprep.subr.mxu0 0.0
  %8270 = vmatpush1.msra.mxu0 0.0
  %8271 = vmatprep.subr.mxu0 0.0
  %8272 = vmatpush1.msra.mxu0 0.0
  %8273 = vmatprep.subr.mxu0 0.0
  %8274 = vmatpush1.msra.mxu0 0.0
  %8275 = vmatprep.subr.mxu0 0.0
  %8276 = vmatpush1.msra.mxu0 0.0
  %8277 = vmatprep.subr.mxu0 0.0
  %8278 = vmatpush1.msra.mxu0 0.0
  %8279 = vmatprep.subr.mxu0 0.0
  %8280 = vmatpush1.msra.mxu0 0.0
  %8281 = vmatprep.subr.mxu0 0.0
  %8282 = vmatpush1.msra.mxu0 0.0
  %8283 = vmatprep.subr.mxu0 0.0
  %8284 = vmatpush1.msra.mxu0 0.0
  %8285 = vmatprep.subr.mxu0 0.0
  %8286 = vmatpush1.msra.mxu0 0.0
  %8287 = vmatprep.subr.mxu0 0.0
  %8288 = vmatpush1.msra.mxu0 0.0
  %8289 = vmatprep.subr.mxu0 0.0
  %8290 = vmatpush1.msra.mxu0 0.0
  %8291 = vmatprep.subr.mxu0 0.0
  %8292 = vmatpush1.msra.mxu0 0.0
  %8293 = vmatprep.subr.mxu0 0.0
  %8294 = vmatpush1.msra.mxu0 0.0
  %8295 = vmatprep.subr.mxu0 0.0
  %8296 = vmatpush1.msra.mxu0 0.0
  %8297 = vmatprep.subr.mxu0 0.0
  %8298 = vmatpush1.msra.mxu0 0.0
  %8299 = vmatprep.subr.mxu0 0.0
  %8300 = vmatpush1.msra.mxu0 0.0
  %8301 = vmatprep.subr.mxu0 0.0
  %8302 = vmatpush1.msra.mxu0 0.0
  %8303 = vmatprep.subr.mxu0 0.0
  %8304 = vmatpush1.msra.mxu0 0.0
  %8305 = vmatprep.subr.mxu0 0.0
  %8306 = vmatpush1.msra.mxu0 0.0
  %8307 = vmatprep.subr.mxu0 0.0
  %8308 = vmatpush1.msra.mxu0 0.0
  %8309 = vmatprep.subr.mxu0 0.0
  %8310 = vmatpush1.msra.mxu0 0.0
  %8311 = vmatprep.subr.mxu0 0.0
  %8312 = vmatpush1.msra.mxu0 0.0
  %8313 = vmatprep.subr.mxu0 0.0
  %8314 = vmatpush1.msra.mxu0 0.0
  %8315 = vmatprep.mubr.f32.mxu0 0.0
  %8316 = vmatmul.mubr.f32.gmra.mrb[0].mxu0 %v8249
  %v8317 = vpop.f32.mrb[0].mxu0
  %v8318 = vadd.f32 0.0, %v8317
  %v8319 = vpop.f32.mrb[0].mxu0
  %8320 = vdwg.mxu0
  %v8321 = vadd.f32 %v8245, %v8318
  %v8322 = vadd.f32 %v8321, %v8003
  %v8323 = vxor.u32 %v8322, 2147483648
  %v8324 = vmul.f32 %v8323, 1.442695
  %v8325 = vpow.pop %v8324
  %v8326 = vadd.f32 %v8325, 1.0
  %v8327 = vrcp.pop %v8326
  %v8328 = vmul.f32 1.0, %v8327
  %v8329 = vtanh.pop %v8322
  %v8330 = vmul.f32 %v8328, %v8234
  %8332 = vrot.lane.b32.xlu0 %v8329, 96
  %v8333 = vpop.permute.xlu0 %8332
  %v8335 = vmul.f32 %v8328, %v8333
  %8337 = vrot.lane.b32.xlu0 %v8335, 16
  %v8338 = vpop.permute.xlu0 %8337
  %v8340 = vadd.f32 %v8330, %v8338
  %v8341 = vtanh.pop %v8340
  %8343 = vrot.lane.b32.xlu0 %v8341, 32
  %v8344 = vpop.permute.xlu0 %8343
  %v8346 = vmul.f32 %v8328, %v8344
  %v8347 = vrot.slane %v7841, 4
  %v8349 = vrot.slane %v7914, 3
  %v8351 = vsel %vm7923, %v8347, %v8349
  %8353 = vrot.lane.b32.xlu0 %v8346, 80
  %v8354 = vpop.permute.xlu0 %8353
  %v8355 = vsel %vm6830, %v8354, 0
  %8357 = vmatprep.subr.mxu0 0.0
  %8358 = vmatpush1.msra.mxu0 %v7917
  %8359 = vmatprep.subr.mxu0 0.0
  %8360 = vmatpush1.msra.mxu0 %v7918
  %8361 = vmatprep.subr.mxu0 0.0
  %8362 = vmatpush1.msra.mxu0 0.0
  %8363 = vmatprep.subr.mxu0 0.0
  %8364 = vmatpush1.msra.mxu0 0.0
  %8365 = vmatprep.subr.mxu0 0.0
  %8366 = vmatpush1.msra.mxu0 0.0
  %8367 = vmatprep.subr.mxu0 0.0
  %8368 = vmatpush1.msra.mxu0 0.0
  %8369 = vmatprep.subr.mxu0 0.0
  %8370 = vmatpush1.msra.mxu0 0.0
  %8371 = vmatprep.subr.mxu0 0.0
  %8372 = vmatpush1.msra.mxu0 0.0
  %8373 = vmatprep.subr.mxu0 0.0
  %8374 = vmatpush1.msra.mxu0 0.0
  %8375 = vmatprep.subr.mxu0 0.0
  %8376 = vmatpush1.msra.mxu0 0.0
  %8377 = vmatprep.subr.mxu0 0.0
  %8378 = vmatpush1.msra.mxu0 0.0
  %8379 = vmatprep.subr.mxu0 0.0
  %8380 = vmatpush1.msra.mxu0 0.0
  %8381 = vmatprep.subr.mxu0 0.0
  %8382 = vmatpush1.msra.mxu0 0.0
  %8383 = vmatprep.subr.mxu0 0.0
  %8384 = vmatpush1.msra.mxu0 0.0
  %8385 = vmatprep.subr.mxu0 0.0
  %8386 = vmatpush1.msra.mxu0 0.0
  %8387 = vmatprep.subr.mxu0 0.0
  %8388 = vmatpush1.msra.mxu0 0.0
  %8389 = vmatprep.subr.mxu0 0.0
  %8390 = vmatpush1.msra.mxu0 0.0
  %8391 = vmatprep.subr.mxu0 0.0
  %8392 = vmatpush1.msra.mxu0 0.0
  %8393 = vmatprep.subr.mxu0 0.0
  %8394 = vmatpush1.msra.mxu0 0.0
  %8395 = vmatprep.subr.mxu0 0.0
  %8396 = vmatpush1.msra.mxu0 0.0
  %8397 = vmatprep.subr.mxu0 0.0
  %8398 = vmatpush1.msra.mxu0 0.0
  %8399 = vmatprep.subr.mxu0 0.0
  %8400 = vmatpush1.msra.mxu0 0.0
  %8401 = vmatprep.subr.mxu0 0.0
  %8402 = vmatpush1.msra.mxu0 0.0
  %8403 = vmatprep.subr.mxu0 0.0
  %8404 = vmatpush1.msra.mxu0 0.0
  %8405 = vmatprep.subr.mxu0 0.0
  %8406 = vmatpush1.msra.mxu0 0.0
  %8407 = vmatprep.subr.mxu0 0.0
  %8408 = vmatpush1.msra.mxu0 0.0
  %8409 = vmatprep.subr.mxu0 0.0
  %8410 = vmatpush1.msra.mxu0 0.0
  %8411 = vmatprep.subr.mxu0 0.0
  %8412 = vmatpush1.msra.mxu0 0.0
  %8413 = vmatprep.subr.mxu0 0.0
  %8414 = vmatpush1.msra.mxu0 0.0
  %8415 = vmatprep.subr.mxu0 0.0
  %8416 = vmatpush1.msra.mxu0 0.0
  %8417 = vmatprep.subr.mxu0 0.0
  %8418 = vmatpush1.msra.mxu0 0.0
  %8419 = vmatprep.subr.mxu0 0.0
  %8420 = vmatpush1.msra.mxu0 0.0
  %8421 = vmatprep.mubr.f32.mxu0 0.0
  %8422 = vmatmul.mubr.f32.gmra.mrb[0].mxu0 %v8355
  %v8423 = vpop.f32.mrb[0].mxu0
  %v8424 = vadd.f32 0.0, %v8423
  %v8425 = vpop.f32.mrb[0].mxu0
  %8426 = vdwg.mxu0
  %v8427 = vadd.f32 %v8351, %v8424
  %v8428 = vadd.f32 %v8427, %v8003
  %v8429 = vxor.u32 %v8428, 2147483648
  %v8430 = vmul.f32 %v8429, 1.442695
  %v8431 = vpow.pop %v8430
  %v8432 = vadd.f32 %v8431, 1.0
  %v8433 = vrcp.pop %v8432
  %v8434 = vmul.f32 1.0, %v8433
  %v8435 = vtanh.pop %v8428
  %v8436 = vmul.f32 %v8434, %v8340
  %8438 = vrot.lane.b32.xlu0 %v8435, 96
  %v8439 = vpop.permute.xlu0 %8438
  %v8441 = vmul.f32 %v8434, %v8439
  %8443 = vrot.lane.b32.xlu0 %v8441, 16
  %v8444 = vpop.permute.xlu0 %8443
  %v8446 = vadd.f32 %v8436, %v8444
  %v8447 = vtanh.pop %v8446
  %8449 = vrot.lane.b32.xlu0 %v8447, 32
  %v8450 = vpop.permute.xlu0 %8449
  %v8452 = vmul.f32 %v8434, %v8450
  %v8453 = vrot.slane %v7759, 4
  %v8455 = vrot.slane %v7765, 3
  %v8457 = vsel %vm7923, %v8453, %v8455
  %v8458 = vld [vmem:[%s12] sm:$0xff]
  %v8459 = vld [vmem:[%s12 + $0x8] sm:$0xff]
  %v8460 = vld [vmem:[%s12 + $0x10] sm:$0xff]
  %v8461 = vld [vmem:[%s12 + $0x18] sm:$0xff]
  %v8462 = vld [vmem:[%s14] sm:$0x1]
  %v8464 = vlaneseq
  %v8465 = vshrl.u32 %v8464, 7
  %v8466 = vsub.s32 0, %v8465
  %v8467 = vrot.slane %v8462, %v8466
  %v8470 = vsel %vm7770, %v8457, 0
  %8472 = vmatprep.subr.mxu0 0.0
  %8473 = vmatpush1.msra.mxu0 %v8458
  %8474 = vmatprep.subr.mxu0 0.0
  %8475 = vmatpush1.msra.mxu0 %v8459
  %8476 = vmatprep.subr.mxu0 0.0
  %8477 = vmatpush1.msra.mxu0 %v8460
  %8478 = vmatprep.subr.mxu0 0.0
  %8479 = vmatpush1.msra.mxu0 %v8461
  %8480 = vmatprep.subr.mxu0 0.0
  %8481 = vmatpush1.msra.mxu0 0.0
  %8482 = vmatprep.subr.mxu0 0.0
  %8483 = vmatpush1.msra.mxu0 0.0
  %8484 = vmatprep.subr.mxu0 0.0
  %8485 = vmatpush1.msra.mxu0 0.0
  %8486 = vmatprep.subr.mxu0 0.0
  %8487 = vmatpush1.msra.mxu0 0.0
  %8488 = vmatprep.subr.mxu0 0.0
  %8489 = vmatpush1.msra.mxu0 0.0
  %8490 = vmatprep.subr.mxu0 0.0
  %8491 = vmatpush1.msra.mxu0 0.0
  %8492 = vmatprep.subr.mxu0 0.0
  %8493 = vmatpush1.msra.mxu0 0.0
  %8494 = vmatprep.subr.mxu0 0.0
  %8495 = vmatpush1.msra.mxu0 0.0
  %8496 = vmatprep.subr.mxu0 0.0
  %8497 = vmatpush1.msra.mxu0 0.0
  %8498 = vmatprep.subr.mxu0 0.0
  %8499 = vmatpush1.msra.mxu0 0.0
  %8500 = vmatprep.subr.mxu0 0.0
  %8501 = vmatpush1.msra.mxu0 0.0
  %8502 = vmatprep.subr.mxu0 0.0
  %8503 = vmatpush1.msra.mxu0 0.0
  %8504 = vmatprep.subr.mxu0 0.0
  %8505 = vmatpush1.msra.mxu0 0.0
  %8506 = vmatprep.subr.mxu0 0.0
  %8507 = vmatpush1.msra.mxu0 0.0
  %8508 = vmatprep.subr.mxu0 0.0
  %8509 = vmatpush1.msra.mxu0 0.0
  %8510 = vmatprep.subr.mxu0 0.0
  %8511 = vmatpush1.msra.mxu0 0.0
  %8512 = vmatprep.subr.mxu0 0.0
  %8513 = vmatpush1.msra.mxu0 0.0
  %8514 = vmatprep.subr.mxu0 0.0
  %8515 = vmatpush1.msra.mxu0 0.0
  %8516 = vmatprep.subr.mxu0 0.0
  %8517 = vmatpush1.msra.mxu0 0.0
  %8518 = vmatprep.subr.mxu0 0.0
  %8519 = vmatpush1.msra.mxu0 0.0
  %8520 = vmatprep.subr.mxu0 0.0
  %8521 = vmatpush1.msra.mxu0 0.0
  %8522 = vmatprep.subr.mxu0 0.0
  %8523 = vmatpush1.msra.mxu0 0.0
  %8524 = vmatprep.subr.mxu0 0.0
  %8525 = vmatpush1.msra.mxu0 0.0
  %8526 = vmatprep.subr.mxu0 0.0
  %8527 = vmatpush1.msra.mxu0 0.0
  %8528 = vmatprep.subr.mxu0 0.0
  %8529 = vmatpush1.msra.mxu0 0.0
  %8530 = vmatprep.subr.mxu0 0.0
  %8531 = vmatpush1.msra.mxu0 0.0
  %8532 = vmatprep.subr.mxu0 0.0
  %8533 = vmatpush1.msra.mxu0 0.0
  %8534 = vmatprep.subr.mxu0 0.0
  %8535 = vmatpush1.msra.mxu0 0.0
  %8536 = vmatprep.mubr.f32.mxu0 0.0
  %8537 = vmatmul.mubr.f32.gmra.mrb[0].mxu0 %v8470
  %v8538 = vpop.f32.mrb[0].mxu0
  %v8539 = vadd.f32 %v8467, %v8538
  %v8540 = vpop.f32.mrb[0].mxu0
  %8541 = vdwg.mxu0
  %v8542 = vxor.u32 %v8539, 2147483648
  %v8543 = vmul.f32 %v8542, 1.442695
  %v8544 = vpow.pop %v8543
  %v8545 = vadd.f32 %v8544, 1.0
  %v8546 = vrcp.pop %v8545
  %v8547 = vmul.f32 1.0, %v8546
  %v8548 = vtanh.pop %v8539
  %v8549 = vmul.f32 %v8547, 0.0
  %8551 = vrot.lane.b32.xlu0 %v8548, 96
  %v8552 = vpop.permute.xlu0 %8551
  %v8554 = vmul.f32 %v8547, %v8552
  %8556 = vrot.lane.b32.xlu0 %v8554, 16
  %v8557 = vpop.permute.xlu0 %8556
  %v8559 = vadd.f32 %v8549, %v8557
  %v8560 = vtanh.pop %v8559
  %8562 = vrot.lane.b32.xlu0 %v8560, 32
  %v8563 = vpop.permute.xlu0 %8562
  %v8565 = vmul.f32 %v8547, %v8563
  %8567 = vrot.lane.b32.xlu0 %v8452, 80
  %v8568 = vpop.permute.xlu0 %8567
  %8571 = vrot.lane.b32.xlu0 %v8565, 96
  %v8572 = vpop.permute.xlu0 %8571
  %v8574 = vsel %vm6830, %v8568, %v8572
  %v8575 = vld [vmem:[%s15] sm:$0xff]
  %v8576 = vld [vmem:[%s15 + $0x8] sm:$0xff]
  %v8577 = vld [vmem:[%s15 + $0x10] sm:$0xff]
  %v8578 = vld [vmem:[%s15 + $0x18] sm:$0xff]
  %v8579 = vld [vmem:[#allocation5] sm:$0x1]
  %v8581 = vlaneseq
  %v8582 = vshrl.u32 %v8581, 7
  %v8583 = vsub.s32 0, %v8582
  %v8584 = vrot.slane %v8579, %v8583
  %v8587 = vsel %vm7770, %v8574, 0
  %8589 = vmatprep.subr.mxu0 0.0
  %8590 = vmatpush1.msra.mxu0 %v8575
  %8591 = vmatprep.subr.mxu0 0.0
  %8592 = vmatpush1.msra.mxu0 %v8576
  %8593 = vmatprep.subr.mxu0 0.0
  %8594 = vmatpush1.msra.mxu0 %v8577
  %8595 = vmatprep.subr.mxu0 0.0
  %8596 = vmatpush1.msra.mxu0 %v8578
  %8597 = vmatprep.subr.mxu0 0.0
  %8598 = vmatpush1.msra.mxu0 0.0
  %8599 = vmatprep.subr.mxu0 0.0
  %8600 = vmatpush1.msra.mxu0 0.0
  %8601 = vmatprep.subr.mxu0 0.0
  %8602 = vmatpush1.msra.mxu0 0.0
  %8603 = vmatprep.subr.mxu0 0.0
  %8604 = vmatpush1.msra.mxu0 0.0
  %8605 = vmatprep.subr.mxu0 0.0
  %8606 = vmatpush1.msra.mxu0 0.0
  %8607 = vmatprep.subr.mxu0 0.0
  %8608 = vmatpush1.msra.mxu0 0.0
  %8609 = vmatprep.subr.mxu0 0.0
  %8610 = vmatpush1.msra.mxu0 0.0
  %8611 = vmatprep.subr.mxu0 0.0
  %8612 = vmatpush1.msra.mxu0 0.0
  %8613 = vmatprep.subr.mxu0 0.0
  %8614 = vmatpush1.msra.mxu0 0.0
  %8615 = vmatprep.subr.mxu0 0.0
  %8616 = vmatpush1.msra.mxu0 0.0
  %8617 = vmatprep.subr.mxu0 0.0
  %8618 = vmatpush1.msra.mxu0 0.0
  %8619 = vmatprep.subr.mxu0 0.0
  %8620 = vmatpush1.msra.mxu0 0.0
  %8621 = vmatprep.subr.mxu0 0.0
  %8622 = vmatpush1.msra.mxu0 0.0
  %8623 = vmatprep.subr.mxu0 0.0
  %8624 = vmatpush1.msra.mxu0 0.0
  %8625 = vmatprep.subr.mxu0 0.0
  %8626 = vmatpush1.msra.mxu0 0.0
  %8627 = vmatprep.subr.mxu0 0.0
  %8628 = vmatpush1.msra.mxu0 0.0
  %8629 = vmatprep.subr.mxu0 0.0
  %8630 = vmatpush1.msra.mxu0 0.0
  %8631 = vmatprep.subr.mxu0 0.0
  %8632 = vmatpush1.msra.mxu0 0.0
  %8633 = vmatprep.subr.mxu0 0.0
  %8634 = vmatpush1.msra.mxu0 0.0
  %8635 = vmatprep.subr.mxu0 0.0
  %8636 = vmatpush1.msra.mxu0 0.0
  %8637 = vmatprep.subr.mxu0 0.0
  %8638 = vmatpush1.msra.mxu0 0.0
  %8639 = vmatprep.subr.mxu0 0.0
  %8640 = vmatpush1.msra.mxu0 0.0
  %8641 = vmatprep.subr.mxu0 0.0
  %8642 = vmatpush1.msra.mxu0 0.0
  %8643 = vmatprep.subr.mxu0 0.0
  %8644 = vmatpush1.msra.mxu0 0.0
  %8645 = vmatprep.subr.mxu0 0.0
  %8646 = vmatpush1.msra.mxu0 0.0
  %8647 = vmatprep.subr.mxu0 0.0
  %8648 = vmatpush1.msra.mxu0 0.0
  %8649 = vmatprep.subr.mxu0 0.0
  %8650 = vmatpush1.msra.mxu0 0.0
  %8651 = vmatprep.subr.mxu0 0.0
  %8652 = vmatpush1.msra.mxu0 0.0
  %8653 = vmatprep.mubr.f32.mxu0 0.0
  %8654 = vmatmul.mubr.f32.gmra.mrb[0].mxu0 %v8587
  %v8655 = vpop.f32.mrb[0].mxu0
  %v8656 = vadd.f32 %v8584, %v8655
  %v8657 = vpop.f32.mrb[0].mxu0
  %8658 = vdwg.mxu0
  %v8659 = vxor.u32 %v8656, 2147483648
  %v8660 = vmul.f32 %v8659, 1.442695
  %v8661 = vpow.pop %v8660
  %v8662 = vadd.f32 %v8661, 1.0
  %v8663 = vrcp.pop %v8662
  %v8664 = vmul.f32 1.0, %v8663
  %vm8665 = vcmask 1024
  %8666 = vst.msk [vmem:[%s17] sm:$0x3] %vm8665, %v8664
  // Predicated region
  $region70: #{discriminator_forward.1} parent=0 // pred_check
    _
  $region71: #{discriminator_forward.1} parent=0 // pred_check_branch
    %8668 = sbr.rel (0) target = $region73
  $region72: #{discriminator_forward.1} parent=0 // pred_region
    _
  $region73: #{discriminator_forward.1} parent=0 // pred_fallthru
    _
  // Predicated region
  $region74: #{discriminator_forward.1} parent=0 // pred_check
    _
  $region75: #{discriminator_forward.1} parent=0 // pred_check_branch
    %8670 = sbr.rel (0) target = $region77
  $region76: #{discriminator_forward.1} parent=0 // pred_region
    _
  $region77: #{discriminator_forward.1} parent=0 // pred_fallthru
    _

</llo_original>
